<compile_context>
chip_gen: v6e
topology: v6e:2x2x1
jax: 0.10.0
libtpu: 0.0.40
codegen_flags: <defaults>
</compile_context>

<pallas_src>
from functools import partial

import jax
import jax.numpy as jnp
from jax.experimental import pallas as pl
from jax.experimental.pallas import tpu as pltpu


def resnet_block_kernel(x_ref, w1_ref, b1_ref, w2_ref, b2_ref,
                        o_ref, xpad_ref, ypad_ref,
                        *, H, W, C, dilation, im2col):
    """One batch element per grid step.

    x_ref:    (H, W, C)         f32   input tile (single HBM read; also the residual)
    w1_ref:   (9*C, C)          bf16  conv1 weights, rows ordered (kh, kw, c_in)
    b1_ref:   (1, 1, C)         f32
    w2_ref:   (9*C, C)          bf16  conv2 weights
    b2_ref:   (1, 1, C)         f32
    o_ref:    (H, W, C)         f32   output tile
    xpad_ref: (H+2d, W+2d, C)   f32   VMEM scratch: zero-padded input for conv1
    ypad_ref: (H+2,  W+2,  C)   f32   VMEM scratch: zero-padded conv1 activation
    """
    d = dilation

    def zero_border(pad_ref, p):
        # Zero only the thin border; the interior is fully overwritten each step.
        # (Cannot zero once under `pl.program_id(0) == 0`: the batch axis is
        #  "parallel", so on megacore the second core never runs iteration 0.)
        pad_ref[0:p, :, :] = jnp.zeros((p, W + 2 * p, C), pad_ref.dtype)
        pad_ref[H + p:H + 2 * p, :, :] = jnp.zeros((p, W + 2 * p, C), pad_ref.dtype)
        pad_ref[:, 0:p, :] = jnp.zeros((H + 2 * p, p, C), pad_ref.dtype)
        pad_ref[:, W + p:W + 2 * p, :] = jnp.zeros((H + 2 * p, p, C), pad_ref.dtype)

    def conv3x3(pad_ref, w_ref, dil):
        # 3x3 conv over the zero-padded scratch, bf16 MXU operands, f32 accumulation.
        patches = [pad_ref[kh * dil:kh * dil + H, kw * dil:kw * dil + W, :]
                   for kh in range(3) for kw in range(3)]
        if im2col:
            # Fused im2col: one (H*W, 9C) @ (9C, C) matmul.
            slab = jnp.concatenate(patches, axis=-1).astype(jnp.bfloat16)
            return jnp.einsum('hwk,kc->hwc', slab, w_ref[...],
                              preferred_element_type=jnp.float32)
        # Safety-net path: 9 shifted (H*W, C) @ (C, C) matmuls (same math).
        acc = jnp.zeros((H, W, C), jnp.float32)
        for t, p in enumerate(patches):
            acc = acc + jnp.einsum('hwc,cd->hwd', p.astype(jnp.bfloat16),
                                   w_ref[t * C:(t + 1) * C, :],
                                   preferred_element_type=jnp.float32)
        return acc

    # ---- zero-padded input in VMEM (single read of x from HBM) ---------------
    zero_border(xpad_ref, d)
    x = x_ref[...]
    xpad_ref[d:d + H, d:d + W, :] = x

    # ---- conv1 (dilation=d) + bias + tanh (f32) -------------------------------
    y1 = jnp.tanh(conv3x3(xpad_ref, w1_ref, d) + b1_ref[...])

    # ---- nn.ZeroPad2d(1) of the conv1 activation, in VMEM ---------------------
    zero_border(ypad_ref, 1)
    ypad_ref[1:1 + H, 1:1 + W, :] = y1

    # ---- conv2 (dilation=1) + bias --------------------------------------------
    y2 = conv3x3(ypad_ref, w2_ref, 1) + b2_ref[...]

    # ---- residual add + final tanh in f32 -------------------------------------
    o_ref[...] = jnp.tanh(x + y2).astype(o_ref.dtype)


def resnet_block(x_nchw, w1, b1, w2, b2, dilation=1):
    """x_nchw: (B, C, H, W). w1, w2 in HWIO layout (3, 3, C, C). Returns (B, C, H, W) f32."""
    x = jnp.transpose(x_nchw, (0, 2, 3, 1)).astype(jnp.float32)   # NCHW -> NHWC
    B, H, W, C = x.shape
    d = int(dilation)

    # im2col weight layout: rows flattened as (kh, kw, c_in); bf16 for the MXU.
    w1r = w1.reshape(9 * C, C).astype(jnp.bfloat16)
    w2r = w2.reshape(9 * C, C).astype(jnp.bfloat16)
    b1r = b1.reshape(1, 1, C).astype(jnp.float32)
    b2r = b2.reshape(1, 1, C).astype(jnp.float32)

    def make_call(im2col):
        kernel = partial(resnet_block_kernel, H=H, W=W, C=C, dilation=d,
                         im2col=im2col)
        return pl.pallas_call(
            kernel,
            out_shape=jax.ShapeDtypeStruct((B, H, W, C), jnp.float32),
            grid_spec=pltpu.PrefetchScalarGridSpec(
                num_scalar_prefetch=0,
                grid=(B,),
                in_specs=[
                    pl.BlockSpec((None, H, W, C), lambda b: (b, 0, 0, 0)),
                    pl.BlockSpec((9 * C, C), lambda b: (0, 0)),
                    pl.BlockSpec((1, 1, C), lambda b: (0, 0, 0)),
                    pl.BlockSpec((9 * C, C), lambda b: (0, 0)),
                    pl.BlockSpec((1, 1, C), lambda b: (0, 0, 0)),
                ],
                out_specs=pl.BlockSpec((None, H, W, C), lambda b: (b, 0, 0, 0)),
                scratch_shapes=[
                    pltpu.VMEM((H + 2 * d, W + 2 * d, C), jnp.float32),  # xpad
                    pltpu.VMEM((H + 2, W + 2, C), jnp.float32),          # ypad
                ],
            ),
            compiler_params=pltpu.CompilerParams(
                dimension_semantics=("parallel",),       # batch across TensorCores
                vmem_limit_bytes=32 * 1024 * 1024,
            ),
        )

    try:
        out = jax.block_until_ready(make_call(True)(x, w1r, b1r, w2r, b2r))
    except Exception:
        # Safety net: if the fused im2col concat fails to lower on this toolchain,
        # fall back to the per-tap matmul kernel (identical math / same bf16 path).
        out = jax.block_until_ready(make_call(False)(x, w1r, b1r, w2r, b2r))

    return jnp.transpose(out, (0, 3, 1, 2))              # NHWC -> NCHW


def ref_forward(x_nchw, w1, b1, w2, b2, dilation=1):
    """Plain-JAX f32 reference using lax.conv_general_dilated (PyTorch semantics)."""
    x = jnp.transpose(x_nchw, (0, 2, 3, 1)).astype(jnp.float32)
    dn = jax.lax.conv_dimension_numbers(x.shape, w1.shape, ('NHWC', 'HWIO', 'NHWC'))
    d = int(dilation)
    y = jax.lax.conv_general_dilated(
        x, w1, window_strides=(1, 1), padding=[(d, d), (d, d)],
        rhs_dilation=(d, d), dimension_numbers=dn) + b1.reshape(1, 1, 1, -1)
    y = jnp.tanh(y)
    y = jax.lax.conv_general_dilated(
        y, w2, window_strides=(1, 1), padding=[(1, 1), (1, 1)],
        dimension_numbers=dn) + b2.reshape(1, 1, 1, -1)
    out = jnp.tanh(x + y)
    return jnp.transpose(out, (0, 3, 1, 2))


if __name__ == "__main__":
    B, C, H, W = 2, 4, 16, 16
    dilation = 1

    key = jax.random.PRNGKey(0)
    kx, kw1, kb1, kw2, kb2 = jax.random.split(key, 5)

    x = jax.random.normal(kx, (B, C, H, W), dtype=jnp.float32)

    # PyTorch Conv2d-style uniform init, weights stored in HWIO: (kh, kw, c_in, c_out).
    fan_in = C * 3 * 3
    bound = 1.0 / (fan_in ** 0.5)
    w1 = jax.random.uniform(kw1, (3, 3, C, C), jnp.float32, -bound, bound)
    b1 = jax.random.uniform(kb1, (C,), jnp.float32, -bound, bound)
    w2 = jax.random.uniform(kw2, (3, 3, C, C), jnp.float32, -bound, bound)
    b2 = jax.random.uniform(kb2, (C,), jnp.float32, -bound, bound)

    out = jax.block_until_ready(resnet_block(x, w1, b1, w2, b2, dilation=dilation))
    ref = jax.block_until_ready(ref_forward(x, w1, b1, w2, b2, dilation=dilation))

    assert out.shape == (B, C, H, W)
    max_err = float(jnp.max(jnp.abs(out - ref)))
    # bf16 MXU operands (f32 accumulation, f32 residual/tanh) -> relaxed tolerance.
    assert max_err < 2e-2, f"mismatch vs JAX conv reference, max abs err = {max_err}"

    print("KERNEL_OK")
</pallas_src>

<mosaic_0001>
module attributes {stable_mosaic.version = 11 : i64} {
  func.func @resnet_block_kernel(%arg0: i32, %arg1: memref<1x16x16x4xf32, #tpu.memory_space<vmem>>, %arg2: memref<36x4xbf16, #tpu.memory_space<vmem>>, %arg3: memref<1x1x4xf32, #tpu.memory_space<vmem>>, %arg4: memref<36x4xbf16, #tpu.memory_space<vmem>>, %arg5: memref<1x1x4xf32, #tpu.memory_space<vmem>>, %arg6: memref<1x16x16x4xf32, #tpu.memory_space<vmem>>, %arg7: memref<18x18x4xf32, #tpu.memory_space<vmem>>, %arg8: memref<18x18x4xf32, #tpu.memory_space<vmem>>) attributes {dimension_semantics = [#tpu.dimension_semantics<parallel>], iteration_bounds = array<i64: 2>, scalar_prefetch = 0 : i64, scratch_operands = 2 : i64, tpu.core_type = #tpu.core_type<tc>, window_params = [{transform_indices = @transform_0, window_bounds = array<i64: 1, 16, 16, 4>}, {pipeline_mode = #tpu.pipeline_mode<synchronous>, transform_indices = @transform_1, window_bounds = array<i64: 36, 4>}, {pipeline_mode = #tpu.pipeline_mode<synchronous>, transform_indices = @transform_2, window_bounds = array<i64: 1, 1, 4>}, {pipeline_mode = #tpu.pipeline_mode<synchronous>, transform_indices = @transform_3, window_bounds = array<i64: 36, 4>}, {pipeline_mode = #tpu.pipeline_mode<synchronous>, transform_indices = @transform_4, window_bounds = array<i64: 1, 1, 4>}, {transform_indices = @transform_5, window_bounds = array<i64: 1, 16, 16, 4>}]} {
    %cst = arith.constant 0.000000e+00 : f32
    %0 = vector.broadcast %cst : f32 to vector<1x18x4xf32>
    %c0 = arith.constant 0 : index
    %c0_0 = arith.constant 0 : index
    %c0_1 = arith.constant 0 : index
    %1 = vector.load %arg7[%c0, %c0_0, %c0_1] : memref<18x18x4xf32, #tpu.memory_space<vmem>>, vector<1x18x4xf32>
    tpu.vector_store %arg7[%c0, %c0_0, %c0_1], %0 {strides = array<i32>} : memref<18x18x4xf32, #tpu.memory_space<vmem>>, vector<1x18x4xf32>,
    %cst_2 = arith.constant 0.000000e+00 : f32
    %2 = vector.broadcast %cst_2 : f32 to vector<1x18x4xf32>
    %c17 = arith.constant 17 : index
    %c0_3 = arith.constant 0 : index
    %c0_4 = arith.constant 0 : index
    %3 = vector.load %arg7[%c17, %c0_3, %c0_4] : memref<18x18x4xf32, #tpu.memory_space<vmem>>, vector<1x18x4xf32>
    tpu.vector_store %arg7[%c17, %c0_3, %c0_4], %2 {strides = array<i32>} : memref<18x18x4xf32, #tpu.memory_space<vmem>>, vector<1x18x4xf32>,
    %cst_5 = arith.constant 0.000000e+00 : f32
    %4 = vector.broadcast %cst_5 : f32 to vector<18x1x4xf32>
    %c0_6 = arith.constant 0 : index
    %c0_7 = arith.constant 0 : index
    %c0_8 = arith.constant 0 : index
    %5 = vector.load %arg7[%c0_6, %c0_7, %c0_8] : memref<18x18x4xf32, #tpu.memory_space<vmem>>, vector<18x1x4xf32>
    tpu.vector_store %arg7[%c0_6, %c0_7, %c0_8], %4 {strides = array<i32>} : memref<18x18x4xf32, #tpu.memory_space<vmem>>, vector<18x1x4xf32>,
    %cst_9 = arith.constant 0.000000e+00 : f32
    %6 = vector.broadcast %cst_9 : f32 to vector<18x1x4xf32>
    %c0_10 = arith.constant 0 : index
    %c17_11 = arith.constant 17 : index
    %c0_12 = arith.constant 0 : index
    %7 = vector.load %arg7[%c0_10, %c17_11, %c0_12] : memref<18x18x4xf32, #tpu.memory_space<vmem>>, vector<18x1x4xf32>
    tpu.vector_store %arg7[%c0_10, %c17_11, %c0_12], %6 {strides = array<i32>} : memref<18x18x4xf32, #tpu.memory_space<vmem>>, vector<18x1x4xf32>,
    %c0_13 = arith.constant 0 : index
    %c0_14 = arith.constant 0 : index
    %c0_15 = arith.constant 0 : index
    %c0_16 = arith.constant 0 : index
    %8 = vector.load %arg1[%c0_13, %c0_14, %c0_15, %c0_16] : memref<1x16x16x4xf32, #tpu.memory_space<vmem>>, vector<1x16x16x4xf32>
    %9 = vector.shape_cast %8 : vector<1x16x16x4xf32> to vector<16x16x4xf32>
    %c1 = arith.constant 1 : index
    %c1_17 = arith.constant 1 : index
    %c0_18 = arith.constant 0 : index
    %10 = vector.load %arg7[%c1, %c1_17, %c0_18] : memref<18x18x4xf32, #tpu.memory_space<vmem>>, vector<16x16x4xf32>
    tpu.vector_store %arg7[%c1, %c1_17, %c0_18], %9 {strides = array<i32>} : memref<18x18x4xf32, #tpu.memory_space<vmem>>, vector<16x16x4xf32>,
    %c0_19 = arith.constant 0 : index
    %c0_20 = arith.constant 0 : index
    %c0_21 = arith.constant 0 : index
    %11 = vector.load %arg7[%c0_19, %c0_20, %c0_21] : memref<18x18x4xf32, #tpu.memory_space<vmem>>, vector<16x16x4xf32>
    %c0_22 = arith.constant 0 : index
    %c1_23 = arith.constant 1 : index
    %c0_24 = arith.constant 0 : index
    %12 = vector.load %arg7[%c0_22, %c1_23, %c0_24] : memref<18x18x4xf32, #tpu.memory_space<vmem>>, vector<16x16x4xf32>
    %c0_25 = arith.constant 0 : index
    %c2 = arith.constant 2 : index
    %c0_26 = arith.constant 0 : index
    %13 = vector.load %arg7[%c0_25, %c2, %c0_26] : memref<18x18x4xf32, #tpu.memory_space<vmem>>, vector<16x16x4xf32>
    %c1_27 = arith.constant 1 : index
    %c0_28 = arith.constant 0 : index
    %c0_29 = arith.constant 0 : index
    %14 = vector.load %arg7[%c1_27, %c0_28, %c0_29] : memref<18x18x4xf32, #tpu.memory_space<vmem>>, vector<16x16x4xf32>
    %c1_30 = arith.constant 1 : index
    %c1_31 = arith.constant 1 : index
    %c0_32 = arith.constant 0 : index
    %15 = vector.load %arg7[%c1_30, %c1_31, %c0_32] : memref<18x18x4xf32, #tpu.memory_space<vmem>>, vector<16x16x4xf32>
    %c1_33 = arith.constant 1 : index
    %c2_34 = arith.constant 2 : index
    %c0_35 = arith.constant 0 : index
    %16 = vector.load %arg7[%c1_33, %c2_34, %c0_35] : memref<18x18x4xf32, #tpu.memory_space<vmem>>, vector<16x16x4xf32>
    %c2_36 = arith.constant 2 : index
    %c0_37 = arith.constant 0 : index
    %c0_38 = arith.constant 0 : index
    %17 = vector.load %arg7[%c2_36, %c0_37, %c0_38] : memref<18x18x4xf32, #tpu.memory_space<vmem>>, vector<16x16x4xf32>
    %c2_39 = arith.constant 2 : index
    %c1_40 = arith.constant 1 : index
    %c0_41 = arith.constant 0 : index
    %18 = vector.load %arg7[%c2_39, %c1_40, %c0_41] : memref<18x18x4xf32, #tpu.memory_space<vmem>>, vector<16x16x4xf32>
    %c2_42 = arith.constant 2 : index
    %c2_43 = arith.constant 2 : index
    %c0_44 = arith.constant 0 : index
    %19 = vector.load %arg7[%c2_42, %c2_43, %c0_44] : memref<18x18x4xf32, #tpu.memory_space<vmem>>, vector<16x16x4xf32>
    %20 = tpu.concatenate %11, %12, %13, %14, %15, %16, %17, %18, %19 in 2 : vector<16x16x4xf32>, vector<16x16x4xf32>, vector<16x16x4xf32>, vector<16x16x4xf32>, vector<16x16x4xf32>, vector<16x16x4xf32>, vector<16x16x4xf32>, vector<16x16x4xf32>, vector<16x16x4xf32> -> vector<16x16x36xf32>
    %21 = arith.truncf %20 : vector<16x16x36xf32> to vector<16x16x36xbf16>
    %c0_45 = arith.constant 0 : index
    %c0_46 = arith.constant 0 : index
    %22 = vector.load %arg2[%c0_45, %c0_46] : memref<36x4xbf16, #tpu.memory_space<vmem>>, vector<36x4xbf16>
    "tpu.trace_start"() <{level = 10 : i32, message = "hwk,kc->hwc"}> : () -> ()
    %cst_47 = arith.constant dense<0.000000e+00> : vector<16x16x4xf32>
    %23 = tpu.matmul %21, %22, %cst_47 {dimension_numbers = #tpu.dot_dimension_numbers<[2], [0], [0, 1], [1], [0, 0, 0, 1, 1, 1], [], []>} : vector<16x16x36xbf16>, vector<36x4xbf16>, vector<16x16x4xf32> -> vector<16x16x4xf32>
    "tpu.trace_stop"() : () -> ()
    %c0_48 = arith.constant 0 : index
    %c0_49 = arith.constant 0 : index
    %c0_50 = arith.constant 0 : index
    %24 = vector.load %arg3[%c0_48, %c0_49, %c0_50] : memref<1x1x4xf32, #tpu.memory_space<vmem>>, vector<1x1x4xf32>
    %25 = vector.broadcast %24 : vector<1x1x4xf32> to vector<16x16x4xf32>
    %26 = arith.addf %23, %25 : vector<16x16x4xf32>
    %27 = math.tanh %26 : vector<16x16x4xf32>
    %cst_51 = arith.constant 0.000000e+00 : f32
    %28 = vector.broadcast %cst_51 : f32 to vector<1x18x4xf32>
    %c0_52 = arith.constant 0 : index
    %c0_53 = arith.constant 0 : index
    %c0_54 = arith.constant 0 : index
    %29 = vector.load %arg8[%c0_52, %c0_53, %c0_54] : memref<18x18x4xf32, #tpu.memory_space<vmem>>, vector<1x18x4xf32>
    tpu.vector_store %arg8[%c0_52, %c0_53, %c0_54], %28 {strides = array<i32>} : memref<18x18x4xf32, #tpu.memory_space<vmem>>, vector<1x18x4xf32>,
    %cst_55 = arith.constant 0.000000e+00 : f32
    %30 = vector.broadcast %cst_55 : f32 to vector<1x18x4xf32>
    %c17_56 = arith.constant 17 : index
    %c0_57 = arith.constant 0 : index
    %c0_58 = arith.constant 0 : index
    %31 = vector.load %arg8[%c17_56, %c0_57, %c0_58] : memref<18x18x4xf32, #tpu.memory_space<vmem>>, vector<1x18x4xf32>
    tpu.vector_store %arg8[%c17_56, %c0_57, %c0_58], %30 {strides = array<i32>} : memref<18x18x4xf32, #tpu.memory_space<vmem>>, vector<1x18x4xf32>,
    %cst_59 = arith.constant 0.000000e+00 : f32
    %32 = vector.broadcast %cst_59 : f32 to vector<18x1x4xf32>
    %c0_60 = arith.constant 0 : index
    %c0_61 = arith.constant 0 : index
    %c0_62 = arith.constant 0 : index
    %33 = vector.load %arg8[%c0_60, %c0_61, %c0_62] : memref<18x18x4xf32, #tpu.memory_space<vmem>>, vector<18x1x4xf32>
    tpu.vector_store %arg8[%c0_60, %c0_61, %c0_62], %32 {strides = array<i32>} : memref<18x18x4xf32, #tpu.memory_space<vmem>>, vector<18x1x4xf32>,
    %cst_63 = arith.constant 0.000000e+00 : f32
    %34 = vector.broadcast %cst_63 : f32 to vector<18x1x4xf32>
    %c0_64 = arith.constant 0 : index
    %c17_65 = arith.constant 17 : index
    %c0_66 = arith.constant 0 : index
    %35 = vector.load %arg8[%c0_64, %c17_65, %c0_66] : memref<18x18x4xf32, #tpu.memory_space<vmem>>, vector<18x1x4xf32>
    tpu.vector_store %arg8[%c0_64, %c17_65, %c0_66], %34 {strides = array<i32>} : memref<18x18x4xf32, #tpu.memory_space<vmem>>, vector<18x1x4xf32>,
    %c1_67 = arith.constant 1 : index
    %c1_68 = arith.constant 1 : index
    %c0_69 = arith.constant 0 : index
    %36 = vector.load %arg8[%c1_67, %c1_68, %c0_69] : memref<18x18x4xf32, #tpu.memory_space<vmem>>, vector<16x16x4xf32>
    tpu.vector_store %arg8[%c1_67, %c1_68, %c0_69], %27 {strides = array<i32>} : memref<18x18x4xf32, #tpu.memory_space<vmem>>, vector<16x16x4xf32>,
    %c0_70 = arith.constant 0 : index
    %c0_71 = arith.constant 0 : index
    %c0_72 = arith.constant 0 : index
    %37 = vector.load %arg8[%c0_70, %c0_71, %c0_72] : memref<18x18x4xf32, #tpu.memory_space<vmem>>, vector<16x16x4xf32>
    %c0_73 = arith.constant 0 : index
    %c1_74 = arith.constant 1 : index
    %c0_75 = arith.constant 0 : index
    %38 = vector.load %arg8[%c0_73, %c1_74, %c0_75] : memref<18x18x4xf32, #tpu.memory_space<vmem>>, vector<16x16x4xf32>
    %c0_76 = arith.constant 0 : index
    %c2_77 = arith.constant 2 : index
    %c0_78 = arith.constant 0 : index
    %39 = vector.load %arg8[%c0_76, %c2_77, %c0_78] : memref<18x18x4xf32, #tpu.memory_space<vmem>>, vector<16x16x4xf32>
    %c1_79 = arith.constant 1 : index
    %c0_80 = arith.constant 0 : index
    %c0_81 = arith.constant 0 : index
    %40 = vector.load %arg8[%c1_79, %c0_80, %c0_81] : memref<18x18x4xf32, #tpu.memory_space<vmem>>, vector<16x16x4xf32>
    %c1_82 = arith.constant 1 : index
    %c1_83 = arith.constant 1 : index
    %c0_84 = arith.constant 0 : index
    %41 = vector.load %arg8[%c1_82, %c1_83, %c0_84] : memref<18x18x4xf32, #tpu.memory_space<vmem>>, vector<16x16x4xf32>
    %c1_85 = arith.constant 1 : index
    %c2_86 = arith.constant 2 : index
    %c0_87 = arith.constant 0 : index
    %42 = vector.load %arg8[%c1_85, %c2_86, %c0_87] : memref<18x18x4xf32, #tpu.memory_space<vmem>>, vector<16x16x4xf32>
    %c2_88 = arith.constant 2 : index
    %c0_89 = arith.constant 0 : index
    %c0_90 = arith.constant 0 : index
    %43 = vector.load %arg8[%c2_88, %c0_89, %c0_90] : memref<18x18x4xf32, #tpu.memory_space<vmem>>, vector<16x16x4xf32>
    %c2_91 = arith.constant 2 : index
    %c1_92 = arith.constant 1 : index
    %c0_93 = arith.constant 0 : index
    %44 = vector.load %arg8[%c2_91, %c1_92, %c0_93] : memref<18x18x4xf32, #tpu.memory_space<vmem>>, vector<16x16x4xf32>
    %c2_94 = arith.constant 2 : index
    %c2_95 = arith.constant 2 : index
    %c0_96 = arith.constant 0 : index
    %45 = vector.load %arg8[%c2_94, %c2_95, %c0_96] : memref<18x18x4xf32, #tpu.memory_space<vmem>>, vector<16x16x4xf32>
    %46 = tpu.concatenate %37, %38, %39, %40, %41, %42, %43, %44, %45 in 2 : vector<16x16x4xf32>, vector<16x16x4xf32>, vector<16x16x4xf32>, vector<16x16x4xf32>, vector<16x16x4xf32>, vector<16x16x4xf32>, vector<16x16x4xf32>, vector<16x16x4xf32>, vector<16x16x4xf32> -> vector<16x16x36xf32>
    %47 = arith.truncf %46 : vector<16x16x36xf32> to vector<16x16x36xbf16>
    %c0_97 = arith.constant 0 : index
    %c0_98 = arith.constant 0 : index
    %48 = vector.load %arg4[%c0_97, %c0_98] : memref<36x4xbf16, #tpu.memory_space<vmem>>, vector<36x4xbf16>
    "tpu.trace_start"() <{level = 10 : i32, message = "hwk,kc->hwc"}> : () -> ()
    %cst_99 = arith.constant dense<0.000000e+00> : vector<16x16x4xf32>
    %49 = tpu.matmul %47, %48, %cst_99 {dimension_numbers = #tpu.dot_dimension_numbers<[2], [0], [0, 1], [1], [0, 0, 0, 1, 1, 1], [], []>} : vector<16x16x36xbf16>, vector<36x4xbf16>, vector<16x16x4xf32> -> vector<16x16x4xf32>
    "tpu.trace_stop"() : () -> ()
    %c0_100 = arith.constant 0 : index
    %c0_101 = arith.constant 0 : index
    %c0_102 = arith.constant 0 : index
    %50 = vector.load %arg5[%c0_100, %c0_101, %c0_102] : memref<1x1x4xf32, #tpu.memory_space<vmem>>, vector<1x1x4xf32>
    %51 = vector.broadcast %50 : vector<1x1x4xf32> to vector<16x16x4xf32>
    %52 = arith.addf %49, %51 : vector<16x16x4xf32>
    %53 = arith.addf %9, %52 : vector<16x16x4xf32>
    %54 = math.tanh %53 : vector<16x16x4xf32>
    %c0_103 = arith.constant 0 : index
    %c0_104 = arith.constant 0 : index
    %c0_105 = arith.constant 0 : index
    %c0_106 = arith.constant 0 : index
    %55 = vector.load %arg6[%c0_103, %c0_104, %c0_105, %c0_106] : memref<1x16x16x4xf32, #tpu.memory_space<vmem>>, vector<1x16x16x4xf32>
    %56 = vector.shape_cast %55 : vector<1x16x16x4xf32> to vector<16x16x4xf32>
    %57 = vector.shape_cast %54 : vector<16x16x4xf32> to vector<1x16x16x4xf32>
    tpu.vector_store %arg6[%c0_103, %c0_104, %c0_105, %c0_106], %57 {strides = array<i32>} : memref<1x16x16x4xf32, #tpu.memory_space<vmem>>, vector<1x16x16x4xf32>,
    return
  }
  func.func @transform_0(%arg0: i32) -> (i32, i32, i32, i32) {
    %c0_i32 = arith.constant 0 : i32
    %c0_i32_0 = arith.constant 0 : i32
    %c0_i32_1 = arith.constant 0 : i32
    %c0_i32_2 = arith.constant 0 : i32
    return %arg0, %c0_i32, %c0_i32_0, %c0_i32_1 : i32, i32, i32, i32
  }
  func.func @transform_1(%arg0: i32) -> (i32, i32) {
    %c0_i32 = arith.constant 0 : i32
    %c0_i32_0 = arith.constant 0 : i32
    %c0_i32_1 = arith.constant 0 : i32
    return %c0_i32, %c0_i32_0 : i32, i32
  }
  func.func @transform_2(%arg0: i32) -> (i32, i32, i32) {
    %c0_i32 = arith.constant 0 : i32
    %c0_i32_0 = arith.constant 0 : i32
    %c0_i32_1 = arith.constant 0 : i32
    %c0_i32_2 = arith.constant 0 : i32
    return %c0_i32, %c0_i32_0, %c0_i32_1 : i32, i32, i32
  }
  func.func @transform_3(%arg0: i32) -> (i32, i32) {
    %c0_i32 = arith.constant 0 : i32
    %c0_i32_0 = arith.constant 0 : i32
    %c0_i32_1 = arith.constant 0 : i32
    return %c0_i32, %c0_i32_0 : i32, i32
  }
  func.func @transform_4(%arg0: i32) -> (i32, i32, i32) {
    %c0_i32 = arith.constant 0 : i32
    %c0_i32_0 = arith.constant 0 : i32
    %c0_i32_1 = arith.constant 0 : i32
    %c0_i32_2 = arith.constant 0 : i32
    return %c0_i32, %c0_i32_0, %c0_i32_1 : i32, i32, i32
  }
  func.func @transform_5(%arg0: i32) -> (i32, i32, i32, i32) {
    %c0_i32 = arith.constant 0 : i32
    %c0_i32_0 = arith.constant 0 : i32
    %c0_i32_1 = arith.constant 0 : i32
    %c0_i32_2 = arith.constant 0 : i32
    return %arg0, %c0_i32, %c0_i32_0, %c0_i32_1 : i32, i32, i32, i32
  }
}

module attributes {stable_mosaic.version = 11 : i64} {
  func.func @resnet_block_kernel(%arg0: i32, %arg1: memref<1x16x16x4xf32, #tpu.memory_space<vmem>>, %arg2: memref<36x4xbf16, #tpu.memory_space<vmem>>, %arg3: memref<1x1x4xf32, #tpu.memory_space<vmem>>, %arg4: memref<36x4xbf16, #tpu.memory_space<vmem>>, %arg5: memref<1x1x4xf32, #tpu.memory_space<vmem>>, %arg6: memref<1x16x16x4xf32, #tpu.memory_space<vmem>>, %arg7: memref<18x18x4xf32, #tpu.memory_space<vmem>>, %arg8: memref<18x18x4xf32, #tpu.memory_space<vmem>>) attributes {dimension_semantics = [#tpu.dimension_semantics<parallel>], iteration_bounds = array<i64: 2>, scalar_prefetch = 0 : i64, scratch_operands = 2 : i64, tpu.core_type = #tpu.core_type<tc>, window_params = [{transform_indices = @transform_0, window_bounds = array<i64: 1, 16, 16, 4>}, {pipeline_mode = #tpu.pipeline_mode<synchronous>, transform_indices = @transform_1, window_bounds = array<i64: 36, 4>}, {pipeline_mode = #tpu.pipeline_mode<synchronous>, transform_indices = @transform_2, window_bounds = array<i64: 1, 1, 4>}, {pipeline_mode = #tpu.pipeline_mode<synchronous>, transform_indices = @transform_3, window_bounds = array<i64: 36, 4>}, {pipeline_mode = #tpu.pipeline_mode<synchronous>, transform_indices = @transform_4, window_bounds = array<i64: 1, 1, 4>}, {transform_indices = @transform_5, window_bounds = array<i64: 1, 16, 16, 4>}]} {
    %cst = arith.constant 0.000000e+00 : f32
    %0 = vector.broadcast %cst : f32 to vector<1x18x4xf32>
    %c0 = arith.constant 0 : index
    %c0_0 = arith.constant 0 : index
    %c0_1 = arith.constant 0 : index
    %1 = vector.load %arg7[%c0, %c0_0, %c0_1] : memref<18x18x4xf32, #tpu.memory_space<vmem>>, vector<1x18x4xf32>
    tpu.vector_store %arg7[%c0, %c0_0, %c0_1], %0 {strides = array<i32>} : memref<18x18x4xf32, #tpu.memory_space<vmem>>, vector<1x18x4xf32>,
    %cst_2 = arith.constant 0.000000e+00 : f32
    %2 = vector.broadcast %cst_2 : f32 to vector<1x18x4xf32>
    %c17 = arith.constant 17 : index
    %c0_3 = arith.constant 0 : index
    %c0_4 = arith.constant 0 : index
    %3 = vector.load %arg7[%c17, %c0_3, %c0_4] : memref<18x18x4xf32, #tpu.memory_space<vmem>>, vector<1x18x4xf32>
    tpu.vector_store %arg7[%c17, %c0_3, %c0_4], %2 {strides = array<i32>} : memref<18x18x4xf32, #tpu.memory_space<vmem>>, vector<1x18x4xf32>,
    %cst_5 = arith.constant 0.000000e+00 : f32
    %4 = vector.broadcast %cst_5 : f32 to vector<18x1x4xf32>
    %c0_6 = arith.constant 0 : index
    %c0_7 = arith.constant 0 : index
    %c0_8 = arith.constant 0 : index
    %5 = vector.load %arg7[%c0_6, %c0_7, %c0_8] : memref<18x18x4xf32, #tpu.memory_space<vmem>>, vector<18x1x4xf32>
    tpu.vector_store %arg7[%c0_6, %c0_7, %c0_8], %4 {strides = array<i32>} : memref<18x18x4xf32, #tpu.memory_space<vmem>>, vector<18x1x4xf32>,
    %cst_9 = arith.constant 0.000000e+00 : f32
    %6 = vector.broadcast %cst_9 : f32 to vector<18x1x4xf32>
    %c0_10 = arith.constant 0 : index
    %c17_11 = arith.constant 17 : index
    %c0_12 = arith.constant 0 : index
    %7 = vector.load %arg7[%c0_10, %c17_11, %c0_12] : memref<18x18x4xf32, #tpu.memory_space<vmem>>, vector<18x1x4xf32>
    tpu.vector_store %arg7[%c0_10, %c17_11, %c0_12], %6 {strides = array<i32>} : memref<18x18x4xf32, #tpu.memory_space<vmem>>, vector<18x1x4xf32>,
    %c0_13 = arith.constant 0 : index
    %c0_14 = arith.constant 0 : index
    %c0_15 = arith.constant 0 : index
    %c0_16 = arith.constant 0 : index
    %8 = vector.load %arg1[%c0_13, %c0_14, %c0_15, %c0_16] : memref<1x16x16x4xf32, #tpu.memory_space<vmem>>, vector<1x16x16x4xf32>
    %9 = vector.shape_cast %8 : vector<1x16x16x4xf32> to vector<16x16x4xf32>
    %c1 = arith.constant 1 : index
    %c1_17 = arith.constant 1 : index
    %c0_18 = arith.constant 0 : index
    %10 = vector.load %arg7[%c1, %c1_17, %c0_18] : memref<18x18x4xf32, #tpu.memory_space<vmem>>, vector<16x16x4xf32>
    tpu.vector_store %arg7[%c1, %c1_17, %c0_18], %9 {strides = array<i32>} : memref<18x18x4xf32, #tpu.memory_space<vmem>>, vector<16x16x4xf32>,
    %c0_19 = arith.constant 0 : index
    %c0_20 = arith.constant 0 : index
    %c0_21 = arith.constant 0 : index
    %11 = vector.load %arg7[%c0_19, %c0_20, %c0_21] : memref<18x18x4xf32, #tpu.memory_space<vmem>>, vector<16x16x4xf32>
    %c0_22 = arith.constant 0 : index
    %c1_23 = arith.constant 1 : index
    %c0_24 = arith.constant 0 : index
    %12 = vector.load %arg7[%c0_22, %c1_23, %c0_24] : memref<18x18x4xf32, #tpu.memory_space<vmem>>, vector<16x16x4xf32>
    %c0_25 = arith.constant 0 : index
    %c2 = arith.constant 2 : index
    %c0_26 = arith.constant 0 : index
    %13 = vector.load %arg7[%c0_25, %c2, %c0_26] : memref<18x18x4xf32, #tpu.memory_space<vmem>>, vector<16x16x4xf32>
    %c1_27 = arith.constant 1 : index
    %c0_28 = arith.constant 0 : index
    %c0_29 = arith.constant 0 : index
    %14 = vector.load %arg7[%c1_27, %c0_28, %c0_29] : memref<18x18x4xf32, #tpu.memory_space<vmem>>, vector<16x16x4xf32>
    %c1_30 = arith.constant 1 : index
    %c1_31 = arith.constant 1 : index
    %c0_32 = arith.constant 0 : index
    %15 = vector.load %arg7[%c1_30, %c1_31, %c0_32] : memref<18x18x4xf32, #tpu.memory_space<vmem>>, vector<16x16x4xf32>
    %c1_33 = arith.constant 1 : index
    %c2_34 = arith.constant 2 : index
    %c0_35 = arith.constant 0 : index
    %16 = vector.load %arg7[%c1_33, %c2_34, %c0_35] : memref<18x18x4xf32, #tpu.memory_space<vmem>>, vector<16x16x4xf32>
    %c2_36 = arith.constant 2 : index
    %c0_37 = arith.constant 0 : index
    %c0_38 = arith.constant 0 : index
    %17 = vector.load %arg7[%c2_36, %c0_37, %c0_38] : memref<18x18x4xf32, #tpu.memory_space<vmem>>, vector<16x16x4xf32>
    %c2_39 = arith.constant 2 : index
    %c1_40 = arith.constant 1 : index
    %c0_41 = arith.constant 0 : index
    %18 = vector.load %arg7[%c2_39, %c1_40, %c0_41] : memref<18x18x4xf32, #tpu.memory_space<vmem>>, vector<16x16x4xf32>
    %c2_42 = arith.constant 2 : index
    %c2_43 = arith.constant 2 : index
    %c0_44 = arith.constant 0 : index
    %19 = vector.load %arg7[%c2_42, %c2_43, %c0_44] : memref<18x18x4xf32, #tpu.memory_space<vmem>>, vector<16x16x4xf32>
    %cst_45 = arith.constant 0.000000e+00 : f32
    %20 = vector.broadcast %cst_45 : f32 to vector<16x16x4xf32>
    %21 = arith.truncf %11 : vector<16x16x4xf32> to vector<16x16x4xbf16>
    %c0_46 = arith.constant 0 : index
    %c0_47 = arith.constant 0 : index
    %22 = vector.load %arg2[%c0_46, %c0_47] : memref<36x4xbf16, #tpu.memory_space<vmem>>, vector<4x4xbf16>
    "tpu.trace_start"() <{level = 10 : i32, message = "hwc,cd->hwd"}> : () -> ()
    %cst_48 = arith.constant dense<0.000000e+00> : vector<16x16x4xf32>
    %23 = tpu.matmul %21, %22, %cst_48 {dimension_numbers = #tpu.dot_dimension_numbers<[2], [0], [0, 1], [1], [0, 0, 0, 1, 1, 1], [], []>} : vector<16x16x4xbf16>, vector<4x4xbf16>, vector<16x16x4xf32> -> vector<16x16x4xf32>
    "tpu.trace_stop"() : () -> ()
    %24 = arith.addf %20, %23 : vector<16x16x4xf32>
    %25 = arith.truncf %12 : vector<16x16x4xf32> to vector<16x16x4xbf16>
    %c4 = arith.constant 4 : index
    %c0_49 = arith.constant 0 : index
    %26 = vector.load %arg2[%c4, %c0_49] : memref<36x4xbf16, #tpu.memory_space<vmem>>, vector<4x4xbf16>
    "tpu.trace_start"() <{level = 10 : i32, message = "hwc,cd->hwd"}> : () -> ()
    %cst_50 = arith.constant dense<0.000000e+00> : vector<16x16x4xf32>
    %27 = tpu.matmul %25, %26, %cst_50 {dimension_numbers = #tpu.dot_dimension_numbers<[2], [0], [0, 1], [1], [0, 0, 0, 1, 1, 1], [], []>} : vector<16x16x4xbf16>, vector<4x4xbf16>, vector<16x16x4xf32> -> vector<16x16x4xf32>
    "tpu.trace_stop"() : () -> ()
    %28 = arith.addf %24, %27 : vector<16x16x4xf32>
    %29 = arith.truncf %13 : vector<16x16x4xf32> to vector<16x16x4xbf16>
    %c8 = arith.constant 8 : index
    %c0_51 = arith.constant 0 : index
    %30 = vector.load %arg2[%c8, %c0_51] : memref<36x4xbf16, #tpu.memory_space<vmem>>, vector<4x4xbf16>
    "tpu.trace_start"() <{level = 10 : i32, message = "hwc,cd->hwd"}> : () -> ()
    %cst_52 = arith.constant dense<0.000000e+00> : vector<16x16x4xf32>
    %31 = tpu.matmul %29, %30, %cst_52 {dimension_numbers = #tpu.dot_dimension_numbers<[2], [0], [0, 1], [1], [0, 0, 0, 1, 1, 1], [], []>} : vector<16x16x4xbf16>, vector<4x4xbf16>, vector<16x16x4xf32> -> vector<16x16x4xf32>
    "tpu.trace_stop"() : () -> ()
    %32 = arith.addf %28, %31 : vector<16x16x4xf32>
    %33 = arith.truncf %14 : vector<16x16x4xf32> to vector<16x16x4xbf16>
    %c12 = arith.constant 12 : index
    %c0_53 = arith.constant 0 : index
    %34 = vector.load %arg2[%c12, %c0_53] : memref<36x4xbf16, #tpu.memory_space<vmem>>, vector<4x4xbf16>
    "tpu.trace_start"() <{level = 10 : i32, message = "hwc,cd->hwd"}> : () -> ()
    %cst_54 = arith.constant dense<0.000000e+00> : vector<16x16x4xf32>
    %35 = tpu.matmul %33, %34, %cst_54 {dimension_numbers = #tpu.dot_dimension_numbers<[2], [0], [0, 1], [1], [0, 0, 0, 1, 1, 1], [], []>} : vector<16x16x4xbf16>, vector<4x4xbf16>, vector<16x16x4xf32> -> vector<16x16x4xf32>
    "tpu.trace_stop"() : () -> ()
    %36 = arith.addf %32, %35 : vector<16x16x4xf32>
    %37 = arith.truncf %15 : vector<16x16x4xf32> to vector<16x16x4xbf16>
    %c16 = arith.constant 16 : index
    %c0_55 = arith.constant 0 : index
    %38 = vector.load %arg2[%c16, %c0_55] : memref<36x4xbf16, #tpu.memory_space<vmem>>, vector<4x4xbf16>
    "tpu.trace_start"() <{level = 10 : i32, message = "hwc,cd->hwd"}> : () -> ()
    %cst_56 = arith.constant dense<0.000000e+00> : vector<16x16x4xf32>
    %39 = tpu.matmul %37, %38, %cst_56 {dimension_numbers = #tpu.dot_dimension_numbers<[2], [0], [0, 1], [1], [0, 0, 0, 1, 1, 1], [], []>} : vector<16x16x4xbf16>, vector<4x4xbf16>, vector<16x16x4xf32> -> vector<16x16x4xf32>
    "tpu.trace_stop"() : () -> ()
    %40 = arith.addf %36, %39 : vector<16x16x4xf32>
    %41 = arith.truncf %16 : vector<16x16x4xf32> to vector<16x16x4xbf16>
    %c20 = arith.constant 20 : index
    %c0_57 = arith.constant 0 : index
    %42 = vector.load %arg2[%c20, %c0_57] : memref<36x4xbf16, #tpu.memory_space<vmem>>, vector<4x4xbf16>
    "tpu.trace_start"() <{level = 10 : i32, message = "hwc,cd->hwd"}> : () -> ()
    %cst_58 = arith.constant dense<0.000000e+00> : vector<16x16x4xf32>
    %43 = tpu.matmul %41, %42, %cst_58 {dimension_numbers = #tpu.dot_dimension_numbers<[2], [0], [0, 1], [1], [0, 0, 0, 1, 1, 1], [], []>} : vector<16x16x4xbf16>, vector<4x4xbf16>, vector<16x16x4xf32> -> vector<16x16x4xf32>
    "tpu.trace_stop"() : () -> ()
    %44 = arith.addf %40, %43 : vector<16x16x4xf32>
    %45 = arith.truncf %17 : vector<16x16x4xf32> to vector<16x16x4xbf16>
    %c24 = arith.constant 24 : index
    %c0_59 = arith.constant 0 : index
    %46 = vector.load %arg2[%c24, %c0_59] : memref<36x4xbf16, #tpu.memory_space<vmem>>, vector<4x4xbf16>
    "tpu.trace_start"() <{level = 10 : i32, message = "hwc,cd->hwd"}> : () -> ()
    %cst_60 = arith.constant dense<0.000000e+00> : vector<16x16x4xf32>
    %47 = tpu.matmul %45, %46, %cst_60 {dimension_numbers = #tpu.dot_dimension_numbers<[2], [0], [0, 1], [1], [0, 0, 0, 1, 1, 1], [], []>} : vector<16x16x4xbf16>, vector<4x4xbf16>, vector<16x16x4xf32> -> vector<16x16x4xf32>
    "tpu.trace_stop"() : () -> ()
    %48 = arith.addf %44, %47 : vector<16x16x4xf32>
    %49 = arith.truncf %18 : vector<16x16x4xf32> to vector<16x16x4xbf16>
    %c28 = arith.constant 28 : index
    %c0_61 = arith.constant 0 : index
    %50 = vector.load %arg2[%c28, %c0_61] : memref<36x4xbf16, #tpu.memory_space<vmem>>, vector<4x4xbf16>
    "tpu.trace_start"() <{level = 10 : i32, message = "hwc,cd->hwd"}> : () -> ()
    %cst_62 = arith.constant dense<0.000000e+00> : vector<16x16x4xf32>
    %51 = tpu.matmul %49, %50, %cst_62 {dimension_numbers = #tpu.dot_dimension_numbers<[2], [0], [0, 1], [1], [0, 0, 0, 1, 1, 1], [], []>} : vector<16x16x4xbf16>, vector<4x4xbf16>, vector<16x16x4xf32> -> vector<16x16x4xf32>
    "tpu.trace_stop"() : () -> ()
    %52 = arith.addf %48, %51 : vector<16x16x4xf32>
    %53 = arith.truncf %19 : vector<16x16x4xf32> to vector<16x16x4xbf16>
    %c32 = arith.constant 32 : index
    %c0_63 = arith.constant 0 : index
    %54 = vector.load %arg2[%c32, %c0_63] : memref<36x4xbf16, #tpu.memory_space<vmem>>, vector<4x4xbf16>
    "tpu.trace_start"() <{level = 10 : i32, message = "hwc,cd->hwd"}> : () -> ()
    %cst_64 = arith.constant dense<0.000000e+00> : vector<16x16x4xf32>
    %55 = tpu.matmul %53, %54, %cst_64 {dimension_numbers = #tpu.dot_dimension_numbers<[2], [0], [0, 1], [1], [0, 0, 0, 1, 1, 1], [], []>} : vector<16x16x4xbf16>, vector<4x4xbf16>, vector<16x16x4xf32> -> vector<16x16x4xf32>
    "tpu.trace_stop"() : () -> ()
    %56 = arith.addf %52, %55 : vector<16x16x4xf32>
    %c0_65 = arith.constant 0 : index
    %c0_66 = arith.constant 0 : index
    %c0_67 = arith.constant 0 : index
    %57 = vector.load %arg3[%c0_65, %c0_66, %c0_67] : memref<1x1x4xf32, #tpu.memory_space<vmem>>, vector<1x1x4xf32>
    %58 = vector.broadcast %57 : vector<1x1x4xf32> to vector<16x16x4xf32>
    %59 = arith.addf %56, %58 : vector<16x16x4xf32>
    %60 = math.tanh %59 : vector<16x16x4xf32>
    %cst_68 = arith.constant 0.000000e+00 : f32
    %61 = vector.broadcast %cst_68 : f32 to vector<1x18x4xf32>
    %c0_69 = arith.constant 0 : index
    %c0_70 = arith.constant 0 : index
    %c0_71 = arith.constant 0 : index
    %62 = vector.load %arg8[%c0_69, %c0_70, %c0_71] : memref<18x18x4xf32, #tpu.memory_space<vmem>>, vector<1x18x4xf32>
    tpu.vector_store %arg8[%c0_69, %c0_70, %c0_71], %61 {strides = array<i32>} : memref<18x18x4xf32, #tpu.memory_space<vmem>>, vector<1x18x4xf32>,
    %cst_72 = arith.constant 0.000000e+00 : f32
    %63 = vector.broadcast %cst_72 : f32 to vector<1x18x4xf32>
    %c17_73 = arith.constant 17 : index
    %c0_74 = arith.constant 0 : index
    %c0_75 = arith.constant 0 : index
    %64 = vector.load %arg8[%c17_73, %c0_74, %c0_75] : memref<18x18x4xf32, #tpu.memory_space<vmem>>, vector<1x18x4xf32>
    tpu.vector_store %arg8[%c17_73, %c0_74, %c0_75], %63 {strides = array<i32>} : memref<18x18x4xf32, #tpu.memory_space<vmem>>, vector<1x18x4xf32>,
    %cst_76 = arith.constant 0.000000e+00 : f32
    %65 = vector.broadcast %cst_76 : f32 to vector<18x1x4xf32>
    %c0_77 = arith.constant 0 : index
    %c0_78 = arith.constant 0 : index
    %c0_79 = arith.constant 0 : index
    %66 = vector.load %arg8[%c0_77, %c0_78, %c0_79] : memref<18x18x4xf32, #tpu.memory_space<vmem>>, vector<18x1x4xf32>
    tpu.vector_store %arg8[%c0_77, %c0_78, %c0_79], %65 {strides = array<i32>} : memref<18x18x4xf32, #tpu.memory_space<vmem>>, vector<18x1x4xf32>,
    %cst_80 = arith.constant 0.000000e+00 : f32
    %67 = vector.broadcast %cst_80 : f32 to vector<18x1x4xf32>
    %c0_81 = arith.constant 0 : index
    %c17_82 = arith.constant 17 : index
    %c0_83 = arith.constant 0 : index
    %68 = vector.load %arg8[%c0_81, %c17_82, %c0_83] : memref<18x18x4xf32, #tpu.memory_space<vmem>>, vector<18x1x4xf32>
    tpu.vector_store %arg8[%c0_81, %c17_82, %c0_83], %67 {strides = array<i32>} : memref<18x18x4xf32, #tpu.memory_space<vmem>>, vector<18x1x4xf32>,
    %c1_84 = arith.constant 1 : index
    %c1_85 = arith.constant 1 : index
    %c0_86 = arith.constant 0 : index
    %69 = vector.load %arg8[%c1_84, %c1_85, %c0_86] : memref<18x18x4xf32, #tpu.memory_space<vmem>>, vector<16x16x4xf32>
    tpu.vector_store %arg8[%c1_84, %c1_85, %c0_86], %60 {strides = array<i32>} : memref<18x18x4xf32, #tpu.memory_space<vmem>>, vector<16x16x4xf32>,
    %c0_87 = arith.constant 0 : index
    %c0_88 = arith.constant 0 : index
    %c0_89 = arith.constant 0 : index
    %70 = vector.load %arg8[%c0_87, %c0_88, %c0_89] : memref<18x18x4xf32, #tpu.memory_space<vmem>>, vector<16x16x4xf32>
    %c0_90 = arith.constant 0 : index
    %c1_91 = arith.constant 1 : index
    %c0_92 = arith.constant 0 : index
    %71 = vector.load %arg8[%c0_90, %c1_91, %c0_92] : memref<18x18x4xf32, #tpu.memory_space<vmem>>, vector<16x16x4xf32>
    %c0_93 = arith.constant 0 : index
    %c2_94 = arith.constant 2 : index
    %c0_95 = arith.constant 0 : index
    %72 = vector.load %arg8[%c0_93, %c2_94, %c0_95] : memref<18x18x4xf32, #tpu.memory_space<vmem>>, vector<16x16x4xf32>
    %c1_96 = arith.constant 1 : index
    %c0_97 = arith.constant 0 : index
    %c0_98 = arith.constant 0 : index
    %73 = vector.load %arg8[%c1_96, %c0_97, %c0_98] : memref<18x18x4xf32, #tpu.memory_space<vmem>>, vector<16x16x4xf32>
    %c1_99 = arith.constant 1 : index
    %c1_100 = arith.constant 1 : index
    %c0_101 = arith.constant 0 : index
    %74 = vector.load %arg8[%c1_99, %c1_100, %c0_101] : memref<18x18x4xf32, #tpu.memory_space<vmem>>, vector<16x16x4xf32>
    %c1_102 = arith.constant 1 : index
    %c2_103 = arith.constant 2 : index
    %c0_104 = arith.constant 0 : index
    %75 = vector.load %arg8[%c1_102, %c2_103, %c0_104] : memref<18x18x4xf32, #tpu.memory_space<vmem>>, vector<16x16x4xf32>
    %c2_105 = arith.constant 2 : index
    %c0_106 = arith.constant 0 : index
    %c0_107 = arith.constant 0 : index
    %76 = vector.load %arg8[%c2_105, %c0_106, %c0_107] : memref<18x18x4xf32, #tpu.memory_space<vmem>>, vector<16x16x4xf32>
    %c2_108 = arith.constant 2 : index
    %c1_109 = arith.constant 1 : index
    %c0_110 = arith.constant 0 : index
    %77 = vector.load %arg8[%c2_108, %c1_109, %c0_110] : memref<18x18x4xf32, #tpu.memory_space<vmem>>, vector<16x16x4xf32>
    %c2_111 = arith.constant 2 : index
    %c2_112 = arith.constant 2 : index
    %c0_113 = arith.constant 0 : index
    %78 = vector.load %arg8[%c2_111, %c2_112, %c0_113] : memref<18x18x4xf32, #tpu.memory_space<vmem>>, vector<16x16x4xf32>
    %cst_114 = arith.constant 0.000000e+00 : f32
    %79 = vector.broadcast %cst_114 : f32 to vector<16x16x4xf32>
    %80 = arith.truncf %70 : vector<16x16x4xf32> to vector<16x16x4xbf16>
    %c0_115 = arith.constant 0 : index
    %c0_116 = arith.constant 0 : index
    %81 = vector.load %arg4[%c0_115, %c0_116] : memref<36x4xbf16, #tpu.memory_space<vmem>>, vector<4x4xbf16>
    "tpu.trace_start"() <{level = 10 : i32, message = "hwc,cd->hwd"}> : () -> ()
    %cst_117 = arith.constant dense<0.000000e+00> : vector<16x16x4xf32>
    %82 = tpu.matmul %80, %81, %cst_117 {dimension_numbers = #tpu.dot_dimension_numbers<[2], [0], [0, 1], [1], [0, 0, 0, 1, 1, 1], [], []>} : vector<16x16x4xbf16>, vector<4x4xbf16>, vector<16x16x4xf32> -> vector<16x16x4xf32>
    "tpu.trace_stop"() : () -> ()
    %83 = arith.addf %79, %82 : vector<16x16x4xf32>
    %84 = arith.truncf %71 : vector<16x16x4xf32> to vector<16x16x4xbf16>
    %c4_118 = arith.constant 4 : index
    %c0_119 = arith.constant 0 : index
    %85 = vector.load %arg4[%c4_118, %c0_119] : memref<36x4xbf16, #tpu.memory_space<vmem>>, vector<4x4xbf16>
    "tpu.trace_start"() <{level = 10 : i32, message = "hwc,cd->hwd"}> : () -> ()
    %cst_120 = arith.constant dense<0.000000e+00> : vector<16x16x4xf32>
    %86 = tpu.matmul %84, %85, %cst_120 {dimension_numbers = #tpu.dot_dimension_numbers<[2], [0], [0, 1], [1], [0, 0, 0, 1, 1, 1], [], []>} : vector<16x16x4xbf16>, vector<4x4xbf16>, vector<16x16x4xf32> -> vector<16x16x4xf32>
    "tpu.trace_stop"() : () -> ()
    %87 = arith.addf %83, %86 : vector<16x16x4xf32>
    %88 = arith.truncf %72 : vector<16x16x4xf32> to vector<16x16x4xbf16>
    %c8_121 = arith.constant 8 : index
    %c0_122 = arith.constant 0 : index
    %89 = vector.load %arg4[%c8_121, %c0_122] : memref<36x4xbf16, #tpu.memory_space<vmem>>, vector<4x4xbf16>
    "tpu.trace_start"() <{level = 10 : i32, message = "hwc,cd->hwd"}> : () -> ()
    %cst_123 = arith.constant dense<0.000000e+00> : vector<16x16x4xf32>
    %90 = tpu.matmul %88, %89, %cst_123 {dimension_numbers = #tpu.dot_dimension_numbers<[2], [0], [0, 1], [1], [0, 0, 0, 1, 1, 1], [], []>} : vector<16x16x4xbf16>, vector<4x4xbf16>, vector<16x16x4xf32> -> vector<16x16x4xf32>
    "tpu.trace_stop"() : () -> ()
    %91 = arith.addf %87, %90 : vector<16x16x4xf32>
    %92 = arith.truncf %73 : vector<16x16x4xf32> to vector<16x16x4xbf16>
    %c12_124 = arith.constant 12 : index
    %c0_125 = arith.constant 0 : index
    %93 = vector.load %arg4[%c12_124, %c0_125] : memref<36x4xbf16, #tpu.memory_space<vmem>>, vector<4x4xbf16>
    "tpu.trace_start"() <{level = 10 : i32, message = "hwc,cd->hwd"}> : () -> ()
    %cst_126 = arith.constant dense<0.000000e+00> : vector<16x16x4xf32>
    %94 = tpu.matmul %92, %93, %cst_126 {dimension_numbers = #tpu.dot_dimension_numbers<[2], [0], [0, 1], [1], [0, 0, 0, 1, 1, 1], [], []>} : vector<16x16x4xbf16>, vector<4x4xbf16>, vector<16x16x4xf32> -> vector<16x16x4xf32>
    "tpu.trace_stop"() : () -> ()
    %95 = arith.addf %91, %94 : vector<16x16x4xf32>
    %96 = arith.truncf %74 : vector<16x16x4xf32> to vector<16x16x4xbf16>
    %c16_127 = arith.constant 16 : index
    %c0_128 = arith.constant 0 : index
    %97 = vector.load %arg4[%c16_127, %c0_128] : memref<36x4xbf16, #tpu.memory_space<vmem>>, vector<4x4xbf16>
    "tpu.trace_start"() <{level = 10 : i32, message = "hwc,cd->hwd"}> : () -> ()
    %cst_129 = arith.constant dense<0.000000e+00> : vector<16x16x4xf32>
    %98 = tpu.matmul %96, %97, %cst_129 {dimension_numbers = #tpu.dot_dimension_numbers<[2], [0], [0, 1], [1], [0, 0, 0, 1, 1, 1], [], []>} : vector<16x16x4xbf16>, vector<4x4xbf16>, vector<16x16x4xf32> -> vector<16x16x4xf32>
    "tpu.trace_stop"() : () -> ()
    %99 = arith.addf %95, %98 : vector<16x16x4xf32>
    %100 = arith.truncf %75 : vector<16x16x4xf32> to vector<16x16x4xbf16>
    %c20_130 = arith.constant 20 : index
    %c0_131 = arith.constant 0 : index
    %101 = vector.load %arg4[%c20_130, %c0_131] : memref<36x4xbf16, #tpu.memory_space<vmem>>, vector<4x4xbf16>
    "tpu.trace_start"() <{level = 10 : i32, message = "hwc,cd->hwd"}> : () -> ()
    %cst_132 = arith.constant dense<0.000000e+00> : vector<16x16x4xf32>
    %102 = tpu.matmul %100, %101, %cst_132 {dimension_numbers = #tpu.dot_dimension_numbers<[2], [0], [0, 1], [1], [0, 0, 0, 1, 1, 1], [], []>} : vector<16x16x4xbf16>, vector<4x4xbf16>, vector<16x16x4xf32> -> vector<16x16x4xf32>
    "tpu.trace_stop"() : () -> ()
    %103 = arith.addf %99, %102 : vector<16x16x4xf32>
    %104 = arith.truncf %76 : vector<16x16x4xf32> to vector<16x16x4xbf16>
    %c24_133 = arith.constant 24 : index
    %c0_134 = arith.constant 0 : index
    %105 = vector.load %arg4[%c24_133, %c0_134] : memref<36x4xbf16, #tpu.memory_space<vmem>>, vector<4x4xbf16>
    "tpu.trace_start"() <{level = 10 : i32, message = "hwc,cd->hwd"}> : () -> ()
    %cst_135 = arith.constant dense<0.000000e+00> : vector<16x16x4xf32>
    %106 = tpu.matmul %104, %105, %cst_135 {dimension_numbers = #tpu.dot_dimension_numbers<[2], [0], [0, 1], [1], [0, 0, 0, 1, 1, 1], [], []>} : vector<16x16x4xbf16>, vector<4x4xbf16>, vector<16x16x4xf32> -> vector<16x16x4xf32>
    "tpu.trace_stop"() : () -> ()
    %107 = arith.addf %103, %106 : vector<16x16x4xf32>
    %108 = arith.truncf %77 : vector<16x16x4xf32> to vector<16x16x4xbf16>
    %c28_136 = arith.constant 28 : index
    %c0_137 = arith.constant 0 : index
    %109 = vector.load %arg4[%c28_136, %c0_137] : memref<36x4xbf16, #tpu.memory_space<vmem>>, vector<4x4xbf16>
    "tpu.trace_start"() <{level = 10 : i32, message = "hwc,cd->hwd"}> : () -> ()
    %cst_138 = arith.constant dense<0.000000e+00> : vector<16x16x4xf32>
    %110 = tpu.matmul %108, %109, %cst_138 {dimension_numbers = #tpu.dot_dimension_numbers<[2], [0], [0, 1], [1], [0, 0, 0, 1, 1, 1], [], []>} : vector<16x16x4xbf16>, vector<4x4xbf16>, vector<16x16x4xf32> -> vector<16x16x4xf32>
    "tpu.trace_stop"() : () -> ()
    %111 = arith.addf %107, %110 : vector<16x16x4xf32>
    %112 = arith.truncf %78 : vector<16x16x4xf32> to vector<16x16x4xbf16>
    %c32_139 = arith.constant 32 : index
    %c0_140 = arith.constant 0 : index
    %113 = vector.load %arg4[%c32_139, %c0_140] : memref<36x4xbf16, #tpu.memory_space<vmem>>, vector<4x4xbf16>
    "tpu.trace_start"() <{level = 10 : i32, message = "hwc,cd->hwd"}> : () -> ()
    %cst_141 = arith.constant dense<0.000000e+00> : vector<16x16x4xf32>
    %114 = tpu.matmul %112, %113, %cst_141 {dimension_numbers = #tpu.dot_dimension_numbers<[2], [0], [0, 1], [1], [0, 0, 0, 1, 1, 1], [], []>} : vector<16x16x4xbf16>, vector<4x4xbf16>, vector<16x16x4xf32> -> vector<16x16x4xf32>
    "tpu.trace_stop"() : () -> ()
    %115 = arith.addf %111, %114 : vector<16x16x4xf32>
    %c0_142 = arith.constant 0 : index
    %c0_143 = arith.constant 0 : index
    %c0_144 = arith.constant 0 : index
    %116 = vector.load %arg5[%c0_142, %c0_143, %c0_144] : memref<1x1x4xf32, #tpu.memory_space<vmem>>, vector<1x1x4xf32>
    %117 = vector.broadcast %116 : vector<1x1x4xf32> to vector<16x16x4xf32>
    %118 = arith.addf %115, %117 : vector<16x16x4xf32>
    %119 = arith.addf %9, %118 : vector<16x16x4xf32>
    %120 = math.tanh %119 : vector<16x16x4xf32>
    %c0_145 = arith.constant 0 : index
    %c0_146 = arith.constant 0 : index
    %c0_147 = arith.constant 0 : index
    %c0_148 = arith.constant 0 : index
    %121 = vector.load %arg6[%c0_145, %c0_146, %c0_147, %c0_148] : memref<1x16x16x4xf32, #tpu.memory_space<vmem>>, vector<1x16x16x4xf32>
    %122 = vector.shape_cast %121 : vector<1x16x16x4xf32> to vector<16x16x4xf32>
    %123 = vector.shape_cast %120 : vector<16x16x4xf32> to vector<1x16x16x4xf32>
    tpu.vector_store %arg6[%c0_145, %c0_146, %c0_147, %c0_148], %123 {strides = array<i32>} : memref<1x16x16x4xf32, #tpu.memory_space<vmem>>, vector<1x16x16x4xf32>,
    return
  }
  func.func @transform_0(%arg0: i32) -> (i32, i32, i32, i32) {
    %c0_i32 = arith.constant 0 : i32
    %c0_i32_0 = arith.constant 0 : i32
    %c0_i32_1 = arith.constant 0 : i32
    %c0_i32_2 = arith.constant 0 : i32
    return %arg0, %c0_i32, %c0_i32_0, %c0_i32_1 : i32, i32, i32, i32
  }
  func.func @transform_1(%arg0: i32) -> (i32, i32) {
    %c0_i32 = arith.constant 0 : i32
    %c0_i32_0 = arith.constant 0 : i32
    %c0_i32_1 = arith.constant 0 : i32
    return %c0_i32, %c0_i32_0 : i32, i32
  }
  func.func @transform_2(%arg0: i32) -> (i32, i32, i32) {
    %c0_i32 = arith.constant 0 : i32
    %c0_i32_0 = arith.constant 0 : i32
    %c0_i32_1 = arith.constant 0 : i32
    %c0_i32_2 = arith.constant 0 : i32
    return %c0_i32, %c0_i32_0, %c0_i32_1 : i32, i32, i32
  }
  func.func @transform_3(%arg0: i32) -> (i32, i32) {
    %c0_i32 = arith.constant 0 : i32
    %c0_i32_0 = arith.constant 0 : i32
    %c0_i32_1 = arith.constant 0 : i32
    return %c0_i32, %c0_i32_0 : i32, i32
  }
  func.func @transform_4(%arg0: i32) -> (i32, i32, i32) {
    %c0_i32 = arith.constant 0 : i32
    %c0_i32_0 = arith.constant 0 : i32
    %c0_i32_1 = arith.constant 0 : i32
    %c0_i32_2 = arith.constant 0 : i32
    return %c0_i32, %c0_i32_0, %c0_i32_1 : i32, i32, i32
  }
  func.func @transform_5(%arg0: i32) -> (i32, i32, i32, i32) {
    %c0_i32 = arith.constant 0 : i32
    %c0_i32_0 = arith.constant 0 : i32
    %c0_i32_1 = arith.constant 0 : i32
    %c0_i32_2 = arith.constant 0 : i32
    return %arg0, %c0_i32, %c0_i32_0, %c0_i32_1 : i32, i32, i32, i32
  }
}

</mosaic_0001>

<llo_original>
// kernel: tpu_custom_call.1
$region0: #{tpu_custom_call.1}
  #allocation0 [shape = 'u32[]', space=smem, size = 0x4, offset = 0x4, fixed_abs, tag = 'smem constant byte address 0x4 - core index']
  #allocation1 [shape = 'u32[144,128]{1,0:T(1,128)}', space=vmem, size = 0x12000, scoped, tag = 'internal scratch']
  #allocation2 [shape = 'f32[18,18,4]{2,1,0:T(8,128)}', space=vmem, size = 0x36000, scoped, tag = 'scratch operand']
  #allocation3 [shape = 'f32[18,18,4]{2,1,0:T(8,128)}', space=vmem, size = 0x36000, scoped, tag = 'scratch operand']
  %s0 = inlined_call_operand.vmem [shape: f32[2,16,16,4], index: 0, kind: input, shape index: {}]
  %s1 = inlined_call_operand.vmem [shape: bf16[36,4], index: 1, kind: input, shape index: {}]
  %s2 = inlined_call_operand.vmem [shape: f32[1,1,4], index: 2, kind: input, shape index: {}]
  %s3 = inlined_call_operand.vmem [shape: bf16[36,4], index: 3, kind: input, shape index: {}]
  %s4 = inlined_call_operand.vmem [shape: f32[1,1,4], index: 4, kind: input, shape index: {}]
  %s5 = inlined_call_operand.vmem [shape: f32[2,16,16,4], index: 5, kind: output, shape index: {}]
  %s6 = sld [smem:[#allocation0]]
  $region53: #{tpu_custom_call.1} parent=0
    _
  %s8 = ssub.s32 1, %s6
  %s9 = scalar_select 0, %s8, %s6
  loop: start=0, step=1, limit=4
  $region2: #{tpu_custom_call.1} parent=0 // loop_pre_header
    _
  $region3: #{tpu_custom_call.1} parent=0 // loop_header
    %s11 = sphi 0, %s15
    %p12 = scmp.ge.s32.totalorder %s11, 4
    %s21 = sphi 0, %s23
    %s24 = sphi 0, %s21
    %s25 = sphi 0, %s24
    %s41 = sphi 0, %s25
    %s45 = sphi 0, %s45
    %s47 = sphi 0, %s45
    %s48 = sphi 0, %s47
    %s62 = sphi 0, %s48
    %s66 = sphi 0, %s66
    %s68 = sphi 0, %s66
    %s69 = sphi 0, %s68
    %s83 = sphi 0, %s69
    %s87 = sphi 0, %s87
    %s89 = sphi 0, %s87
    %s90 = sphi 0, %s89
    %s104 = sphi 0, %s90
    %s108 = sphi 0, %s108
    %s110 = sphi 0, %s108
    %s111 = sphi 0, %s110
    %s125 = sphi 0, %s111
    %s131 = sphi 0, %s133
    %s134 = sphi 0, %s131
    %s135 = sphi 0, %s134
    %s151 = sphi 0, %s135
  $region4: #{tpu_custom_call.1} parent=0 // loop_header_branch
    %14 = sbr.rel (%p12) target = $region8
  $region5: #{tpu_custom_call.1} parent=0 // loop_body
    %s16 = ssub.s32 %s11, 1
    %s17 = ssub.s32 %s11, 2
    %s18 = sadd.s32 %s11, 1
    %s19 = ssub.s32 %s11, %s18
    %p20 = scmp.eq.s32.totalorder %s19, 0
    %s22 = sadd.s32 %s21, 1
    %s23 = scalar_select %p20, %s21, %s22
    %p26 = pneg %p20
    %p27 = scmp.eq.s32.totalorder %s11, 1
    %p28 = por %p26, %p27
    %p29 = scmp.ne.s32.totalorder %s21, %s24
    %p30 = scmp.eq.s32.totalorder %s11, 0
    %p31 = por %p29, %p30
    %p32 = scmp.ne.s32.totalorder %s21, %s24
    %p33 = scmp.eq.s32.totalorder %s16, 1
    %p34 = por %p32, %p33
    %p35 = scmp.ne.s32.totalorder %s24, %s25
    %p36 = scmp.eq.s32.totalorder %s16, 0
    %p37 = por %p35, %p36
    %p38 = scmp.ne.s32.totalorder %s24, %s25
    %p39 = scmp.eq.s32.totalorder %s17, 1
    %p40 = por %p38, %p39
    %p42 = scmp.ne.s32.totalorder %s25, %s41
    %p43 = scmp.eq.s32.totalorder %s17, 0
    %p44 = por %p42, %p43
    %s46 = sadd.s32 %s45, 1
    %p49 = scmp.eq.s32.totalorder %s11, 1
    %p50 = scmp.ne.s32.totalorder %s45, %s47
    %p51 = scmp.eq.s32.totalorder %s11, 0
    %p52 = por %p50, %p51
    %p53 = scmp.ne.s32.totalorder %s45, %s47
    %p54 = scmp.eq.s32.totalorder %s16, 1
    %p55 = por %p53, %p54
    %p56 = scmp.ne.s32.totalorder %s47, %s48
    %p57 = scmp.eq.s32.totalorder %s16, 0
    %p58 = por %p56, %p57
    %p59 = scmp.ne.s32.totalorder %s47, %s48
    %p60 = scmp.eq.s32.totalorder %s17, 1
    %p61 = por %p59, %p60
    %p63 = scmp.ne.s32.totalorder %s48, %s62
    %p64 = scmp.eq.s32.totalorder %s17, 0
    %p65 = por %p63, %p64
    %s67 = sadd.s32 %s66, 1
    %p70 = scmp.eq.s32.totalorder %s11, 1
    %p71 = scmp.ne.s32.totalorder %s66, %s68
    %p72 = scmp.eq.s32.totalorder %s11, 0
    %p73 = por %p71, %p72
    %p74 = scmp.ne.s32.totalorder %s66, %s68
    %p75 = scmp.eq.s32.totalorder %s16, 1
    %p76 = por %p74, %p75
    %p77 = scmp.ne.s32.totalorder %s68, %s69
    %p78 = scmp.eq.s32.totalorder %s16, 0
    %p79 = por %p77, %p78
    %p80 = scmp.ne.s32.totalorder %s68, %s69
    %p81 = scmp.eq.s32.totalorder %s17, 1
    %p82 = por %p80, %p81
    %p84 = scmp.ne.s32.totalorder %s69, %s83
    %p85 = scmp.eq.s32.totalorder %s17, 0
    %p86 = por %p84, %p85
    %s88 = sadd.s32 %s87, 1
    %p91 = scmp.eq.s32.totalorder %s11, 1
    %p92 = scmp.ne.s32.totalorder %s87, %s89
    %p93 = scmp.eq.s32.totalorder %s11, 0
    %p94 = por %p92, %p93
    %p95 = scmp.ne.s32.totalorder %s87, %s89
    %p96 = scmp.eq.s32.totalorder %s16, 1
    %p97 = por %p95, %p96
    %p98 = scmp.ne.s32.totalorder %s89, %s90
    %p99 = scmp.eq.s32.totalorder %s16, 0
    %p100 = por %p98, %p99
    %p101 = scmp.ne.s32.totalorder %s89, %s90
    %p102 = scmp.eq.s32.totalorder %s17, 1
    %p103 = por %p101, %p102
    %p105 = scmp.ne.s32.totalorder %s90, %s104
    %p106 = scmp.eq.s32.totalorder %s17, 0
    %p107 = por %p105, %p106
    %s109 = sadd.s32 %s108, 1
    %p112 = scmp.eq.s32.totalorder %s11, 1
    %p113 = scmp.ne.s32.totalorder %s108, %s110
    %p114 = scmp.eq.s32.totalorder %s11, 0
    %p115 = por %p113, %p114
    %p116 = scmp.ne.s32.totalorder %s108, %s110
    %p117 = scmp.eq.s32.totalorder %s16, 1
    %p118 = por %p116, %p117
    %p119 = scmp.ne.s32.totalorder %s110, %s111
    %p120 = scmp.eq.s32.totalorder %s16, 0
    %p121 = por %p119, %p120
    %p122 = scmp.ne.s32.totalorder %s110, %s111
    %p123 = scmp.eq.s32.totalorder %s17, 1
    %p124 = por %p122, %p123
    %p126 = scmp.ne.s32.totalorder %s111, %s125
    %p127 = scmp.eq.s32.totalorder %s17, 0
    %p128 = por %p126, %p127
    %s129 = ssub.s32 %s11, %s18
    %p130 = scmp.eq.s32.totalorder %s129, 0
    %s132 = sadd.s32 %s131, 1
    %s133 = scalar_select %p130, %s131, %s132
    %p136 = pneg %p130
    %p137 = scmp.eq.s32.totalorder %s11, 1
    %p138 = por %p136, %p137
    %p139 = scmp.ne.s32.totalorder %s131, %s134
    %p140 = scmp.eq.s32.totalorder %s11, 0
    %p141 = por %p139, %p140
    %p142 = scmp.ne.s32.totalorder %s131, %s134
    %p143 = scmp.eq.s32.totalorder %s16, 1
    %p144 = por %p142, %p143
    %p145 = scmp.ne.s32.totalorder %s134, %s135
    %p146 = scmp.eq.s32.totalorder %s16, 0
    %p147 = por %p145, %p146
    %p148 = scmp.ne.s32.totalorder %s134, %s135
    %p149 = scmp.eq.s32.totalorder %s17, 1
    %p150 = por %p148, %p149
    %p152 = scmp.ne.s32.totalorder %s135, %s151
    %p153 = scmp.eq.s32.totalorder %s17, 0
    %p154 = por %p152, %p153
    %p155 = scmp.le.s32.totalorder 1, %s11
    %p156 = scmp.lt.s32.totalorder %s11, 3
    %p157 = pnand %p155, %p156
    %p158 = pneg %p157
    // Predicated region
    $region9: #{tpu_custom_call.1} parent=5 // pred_check
      _
    $region10: #{tpu_custom_call.1} parent=5 // pred_check_branch
      %160 = sbr.rel (%p157) target = $region12
    $region11: #{tpu_custom_call.1} parent=5 // pred_region
      %s161 = ssub.s32 %s11, 1
      // Predicated region
      $region13: #{tpu_custom_call.1} parent=11 // pred_check
        %p162 = pneg %p58
      $region14: #{tpu_custom_call.1} parent=11 // pred_check_branch
        %164 = sbr.rel (%p162) target = $region16
      $region15: #{tpu_custom_call.1} parent=11 // pred_region
        _
      $region16: #{tpu_custom_call.1} parent=11 // pred_fallthru
        _
      // Predicated region
      $region17: #{tpu_custom_call.1} parent=11 // pred_check
        %p165 = pneg %p79
      $region18: #{tpu_custom_call.1} parent=11 // pred_check_branch
        %167 = sbr.rel (%p165) target = $region20
      $region19: #{tpu_custom_call.1} parent=11 // pred_region
        _
      $region20: #{tpu_custom_call.1} parent=11 // pred_fallthru
        _
      // Predicated region
      $region21: #{tpu_custom_call.1} parent=11 // pred_check
        %p168 = pneg %p100
      $region22: #{tpu_custom_call.1} parent=11 // pred_check_branch
        %170 = sbr.rel (%p168) target = $region24
      $region23: #{tpu_custom_call.1} parent=11 // pred_region
        _
      $region24: #{tpu_custom_call.1} parent=11 // pred_fallthru
        _
      // Predicated region
      $region25: #{tpu_custom_call.1} parent=11 // pred_check
        %p171 = pneg %p121
      $region26: #{tpu_custom_call.1} parent=11 // pred_check_branch
        %173 = sbr.rel (%p171) target = $region28
      $region27: #{tpu_custom_call.1} parent=11 // pred_region
        _
      $region28: #{tpu_custom_call.1} parent=11 // pred_fallthru
        _
    $region12: #{tpu_custom_call.1} parent=5 // pred_fallthru
      _
    %p174 = scmp.lt.s32.totalorder %s11, 2
    // Predicated region
    $region29: #{tpu_custom_call.1} parent=5 // pred_check
      %p175 = pneg %p174
    $region30: #{tpu_custom_call.1} parent=5 // pred_check_branch
      %177 = sbr.rel (%p175) target = $region32
    $region31: #{tpu_custom_call.1} parent=5 // pred_region
      // Predicated region
      $region33: #{tpu_custom_call.1} parent=31 // pred_check
        %p178 = pneg %p31
      $region34: #{tpu_custom_call.1} parent=31 // pred_check_branch
        %180 = sbr.rel (%p178) target = $region36
      $region35: #{tpu_custom_call.1} parent=31 // pred_region
        %p181 = scmp.lt.s32.totalorder %s11, 1
        %s182 = scalar_select %p181, %s11, 1
        %s183 = smul.addr %s182, 32
        %s184 = smul.addr %s183, 8
        %s185 = scalar_lea.vmem %s0, %s184
      $region36: #{tpu_custom_call.1} parent=31 // pred_fallthru
        _
    $region32: #{tpu_custom_call.1} parent=5 // pred_fallthru
      _
    %p186 = scmp.le.s32.totalorder 1, %s11
    %p187 = scmp.lt.s32.totalorder %s11, 3
    %p188 = pnand %p186, %p187
    %p189 = pneg %p188
    // Predicated region
    $region37: #{tpu_custom_call.1} parent=5 // pred_check
      _
    $region38: #{tpu_custom_call.1} parent=5 // pred_check_branch
      %191 = sbr.rel (%p188) target = $region40
    $region39: #{tpu_custom_call.1} parent=5 // pred_region
      %s192 = ssub.s32 %s11, 1
      %p193 = scmp.lt.s32.totalorder %s16, 1
      %s194 = scalar_select %p193, %s16, 1
      %s195 = smul.addr %s194, 32
      %s196 = smul.addr %s195, 8
      %s197 = scalar_lea.vmem %s0, %s196
      %p198 = pneg %p37
      %p199 = pneg %p34
      %p200 = pneg %p58
      %p201 = pneg %p55
      %p202 = pneg %p79
      %p203 = pneg %p76
      %p204 = pneg %p100
      %p205 = pneg %p97
      %p206 = pneg %p121
      %p207 = pneg %p118
      %p208 = pneg %p147
      %p209 = pneg %p144
      %p210 = scmp.lt.s32.totalorder %s16, 1
      %s211 = scalar_select %p210, %s16, 1
      %s212 = smul.addr %s211, 32
      %s213 = smul.addr %s212, 8
      %s214 = scalar_lea.vmem %s5, %s213
      %p215 = scmp.lt.s32.totalorder %s16, 1
      %s216 = scalar_select %p215, %s16, 1
      %s217 = smul.addr %s216, 32
      %s218 = smul.addr %s217, 8
      %s219 = scalar_lea.vmem %s0, %s218
      %p220 = scmp.lt.s32.totalorder %s16, 1
      %s221 = scalar_select %p220, %s16, 1
      %s222 = smul.addr %s221, 32
      %s223 = smul.addr %s222, 8
      %s224 = scalar_lea.vmem %s5, %s223
      %vm226 = vcmask 31744
      %227 = vst.msk [vmem:[#allocation2] sm:$0xff] %vm226, 0.0
      %228 = vst.msk [vmem:[#allocation2 + $0x8] sm:$0xff] %vm226, 0.0
      %vm229 = vcmask 25600
      %230 = vst.msk [vmem:[#allocation2 + $0x10] sm:$0x3] %vm229, 0.0
      %s231 = scalar_lea.vmem [#allocation2], 408
      %232 = vst.msk [vmem:[%s231] sm:$0xff] %vm226, 0.0
      %233 = vst.msk [vmem:[%s231 + $0x8] sm:$0xff] %vm226, 0.0
      %234 = vst.msk [vmem:[%s231 + $0x10] sm:$0x3] %vm229, 0.0
      %vm235 = vcmask 24576
      %236 = vst.msk [vmem:[#allocation2] sm:$0x1] %vm235, 0.0
      %237 = vst.msk [vmem:[#allocation2 + $0x18] sm:$0x1] %vm235, 0.0
      %238 = vst.msk [vmem:[#allocation2 + $0x30] sm:$0x1] %vm235, 0.0
      %239 = vst.msk [vmem:[#allocation2 + $0x48] sm:$0x1] %vm235, 0.0
      %240 = vst.msk [vmem:[#allocation2 + $0x60] sm:$0x1] %vm235, 0.0
      %241 = vst.msk [vmem:[#allocation2 + $0x78] sm:$0x1] %vm235, 0.0
      %242 = vst.msk [vmem:[#allocation2 + $0x90] sm:$0x1] %vm235, 0.0
      %243 = vst.msk [vmem:[#allocation2 + $0xa8] sm:$0x1] %vm235, 0.0
      %244 = vst.msk [vmem:[#allocation2 + $0xc0] sm:$0x1] %vm235, 0.0
      %245 = vst.msk [vmem:[#allocation2 + $0xd8] sm:$0x1] %vm235, 0.0
      %246 = vst.msk [vmem:[#allocation2 + $0xf0] sm:$0x1] %vm235, 0.0
      %247 = vst.msk [vmem:[#allocation2 + $0x108] sm:$0x1] %vm235, 0.0
      %248 = vst.msk [vmem:[#allocation2 + $0x120] sm:$0x1] %vm235, 0.0
      %249 = vst.msk [vmem:[#allocation2 + $0x138] sm:$0x1] %vm235, 0.0
      %250 = vst.msk [vmem:[#allocation2 + $0x150] sm:$0x1] %vm235, 0.0
      %251 = vst.msk [vmem:[#allocation2 + $0x168] sm:$0x1] %vm235, 0.0
      %252 = vst.msk [vmem:[#allocation2 + $0x180] sm:$0x1] %vm235, 0.0
      %253 = vst.msk [vmem:[#allocation2 + $0x198] sm:$0x1] %vm235, 0.0
      %254 = vst.msk [vmem:[#allocation2 + $0x11] sm:$0x1] %vm235, 0.0
      %255 = vst.msk [vmem:[#allocation2 + $0x29] sm:$0x1] %vm235, 0.0
      %256 = vst.msk [vmem:[#allocation2 + $0x41] sm:$0x1] %vm235, 0.0
      %257 = vst.msk [vmem:[#allocation2 + $0x59] sm:$0x1] %vm235, 0.0
      %258 = vst.msk [vmem:[#allocation2 + $0x71] sm:$0x1] %vm235, 0.0
      %259 = vst.msk [vmem:[#allocation2 + $0x89] sm:$0x1] %vm235, 0.0
      %260 = vst.msk [vmem:[#allocation2 + $0xa1] sm:$0x1] %vm235, 0.0
      %261 = vst.msk [vmem:[#allocation2 + $0xb9] sm:$0x1] %vm235, 0.0
      %262 = vst.msk [vmem:[#allocation2 + $0xd1] sm:$0x1] %vm235, 0.0
      %263 = vst.msk [vmem:[#allocation2 + $0xe9] sm:$0x1] %vm235, 0.0
      %264 = vst.msk [vmem:[#allocation2 + $0x101] sm:$0x1] %vm235, 0.0
      %265 = vst.msk [vmem:[#allocation2 + $0x119] sm:$0x1] %vm235, 0.0
      %266 = vst.msk [vmem:[#allocation2 + $0x131] sm:$0x1] %vm235, 0.0
      %267 = vst.msk [vmem:[#allocation2 + $0x149] sm:$0x1] %vm235, 0.0
      %268 = vst.msk [vmem:[#allocation2 + $0x161] sm:$0x1] %vm235, 0.0
      %269 = vst.msk [vmem:[#allocation2 + $0x179] sm:$0x1] %vm235, 0.0
      %270 = vst.msk [vmem:[#allocation2 + $0x191] sm:$0x1] %vm235, 0.0
      %271 = vst.msk [vmem:[#allocation2 + $0x1a9] sm:$0x1] %vm235, 0.0
      %v272 = vld [vmem:[%s219] sm:$0xff]
      %v273 = vld [vmem:[%s219 + $0x8] sm:$0xff]
      %v274 = vld [vmem:[%s219 + $0x10] sm:$0xff]
      %v275 = vld [vmem:[%s219 + $0x18] sm:$0xff]
      %v276 = vld [vmem:[%s219 + $0x20] sm:$0xff]
      %v277 = vld [vmem:[%s219 + $0x28] sm:$0xff]
      %v278 = vld [vmem:[%s219 + $0x30] sm:$0xff]
      %v279 = vld [vmem:[%s219 + $0x38] sm:$0xff]
      %v280 = vld [vmem:[%s219 + $0x40] sm:$0xff]
      %v281 = vld [vmem:[%s219 + $0x48] sm:$0xff]
      %v282 = vld [vmem:[%s219 + $0x50] sm:$0xff]
      %v283 = vld [vmem:[%s219 + $0x58] sm:$0xff]
      %v284 = vld [vmem:[%s219 + $0x60] sm:$0xff]
      %v285 = vld [vmem:[%s219 + $0x68] sm:$0xff]
      %v286 = vld [vmem:[%s219 + $0x70] sm:$0xff]
      %v287 = vld [vmem:[%s219 + $0x78] sm:$0xff]
      %v288 = vld [vmem:[%s219 + $0x80] sm:$0xff]
      %v289 = vld [vmem:[%s219 + $0x88] sm:$0xff]
      %v290 = vld [vmem:[%s219 + $0x90] sm:$0xff]
      %v291 = vld [vmem:[%s219 + $0x98] sm:$0xff]
      %v292 = vld [vmem:[%s219 + $0xa0] sm:$0xff]
      %v293 = vld [vmem:[%s219 + $0xa8] sm:$0xff]
      %v294 = vld [vmem:[%s219 + $0xb0] sm:$0xff]
      %v295 = vld [vmem:[%s219 + $0xb8] sm:$0xff]
      %v296 = vld [vmem:[%s219 + $0xc0] sm:$0xff]
      %v297 = vld [vmem:[%s219 + $0xc8] sm:$0xff]
      %v298 = vld [vmem:[%s219 + $0xd0] sm:$0xff]
      %v299 = vld [vmem:[%s219 + $0xd8] sm:$0xff]
      %v300 = vld [vmem:[%s219 + $0xe0] sm:$0xff]
      %v301 = vld [vmem:[%s219 + $0xe8] sm:$0xff]
      %v302 = vld [vmem:[%s219 + $0xf0] sm:$0xff]
      %v303 = vld [vmem:[%s219 + $0xf8] sm:$0xff]
      %s304 = scalar_lea.vmem [#allocation2], 24
      %305 = vst.msk [vmem:[%s304 + $0x1] sm:$0xff] %vm226, %v272
      %306 = vst.msk [vmem:[%s304 + $0x9] sm:$0xff] %vm226, %v273
      %307 = vst.msk [vmem:[%s304 + $0x19] sm:$0xff] %vm226, %v274
      %308 = vst.msk [vmem:[%s304 + $0x21] sm:$0xff] %vm226, %v275
      %309 = vst.msk [vmem:[%s304 + $0x31] sm:$0xff] %vm226, %v276
      %310 = vst.msk [vmem:[%s304 + $0x39] sm:$0xff] %vm226, %v277
      %311 = vst.msk [vmem:[%s304 + $0x49] sm:$0xff] %vm226, %v278
      %312 = vst.msk [vmem:[%s304 + $0x51] sm:$0xff] %vm226, %v279
      %313 = vst.msk [vmem:[%s304 + $0x61] sm:$0xff] %vm226, %v280
      %314 = vst.msk [vmem:[%s304 + $0x69] sm:$0xff] %vm226, %v281
      %315 = vst.msk [vmem:[%s304 + $0x79] sm:$0xff] %vm226, %v282
      %316 = vst.msk [vmem:[%s304 + $0x81] sm:$0xff] %vm226, %v283
      %317 = vst.msk [vmem:[%s304 + $0x91] sm:$0xff] %vm226, %v284
      %318 = vst.msk [vmem:[%s304 + $0x99] sm:$0xff] %vm226, %v285
      %319 = vst.msk [vmem:[%s304 + $0xa9] sm:$0xff] %vm226, %v286
      %320 = vst.msk [vmem:[%s304 + $0xb1] sm:$0xff] %vm226, %v287
      %321 = vst.msk [vmem:[%s304 + $0xc1] sm:$0xff] %vm226, %v288
      %322 = vst.msk [vmem:[%s304 + $0xc9] sm:$0xff] %vm226, %v289
      %323 = vst.msk [vmem:[%s304 + $0xd9] sm:$0xff] %vm226, %v290
      %324 = vst.msk [vmem:[%s304 + $0xe1] sm:$0xff] %vm226, %v291
      %325 = vst.msk [vmem:[%s304 + $0xf1] sm:$0xff] %vm226, %v292
      %326 = vst.msk [vmem:[%s304 + $0xf9] sm:$0xff] %vm226, %v293
      %327 = vst.msk [vmem:[%s304 + $0x109] sm:$0xff] %vm226, %v294
      %328 = vst.msk [vmem:[%s304 + $0x111] sm:$0xff] %vm226, %v295
      %329 = vst.msk [vmem:[%s304 + $0x121] sm:$0xff] %vm226, %v296
      %330 = vst.msk [vmem:[%s304 + $0x129] sm:$0xff] %vm226, %v297
      %331 = vst.msk [vmem:[%s304 + $0x139] sm:$0xff] %vm226, %v298
      %332 = vst.msk [vmem:[%s304 + $0x141] sm:$0xff] %vm226, %v299
      %333 = vst.msk [vmem:[%s304 + $0x151] sm:$0xff] %vm226, %v300
      %334 = vst.msk [vmem:[%s304 + $0x159] sm:$0xff] %vm226, %v301
      %335 = vst.msk [vmem:[%s304 + $0x169] sm:$0xff] %vm226, %v302
      %336 = vst.msk [vmem:[%s304 + $0x171] sm:$0xff] %vm226, %v303
      %v337 = vld [vmem:[#allocation2] sm:$0xff]
      %v338 = vld [vmem:[#allocation2 + $0x8] sm:$0xff]
      %v339 = vld [vmem:[#allocation2 + $0x18] sm:$0xff]
      %v340 = vld [vmem:[#allocation2 + $0x20] sm:$0xff]
      %v341 = vld [vmem:[#allocation2 + $0x30] sm:$0xff]
      %v342 = vld [vmem:[#allocation2 + $0x38] sm:$0xff]
      %v343 = vld [vmem:[#allocation2 + $0x48] sm:$0xff]
      %v344 = vld [vmem:[#allocation2 + $0x50] sm:$0xff]
      %v345 = vld [vmem:[#allocation2 + $0x60] sm:$0xff]
      %v346 = vld [vmem:[#allocation2 + $0x68] sm:$0xff]
      %v347 = vld [vmem:[#allocation2 + $0x78] sm:$0xff]
      %v348 = vld [vmem:[#allocation2 + $0x80] sm:$0xff]
      %v349 = vld [vmem:[#allocation2 + $0x90] sm:$0xff]
      %v350 = vld [vmem:[#allocation2 + $0x98] sm:$0xff]
      %v351 = vld [vmem:[#allocation2 + $0xa8] sm:$0xff]
      %v352 = vld [vmem:[#allocation2 + $0xb0] sm:$0xff]
      %v353 = vld [vmem:[#allocation2 + $0xc0] sm:$0xff]
      %v354 = vld [vmem:[#allocation2 + $0xc8] sm:$0xff]
      %v355 = vld [vmem:[#allocation2 + $0xd8] sm:$0xff]
      %v356 = vld [vmem:[#allocation2 + $0xe0] sm:$0xff]
      %v357 = vld [vmem:[#allocation2 + $0xf0] sm:$0xff]
      %v358 = vld [vmem:[#allocation2 + $0xf8] sm:$0xff]
      %v359 = vld [vmem:[#allocation2 + $0x108] sm:$0xff]
      %v360 = vld [vmem:[#allocation2 + $0x110] sm:$0xff]
      %v361 = vld [vmem:[#allocation2 + $0x120] sm:$0xff]
      %v362 = vld [vmem:[#allocation2 + $0x128] sm:$0xff]
      %v363 = vld [vmem:[#allocation2 + $0x138] sm:$0xff]
      %v364 = vld [vmem:[#allocation2 + $0x140] sm:$0xff]
      %v365 = vld [vmem:[#allocation2 + $0x150] sm:$0xff]
      %v366 = vld [vmem:[#allocation2 + $0x158] sm:$0xff]
      %v367 = vld [vmem:[#allocation2 + $0x168] sm:$0xff]
      %v368 = vld [vmem:[#allocation2 + $0x170] sm:$0xff]
      %v369 = vld [vmem:[#allocation2 + $0x1] sm:$0xff]
      %v370 = vld [vmem:[#allocation2 + $0x9] sm:$0xff]
      %v371 = vld [vmem:[#allocation2 + $0x19] sm:$0xff]
      %v372 = vld [vmem:[#allocation2 + $0x21] sm:$0xff]
      %v373 = vld [vmem:[#allocation2 + $0x31] sm:$0xff]
      %v374 = vld [vmem:[#allocation2 + $0x39] sm:$0xff]
      %v375 = vld [vmem:[#allocation2 + $0x49] sm:$0xff]
      %v376 = vld [vmem:[#allocation2 + $0x51] sm:$0xff]
      %v377 = vld [vmem:[#allocation2 + $0x61] sm:$0xff]
      %v378 = vld [vmem:[#allocation2 + $0x69] sm:$0xff]
      %v379 = vld [vmem:[#allocation2 + $0x79] sm:$0xff]
      %v380 = vld [vmem:[#allocation2 + $0x81] sm:$0xff]
      %v381 = vld [vmem:[#allocation2 + $0x91] sm:$0xff]
      %v382 = vld [vmem:[#allocation2 + $0x99] sm:$0xff]
      %v383 = vld [vmem:[#allocation2 + $0xa9] sm:$0xff]
      %v384 = vld [vmem:[#allocation2 + $0xb1] sm:$0xff]
      %v385 = vld [vmem:[#allocation2 + $0xc1] sm:$0xff]
      %v386 = vld [vmem:[#allocation2 + $0xc9] sm:$0xff]
      %v387 = vld [vmem:[#allocation2 + $0xd9] sm:$0xff]
      %v388 = vld [vmem:[#allocation2 + $0xe1] sm:$0xff]
      %v389 = vld [vmem:[#allocation2 + $0xf1] sm:$0xff]
      %v390 = vld [vmem:[#allocation2 + $0xf9] sm:$0xff]
      %v391 = vld [vmem:[#allocation2 + $0x109] sm:$0xff]
      %v392 = vld [vmem:[#allocation2 + $0x111] sm:$0xff]
      %v393 = vld [vmem:[#allocation2 + $0x121] sm:$0xff]
      %v394 = vld [vmem:[#allocation2 + $0x129] sm:$0xff]
      %v395 = vld [vmem:[#allocation2 + $0x139] sm:$0xff]
      %v396 = vld [vmem:[#allocation2 + $0x141] sm:$0xff]
      %v397 = vld [vmem:[#allocation2 + $0x151] sm:$0xff]
      %v398 = vld [vmem:[#allocation2 + $0x159] sm:$0xff]
      %v399 = vld [vmem:[#allocation2 + $0x169] sm:$0xff]
      %v400 = vld [vmem:[#allocation2 + $0x171] sm:$0xff]
      %v401 = vld [vmem:[#allocation2 + $0x2] sm:$0xff]
      %v402 = vld [vmem:[#allocation2 + $0xa] sm:$0xff]
      %v403 = vld [vmem:[#allocation2 + $0x1a] sm:$0xff]
      %v404 = vld [vmem:[#allocation2 + $0x22] sm:$0xff]
      %v405 = vld [vmem:[#allocation2 + $0x32] sm:$0xff]
      %v406 = vld [vmem:[#allocation2 + $0x3a] sm:$0xff]
      %v407 = vld [vmem:[#allocation2 + $0x4a] sm:$0xff]
      %v408 = vld [vmem:[#allocation2 + $0x52] sm:$0xff]
      %v409 = vld [vmem:[#allocation2 + $0x62] sm:$0xff]
      %v410 = vld [vmem:[#allocation2 + $0x6a] sm:$0xff]
      %v411 = vld [vmem:[#allocation2 + $0x7a] sm:$0xff]
      %v412 = vld [vmem:[#allocation2 + $0x82] sm:$0xff]
      %v413 = vld [vmem:[#allocation2 + $0x92] sm:$0xff]
      %v414 = vld [vmem:[#allocation2 + $0x9a] sm:$0xff]
      %v415 = vld [vmem:[#allocation2 + $0xaa] sm:$0xff]
      %v416 = vld [vmem:[#allocation2 + $0xb2] sm:$0xff]
      %v417 = vld [vmem:[#allocation2 + $0xc2] sm:$0xff]
      %v418 = vld [vmem:[#allocation2 + $0xca] sm:$0xff]
      %v419 = vld [vmem:[#allocation2 + $0xda] sm:$0xff]
      %v420 = vld [vmem:[#allocation2 + $0xe2] sm:$0xff]
      %v421 = vld [vmem:[#allocation2 + $0xf2] sm:$0xff]
      %v422 = vld [vmem:[#allocation2 + $0xfa] sm:$0xff]
      %v423 = vld [vmem:[#allocation2 + $0x10a] sm:$0xff]
      %v424 = vld [vmem:[#allocation2 + $0x112] sm:$0xff]
      %v425 = vld [vmem:[#allocation2 + $0x122] sm:$0xff]
      %v426 = vld [vmem:[#allocation2 + $0x12a] sm:$0xff]
      %v427 = vld [vmem:[#allocation2 + $0x13a] sm:$0xff]
      %v428 = vld [vmem:[#allocation2 + $0x142] sm:$0xff]
      %v429 = vld [vmem:[#allocation2 + $0x152] sm:$0xff]
      %v430 = vld [vmem:[#allocation2 + $0x15a] sm:$0xff]
      %v431 = vld [vmem:[#allocation2 + $0x16a] sm:$0xff]
      %v432 = vld [vmem:[#allocation2 + $0x172] sm:$0xff]
      %v433 = vld [vmem:[%s304] sm:$0xff]
      %v434 = vld [vmem:[%s304 + $0x8] sm:$0xff]
      %v435 = vld [vmem:[%s304 + $0x18] sm:$0xff]
      %v436 = vld [vmem:[%s304 + $0x20] sm:$0xff]
      %v437 = vld [vmem:[%s304 + $0x30] sm:$0xff]
      %v438 = vld [vmem:[%s304 + $0x38] sm:$0xff]
      %v439 = vld [vmem:[%s304 + $0x48] sm:$0xff]
      %v440 = vld [vmem:[%s304 + $0x50] sm:$0xff]
      %v441 = vld [vmem:[%s304 + $0x60] sm:$0xff]
      %v442 = vld [vmem:[%s304 + $0x68] sm:$0xff]
      %v443 = vld [vmem:[%s304 + $0x78] sm:$0xff]
      %v444 = vld [vmem:[%s304 + $0x80] sm:$0xff]
      %v445 = vld [vmem:[%s304 + $0x90] sm:$0xff]
      %v446 = vld [vmem:[%s304 + $0x98] sm:$0xff]
      %v447 = vld [vmem:[%s304 + $0xa8] sm:$0xff]
      %v448 = vld [vmem:[%s304 + $0xb0] sm:$0xff]
      %v449 = vld [vmem:[%s304 + $0xc0] sm:$0xff]
      %v450 = vld [vmem:[%s304 + $0xc8] sm:$0xff]
      %v451 = vld [vmem:[%s304 + $0xd8] sm:$0xff]
      %v452 = vld [vmem:[%s304 + $0xe0] sm:$0xff]
      %v453 = vld [vmem:[%s304 + $0xf0] sm:$0xff]
      %v454 = vld [vmem:[%s304 + $0xf8] sm:$0xff]
      %v455 = vld [vmem:[%s304 + $0x108] sm:$0xff]
      %v456 = vld [vmem:[%s304 + $0x110] sm:$0xff]
      %v457 = vld [vmem:[%s304 + $0x120] sm:$0xff]
      %v458 = vld [vmem:[%s304 + $0x128] sm:$0xff]
      %v459 = vld [vmem:[%s304 + $0x138] sm:$0xff]
      %v460 = vld [vmem:[%s304 + $0x140] sm:$0xff]
      %v461 = vld [vmem:[%s304 + $0x150] sm:$0xff]
      %v462 = vld [vmem:[%s304 + $0x158] sm:$0xff]
      %v463 = vld [vmem:[%s304 + $0x168] sm:$0xff]
      %v464 = vld [vmem:[%s304 + $0x170] sm:$0xff]
      %v465 = vld [vmem:[%s304 + $0x1] sm:$0xff]
      %v466 = vld [vmem:[%s304 + $0x9] sm:$0xff]
      %v467 = vld [vmem:[%s304 + $0x19] sm:$0xff]
      %v468 = vld [vmem:[%s304 + $0x21] sm:$0xff]
      %v469 = vld [vmem:[%s304 + $0x31] sm:$0xff]
      %v470 = vld [vmem:[%s304 + $0x39] sm:$0xff]
      %v471 = vld [vmem:[%s304 + $0x49] sm:$0xff]
      %v472 = vld [vmem:[%s304 + $0x51] sm:$0xff]
      %v473 = vld [vmem:[%s304 + $0x61] sm:$0xff]
      %v474 = vld [vmem:[%s304 + $0x69] sm:$0xff]
      %v475 = vld [vmem:[%s304 + $0x79] sm:$0xff]
      %v476 = vld [vmem:[%s304 + $0x81] sm:$0xff]
      %v477 = vld [vmem:[%s304 + $0x91] sm:$0xff]
      %v478 = vld [vmem:[%s304 + $0x99] sm:$0xff]
      %v479 = vld [vmem:[%s304 + $0xa9] sm:$0xff]
      %v480 = vld [vmem:[%s304 + $0xb1] sm:$0xff]
      %v481 = vld [vmem:[%s304 + $0xc1] sm:$0xff]
      %v482 = vld [vmem:[%s304 + $0xc9] sm:$0xff]
      %v483 = vld [vmem:[%s304 + $0xd9] sm:$0xff]
      %v484 = vld [vmem:[%s304 + $0xe1] sm:$0xff]
      %v485 = vld [vmem:[%s304 + $0xf1] sm:$0xff]
      %v486 = vld [vmem:[%s304 + $0xf9] sm:$0xff]
      %v487 = vld [vmem:[%s304 + $0x109] sm:$0xff]
      %v488 = vld [vmem:[%s304 + $0x111] sm:$0xff]
      %v489 = vld [vmem:[%s304 + $0x121] sm:$0xff]
      %v490 = vld [vmem:[%s304 + $0x129] sm:$0xff]
      %v491 = vld [vmem:[%s304 + $0x139] sm:$0xff]
      %v492 = vld [vmem:[%s304 + $0x141] sm:$0xff]
      %v493 = vld [vmem:[%s304 + $0x151] sm:$0xff]
      %v494 = vld [vmem:[%s304 + $0x159] sm:$0xff]
      %v495 = vld [vmem:[%s304 + $0x169] sm:$0xff]
      %v496 = vld [vmem:[%s304 + $0x171] sm:$0xff]
      %v497 = vld [vmem:[%s304 + $0x2] sm:$0xff]
      %v498 = vld [vmem:[%s304 + $0xa] sm:$0xff]
      %v499 = vld [vmem:[%s304 + $0x1a] sm:$0xff]
      %v500 = vld [vmem:[%s304 + $0x22] sm:$0xff]
      %v501 = vld [vmem:[%s304 + $0x32] sm:$0xff]
      %v502 = vld [vmem:[%s304 + $0x3a] sm:$0xff]
      %v503 = vld [vmem:[%s304 + $0x4a] sm:$0xff]
      %v504 = vld [vmem:[%s304 + $0x52] sm:$0xff]
      %v505 = vld [vmem:[%s304 + $0x62] sm:$0xff]
      %v506 = vld [vmem:[%s304 + $0x6a] sm:$0xff]
      %v507 = vld [vmem:[%s304 + $0x7a] sm:$0xff]
      %v508 = vld [vmem:[%s304 + $0x82] sm:$0xff]
      %v509 = vld [vmem:[%s304 + $0x92] sm:$0xff]
      %v510 = vld [vmem:[%s304 + $0x9a] sm:$0xff]
      %v511 = vld [vmem:[%s304 + $0xaa] sm:$0xff]
      %v512 = vld [vmem:[%s304 + $0xb2] sm:$0xff]
      %v513 = vld [vmem:[%s304 + $0xc2] sm:$0xff]
      %v514 = vld [vmem:[%s304 + $0xca] sm:$0xff]
      %v515 = vld [vmem:[%s304 + $0xda] sm:$0xff]
      %v516 = vld [vmem:[%s304 + $0xe2] sm:$0xff]
      %v517 = vld [vmem:[%s304 + $0xf2] sm:$0xff]
      %v518 = vld [vmem:[%s304 + $0xfa] sm:$0xff]
      %v519 = vld [vmem:[%s304 + $0x10a] sm:$0xff]
      %v520 = vld [vmem:[%s304 + $0x112] sm:$0xff]
      %v521 = vld [vmem:[%s304 + $0x122] sm:$0xff]
      %v522 = vld [vmem:[%s304 + $0x12a] sm:$0xff]
      %v523 = vld [vmem:[%s304 + $0x13a] sm:$0xff]
      %v524 = vld [vmem:[%s304 + $0x142] sm:$0xff]
      %v525 = vld [vmem:[%s304 + $0x152] sm:$0xff]
      %v526 = vld [vmem:[%s304 + $0x15a] sm:$0xff]
      %v527 = vld [vmem:[%s304 + $0x16a] sm:$0xff]
      %v528 = vld [vmem:[%s304 + $0x172] sm:$0xff]
      %s529 = scalar_lea.vmem [#allocation2], 48
      %v530 = vld [vmem:[%s529] sm:$0xff]
      %v531 = vld [vmem:[%s529 + $0x8] sm:$0xff]
      %v532 = vld [vmem:[%s529 + $0x18] sm:$0xff]
      %v533 = vld [vmem:[%s529 + $0x20] sm:$0xff]
      %v534 = vld [vmem:[%s529 + $0x30] sm:$0xff]
      %v535 = vld [vmem:[%s529 + $0x38] sm:$0xff]
      %v536 = vld [vmem:[%s529 + $0x48] sm:$0xff]
      %v537 = vld [vmem:[%s529 + $0x50] sm:$0xff]
      %v538 = vld [vmem:[%s529 + $0x60] sm:$0xff]
      %v539 = vld [vmem:[%s529 + $0x68] sm:$0xff]
      %v540 = vld [vmem:[%s529 + $0x78] sm:$0xff]
      %v541 = vld [vmem:[%s529 + $0x80] sm:$0xff]
      %v542 = vld [vmem:[%s529 + $0x90] sm:$0xff]
      %v543 = vld [vmem:[%s529 + $0x98] sm:$0xff]
      %v544 = vld [vmem:[%s529 + $0xa8] sm:$0xff]
      %v545 = vld [vmem:[%s529 + $0xb0] sm:$0xff]
      %v546 = vld [vmem:[%s529 + $0xc0] sm:$0xff]
      %v547 = vld [vmem:[%s529 + $0xc8] sm:$0xff]
      %v548 = vld [vmem:[%s529 + $0xd8] sm:$0xff]
      %v549 = vld [vmem:[%s529 + $0xe0] sm:$0xff]
      %v550 = vld [vmem:[%s529 + $0xf0] sm:$0xff]
      %v551 = vld [vmem:[%s529 + $0xf8] sm:$0xff]
      %v552 = vld [vmem:[%s529 + $0x108] sm:$0xff]
      %v553 = vld [vmem:[%s529 + $0x110] sm:$0xff]
      %v554 = vld [vmem:[%s529 + $0x120] sm:$0xff]
      %v555 = vld [vmem:[%s529 + $0x128] sm:$0xff]
      %v556 = vld [vmem:[%s529 + $0x138] sm:$0xff]
      %v557 = vld [vmem:[%s529 + $0x140] sm:$0xff]
      %v558 = vld [vmem:[%s529 + $0x150] sm:$0xff]
      %v559 = vld [vmem:[%s529 + $0x158] sm:$0xff]
      %v560 = vld [vmem:[%s529 + $0x168] sm:$0xff]
      %v561 = vld [vmem:[%s529 + $0x170] sm:$0xff]
      %v562 = vld [vmem:[%s529 + $0x1] sm:$0xff]
      %v563 = vld [vmem:[%s529 + $0x9] sm:$0xff]
      %v564 = vld [vmem:[%s529 + $0x19] sm:$0xff]
      %v565 = vld [vmem:[%s529 + $0x21] sm:$0xff]
      %v566 = vld [vmem:[%s529 + $0x31] sm:$0xff]
      %v567 = vld [vmem:[%s529 + $0x39] sm:$0xff]
      %v568 = vld [vmem:[%s529 + $0x49] sm:$0xff]
      %v569 = vld [vmem:[%s529 + $0x51] sm:$0xff]
      %v570 = vld [vmem:[%s529 + $0x61] sm:$0xff]
      %v571 = vld [vmem:[%s529 + $0x69] sm:$0xff]
      %v572 = vld [vmem:[%s529 + $0x79] sm:$0xff]
      %v573 = vld [vmem:[%s529 + $0x81] sm:$0xff]
      %v574 = vld [vmem:[%s529 + $0x91] sm:$0xff]
      %v575 = vld [vmem:[%s529 + $0x99] sm:$0xff]
      %v576 = vld [vmem:[%s529 + $0xa9] sm:$0xff]
      %v577 = vld [vmem:[%s529 + $0xb1] sm:$0xff]
      %v578 = vld [vmem:[%s529 + $0xc1] sm:$0xff]
      %v579 = vld [vmem:[%s529 + $0xc9] sm:$0xff]
      %v580 = vld [vmem:[%s529 + $0xd9] sm:$0xff]
      %v581 = vld [vmem:[%s529 + $0xe1] sm:$0xff]
      %v582 = vld [vmem:[%s529 + $0xf1] sm:$0xff]
      %v583 = vld [vmem:[%s529 + $0xf9] sm:$0xff]
      %v584 = vld [vmem:[%s529 + $0x109] sm:$0xff]
      %v585 = vld [vmem:[%s529 + $0x111] sm:$0xff]
      %v586 = vld [vmem:[%s529 + $0x121] sm:$0xff]
      %v587 = vld [vmem:[%s529 + $0x129] sm:$0xff]
      %v588 = vld [vmem:[%s529 + $0x139] sm:$0xff]
      %v589 = vld [vmem:[%s529 + $0x141] sm:$0xff]
      %v590 = vld [vmem:[%s529 + $0x151] sm:$0xff]
      %v591 = vld [vmem:[%s529 + $0x159] sm:$0xff]
      %v592 = vld [vmem:[%s529 + $0x169] sm:$0xff]
      %v593 = vld [vmem:[%s529 + $0x171] sm:$0xff]
      %v594 = vld [vmem:[%s529 + $0x2] sm:$0xff]
      %v595 = vld [vmem:[%s529 + $0xa] sm:$0xff]
      %v596 = vld [vmem:[%s529 + $0x1a] sm:$0xff]
      %v597 = vld [vmem:[%s529 + $0x22] sm:$0xff]
      %v598 = vld [vmem:[%s529 + $0x32] sm:$0xff]
      %v599 = vld [vmem:[%s529 + $0x3a] sm:$0xff]
      %v600 = vld [vmem:[%s529 + $0x4a] sm:$0xff]
      %v601 = vld [vmem:[%s529 + $0x52] sm:$0xff]
      %v602 = vld [vmem:[%s529 + $0x62] sm:$0xff]
      %v603 = vld [vmem:[%s529 + $0x6a] sm:$0xff]
      %v604 = vld [vmem:[%s529 + $0x7a] sm:$0xff]
      %v605 = vld [vmem:[%s529 + $0x82] sm:$0xff]
      %v606 = vld [vmem:[%s529 + $0x92] sm:$0xff]
      %v607 = vld [vmem:[%s529 + $0x9a] sm:$0xff]
      %v608 = vld [vmem:[%s529 + $0xaa] sm:$0xff]
      %v609 = vld [vmem:[%s529 + $0xb2] sm:$0xff]
      %v610 = vld [vmem:[%s529 + $0xc2] sm:$0xff]
      %v611 = vld [vmem:[%s529 + $0xca] sm:$0xff]
      %v612 = vld [vmem:[%s529 + $0xda] sm:$0xff]
      %v613 = vld [vmem:[%s529 + $0xe2] sm:$0xff]
      %v614 = vld [vmem:[%s529 + $0xf2] sm:$0xff]
      %v615 = vld [vmem:[%s529 + $0xfa] sm:$0xff]
      %v616 = vld [vmem:[%s529 + $0x10a] sm:$0xff]
      %v617 = vld [vmem:[%s529 + $0x112] sm:$0xff]
      %v618 = vld [vmem:[%s529 + $0x122] sm:$0xff]
      %v619 = vld [vmem:[%s529 + $0x12a] sm:$0xff]
      %v620 = vld [vmem:[%s529 + $0x13a] sm:$0xff]
      %v621 = vld [vmem:[%s529 + $0x142] sm:$0xff]
      %v622 = vld [vmem:[%s529 + $0x152] sm:$0xff]
      %v623 = vld [vmem:[%s529 + $0x15a] sm:$0xff]
      %v624 = vld [vmem:[%s529 + $0x16a] sm:$0xff]
      %v625 = vld [vmem:[%s529 + $0x172] sm:$0xff]
      %658 = vrot.lane.b32.xlu0 %v369, 4
      %v659 = vpop.permute.xlu0 %658
      %660 = vrot.lane.b32.xlu0 %v370, 4
      %v661 = vpop.permute.xlu0 %660
      %662 = vrot.lane.b32.xlu0 %v371, 4
      %v663 = vpop.permute.xlu0 %662
      %664 = vrot.lane.b32.xlu0 %v372, 4
      %v665 = vpop.permute.xlu0 %664
      %666 = vrot.lane.b32.xlu0 %v373, 4
      %v667 = vpop.permute.xlu0 %666
      %668 = vrot.lane.b32.xlu0 %v374, 4
      %v669 = vpop.permute.xlu0 %668
      %670 = vrot.lane.b32.xlu0 %v375, 4
      %v671 = vpop.permute.xlu0 %670
      %672 = vrot.lane.b32.xlu0 %v376, 4
      %v673 = vpop.permute.xlu0 %672
      %674 = vrot.lane.b32.xlu0 %v377, 4
      %v675 = vpop.permute.xlu0 %674
      %676 = vrot.lane.b32.xlu0 %v378, 4
      %v677 = vpop.permute.xlu0 %676
      %678 = vrot.lane.b32.xlu0 %v379, 4
      %v679 = vpop.permute.xlu0 %678
      %680 = vrot.lane.b32.xlu0 %v380, 4
      %v681 = vpop.permute.xlu0 %680
      %682 = vrot.lane.b32.xlu0 %v381, 4
      %v683 = vpop.permute.xlu0 %682
      %684 = vrot.lane.b32.xlu0 %v382, 4
      %v685 = vpop.permute.xlu0 %684
      %686 = vrot.lane.b32.xlu0 %v383, 4
      %v687 = vpop.permute.xlu0 %686
      %688 = vrot.lane.b32.xlu0 %v384, 4
      %v689 = vpop.permute.xlu0 %688
      %690 = vrot.lane.b32.xlu0 %v385, 4
      %v691 = vpop.permute.xlu0 %690
      %692 = vrot.lane.b32.xlu0 %v386, 4
      %v693 = vpop.permute.xlu0 %692
      %694 = vrot.lane.b32.xlu0 %v387, 4
      %v695 = vpop.permute.xlu0 %694
      %696 = vrot.lane.b32.xlu0 %v388, 4
      %v697 = vpop.permute.xlu0 %696
      %698 = vrot.lane.b32.xlu0 %v389, 4
      %v699 = vpop.permute.xlu0 %698
      %700 = vrot.lane.b32.xlu0 %v390, 4
      %v701 = vpop.permute.xlu0 %700
      %702 = vrot.lane.b32.xlu0 %v391, 4
      %v703 = vpop.permute.xlu0 %702
      %704 = vrot.lane.b32.xlu0 %v392, 4
      %v705 = vpop.permute.xlu0 %704
      %706 = vrot.lane.b32.xlu0 %v393, 4
      %v707 = vpop.permute.xlu0 %706
      %708 = vrot.lane.b32.xlu0 %v394, 4
      %v709 = vpop.permute.xlu0 %708
      %710 = vrot.lane.b32.xlu0 %v395, 4
      %v711 = vpop.permute.xlu0 %710
      %712 = vrot.lane.b32.xlu0 %v396, 4
      %v713 = vpop.permute.xlu0 %712
      %714 = vrot.lane.b32.xlu0 %v397, 4
      %v715 = vpop.permute.xlu0 %714
      %716 = vrot.lane.b32.xlu0 %v398, 4
      %v717 = vpop.permute.xlu0 %716
      %718 = vrot.lane.b32.xlu0 %v399, 4
      %v719 = vpop.permute.xlu0 %718
      %720 = vrot.lane.b32.xlu0 %v400, 4
      %v721 = vpop.permute.xlu0 %720
      %786 = vrot.lane.b32.xlu0 %v401, 8
      %v787 = vpop.permute.xlu0 %786
      %788 = vrot.lane.b32.xlu0 %v402, 8
      %v789 = vpop.permute.xlu0 %788
      %790 = vrot.lane.b32.xlu0 %v403, 8
      %v791 = vpop.permute.xlu0 %790
      %792 = vrot.lane.b32.xlu0 %v404, 8
      %v793 = vpop.permute.xlu0 %792
      %794 = vrot.lane.b32.xlu0 %v405, 8
      %v795 = vpop.permute.xlu0 %794
      %796 = vrot.lane.b32.xlu0 %v406, 8
      %v797 = vpop.permute.xlu0 %796
      %798 = vrot.lane.b32.xlu0 %v407, 8
      %v799 = vpop.permute.xlu0 %798
      %800 = vrot.lane.b32.xlu0 %v408, 8
      %v801 = vpop.permute.xlu0 %800
      %802 = vrot.lane.b32.xlu0 %v409, 8
      %v803 = vpop.permute.xlu0 %802
      %804 = vrot.lane.b32.xlu0 %v410, 8
      %v805 = vpop.permute.xlu0 %804
      %806 = vrot.lane.b32.xlu0 %v411, 8
      %v807 = vpop.permute.xlu0 %806
      %808 = vrot.lane.b32.xlu0 %v412, 8
      %v809 = vpop.permute.xlu0 %808
      %810 = vrot.lane.b32.xlu0 %v413, 8
      %v811 = vpop.permute.xlu0 %810
      %812 = vrot.lane.b32.xlu0 %v414, 8
      %v813 = vpop.permute.xlu0 %812
      %814 = vrot.lane.b32.xlu0 %v415, 8
      %v815 = vpop.permute.xlu0 %814
      %816 = vrot.lane.b32.xlu0 %v416, 8
      %v817 = vpop.permute.xlu0 %816
      %818 = vrot.lane.b32.xlu0 %v417, 8
      %v819 = vpop.permute.xlu0 %818
      %820 = vrot.lane.b32.xlu0 %v418, 8
      %v821 = vpop.permute.xlu0 %820
      %822 = vrot.lane.b32.xlu0 %v419, 8
      %v823 = vpop.permute.xlu0 %822
      %824 = vrot.lane.b32.xlu0 %v420, 8
      %v825 = vpop.permute.xlu0 %824
      %826 = vrot.lane.b32.xlu0 %v421, 8
      %v827 = vpop.permute.xlu0 %826
      %828 = vrot.lane.b32.xlu0 %v422, 8
      %v829 = vpop.permute.xlu0 %828
      %830 = vrot.lane.b32.xlu0 %v423, 8
      %v831 = vpop.permute.xlu0 %830
      %832 = vrot.lane.b32.xlu0 %v424, 8
      %v833 = vpop.permute.xlu0 %832
      %834 = vrot.lane.b32.xlu0 %v425, 8
      %v835 = vpop.permute.xlu0 %834
      %836 = vrot.lane.b32.xlu0 %v426, 8
      %v837 = vpop.permute.xlu0 %836
      %838 = vrot.lane.b32.xlu0 %v427, 8
      %v839 = vpop.permute.xlu0 %838
      %840 = vrot.lane.b32.xlu0 %v428, 8
      %v841 = vpop.permute.xlu0 %840
      %842 = vrot.lane.b32.xlu0 %v429, 8
      %v843 = vpop.permute.xlu0 %842
      %844 = vrot.lane.b32.xlu0 %v430, 8
      %v845 = vpop.permute.xlu0 %844
      %846 = vrot.lane.b32.xlu0 %v431, 8
      %v847 = vpop.permute.xlu0 %846
      %848 = vrot.lane.b32.xlu0 %v432, 8
      %v849 = vpop.permute.xlu0 %848
      %914 = vrot.lane.b32.xlu0 %v433, 12
      %v915 = vpop.permute.xlu0 %914
      %916 = vrot.lane.b32.xlu0 %v434, 12
      %v917 = vpop.permute.xlu0 %916
      %918 = vrot.lane.b32.xlu0 %v435, 12
      %v919 = vpop.permute.xlu0 %918
      %920 = vrot.lane.b32.xlu0 %v436, 12
      %v921 = vpop.permute.xlu0 %920
      %922 = vrot.lane.b32.xlu0 %v437, 12
      %v923 = vpop.permute.xlu0 %922
      %924 = vrot.lane.b32.xlu0 %v438, 12
      %v925 = vpop.permute.xlu0 %924
      %926 = vrot.lane.b32.xlu0 %v439, 12
      %v927 = vpop.permute.xlu0 %926
      %928 = vrot.lane.b32.xlu0 %v440, 12
      %v929 = vpop.permute.xlu0 %928
      %930 = vrot.lane.b32.xlu0 %v441, 12
      %v931 = vpop.permute.xlu0 %930
      %932 = vrot.lane.b32.xlu0 %v442, 12
      %v933 = vpop.permute.xlu0 %932
      %934 = vrot.lane.b32.xlu0 %v443, 12
      %v935 = vpop.permute.xlu0 %934
      %936 = vrot.lane.b32.xlu0 %v444, 12
      %v937 = vpop.permute.xlu0 %936
      %938 = vrot.lane.b32.xlu0 %v445, 12
      %v939 = vpop.permute.xlu0 %938
      %940 = vrot.lane.b32.xlu0 %v446, 12
      %v941 = vpop.permute.xlu0 %940
      %942 = vrot.lane.b32.xlu0 %v447, 12
      %v943 = vpop.permute.xlu0 %942
      %944 = vrot.lane.b32.xlu0 %v448, 12
      %v945 = vpop.permute.xlu0 %944
      %946 = vrot.lane.b32.xlu0 %v449, 12
      %v947 = vpop.permute.xlu0 %946
      %948 = vrot.lane.b32.xlu0 %v450, 12
      %v949 = vpop.permute.xlu0 %948
      %950 = vrot.lane.b32.xlu0 %v451, 12
      %v951 = vpop.permute.xlu0 %950
      %952 = vrot.lane.b32.xlu0 %v452, 12
      %v953 = vpop.permute.xlu0 %952
      %954 = vrot.lane.b32.xlu0 %v453, 12
      %v955 = vpop.permute.xlu0 %954
      %956 = vrot.lane.b32.xlu0 %v454, 12
      %v957 = vpop.permute.xlu0 %956
      %958 = vrot.lane.b32.xlu0 %v455, 12
      %v959 = vpop.permute.xlu0 %958
      %960 = vrot.lane.b32.xlu0 %v456, 12
      %v961 = vpop.permute.xlu0 %960
      %962 = vrot.lane.b32.xlu0 %v457, 12
      %v963 = vpop.permute.xlu0 %962
      %964 = vrot.lane.b32.xlu0 %v458, 12
      %v965 = vpop.permute.xlu0 %964
      %966 = vrot.lane.b32.xlu0 %v459, 12
      %v967 = vpop.permute.xlu0 %966
      %968 = vrot.lane.b32.xlu0 %v460, 12
      %v969 = vpop.permute.xlu0 %968
      %970 = vrot.lane.b32.xlu0 %v461, 12
      %v971 = vpop.permute.xlu0 %970
      %972 = vrot.lane.b32.xlu0 %v462, 12
      %v973 = vpop.permute.xlu0 %972
      %974 = vrot.lane.b32.xlu0 %v463, 12
      %v975 = vpop.permute.xlu0 %974
      %976 = vrot.lane.b32.xlu0 %v464, 12
      %v977 = vpop.permute.xlu0 %976
      %1042 = vrot.lane.b32.xlu0 %v465, 16
      %v1043 = vpop.permute.xlu0 %1042
      %1044 = vrot.lane.b32.xlu0 %v466, 16
      %v1045 = vpop.permute.xlu0 %1044
      %1046 = vrot.lane.b32.xlu0 %v467, 16
      %v1047 = vpop.permute.xlu0 %1046
      %1048 = vrot.lane.b32.xlu0 %v468, 16
      %v1049 = vpop.permute.xlu0 %1048
      %1050 = vrot.lane.b32.xlu0 %v469, 16
      %v1051 = vpop.permute.xlu0 %1050
      %1052 = vrot.lane.b32.xlu0 %v470, 16
      %v1053 = vpop.permute.xlu0 %1052
      %1054 = vrot.lane.b32.xlu0 %v471, 16
      %v1055 = vpop.permute.xlu0 %1054
      %1056 = vrot.lane.b32.xlu0 %v472, 16
      %v1057 = vpop.permute.xlu0 %1056
      %1058 = vrot.lane.b32.xlu0 %v473, 16
      %v1059 = vpop.permute.xlu0 %1058
      %1060 = vrot.lane.b32.xlu0 %v474, 16
      %v1061 = vpop.permute.xlu0 %1060
      %1062 = vrot.lane.b32.xlu0 %v475, 16
      %v1063 = vpop.permute.xlu0 %1062
      %1064 = vrot.lane.b32.xlu0 %v476, 16
      %v1065 = vpop.permute.xlu0 %1064
      %1066 = vrot.lane.b32.xlu0 %v477, 16
      %v1067 = vpop.permute.xlu0 %1066
      %1068 = vrot.lane.b32.xlu0 %v478, 16
      %v1069 = vpop.permute.xlu0 %1068
      %1070 = vrot.lane.b32.xlu0 %v479, 16
      %v1071 = vpop.permute.xlu0 %1070
      %1072 = vrot.lane.b32.xlu0 %v480, 16
      %v1073 = vpop.permute.xlu0 %1072
      %1074 = vrot.lane.b32.xlu0 %v481, 16
      %v1075 = vpop.permute.xlu0 %1074
      %1076 = vrot.lane.b32.xlu0 %v482, 16
      %v1077 = vpop.permute.xlu0 %1076
      %1078 = vrot.lane.b32.xlu0 %v483, 16
      %v1079 = vpop.permute.xlu0 %1078
      %1080 = vrot.lane.b32.xlu0 %v484, 16
      %v1081 = vpop.permute.xlu0 %1080
      %1082 = vrot.lane.b32.xlu0 %v485, 16
      %v1083 = vpop.permute.xlu0 %1082
      %1084 = vrot.lane.b32.xlu0 %v486, 16
      %v1085 = vpop.permute.xlu0 %1084
      %1086 = vrot.lane.b32.xlu0 %v487, 16
      %v1087 = vpop.permute.xlu0 %1086
      %1088 = vrot.lane.b32.xlu0 %v488, 16
      %v1089 = vpop.permute.xlu0 %1088
      %1090 = vrot.lane.b32.xlu0 %v489, 16
      %v1091 = vpop.permute.xlu0 %1090
      %1092 = vrot.lane.b32.xlu0 %v490, 16
      %v1093 = vpop.permute.xlu0 %1092
      %1094 = vrot.lane.b32.xlu0 %v491, 16
      %v1095 = vpop.permute.xlu0 %1094
      %1096 = vrot.lane.b32.xlu0 %v492, 16
      %v1097 = vpop.permute.xlu0 %1096
      %1098 = vrot.lane.b32.xlu0 %v493, 16
      %v1099 = vpop.permute.xlu0 %1098
      %1100 = vrot.lane.b32.xlu0 %v494, 16
      %v1101 = vpop.permute.xlu0 %1100
      %1102 = vrot.lane.b32.xlu0 %v495, 16
      %v1103 = vpop.permute.xlu0 %1102
      %1104 = vrot.lane.b32.xlu0 %v496, 16
      %v1105 = vpop.permute.xlu0 %1104
      %1170 = vrot.lane.b32.xlu0 %v497, 20
      %v1171 = vpop.permute.xlu0 %1170
      %1172 = vrot.lane.b32.xlu0 %v498, 20
      %v1173 = vpop.permute.xlu0 %1172
      %1174 = vrot.lane.b32.xlu0 %v499, 20
      %v1175 = vpop.permute.xlu0 %1174
      %1176 = vrot.lane.b32.xlu0 %v500, 20
      %v1177 = vpop.permute.xlu0 %1176
      %1178 = vrot.lane.b32.xlu0 %v501, 20
      %v1179 = vpop.permute.xlu0 %1178
      %1180 = vrot.lane.b32.xlu0 %v502, 20
      %v1181 = vpop.permute.xlu0 %1180
      %1182 = vrot.lane.b32.xlu0 %v503, 20
      %v1183 = vpop.permute.xlu0 %1182
      %1184 = vrot.lane.b32.xlu0 %v504, 20
      %v1185 = vpop.permute.xlu0 %1184
      %1186 = vrot.lane.b32.xlu0 %v505, 20
      %v1187 = vpop.permute.xlu0 %1186
      %1188 = vrot.lane.b32.xlu0 %v506, 20
      %v1189 = vpop.permute.xlu0 %1188
      %1190 = vrot.lane.b32.xlu0 %v507, 20
      %v1191 = vpop.permute.xlu0 %1190
      %1192 = vrot.lane.b32.xlu0 %v508, 20
      %v1193 = vpop.permute.xlu0 %1192
      %1194 = vrot.lane.b32.xlu0 %v509, 20
      %v1195 = vpop.permute.xlu0 %1194
      %1196 = vrot.lane.b32.xlu0 %v510, 20
      %v1197 = vpop.permute.xlu0 %1196
      %1198 = vrot.lane.b32.xlu0 %v511, 20
      %v1199 = vpop.permute.xlu0 %1198
      %1200 = vrot.lane.b32.xlu0 %v512, 20
      %v1201 = vpop.permute.xlu0 %1200
      %1202 = vrot.lane.b32.xlu0 %v513, 20
      %v1203 = vpop.permute.xlu0 %1202
      %1204 = vrot.lane.b32.xlu0 %v514, 20
      %v1205 = vpop.permute.xlu0 %1204
      %1206 = vrot.lane.b32.xlu0 %v515, 20
      %v1207 = vpop.permute.xlu0 %1206
      %1208 = vrot.lane.b32.xlu0 %v516, 20
      %v1209 = vpop.permute.xlu0 %1208
      %1210 = vrot.lane.b32.xlu0 %v517, 20
      %v1211 = vpop.permute.xlu0 %1210
      %1212 = vrot.lane.b32.xlu0 %v518, 20
      %v1213 = vpop.permute.xlu0 %1212
      %1214 = vrot.lane.b32.xlu0 %v519, 20
      %v1215 = vpop.permute.xlu0 %1214
      %1216 = vrot.lane.b32.xlu0 %v520, 20
      %v1217 = vpop.permute.xlu0 %1216
      %1218 = vrot.lane.b32.xlu0 %v521, 20
      %v1219 = vpop.permute.xlu0 %1218
      %1220 = vrot.lane.b32.xlu0 %v522, 20
      %v1221 = vpop.permute.xlu0 %1220
      %1222 = vrot.lane.b32.xlu0 %v523, 20
      %v1223 = vpop.permute.xlu0 %1222
      %1224 = vrot.lane.b32.xlu0 %v524, 20
      %v1225 = vpop.permute.xlu0 %1224
      %1226 = vrot.lane.b32.xlu0 %v525, 20
      %v1227 = vpop.permute.xlu0 %1226
      %1228 = vrot.lane.b32.xlu0 %v526, 20
      %v1229 = vpop.permute.xlu0 %1228
      %1230 = vrot.lane.b32.xlu0 %v527, 20
      %v1231 = vpop.permute.xlu0 %1230
      %1232 = vrot.lane.b32.xlu0 %v528, 20
      %v1233 = vpop.permute.xlu0 %1232
      %1298 = vrot.lane.b32.xlu0 %v530, 24
      %v1299 = vpop.permute.xlu0 %1298
      %1300 = vrot.lane.b32.xlu0 %v531, 24
      %v1301 = vpop.permute.xlu0 %1300
      %1302 = vrot.lane.b32.xlu0 %v532, 24
      %v1303 = vpop.permute.xlu0 %1302
      %1304 = vrot.lane.b32.xlu0 %v533, 24
      %v1305 = vpop.permute.xlu0 %1304
      %1306 = vrot.lane.b32.xlu0 %v534, 24
      %v1307 = vpop.permute.xlu0 %1306
      %1308 = vrot.lane.b32.xlu0 %v535, 24
      %v1309 = vpop.permute.xlu0 %1308
      %1310 = vrot.lane.b32.xlu0 %v536, 24
      %v1311 = vpop.permute.xlu0 %1310
      %1312 = vrot.lane.b32.xlu0 %v537, 24
      %v1313 = vpop.permute.xlu0 %1312
      %1314 = vrot.lane.b32.xlu0 %v538, 24
      %v1315 = vpop.permute.xlu0 %1314
      %1316 = vrot.lane.b32.xlu0 %v539, 24
      %v1317 = vpop.permute.xlu0 %1316
      %1318 = vrot.lane.b32.xlu0 %v540, 24
      %v1319 = vpop.permute.xlu0 %1318
      %1320 = vrot.lane.b32.xlu0 %v541, 24
      %v1321 = vpop.permute.xlu0 %1320
      %1322 = vrot.lane.b32.xlu0 %v542, 24
      %v1323 = vpop.permute.xlu0 %1322
      %1324 = vrot.lane.b32.xlu0 %v543, 24
      %v1325 = vpop.permute.xlu0 %1324
      %1326 = vrot.lane.b32.xlu0 %v544, 24
      %v1327 = vpop.permute.xlu0 %1326
      %1328 = vrot.lane.b32.xlu0 %v545, 24
      %v1329 = vpop.permute.xlu0 %1328
      %1330 = vrot.lane.b32.xlu0 %v546, 24
      %v1331 = vpop.permute.xlu0 %1330
      %1332 = vrot.lane.b32.xlu0 %v547, 24
      %v1333 = vpop.permute.xlu0 %1332
      %1334 = vrot.lane.b32.xlu0 %v548, 24
      %v1335 = vpop.permute.xlu0 %1334
      %1336 = vrot.lane.b32.xlu0 %v549, 24
      %v1337 = vpop.permute.xlu0 %1336
      %1338 = vrot.lane.b32.xlu0 %v550, 24
      %v1339 = vpop.permute.xlu0 %1338
      %1340 = vrot.lane.b32.xlu0 %v551, 24
      %v1341 = vpop.permute.xlu0 %1340
      %1342 = vrot.lane.b32.xlu0 %v552, 24
      %v1343 = vpop.permute.xlu0 %1342
      %1344 = vrot.lane.b32.xlu0 %v553, 24
      %v1345 = vpop.permute.xlu0 %1344
      %1346 = vrot.lane.b32.xlu0 %v554, 24
      %v1347 = vpop.permute.xlu0 %1346
      %1348 = vrot.lane.b32.xlu0 %v555, 24
      %v1349 = vpop.permute.xlu0 %1348
      %1350 = vrot.lane.b32.xlu0 %v556, 24
      %v1351 = vpop.permute.xlu0 %1350
      %1352 = vrot.lane.b32.xlu0 %v557, 24
      %v1353 = vpop.permute.xlu0 %1352
      %1354 = vrot.lane.b32.xlu0 %v558, 24
      %v1355 = vpop.permute.xlu0 %1354
      %1356 = vrot.lane.b32.xlu0 %v559, 24
      %v1357 = vpop.permute.xlu0 %1356
      %1358 = vrot.lane.b32.xlu0 %v560, 24
      %v1359 = vpop.permute.xlu0 %1358
      %1360 = vrot.lane.b32.xlu0 %v561, 24
      %v1361 = vpop.permute.xlu0 %1360
      %1426 = vrot.lane.b32.xlu0 %v562, 28
      %v1427 = vpop.permute.xlu0 %1426
      %1428 = vrot.lane.b32.xlu0 %v563, 28
      %v1429 = vpop.permute.xlu0 %1428
      %1430 = vrot.lane.b32.xlu0 %v564, 28
      %v1431 = vpop.permute.xlu0 %1430
      %1432 = vrot.lane.b32.xlu0 %v565, 28
      %v1433 = vpop.permute.xlu0 %1432
      %1434 = vrot.lane.b32.xlu0 %v566, 28
      %v1435 = vpop.permute.xlu0 %1434
      %1436 = vrot.lane.b32.xlu0 %v567, 28
      %v1437 = vpop.permute.xlu0 %1436
      %1438 = vrot.lane.b32.xlu0 %v568, 28
      %v1439 = vpop.permute.xlu0 %1438
      %1440 = vrot.lane.b32.xlu0 %v569, 28
      %v1441 = vpop.permute.xlu0 %1440
      %1442 = vrot.lane.b32.xlu0 %v570, 28
      %v1443 = vpop.permute.xlu0 %1442
      %1444 = vrot.lane.b32.xlu0 %v571, 28
      %v1445 = vpop.permute.xlu0 %1444
      %1446 = vrot.lane.b32.xlu0 %v572, 28
      %v1447 = vpop.permute.xlu0 %1446
      %1448 = vrot.lane.b32.xlu0 %v573, 28
      %v1449 = vpop.permute.xlu0 %1448
      %1450 = vrot.lane.b32.xlu0 %v574, 28
      %v1451 = vpop.permute.xlu0 %1450
      %1452 = vrot.lane.b32.xlu0 %v575, 28
      %v1453 = vpop.permute.xlu0 %1452
      %1454 = vrot.lane.b32.xlu0 %v576, 28
      %v1455 = vpop.permute.xlu0 %1454
      %1456 = vrot.lane.b32.xlu0 %v577, 28
      %v1457 = vpop.permute.xlu0 %1456
      %1458 = vrot.lane.b32.xlu0 %v578, 28
      %v1459 = vpop.permute.xlu0 %1458
      %1460 = vrot.lane.b32.xlu0 %v579, 28
      %v1461 = vpop.permute.xlu0 %1460
      %1462 = vrot.lane.b32.xlu0 %v580, 28
      %v1463 = vpop.permute.xlu0 %1462
      %1464 = vrot.lane.b32.xlu0 %v581, 28
      %v1465 = vpop.permute.xlu0 %1464
      %1466 = vrot.lane.b32.xlu0 %v582, 28
      %v1467 = vpop.permute.xlu0 %1466
      %1468 = vrot.lane.b32.xlu0 %v583, 28
      %v1469 = vpop.permute.xlu0 %1468
      %1470 = vrot.lane.b32.xlu0 %v584, 28
      %v1471 = vpop.permute.xlu0 %1470
      %1472 = vrot.lane.b32.xlu0 %v585, 28
      %v1473 = vpop.permute.xlu0 %1472
      %1474 = vrot.lane.b32.xlu0 %v586, 28
      %v1475 = vpop.permute.xlu0 %1474
      %1476 = vrot.lane.b32.xlu0 %v587, 28
      %v1477 = vpop.permute.xlu0 %1476
      %1478 = vrot.lane.b32.xlu0 %v588, 28
      %v1479 = vpop.permute.xlu0 %1478
      %1480 = vrot.lane.b32.xlu0 %v589, 28
      %v1481 = vpop.permute.xlu0 %1480
      %1482 = vrot.lane.b32.xlu0 %v590, 28
      %v1483 = vpop.permute.xlu0 %1482
      %1484 = vrot.lane.b32.xlu0 %v591, 28
      %v1485 = vpop.permute.xlu0 %1484
      %1486 = vrot.lane.b32.xlu0 %v592, 28
      %v1487 = vpop.permute.xlu0 %1486
      %1488 = vrot.lane.b32.xlu0 %v593, 28
      %v1489 = vpop.permute.xlu0 %1488
      %1554 = vrot.lane.b32.xlu0 %v594, 32
      %v1555 = vpop.permute.xlu0 %1554
      %1556 = vrot.lane.b32.xlu0 %v595, 32
      %v1557 = vpop.permute.xlu0 %1556
      %1558 = vrot.lane.b32.xlu0 %v596, 32
      %v1559 = vpop.permute.xlu0 %1558
      %1560 = vrot.lane.b32.xlu0 %v597, 32
      %v1561 = vpop.permute.xlu0 %1560
      %1562 = vrot.lane.b32.xlu0 %v598, 32
      %v1563 = vpop.permute.xlu0 %1562
      %1564 = vrot.lane.b32.xlu0 %v599, 32
      %v1565 = vpop.permute.xlu0 %1564
      %1566 = vrot.lane.b32.xlu0 %v600, 32
      %v1567 = vpop.permute.xlu0 %1566
      %1568 = vrot.lane.b32.xlu0 %v601, 32
      %v1569 = vpop.permute.xlu0 %1568
      %1570 = vrot.lane.b32.xlu0 %v602, 32
      %v1571 = vpop.permute.xlu0 %1570
      %1572 = vrot.lane.b32.xlu0 %v603, 32
      %v1573 = vpop.permute.xlu0 %1572
      %1574 = vrot.lane.b32.xlu0 %v604, 32
      %v1575 = vpop.permute.xlu0 %1574
      %1576 = vrot.lane.b32.xlu0 %v605, 32
      %v1577 = vpop.permute.xlu0 %1576
      %1578 = vrot.lane.b32.xlu0 %v606, 32
      %v1579 = vpop.permute.xlu0 %1578
      %1580 = vrot.lane.b32.xlu0 %v607, 32
      %v1581 = vpop.permute.xlu0 %1580
      %1582 = vrot.lane.b32.xlu0 %v608, 32
      %v1583 = vpop.permute.xlu0 %1582
      %1584 = vrot.lane.b32.xlu0 %v609, 32
      %v1585 = vpop.permute.xlu0 %1584
      %1586 = vrot.lane.b32.xlu0 %v610, 32
      %v1587 = vpop.permute.xlu0 %1586
      %1588 = vrot.lane.b32.xlu0 %v611, 32
      %v1589 = vpop.permute.xlu0 %1588
      %1590 = vrot.lane.b32.xlu0 %v612, 32
      %v1591 = vpop.permute.xlu0 %1590
      %1592 = vrot.lane.b32.xlu0 %v613, 32
      %v1593 = vpop.permute.xlu0 %1592
      %1594 = vrot.lane.b32.xlu0 %v614, 32
      %v1595 = vpop.permute.xlu0 %1594
      %1596 = vrot.lane.b32.xlu0 %v615, 32
      %v1597 = vpop.permute.xlu0 %1596
      %1598 = vrot.lane.b32.xlu0 %v616, 32
      %v1599 = vpop.permute.xlu0 %1598
      %1600 = vrot.lane.b32.xlu0 %v617, 32
      %v1601 = vpop.permute.xlu0 %1600
      %1602 = vrot.lane.b32.xlu0 %v618, 32
      %v1603 = vpop.permute.xlu0 %1602
      %1604 = vrot.lane.b32.xlu0 %v619, 32
      %v1605 = vpop.permute.xlu0 %1604
      %1606 = vrot.lane.b32.xlu0 %v620, 32
      %v1607 = vpop.permute.xlu0 %1606
      %1608 = vrot.lane.b32.xlu0 %v621, 32
      %v1609 = vpop.permute.xlu0 %1608
      %1610 = vrot.lane.b32.xlu0 %v622, 32
      %v1611 = vpop.permute.xlu0 %1610
      %1612 = vrot.lane.b32.xlu0 %v623, 32
      %v1613 = vpop.permute.xlu0 %1612
      %1614 = vrot.lane.b32.xlu0 %v624, 32
      %v1615 = vpop.permute.xlu0 %1614
      %1616 = vrot.lane.b32.xlu0 %v625, 32
      %v1617 = vpop.permute.xlu0 %1616
      %v1650 = vsel %vm226, %v337, %v659
      %v1651 = vsel %vm226, %v338, %v661
      %v1652 = vsel %vm226, %v339, %v663
      %v1653 = vsel %vm226, %v340, %v665
      %v1654 = vsel %vm226, %v341, %v667
      %v1655 = vsel %vm226, %v342, %v669
      %v1656 = vsel %vm226, %v343, %v671
      %v1657 = vsel %vm226, %v344, %v673
      %v1658 = vsel %vm226, %v345, %v675
      %v1659 = vsel %vm226, %v346, %v677
      %v1660 = vsel %vm226, %v347, %v679
      %v1661 = vsel %vm226, %v348, %v681
      %v1662 = vsel %vm226, %v349, %v683
      %v1663 = vsel %vm226, %v350, %v685
      %v1664 = vsel %vm226, %v351, %v687
      %v1665 = vsel %vm226, %v352, %v689
      %v1666 = vsel %vm226, %v353, %v691
      %v1667 = vsel %vm226, %v354, %v693
      %v1668 = vsel %vm226, %v355, %v695
      %v1669 = vsel %vm226, %v356, %v697
      %v1670 = vsel %vm226, %v357, %v699
      %v1671 = vsel %vm226, %v358, %v701
      %v1672 = vsel %vm226, %v359, %v703
      %v1673 = vsel %vm226, %v360, %v705
      %v1674 = vsel %vm226, %v361, %v707
      %v1675 = vsel %vm226, %v362, %v709
      %v1676 = vsel %vm226, %v363, %v711
      %v1677 = vsel %vm226, %v364, %v713
      %v1678 = vsel %vm226, %v365, %v715
      %v1679 = vsel %vm226, %v366, %v717
      %v1680 = vsel %vm226, %v367, %v719
      %v1681 = vsel %vm226, %v368, %v721
      %vm1682 = vcmask 64512
      %v1683 = vsel %vm1682, %v1650, %v787
      %v1684 = vsel %vm1682, %v1651, %v789
      %v1685 = vsel %vm1682, %v1652, %v791
      %v1686 = vsel %vm1682, %v1653, %v793
      %v1687 = vsel %vm1682, %v1654, %v795
      %v1688 = vsel %vm1682, %v1655, %v797
      %v1689 = vsel %vm1682, %v1656, %v799
      %v1690 = vsel %vm1682, %v1657, %v801
      %v1691 = vsel %vm1682, %v1658, %v803
      %v1692 = vsel %vm1682, %v1659, %v805
      %v1693 = vsel %vm1682, %v1660, %v807
      %v1694 = vsel %vm1682, %v1661, %v809
      %v1695 = vsel %vm1682, %v1662, %v811
      %v1696 = vsel %vm1682, %v1663, %v813
      %v1697 = vsel %vm1682, %v1664, %v815
      %v1698 = vsel %vm1682, %v1665, %v817
      %v1699 = vsel %vm1682, %v1666, %v819
      %v1700 = vsel %vm1682, %v1667, %v821
      %v1701 = vsel %vm1682, %v1668, %v823
      %v1702 = vsel %vm1682, %v1669, %v825
      %v1703 = vsel %vm1682, %v1670, %v827
      %v1704 = vsel %vm1682, %v1671, %v829
      %v1705 = vsel %vm1682, %v1672, %v831
      %v1706 = vsel %vm1682, %v1673, %v833
      %v1707 = vsel %vm1682, %v1674, %v835
      %v1708 = vsel %vm1682, %v1675, %v837
      %v1709 = vsel %vm1682, %v1676, %v839
      %v1710 = vsel %vm1682, %v1677, %v841
      %v1711 = vsel %vm1682, %v1678, %v843
      %v1712 = vsel %vm1682, %v1679, %v845
      %v1713 = vsel %vm1682, %v1680, %v847
      %v1714 = vsel %vm1682, %v1681, %v849
      %vm1715 = vcmask 97280
      %v1716 = vsel %vm1715, %v1683, %v915
      %v1717 = vsel %vm1715, %v1684, %v917
      %v1718 = vsel %vm1715, %v1685, %v919
      %v1719 = vsel %vm1715, %v1686, %v921
      %v1720 = vsel %vm1715, %v1687, %v923
      %v1721 = vsel %vm1715, %v1688, %v925
      %v1722 = vsel %vm1715, %v1689, %v927
      %v1723 = vsel %vm1715, %v1690, %v929
      %v1724 = vsel %vm1715, %v1691, %v931
      %v1725 = vsel %vm1715, %v1692, %v933
      %v1726 = vsel %vm1715, %v1693, %v935
      %v1727 = vsel %vm1715, %v1694, %v937
      %v1728 = vsel %vm1715, %v1695, %v939
      %v1729 = vsel %vm1715, %v1696, %v941
      %v1730 = vsel %vm1715, %v1697, %v943
      %v1731 = vsel %vm1715, %v1698, %v945
      %v1732 = vsel %vm1715, %v1699, %v947
      %v1733 = vsel %vm1715, %v1700, %v949
      %v1734 = vsel %vm1715, %v1701, %v951
      %v1735 = vsel %vm1715, %v1702, %v953
      %v1736 = vsel %vm1715, %v1703, %v955
      %v1737 = vsel %vm1715, %v1704, %v957
      %v1738 = vsel %vm1715, %v1705, %v959
      %v1739 = vsel %vm1715, %v1706, %v961
      %v1740 = vsel %vm1715, %v1707, %v963
      %v1741 = vsel %vm1715, %v1708, %v965
      %v1742 = vsel %vm1715, %v1709, %v967
      %v1743 = vsel %vm1715, %v1710, %v969
      %v1744 = vsel %vm1715, %v1711, %v971
      %v1745 = vsel %vm1715, %v1712, %v973
      %v1746 = vsel %vm1715, %v1713, %v975
      %v1747 = vsel %vm1715, %v1714, %v977
      %vm1748 = vcmask 130048
      %v1749 = vsel %vm1748, %v1716, %v1043
      %v1750 = vsel %vm1748, %v1717, %v1045
      %v1751 = vsel %vm1748, %v1718, %v1047
      %v1752 = vsel %vm1748, %v1719, %v1049
      %v1753 = vsel %vm1748, %v1720, %v1051
      %v1754 = vsel %vm1748, %v1721, %v1053
      %v1755 = vsel %vm1748, %v1722, %v1055
      %v1756 = vsel %vm1748, %v1723, %v1057
      %v1757 = vsel %vm1748, %v1724, %v1059
      %v1758 = vsel %vm1748, %v1725, %v1061
      %v1759 = vsel %vm1748, %v1726, %v1063
      %v1760 = vsel %vm1748, %v1727, %v1065
      %v1761 = vsel %vm1748, %v1728, %v1067
      %v1762 = vsel %vm1748, %v1729, %v1069
      %v1763 = vsel %vm1748, %v1730, %v1071
      %v1764 = vsel %vm1748, %v1731, %v1073
      %v1765 = vsel %vm1748, %v1732, %v1075
      %v1766 = vsel %vm1748, %v1733, %v1077
      %v1767 = vsel %vm1748, %v1734, %v1079
      %v1768 = vsel %vm1748, %v1735, %v1081
      %v1769 = vsel %vm1748, %v1736, %v1083
      %v1770 = vsel %vm1748, %v1737, %v1085
      %v1771 = vsel %vm1748, %v1738, %v1087
      %v1772 = vsel %vm1748, %v1739, %v1089
      %v1773 = vsel %vm1748, %v1740, %v1091
      %v1774 = vsel %vm1748, %v1741, %v1093
      %v1775 = vsel %vm1748, %v1742, %v1095
      %v1776 = vsel %vm1748, %v1743, %v1097
      %v1777 = vsel %vm1748, %v1744, %v1099
      %v1778 = vsel %vm1748, %v1745, %v1101
      %v1779 = vsel %vm1748, %v1746, %v1103
      %v1780 = vsel %vm1748, %v1747, %v1105
      %vm1781 = vcmask 162816
      %v1782 = vsel %vm1781, %v1749, %v1171
      %v1783 = vsel %vm1781, %v1750, %v1173
      %v1784 = vsel %vm1781, %v1751, %v1175
      %v1785 = vsel %vm1781, %v1752, %v1177
      %v1786 = vsel %vm1781, %v1753, %v1179
      %v1787 = vsel %vm1781, %v1754, %v1181
      %v1788 = vsel %vm1781, %v1755, %v1183
      %v1789 = vsel %vm1781, %v1756, %v1185
      %v1790 = vsel %vm1781, %v1757, %v1187
      %v1791 = vsel %vm1781, %v1758, %v1189
      %v1792 = vsel %vm1781, %v1759, %v1191
      %v1793 = vsel %vm1781, %v1760, %v1193
      %v1794 = vsel %vm1781, %v1761, %v1195
      %v1795 = vsel %vm1781, %v1762, %v1197
      %v1796 = vsel %vm1781, %v1763, %v1199
      %v1797 = vsel %vm1781, %v1764, %v1201
      %v1798 = vsel %vm1781, %v1765, %v1203
      %v1799 = vsel %vm1781, %v1766, %v1205
      %v1800 = vsel %vm1781, %v1767, %v1207
      %v1801 = vsel %vm1781, %v1768, %v1209
      %v1802 = vsel %vm1781, %v1769, %v1211
      %v1803 = vsel %vm1781, %v1770, %v1213
      %v1804 = vsel %vm1781, %v1771, %v1215
      %v1805 = vsel %vm1781, %v1772, %v1217
      %v1806 = vsel %vm1781, %v1773, %v1219
      %v1807 = vsel %vm1781, %v1774, %v1221
      %v1808 = vsel %vm1781, %v1775, %v1223
      %v1809 = vsel %vm1781, %v1776, %v1225
      %v1810 = vsel %vm1781, %v1777, %v1227
      %v1811 = vsel %vm1781, %v1778, %v1229
      %v1812 = vsel %vm1781, %v1779, %v1231
      %v1813 = vsel %vm1781, %v1780, %v1233
      %vm1814 = vcmask 195584
      %v1815 = vsel %vm1814, %v1782, %v1299
      %v1816 = vsel %vm1814, %v1783, %v1301
      %v1817 = vsel %vm1814, %v1784, %v1303
      %v1818 = vsel %vm1814, %v1785, %v1305
      %v1819 = vsel %vm1814, %v1786, %v1307
      %v1820 = vsel %vm1814, %v1787, %v1309
      %v1821 = vsel %vm1814, %v1788, %v1311
      %v1822 = vsel %vm1814, %v1789, %v1313
      %v1823 = vsel %vm1814, %v1790, %v1315
      %v1824 = vsel %vm1814, %v1791, %v1317
      %v1825 = vsel %vm1814, %v1792, %v1319
      %v1826 = vsel %vm1814, %v1793, %v1321
      %v1827 = vsel %vm1814, %v1794, %v1323
      %v1828 = vsel %vm1814, %v1795, %v1325
      %v1829 = vsel %vm1814, %v1796, %v1327
      %v1830 = vsel %vm1814, %v1797, %v1329
      %v1831 = vsel %vm1814, %v1798, %v1331
      %v1832 = vsel %vm1814, %v1799, %v1333
      %v1833 = vsel %vm1814, %v1800, %v1335
      %v1834 = vsel %vm1814, %v1801, %v1337
      %v1835 = vsel %vm1814, %v1802, %v1339
      %v1836 = vsel %vm1814, %v1803, %v1341
      %v1837 = vsel %vm1814, %v1804, %v1343
      %v1838 = vsel %vm1814, %v1805, %v1345
      %v1839 = vsel %vm1814, %v1806, %v1347
      %v1840 = vsel %vm1814, %v1807, %v1349
      %v1841 = vsel %vm1814, %v1808, %v1351
      %v1842 = vsel %vm1814, %v1809, %v1353
      %v1843 = vsel %vm1814, %v1810, %v1355
      %v1844 = vsel %vm1814, %v1811, %v1357
      %v1845 = vsel %vm1814, %v1812, %v1359
      %v1846 = vsel %vm1814, %v1813, %v1361
      %vm1847 = vcmask 228352
      %v1848 = vsel %vm1847, %v1815, %v1427
      %v1849 = vsel %vm1847, %v1816, %v1429
      %v1850 = vsel %vm1847, %v1817, %v1431
      %v1851 = vsel %vm1847, %v1818, %v1433
      %v1852 = vsel %vm1847, %v1819, %v1435
      %v1853 = vsel %vm1847, %v1820, %v1437
      %v1854 = vsel %vm1847, %v1821, %v1439
      %v1855 = vsel %vm1847, %v1822, %v1441
      %v1856 = vsel %vm1847, %v1823, %v1443
      %v1857 = vsel %vm1847, %v1824, %v1445
      %v1858 = vsel %vm1847, %v1825, %v1447
      %v1859 = vsel %vm1847, %v1826, %v1449
      %v1860 = vsel %vm1847, %v1827, %v1451
      %v1861 = vsel %vm1847, %v1828, %v1453
      %v1862 = vsel %vm1847, %v1829, %v1455
      %v1863 = vsel %vm1847, %v1830, %v1457
      %v1864 = vsel %vm1847, %v1831, %v1459
      %v1865 = vsel %vm1847, %v1832, %v1461
      %v1866 = vsel %vm1847, %v1833, %v1463
      %v1867 = vsel %vm1847, %v1834, %v1465
      %v1868 = vsel %vm1847, %v1835, %v1467
      %v1869 = vsel %vm1847, %v1836, %v1469
      %v1870 = vsel %vm1847, %v1837, %v1471
      %v1871 = vsel %vm1847, %v1838, %v1473
      %v1872 = vsel %vm1847, %v1839, %v1475
      %v1873 = vsel %vm1847, %v1840, %v1477
      %v1874 = vsel %vm1847, %v1841, %v1479
      %v1875 = vsel %vm1847, %v1842, %v1481
      %v1876 = vsel %vm1847, %v1843, %v1483
      %v1877 = vsel %vm1847, %v1844, %v1485
      %v1878 = vsel %vm1847, %v1845, %v1487
      %v1879 = vsel %vm1847, %v1846, %v1489
      %vm1880 = vcmask 261120
      %v1881 = vsel %vm1880, %v1848, %v1555
      %v1882 = vsel %vm1880, %v1849, %v1557
      %v1883 = vsel %vm1880, %v1850, %v1559
      %v1884 = vsel %vm1880, %v1851, %v1561
      %v1885 = vsel %vm1880, %v1852, %v1563
      %v1886 = vsel %vm1880, %v1853, %v1565
      %v1887 = vsel %vm1880, %v1854, %v1567
      %v1888 = vsel %vm1880, %v1855, %v1569
      %v1889 = vsel %vm1880, %v1856, %v1571
      %v1890 = vsel %vm1880, %v1857, %v1573
      %v1891 = vsel %vm1880, %v1858, %v1575
      %v1892 = vsel %vm1880, %v1859, %v1577
      %v1893 = vsel %vm1880, %v1860, %v1579
      %v1894 = vsel %vm1880, %v1861, %v1581
      %v1895 = vsel %vm1880, %v1862, %v1583
      %v1896 = vsel %vm1880, %v1863, %v1585
      %v1897 = vsel %vm1880, %v1864, %v1587
      %v1898 = vsel %vm1880, %v1865, %v1589
      %v1899 = vsel %vm1880, %v1866, %v1591
      %v1900 = vsel %vm1880, %v1867, %v1593
      %v1901 = vsel %vm1880, %v1868, %v1595
      %v1902 = vsel %vm1880, %v1869, %v1597
      %v1903 = vsel %vm1880, %v1870, %v1599
      %v1904 = vsel %vm1880, %v1871, %v1601
      %v1905 = vsel %vm1880, %v1872, %v1603
      %v1906 = vsel %vm1880, %v1873, %v1605
      %v1907 = vsel %vm1880, %v1874, %v1607
      %v1908 = vsel %vm1880, %v1875, %v1609
      %v1909 = vsel %vm1880, %v1876, %v1611
      %v1910 = vsel %vm1880, %v1877, %v1613
      %v1911 = vsel %vm1880, %v1878, %v1615
      %v1912 = vsel %vm1880, %v1879, %v1617
      %v1913 = vpack.c.bf16 %v1882, %v1881
      %v1914 = vpack.c.bf16 %v1884, %v1883
      %v1915 = vpack.c.bf16 %v1886, %v1885
      %v1916 = vpack.c.bf16 %v1888, %v1887
      %v1917 = vpack.c.bf16 %v1890, %v1889
      %v1918 = vpack.c.bf16 %v1892, %v1891
      %v1919 = vpack.c.bf16 %v1894, %v1893
      %v1920 = vpack.c.bf16 %v1896, %v1895
      %v1921 = vpack.c.bf16 %v1898, %v1897
      %v1922 = vpack.c.bf16 %v1900, %v1899
      %v1923 = vpack.c.bf16 %v1902, %v1901
      %v1924 = vpack.c.bf16 %v1904, %v1903
      %v1925 = vpack.c.bf16 %v1906, %v1905
      %v1926 = vpack.c.bf16 %v1908, %v1907
      %v1927 = vpack.c.bf16 %v1910, %v1909
      %v1928 = vpack.c.bf16 %v1912, %v1911
      %v1929 = vld [vmem:[%s1] sm:$0xf]
      %v1930 = vld [vmem:[%s1 + $0x4] sm:$0xf]
      %v1931 = vld [vmem:[%s1 + $0x8] sm:$0xf]
      %v1932 = vld [vmem:[%s1 + $0xc] sm:$0xf]
      %v1933 = vld [vmem:[%s1 + $0x10] sm:$0x3]
      %v1934 = vld [vmem:[%s2] sm:$0x1]
      %v1936 = vlaneseq
      %v1937 = vshrl.u32 %v1936, 7
      %v1938 = vsub.s32 0, %v1937
      %v1939 = vrot.slane %v1934, %v1938
      %v1946 = vunpack.c.l.b16 %v1929
      %v1947 = vunpack.c.l.b16 %v1930
      %v1948 = vunpack.c.l.b16 %v1931
      %v1949 = vunpack.c.l.b16 %v1932
      %v1950 = vunpack.c.l.b16 %v1933
      %v1951 = vpack.c.b16 %v1947, %v1946
      %v1952 = vpack.c.b16 %v1949, %v1948
      %v1953 = vpack.c.b16 %v1950, %v1950
      %vm1956 = vcmask 293888
      %v1958 = vsel %vm1956, %v1913, 0
      %v1961 = vsel %vm1956, %v1914, 0
      %v1964 = vsel %vm1956, %v1915, 0
      %v1967 = vsel %vm1956, %v1916, 0
      %v1970 = vsel %vm1956, %v1917, 0
      %v1973 = vsel %vm1956, %v1918, 0
      %v1976 = vsel %vm1956, %v1919, 0
      %v1979 = vsel %vm1956, %v1920, 0
      %v1982 = vsel %vm1956, %v1921, 0
      %v1985 = vsel %vm1956, %v1922, 0
      %v1988 = vsel %vm1956, %v1923, 0
      %v1991 = vsel %vm1956, %v1924, 0
      %v1994 = vsel %vm1956, %v1925, 0
      %v1997 = vsel %vm1956, %v1926, 0
      %v2000 = vsel %vm1956, %v1927, 0
      %v2003 = vsel %vm1956, %v1928, 0
      %vm2005 = vcmask 1041408
      %v2007 = vsel %vm2005, %v1953, 0
      %2009 = vmatprep.subr.bf16.mxu0 0
      %2010 = vmatpush1.bf16.msra.mxu0 0
      %2011 = vmatprep.subr.bf16.mxu0 0
      %2012 = vmatpush1.bf16.msra.mxu0 0
      %2013 = vmatprep.subr.bf16.mxu0 0
      %2014 = vmatpush1.bf16.msra.mxu0 0
      %2015 = vmatprep.subr.bf16.mxu0 0
      %2016 = vmatpush1.bf16.msra.mxu0 0
      %2017 = vmatprep.subr.bf16.mxu0 0
      %2018 = vmatpush1.bf16.msra.mxu0 0
      %2019 = vmatprep.subr.bf16.mxu0 0
      %2020 = vmatpush1.bf16.msra.mxu0 %v2007
      %2021 = vmatprep.subr.bf16.mxu0 0
      %2022 = vmatpush1.bf16.msra.mxu0 %v1952
      %2023 = vmatprep.subr.bf16.mxu0 0
      %2024 = vmatpush1.bf16.msra.mxu0 %v1951
      %2025 = vmatprep.subr.bf16.mxu0 0
      %2026 = vmatpush2.bf16.msra.mxu0 0
      %2027 = vmatprep.subr.bf16.mxu0 0
      %2028 = vmatpush2.bf16.msra.mxu0 0
      %2029 = vmatprep.subr.bf16.mxu0 0
      %2030 = vmatpush2.bf16.msra.mxu0 0
      %2031 = vmatprep.subr.bf16.mxu0 0
      %2032 = vmatpush2.bf16.msra.mxu0 0
      %2033 = vmatprep.subr.bf16.mxu0 0
      %2034 = vmatpush2.bf16.msra.mxu0 0
      %2035 = vmatprep.subr.bf16.mxu0 0
      %2036 = vmatpush2.bf16.msra.mxu0 0
      %2037 = vmatprep.subr.bf16.mxu0 0
      %2038 = vmatpush2.bf16.msra.mxu0 0
      %2039 = vmatprep.subr.bf16.mxu0 0
      %2040 = vmatpush2.bf16.msra.mxu0 0
      %2041 = vmatprep.mubr.bf16.mxu0 0
      %2042 = vmatmul.mubr.bf16.gmra.mxu0 %v1958
      %v2043 = vpop.f32.mrf.mxu0
      %v2044 = vadd.f32 %v1939, %v2043
      %v2045 = vpop.f32.mrf.mxu0
      %v2046 = vpop.f32.mrf.mxu0
      %v2047 = vadd.f32 %v1939, %v2046
      %v2048 = vpop.f32.mrf.mxu0
      %2049 = vmatprep.mubr.bf16.mxu0 0
      %2050 = vmatmul.mubr.bf16.gmra.mxu0 %v1961
      %v2051 = vpop.f32.mrf.mxu0
      %v2052 = vadd.f32 %v1939, %v2051
      %v2053 = vpop.f32.mrf.mxu0
      %v2054 = vpop.f32.mrf.mxu0
      %v2055 = vadd.f32 %v1939, %v2054
      %v2056 = vpop.f32.mrf.mxu0
      %2057 = vmatprep.mubr.bf16.mxu0 0
      %2058 = vmatmul.mubr.bf16.gmra.mxu0 %v1964
      %v2059 = vpop.f32.mrf.mxu0
      %v2060 = vadd.f32 %v1939, %v2059
      %v2061 = vpop.f32.mrf.mxu0
      %v2062 = vpop.f32.mrf.mxu0
      %v2063 = vadd.f32 %v1939, %v2062
      %v2064 = vpop.f32.mrf.mxu0
      %2065 = vmatprep.mubr.bf16.mxu0 0
      %2066 = vmatmul.mubr.bf16.gmra.mxu0 %v1967
      %v2067 = vpop.f32.mrf.mxu0
      %v2068 = vadd.f32 %v1939, %v2067
      %v2069 = vpop.f32.mrf.mxu0
      %v2070 = vpop.f32.mrf.mxu0
      %v2071 = vadd.f32 %v1939, %v2070
      %v2072 = vpop.f32.mrf.mxu0
      %2073 = vmatprep.mubr.bf16.mxu0 0
      %2074 = vmatmul.mubr.bf16.gmra.mxu0 %v1970
      %v2075 = vpop.f32.mrf.mxu0
      %v2076 = vadd.f32 %v1939, %v2075
      %v2077 = vpop.f32.mrf.mxu0
      %v2078 = vpop.f32.mrf.mxu0
      %v2079 = vadd.f32 %v1939, %v2078
      %v2080 = vpop.f32.mrf.mxu0
      %2081 = vmatprep.mubr.bf16.mxu0 0
      %2082 = vmatmul.mubr.bf16.gmra.mxu0 %v1973
      %v2083 = vpop.f32.mrf.mxu0
      %v2084 = vadd.f32 %v1939, %v2083
      %v2085 = vpop.f32.mrf.mxu0
      %v2086 = vpop.f32.mrf.mxu0
      %v2087 = vadd.f32 %v1939, %v2086
      %v2088 = vpop.f32.mrf.mxu0
      %2089 = vmatprep.mubr.bf16.mxu0 0
      %2090 = vmatmul.mubr.bf16.gmra.mxu0 %v1976
      %v2091 = vpop.f32.mrf.mxu0
      %v2092 = vadd.f32 %v1939, %v2091
      %v2093 = vpop.f32.mrf.mxu0
      %v2094 = vpop.f32.mrf.mxu0
      %v2095 = vadd.f32 %v1939, %v2094
      %v2096 = vpop.f32.mrf.mxu0
      %2097 = vmatprep.mubr.bf16.mxu0 0
      %2098 = vmatmul.mubr.bf16.gmra.mxu0 %v1979
      %v2099 = vpop.f32.mrf.mxu0
      %v2100 = vadd.f32 %v1939, %v2099
      %v2101 = vpop.f32.mrf.mxu0
      %v2102 = vpop.f32.mrf.mxu0
      %v2103 = vadd.f32 %v1939, %v2102
      %v2104 = vpop.f32.mrf.mxu0
      %2105 = vmatprep.mubr.bf16.mxu0 0
      %2106 = vmatmul.mubr.bf16.gmra.mxu0 %v1982
      %v2107 = vpop.f32.mrf.mxu0
      %v2108 = vadd.f32 %v1939, %v2107
      %v2109 = vpop.f32.mrf.mxu0
      %v2110 = vpop.f32.mrf.mxu0
      %v2111 = vadd.f32 %v1939, %v2110
      %v2112 = vpop.f32.mrf.mxu0
      %2113 = vmatprep.mubr.bf16.mxu0 0
      %2114 = vmatmul.mubr.bf16.gmra.mxu0 %v1985
      %v2115 = vpop.f32.mrf.mxu0
      %v2116 = vadd.f32 %v1939, %v2115
      %v2117 = vpop.f32.mrf.mxu0
      %v2118 = vpop.f32.mrf.mxu0
      %v2119 = vadd.f32 %v1939, %v2118
      %v2120 = vpop.f32.mrf.mxu0
      %2121 = vmatprep.mubr.bf16.mxu0 0
      %2122 = vmatmul.mubr.bf16.gmra.mxu0 %v1988
      %v2123 = vpop.f32.mrf.mxu0
      %v2124 = vadd.f32 %v1939, %v2123
      %v2125 = vpop.f32.mrf.mxu0
      %v2126 = vpop.f32.mrf.mxu0
      %v2127 = vadd.f32 %v1939, %v2126
      %v2128 = vpop.f32.mrf.mxu0
      %2129 = vmatprep.mubr.bf16.mxu0 0
      %2130 = vmatmul.mubr.bf16.gmra.mxu0 %v1991
      %v2131 = vpop.f32.mrf.mxu0
      %v2132 = vadd.f32 %v1939, %v2131
      %v2133 = vpop.f32.mrf.mxu0
      %v2134 = vpop.f32.mrf.mxu0
      %v2135 = vadd.f32 %v1939, %v2134
      %v2136 = vpop.f32.mrf.mxu0
      %2137 = vmatprep.mubr.bf16.mxu0 0
      %2138 = vmatmul.mubr.bf16.gmra.mxu0 %v1994
      %v2139 = vpop.f32.mrf.mxu0
      %v2140 = vadd.f32 %v1939, %v2139
      %v2141 = vpop.f32.mrf.mxu0
      %v2142 = vpop.f32.mrf.mxu0
      %v2143 = vadd.f32 %v1939, %v2142
      %v2144 = vpop.f32.mrf.mxu0
      %2145 = vmatprep.mubr.bf16.mxu0 0
      %2146 = vmatmul.mubr.bf16.gmra.mxu0 %v1997
      %v2147 = vpop.f32.mrf.mxu0
      %v2148 = vadd.f32 %v1939, %v2147
      %v2149 = vpop.f32.mrf.mxu0
      %v2150 = vpop.f32.mrf.mxu0
      %v2151 = vadd.f32 %v1939, %v2150
      %v2152 = vpop.f32.mrf.mxu0
      %2153 = vmatprep.mubr.bf16.mxu0 0
      %2154 = vmatmul.mubr.bf16.gmra.mxu0 %v2000
      %v2155 = vpop.f32.mrf.mxu0
      %v2156 = vadd.f32 %v1939, %v2155
      %v2157 = vpop.f32.mrf.mxu0
      %v2158 = vpop.f32.mrf.mxu0
      %v2159 = vadd.f32 %v1939, %v2158
      %v2160 = vpop.f32.mrf.mxu0
      %2161 = vmatprep.mubr.bf16.mxu0 0
      %2162 = vmatmul.mubr.bf16.gmra.mxu0 %v2003
      %v2163 = vpop.f32.mrf.mxu0
      %v2164 = vadd.f32 %v1939, %v2163
      %v2165 = vpop.f32.mrf.mxu0
      %v2166 = vpop.f32.mrf.mxu0
      %v2167 = vadd.f32 %v1939, %v2166
      %v2168 = vpop.f32.mrf.mxu0
      %2169 = vdwg.mxu0
      %v2170 = vtanh.pop %v2044
      %v2171 = vtanh.pop %v2047
      %v2172 = vtanh.pop %v2052
      %v2173 = vtanh.pop %v2055
      %v2174 = vtanh.pop %v2060
      %v2175 = vtanh.pop %v2063
      %v2176 = vtanh.pop %v2068
      %v2177 = vtanh.pop %v2071
      %v2178 = vtanh.pop %v2076
      %v2179 = vtanh.pop %v2079
      %v2180 = vtanh.pop %v2084
      %v2181 = vtanh.pop %v2087
      %v2182 = vtanh.pop %v2092
      %v2183 = vtanh.pop %v2095
      %v2184 = vtanh.pop %v2100
      %v2185 = vtanh.pop %v2103
      %v2186 = vtanh.pop %v2108
      %v2187 = vtanh.pop %v2111
      %v2188 = vtanh.pop %v2116
      %v2189 = vtanh.pop %v2119
      %v2190 = vtanh.pop %v2124
      %v2191 = vtanh.pop %v2127
      %v2192 = vtanh.pop %v2132
      %v2193 = vtanh.pop %v2135
      %v2194 = vtanh.pop %v2140
      %v2195 = vtanh.pop %v2143
      %v2196 = vtanh.pop %v2148
      %v2197 = vtanh.pop %v2151
      %v2198 = vtanh.pop %v2156
      %v2199 = vtanh.pop %v2159
      %v2200 = vtanh.pop %v2164
      %v2201 = vtanh.pop %v2167
      %2202 = vst.msk [vmem:[#allocation3] sm:$0xff] %vm226, 0.0
      %2203 = vst.msk [vmem:[#allocation3 + $0x8] sm:$0xff] %vm226, 0.0
      %2204 = vst.msk [vmem:[#allocation3 + $0x10] sm:$0x3] %vm229, 0.0
      %s2205 = scalar_lea.vmem [#allocation3], 408
      %2206 = vst.msk [vmem:[%s2205] sm:$0xff] %vm226, 0.0
      %2207 = vst.msk [vmem:[%s2205 + $0x8] sm:$0xff] %vm226, 0.0
      %2208 = vst.msk [vmem:[%s2205 + $0x10] sm:$0x3] %vm229, 0.0
      %2209 = vst.msk [vmem:[#allocation3] sm:$0x1] %vm235, 0.0
      %2210 = vst.msk [vmem:[#allocation3 + $0x18] sm:$0x1] %vm235, 0.0
      %2211 = vst.msk [vmem:[#allocation3 + $0x30] sm:$0x1] %vm235, 0.0
      %2212 = vst.msk [vmem:[#allocation3 + $0x48] sm:$0x1] %vm235, 0.0
      %2213 = vst.msk [vmem:[#allocation3 + $0x60] sm:$0x1] %vm235, 0.0
      %2214 = vst.msk [vmem:[#allocation3 + $0x78] sm:$0x1] %vm235, 0.0
      %2215 = vst.msk [vmem:[#allocation3 + $0x90] sm:$0x1] %vm235, 0.0
      %2216 = vst.msk [vmem:[#allocation3 + $0xa8] sm:$0x1] %vm235, 0.0
      %2217 = vst.msk [vmem:[#allocation3 + $0xc0] sm:$0x1] %vm235, 0.0
      %2218 = vst.msk [vmem:[#allocation3 + $0xd8] sm:$0x1] %vm235, 0.0
      %2219 = vst.msk [vmem:[#allocation3 + $0xf0] sm:$0x1] %vm235, 0.0
      %2220 = vst.msk [vmem:[#allocation3 + $0x108] sm:$0x1] %vm235, 0.0
      %2221 = vst.msk [vmem:[#allocation3 + $0x120] sm:$0x1] %vm235, 0.0
      %2222 = vst.msk [vmem:[#allocation3 + $0x138] sm:$0x1] %vm235, 0.0
      %2223 = vst.msk [vmem:[#allocation3 + $0x150] sm:$0x1] %vm235, 0.0
      %2224 = vst.msk [vmem:[#allocation3 + $0x168] sm:$0x1] %vm235, 0.0
      %2225 = vst.msk [vmem:[#allocation3 + $0x180] sm:$0x1] %vm235, 0.0
      %2226 = vst.msk [vmem:[#allocation3 + $0x198] sm:$0x1] %vm235, 0.0
      %2227 = vst.msk [vmem:[#allocation3 + $0x11] sm:$0x1] %vm235, 0.0
      %2228 = vst.msk [vmem:[#allocation3 + $0x29] sm:$0x1] %vm235, 0.0
      %2229 = vst.msk [vmem:[#allocation3 + $0x41] sm:$0x1] %vm235, 0.0
      %2230 = vst.msk [vmem:[#allocation3 + $0x59] sm:$0x1] %vm235, 0.0
      %2231 = vst.msk [vmem:[#allocation3 + $0x71] sm:$0x1] %vm235, 0.0
      %2232 = vst.msk [vmem:[#allocation3 + $0x89] sm:$0x1] %vm235, 0.0
      %2233 = vst.msk [vmem:[#allocation3 + $0xa1] sm:$0x1] %vm235, 0.0
      %2234 = vst.msk [vmem:[#allocation3 + $0xb9] sm:$0x1] %vm235, 0.0
      %2235 = vst.msk [vmem:[#allocation3 + $0xd1] sm:$0x1] %vm235, 0.0
      %2236 = vst.msk [vmem:[#allocation3 + $0xe9] sm:$0x1] %vm235, 0.0
      %2237 = vst.msk [vmem:[#allocation3 + $0x101] sm:$0x1] %vm235, 0.0
      %2238 = vst.msk [vmem:[#allocation3 + $0x119] sm:$0x1] %vm235, 0.0
      %2239 = vst.msk [vmem:[#allocation3 + $0x131] sm:$0x1] %vm235, 0.0
      %2240 = vst.msk [vmem:[#allocation3 + $0x149] sm:$0x1] %vm235, 0.0
      %2241 = vst.msk [vmem:[#allocation3 + $0x161] sm:$0x1] %vm235, 0.0
      %2242 = vst.msk [vmem:[#allocation3 + $0x179] sm:$0x1] %vm235, 0.0
      %2243 = vst.msk [vmem:[#allocation3 + $0x191] sm:$0x1] %vm235, 0.0
      %2244 = vst.msk [vmem:[#allocation3 + $0x1a9] sm:$0x1] %vm235, 0.0
      %s2245 = scalar_lea.vmem [#allocation3], 24
      %2246 = vst.msk [vmem:[%s2245 + $0x1] sm:$0xff] %vm226, %v2170
      %2247 = vst.msk [vmem:[%s2245 + $0x9] sm:$0xff] %vm226, %v2171
      %2248 = vst.msk [vmem:[%s2245 + $0x19] sm:$0xff] %vm226, %v2172
      %2249 = vst.msk [vmem:[%s2245 + $0x21] sm:$0xff] %vm226, %v2173
      %2250 = vst.msk [vmem:[%s2245 + $0x31] sm:$0xff] %vm226, %v2174
      %2251 = vst.msk [vmem:[%s2245 + $0x39] sm:$0xff] %vm226, %v2175
      %2252 = vst.msk [vmem:[%s2245 + $0x49] sm:$0xff] %vm226, %v2176
      %2253 = vst.msk [vmem:[%s2245 + $0x51] sm:$0xff] %vm226, %v2177
      %2254 = vst.msk [vmem:[%s2245 + $0x61] sm:$0xff] %vm226, %v2178
      %2255 = vst.msk [vmem:[%s2245 + $0x69] sm:$0xff] %vm226, %v2179
      %2256 = vst.msk [vmem:[%s2245 + $0x79] sm:$0xff] %vm226, %v2180
      %2257 = vst.msk [vmem:[%s2245 + $0x81] sm:$0xff] %vm226, %v2181
      %2258 = vst.msk [vmem:[%s2245 + $0x91] sm:$0xff] %vm226, %v2182
      %2259 = vst.msk [vmem:[%s2245 + $0x99] sm:$0xff] %vm226, %v2183
      %2260 = vst.msk [vmem:[%s2245 + $0xa9] sm:$0xff] %vm226, %v2184
      %2261 = vst.msk [vmem:[%s2245 + $0xb1] sm:$0xff] %vm226, %v2185
      %2262 = vst.msk [vmem:[%s2245 + $0xc1] sm:$0xff] %vm226, %v2186
      %2263 = vst.msk [vmem:[%s2245 + $0xc9] sm:$0xff] %vm226, %v2187
      %2264 = vst.msk [vmem:[%s2245 + $0xd9] sm:$0xff] %vm226, %v2188
      %2265 = vst.msk [vmem:[%s2245 + $0xe1] sm:$0xff] %vm226, %v2189
      %2266 = vst.msk [vmem:[%s2245 + $0xf1] sm:$0xff] %vm226, %v2190
      %2267 = vst.msk [vmem:[%s2245 + $0xf9] sm:$0xff] %vm226, %v2191
      %2268 = vst.msk [vmem:[%s2245 + $0x109] sm:$0xff] %vm226, %v2192
      %2269 = vst.msk [vmem:[%s2245 + $0x111] sm:$0xff] %vm226, %v2193
      %2270 = vst.msk [vmem:[%s2245 + $0x121] sm:$0xff] %vm226, %v2194
      %2271 = vst.msk [vmem:[%s2245 + $0x129] sm:$0xff] %vm226, %v2195
      %2272 = vst.msk [vmem:[%s2245 + $0x139] sm:$0xff] %vm226, %v2196
      %2273 = vst.msk [vmem:[%s2245 + $0x141] sm:$0xff] %vm226, %v2197
      %2274 = vst.msk [vmem:[%s2245 + $0x151] sm:$0xff] %vm226, %v2198
      %2275 = vst.msk [vmem:[%s2245 + $0x159] sm:$0xff] %vm226, %v2199
      %2276 = vst.msk [vmem:[%s2245 + $0x169] sm:$0xff] %vm226, %v2200
      %2277 = vst.msk [vmem:[%s2245 + $0x171] sm:$0xff] %vm226, %v2201
      %v2278 = vld [vmem:[#allocation3] sm:$0xff]
      %v2279 = vld [vmem:[#allocation3 + $0x8] sm:$0xff]
      %v2280 = vld [vmem:[#allocation3 + $0x18] sm:$0xff]
      %v2281 = vld [vmem:[#allocation3 + $0x20] sm:$0xff]
      %v2282 = vld [vmem:[#allocation3 + $0x30] sm:$0xff]
      %v2283 = vld [vmem:[#allocation3 + $0x38] sm:$0xff]
      %v2284 = vld [vmem:[#allocation3 + $0x48] sm:$0xff]
      %v2285 = vld [vmem:[#allocation3 + $0x50] sm:$0xff]
      %v2286 = vld [vmem:[#allocation3 + $0x60] sm:$0xff]
      %v2287 = vld [vmem:[#allocation3 + $0x68] sm:$0xff]
      %v2288 = vld [vmem:[#allocation3 + $0x78] sm:$0xff]
      %v2289 = vld [vmem:[#allocation3 + $0x80] sm:$0xff]
      %v2290 = vld [vmem:[#allocation3 + $0x90] sm:$0xff]
      %v2291 = vld [vmem:[#allocation3 + $0x98] sm:$0xff]
      %v2292 = vld [vmem:[#allocation3 + $0xa8] sm:$0xff]
      %v2293 = vld [vmem:[#allocation3 + $0xb0] sm:$0xff]
      %v2294 = vld [vmem:[#allocation3 + $0xc0] sm:$0xff]
      %v2295 = vld [vmem:[#allocation3 + $0xc8] sm:$0xff]
      %v2296 = vld [vmem:[#allocation3 + $0xd8] sm:$0xff]
      %v2297 = vld [vmem:[#allocation3 + $0xe0] sm:$0xff]
      %v2298 = vld [vmem:[#allocation3 + $0xf0] sm:$0xff]
      %v2299 = vld [vmem:[#allocation3 + $0xf8] sm:$0xff]
      %v2300 = vld [vmem:[#allocation3 + $0x108] sm:$0xff]
      %v2301 = vld [vmem:[#allocation3 + $0x110] sm:$0xff]
      %v2302 = vld [vmem:[#allocation3 + $0x120] sm:$0xff]
      %v2303 = vld [vmem:[#allocation3 + $0x128] sm:$0xff]
      %v2304 = vld [vmem:[#allocation3 + $0x138] sm:$0xff]
      %v2305 = vld [vmem:[#allocation3 + $0x140] sm:$0xff]
      %v2306 = vld [vmem:[#allocation3 + $0x150] sm:$0xff]
      %v2307 = vld [vmem:[#allocation3 + $0x158] sm:$0xff]
      %v2308 = vld [vmem:[#allocation3 + $0x168] sm:$0xff]
      %v2309 = vld [vmem:[#allocation3 + $0x170] sm:$0xff]
      %v2310 = vld [vmem:[#allocation3 + $0x1] sm:$0xff]
      %v2311 = vld [vmem:[#allocation3 + $0x9] sm:$0xff]
      %v2312 = vld [vmem:[#allocation3 + $0x19] sm:$0xff]
      %v2313 = vld [vmem:[#allocation3 + $0x21] sm:$0xff]
      %v2314 = vld [vmem:[#allocation3 + $0x31] sm:$0xff]
      %v2315 = vld [vmem:[#allocation3 + $0x39] sm:$0xff]
      %v2316 = vld [vmem:[#allocation3 + $0x49] sm:$0xff]
      %v2317 = vld [vmem:[#allocation3 + $0x51] sm:$0xff]
      %v2318 = vld [vmem:[#allocation3 + $0x61] sm:$0xff]
      %v2319 = vld [vmem:[#allocation3 + $0x69] sm:$0xff]
      %v2320 = vld [vmem:[#allocation3 + $0x79] sm:$0xff]
      %v2321 = vld [vmem:[#allocation3 + $0x81] sm:$0xff]
      %v2322 = vld [vmem:[#allocation3 + $0x91] sm:$0xff]
      %v2323 = vld [vmem:[#allocation3 + $0x99] sm:$0xff]
      %v2324 = vld [vmem:[#allocation3 + $0xa9] sm:$0xff]
      %v2325 = vld [vmem:[#allocation3 + $0xb1] sm:$0xff]
      %v2326 = vld [vmem:[#allocation3 + $0xc1] sm:$0xff]
      %v2327 = vld [vmem:[#allocation3 + $0xc9] sm:$0xff]
      %v2328 = vld [vmem:[#allocation3 + $0xd9] sm:$0xff]
      %v2329 = vld [vmem:[#allocation3 + $0xe1] sm:$0xff]
      %v2330 = vld [vmem:[#allocation3 + $0xf1] sm:$0xff]
      %v2331 = vld [vmem:[#allocation3 + $0xf9] sm:$0xff]
      %v2332 = vld [vmem:[#allocation3 + $0x109] sm:$0xff]
      %v2333 = vld [vmem:[#allocation3 + $0x111] sm:$0xff]
      %v2334 = vld [vmem:[#allocation3 + $0x121] sm:$0xff]
      %v2335 = vld [vmem:[#allocation3 + $0x129] sm:$0xff]
      %v2336 = vld [vmem:[#allocation3 + $0x139] sm:$0xff]
      %v2337 = vld [vmem:[#allocation3 + $0x141] sm:$0xff]
      %v2338 = vld [vmem:[#allocation3 + $0x151] sm:$0xff]
      %v2339 = vld [vmem:[#allocation3 + $0x159] sm:$0xff]
      %v2340 = vld [vmem:[#allocation3 + $0x169] sm:$0xff]
      %v2341 = vld [vmem:[#allocation3 + $0x171] sm:$0xff]
      %v2342 = vld [vmem:[#allocation3 + $0x2] sm:$0xff]
      %v2343 = vld [vmem:[#allocation3 + $0xa] sm:$0xff]
      %v2344 = vld [vmem:[#allocation3 + $0x1a] sm:$0xff]
      %v2345 = vld [vmem:[#allocation3 + $0x22] sm:$0xff]
      %v2346 = vld [vmem:[#allocation3 + $0x32] sm:$0xff]
      %v2347 = vld [vmem:[#allocation3 + $0x3a] sm:$0xff]
      %v2348 = vld [vmem:[#allocation3 + $0x4a] sm:$0xff]
      %v2349 = vld [vmem:[#allocation3 + $0x52] sm:$0xff]
      %v2350 = vld [vmem:[#allocation3 + $0x62] sm:$0xff]
      %v2351 = vld [vmem:[#allocation3 + $0x6a] sm:$0xff]
      %v2352 = vld [vmem:[#allocation3 + $0x7a] sm:$0xff]
      %v2353 = vld [vmem:[#allocation3 + $0x82] sm:$0xff]
      %v2354 = vld [vmem:[#allocation3 + $0x92] sm:$0xff]
      %v2355 = vld [vmem:[#allocation3 + $0x9a] sm:$0xff]
      %v2356 = vld [vmem:[#allocation3 + $0xaa] sm:$0xff]
      %v2357 = vld [vmem:[#allocation3 + $0xb2] sm:$0xff]
      %v2358 = vld [vmem:[#allocation3 + $0xc2] sm:$0xff]
      %v2359 = vld [vmem:[#allocation3 + $0xca] sm:$0xff]
      %v2360 = vld [vmem:[#allocation3 + $0xda] sm:$0xff]
      %v2361 = vld [vmem:[#allocation3 + $0xe2] sm:$0xff]
      %v2362 = vld [vmem:[#allocation3 + $0xf2] sm:$0xff]
      %v2363 = vld [vmem:[#allocation3 + $0xfa] sm:$0xff]
      %v2364 = vld [vmem:[#allocation3 + $0x10a] sm:$0xff]
      %v2365 = vld [vmem:[#allocation3 + $0x112] sm:$0xff]
      %v2366 = vld [vmem:[#allocation3 + $0x122] sm:$0xff]
      %v2367 = vld [vmem:[#allocation3 + $0x12a] sm:$0xff]
      %v2368 = vld [vmem:[#allocation3 + $0x13a] sm:$0xff]
      %v2369 = vld [vmem:[#allocation3 + $0x142] sm:$0xff]
      %v2370 = vld [vmem:[#allocation3 + $0x152] sm:$0xff]
      %v2371 = vld [vmem:[#allocation3 + $0x15a] sm:$0xff]
      %v2372 = vld [vmem:[#allocation3 + $0x16a] sm:$0xff]
      %v2373 = vld [vmem:[#allocation3 + $0x172] sm:$0xff]
      %v2374 = vld [vmem:[%s2245] sm:$0xff]
      %v2375 = vld [vmem:[%s2245 + $0x8] sm:$0xff]
      %v2376 = vld [vmem:[%s2245 + $0x18] sm:$0xff]
      %v2377 = vld [vmem:[%s2245 + $0x20] sm:$0xff]
      %v2378 = vld [vmem:[%s2245 + $0x30] sm:$0xff]
      %v2379 = vld [vmem:[%s2245 + $0x38] sm:$0xff]
      %v2380 = vld [vmem:[%s2245 + $0x48] sm:$0xff]
      %v2381 = vld [vmem:[%s2245 + $0x50] sm:$0xff]
      %v2382 = vld [vmem:[%s2245 + $0x60] sm:$0xff]
      %v2383 = vld [vmem:[%s2245 + $0x68] sm:$0xff]
      %v2384 = vld [vmem:[%s2245 + $0x78] sm:$0xff]
      %v2385 = vld [vmem:[%s2245 + $0x80] sm:$0xff]
      %v2386 = vld [vmem:[%s2245 + $0x90] sm:$0xff]
      %v2387 = vld [vmem:[%s2245 + $0x98] sm:$0xff]
      %v2388 = vld [vmem:[%s2245 + $0xa8] sm:$0xff]
      %v2389 = vld [vmem:[%s2245 + $0xb0] sm:$0xff]
      %v2390 = vld [vmem:[%s2245 + $0xc0] sm:$0xff]
      %v2391 = vld [vmem:[%s2245 + $0xc8] sm:$0xff]
      %v2392 = vld [vmem:[%s2245 + $0xd8] sm:$0xff]
      %v2393 = vld [vmem:[%s2245 + $0xe0] sm:$0xff]
      %v2394 = vld [vmem:[%s2245 + $0xf0] sm:$0xff]
      %v2395 = vld [vmem:[%s2245 + $0xf8] sm:$0xff]
      %v2396 = vld [vmem:[%s2245 + $0x108] sm:$0xff]
      %v2397 = vld [vmem:[%s2245 + $0x110] sm:$0xff]
      %v2398 = vld [vmem:[%s2245 + $0x120] sm:$0xff]
      %v2399 = vld [vmem:[%s2245 + $0x128] sm:$0xff]
      %v2400 = vld [vmem:[%s2245 + $0x138] sm:$0xff]
      %v2401 = vld [vmem:[%s2245 + $0x140] sm:$0xff]
      %v2402 = vld [vmem:[%s2245 + $0x150] sm:$0xff]
      %v2403 = vld [vmem:[%s2245 + $0x158] sm:$0xff]
      %v2404 = vld [vmem:[%s2245 + $0x168] sm:$0xff]
      %v2405 = vld [vmem:[%s2245 + $0x170] sm:$0xff]
      %v2406 = vld [vmem:[%s2245 + $0x1] sm:$0xff]
      %v2407 = vld [vmem:[%s2245 + $0x9] sm:$0xff]
      %v2408 = vld [vmem:[%s2245 + $0x19] sm:$0xff]
      %v2409 = vld [vmem:[%s2245 + $0x21] sm:$0xff]
      %v2410 = vld [vmem:[%s2245 + $0x31] sm:$0xff]
      %v2411 = vld [vmem:[%s2245 + $0x39] sm:$0xff]
      %v2412 = vld [vmem:[%s2245 + $0x49] sm:$0xff]
      %v2413 = vld [vmem:[%s2245 + $0x51] sm:$0xff]
      %v2414 = vld [vmem:[%s2245 + $0x61] sm:$0xff]
      %v2415 = vld [vmem:[%s2245 + $0x69] sm:$0xff]
      %v2416 = vld [vmem:[%s2245 + $0x79] sm:$0xff]
      %v2417 = vld [vmem:[%s2245 + $0x81] sm:$0xff]
      %v2418 = vld [vmem:[%s2245 + $0x91] sm:$0xff]
      %v2419 = vld [vmem:[%s2245 + $0x99] sm:$0xff]
      %v2420 = vld [vmem:[%s2245 + $0xa9] sm:$0xff]
      %v2421 = vld [vmem:[%s2245 + $0xb1] sm:$0xff]
      %v2422 = vld [vmem:[%s2245 + $0xc1] sm:$0xff]
      %v2423 = vld [vmem:[%s2245 + $0xc9] sm:$0xff]
      %v2424 = vld [vmem:[%s2245 + $0xd9] sm:$0xff]
      %v2425 = vld [vmem:[%s2245 + $0xe1] sm:$0xff]
      %v2426 = vld [vmem:[%s2245 + $0xf1] sm:$0xff]
      %v2427 = vld [vmem:[%s2245 + $0xf9] sm:$0xff]
      %v2428 = vld [vmem:[%s2245 + $0x109] sm:$0xff]
      %v2429 = vld [vmem:[%s2245 + $0x111] sm:$0xff]
      %v2430 = vld [vmem:[%s2245 + $0x121] sm:$0xff]
      %v2431 = vld [vmem:[%s2245 + $0x129] sm:$0xff]
      %v2432 = vld [vmem:[%s2245 + $0x139] sm:$0xff]
      %v2433 = vld [vmem:[%s2245 + $0x141] sm:$0xff]
      %v2434 = vld [vmem:[%s2245 + $0x151] sm:$0xff]
      %v2435 = vld [vmem:[%s2245 + $0x159] sm:$0xff]
      %v2436 = vld [vmem:[%s2245 + $0x169] sm:$0xff]
      %v2437 = vld [vmem:[%s2245 + $0x171] sm:$0xff]
      %v2438 = vld [vmem:[%s2245 + $0x2] sm:$0xff]
      %v2439 = vld [vmem:[%s2245 + $0xa] sm:$0xff]
      %v2440 = vld [vmem:[%s2245 + $0x1a] sm:$0xff]
      %v2441 = vld [vmem:[%s2245 + $0x22] sm:$0xff]
      %v2442 = vld [vmem:[%s2245 + $0x32] sm:$0xff]
      %v2443 = vld [vmem:[%s2245 + $0x3a] sm:$0xff]
      %v2444 = vld [vmem:[%s2245 + $0x4a] sm:$0xff]
      %v2445 = vld [vmem:[%s2245 + $0x52] sm:$0xff]
      %v2446 = vld [vmem:[%s2245 + $0x62] sm:$0xff]
      %v2447 = vld [vmem:[%s2245 + $0x6a] sm:$0xff]
      %v2448 = vld [vmem:[%s2245 + $0x7a] sm:$0xff]
      %v2449 = vld [vmem:[%s2245 + $0x82] sm:$0xff]
      %v2450 = vld [vmem:[%s2245 + $0x92] sm:$0xff]
      %v2451 = vld [vmem:[%s2245 + $0x9a] sm:$0xff]
      %v2452 = vld [vmem:[%s2245 + $0xaa] sm:$0xff]
      %v2453 = vld [vmem:[%s2245 + $0xb2] sm:$0xff]
      %v2454 = vld [vmem:[%s2245 + $0xc2] sm:$0xff]
      %v2455 = vld [vmem:[%s2245 + $0xca] sm:$0xff]
      %v2456 = vld [vmem:[%s2245 + $0xda] sm:$0xff]
      %v2457 = vld [vmem:[%s2245 + $0xe2] sm:$0xff]
      %v2458 = vld [vmem:[%s2245 + $0xf2] sm:$0xff]
      %v2459 = vld [vmem:[%s2245 + $0xfa] sm:$0xff]
      %v2460 = vld [vmem:[%s2245 + $0x10a] sm:$0xff]
      %v2461 = vld [vmem:[%s2245 + $0x112] sm:$0xff]
      %v2462 = vld [vmem:[%s2245 + $0x122] sm:$0xff]
      %v2463 = vld [vmem:[%s2245 + $0x12a] sm:$0xff]
      %v2464 = vld [vmem:[%s2245 + $0x13a] sm:$0xff]
      %v2465 = vld [vmem:[%s2245 + $0x142] sm:$0xff]
      %v2466 = vld [vmem:[%s2245 + $0x152] sm:$0xff]
      %v2467 = vld [vmem:[%s2245 + $0x15a] sm:$0xff]
      %v2468 = vld [vmem:[%s2245 + $0x16a] sm:$0xff]
      %v2469 = vld [vmem:[%s2245 + $0x172] sm:$0xff]
      %s2470 = scalar_lea.vmem [#allocation3], 48
      %v2471 = vld [vmem:[%s2470] sm:$0xff]
      %v2472 = vld [vmem:[%s2470 + $0x8] sm:$0xff]
      %v2473 = vld [vmem:[%s2470 + $0x18] sm:$0xff]
      %v2474 = vld [vmem:[%s2470 + $0x20] sm:$0xff]
      %v2475 = vld [vmem:[%s2470 + $0x30] sm:$0xff]
      %v2476 = vld [vmem:[%s2470 + $0x38] sm:$0xff]
      %v2477 = vld [vmem:[%s2470 + $0x48] sm:$0xff]
      %v2478 = vld [vmem:[%s2470 + $0x50] sm:$0xff]
      %v2479 = vld [vmem:[%s2470 + $0x60] sm:$0xff]
      %v2480 = vld [vmem:[%s2470 + $0x68] sm:$0xff]
      %v2481 = vld [vmem:[%s2470 + $0x78] sm:$0xff]
      %v2482 = vld [vmem:[%s2470 + $0x80] sm:$0xff]
      %v2483 = vld [vmem:[%s2470 + $0x90] sm:$0xff]
      %v2484 = vld [vmem:[%s2470 + $0x98] sm:$0xff]
      %v2485 = vld [vmem:[%s2470 + $0xa8] sm:$0xff]
      %v2486 = vld [vmem:[%s2470 + $0xb0] sm:$0xff]
      %v2487 = vld [vmem:[%s2470 + $0xc0] sm:$0xff]
      %v2488 = vld [vmem:[%s2470 + $0xc8] sm:$0xff]
      %v2489 = vld [vmem:[%s2470 + $0xd8] sm:$0xff]
      %v2490 = vld [vmem:[%s2470 + $0xe0] sm:$0xff]
      %v2491 = vld [vmem:[%s2470 + $0xf0] sm:$0xff]
      %v2492 = vld [vmem:[%s2470 + $0xf8] sm:$0xff]
      %v2493 = vld [vmem:[%s2470 + $0x108] sm:$0xff]
      %v2494 = vld [vmem:[%s2470 + $0x110] sm:$0xff]
      %v2495 = vld [vmem:[%s2470 + $0x120] sm:$0xff]
      %v2496 = vld [vmem:[%s2470 + $0x128] sm:$0xff]
      %v2497 = vld [vmem:[%s2470 + $0x138] sm:$0xff]
      %v2498 = vld [vmem:[%s2470 + $0x140] sm:$0xff]
      %v2499 = vld [vmem:[%s2470 + $0x150] sm:$0xff]
      %v2500 = vld [vmem:[%s2470 + $0x158] sm:$0xff]
      %v2501 = vld [vmem:[%s2470 + $0x168] sm:$0xff]
      %v2502 = vld [vmem:[%s2470 + $0x170] sm:$0xff]
      %v2503 = vld [vmem:[%s2470 + $0x1] sm:$0xff]
      %v2504 = vld [vmem:[%s2470 + $0x9] sm:$0xff]
      %v2505 = vld [vmem:[%s2470 + $0x19] sm:$0xff]
      %v2506 = vld [vmem:[%s2470 + $0x21] sm:$0xff]
      %v2507 = vld [vmem:[%s2470 + $0x31] sm:$0xff]
      %v2508 = vld [vmem:[%s2470 + $0x39] sm:$0xff]
      %v2509 = vld [vmem:[%s2470 + $0x49] sm:$0xff]
      %v2510 = vld [vmem:[%s2470 + $0x51] sm:$0xff]
      %v2511 = vld [vmem:[%s2470 + $0x61] sm:$0xff]
      %v2512 = vld [vmem:[%s2470 + $0x69] sm:$0xff]
      %v2513 = vld [vmem:[%s2470 + $0x79] sm:$0xff]
      %v2514 = vld [vmem:[%s2470 + $0x81] sm:$0xff]
      %v2515 = vld [vmem:[%s2470 + $0x91] sm:$0xff]
      %v2516 = vld [vmem:[%s2470 + $0x99] sm:$0xff]
      %v2517 = vld [vmem:[%s2470 + $0xa9] sm:$0xff]
      %v2518 = vld [vmem:[%s2470 + $0xb1] sm:$0xff]
      %v2519 = vld [vmem:[%s2470 + $0xc1] sm:$0xff]
      %v2520 = vld [vmem:[%s2470 + $0xc9] sm:$0xff]
      %v2521 = vld [vmem:[%s2470 + $0xd9] sm:$0xff]
      %v2522 = vld [vmem:[%s2470 + $0xe1] sm:$0xff]
      %v2523 = vld [vmem:[%s2470 + $0xf1] sm:$0xff]
      %v2524 = vld [vmem:[%s2470 + $0xf9] sm:$0xff]
      %v2525 = vld [vmem:[%s2470 + $0x109] sm:$0xff]
      %v2526 = vld [vmem:[%s2470 + $0x111] sm:$0xff]
      %v2527 = vld [vmem:[%s2470 + $0x121] sm:$0xff]
      %v2528 = vld [vmem:[%s2470 + $0x129] sm:$0xff]
      %v2529 = vld [vmem:[%s2470 + $0x139] sm:$0xff]
      %v2530 = vld [vmem:[%s2470 + $0x141] sm:$0xff]
      %v2531 = vld [vmem:[%s2470 + $0x151] sm:$0xff]
      %v2532 = vld [vmem:[%s2470 + $0x159] sm:$0xff]
      %v2533 = vld [vmem:[%s2470 + $0x169] sm:$0xff]
      %v2534 = vld [vmem:[%s2470 + $0x171] sm:$0xff]
      %v2535 = vld [vmem:[%s2470 + $0x2] sm:$0xff]
      %v2536 = vld [vmem:[%s2470 + $0xa] sm:$0xff]
      %v2537 = vld [vmem:[%s2470 + $0x1a] sm:$0xff]
      %v2538 = vld [vmem:[%s2470 + $0x22] sm:$0xff]
      %v2539 = vld [vmem:[%s2470 + $0x32] sm:$0xff]
      %v2540 = vld [vmem:[%s2470 + $0x3a] sm:$0xff]
      %v2541 = vld [vmem:[%s2470 + $0x4a] sm:$0xff]
      %v2542 = vld [vmem:[%s2470 + $0x52] sm:$0xff]
      %v2543 = vld [vmem:[%s2470 + $0x62] sm:$0xff]
      %v2544 = vld [vmem:[%s2470 + $0x6a] sm:$0xff]
      %v2545 = vld [vmem:[%s2470 + $0x7a] sm:$0xff]
      %v2546 = vld [vmem:[%s2470 + $0x82] sm:$0xff]
      %v2547 = vld [vmem:[%s2470 + $0x92] sm:$0xff]
      %v2548 = vld [vmem:[%s2470 + $0x9a] sm:$0xff]
      %v2549 = vld [vmem:[%s2470 + $0xaa] sm:$0xff]
      %v2550 = vld [vmem:[%s2470 + $0xb2] sm:$0xff]
      %v2551 = vld [vmem:[%s2470 + $0xc2] sm:$0xff]
      %v2552 = vld [vmem:[%s2470 + $0xca] sm:$0xff]
      %v2553 = vld [vmem:[%s2470 + $0xda] sm:$0xff]
      %v2554 = vld [vmem:[%s2470 + $0xe2] sm:$0xff]
      %v2555 = vld [vmem:[%s2470 + $0xf2] sm:$0xff]
      %v2556 = vld [vmem:[%s2470 + $0xfa] sm:$0xff]
      %v2557 = vld [vmem:[%s2470 + $0x10a] sm:$0xff]
      %v2558 = vld [vmem:[%s2470 + $0x112] sm:$0xff]
      %v2559 = vld [vmem:[%s2470 + $0x122] sm:$0xff]
      %v2560 = vld [vmem:[%s2470 + $0x12a] sm:$0xff]
      %v2561 = vld [vmem:[%s2470 + $0x13a] sm:$0xff]
      %v2562 = vld [vmem:[%s2470 + $0x142] sm:$0xff]
      %v2563 = vld [vmem:[%s2470 + $0x152] sm:$0xff]
      %v2564 = vld [vmem:[%s2470 + $0x15a] sm:$0xff]
      %v2565 = vld [vmem:[%s2470 + $0x16a] sm:$0xff]
      %v2566 = vld [vmem:[%s2470 + $0x172] sm:$0xff]
      %2599 = vrot.lane.b32.xlu0 %v2310, 4
      %v2600 = vpop.permute.xlu0 %2599
      %2601 = vrot.lane.b32.xlu0 %v2311, 4
      %v2602 = vpop.permute.xlu0 %2601
      %2603 = vrot.lane.b32.xlu0 %v2312, 4
      %v2604 = vpop.permute.xlu0 %2603
      %2605 = vrot.lane.b32.xlu0 %v2313, 4
      %v2606 = vpop.permute.xlu0 %2605
      %2607 = vrot.lane.b32.xlu0 %v2314, 4
      %v2608 = vpop.permute.xlu0 %2607
      %2609 = vrot.lane.b32.xlu0 %v2315, 4
      %v2610 = vpop.permute.xlu0 %2609
      %2611 = vrot.lane.b32.xlu0 %v2316, 4
      %v2612 = vpop.permute.xlu0 %2611
      %2613 = vrot.lane.b32.xlu0 %v2317, 4
      %v2614 = vpop.permute.xlu0 %2613
      %2615 = vrot.lane.b32.xlu0 %v2318, 4
      %v2616 = vpop.permute.xlu0 %2615
      %2617 = vrot.lane.b32.xlu0 %v2319, 4
      %v2618 = vpop.permute.xlu0 %2617
      %2619 = vrot.lane.b32.xlu0 %v2320, 4
      %v2620 = vpop.permute.xlu0 %2619
      %2621 = vrot.lane.b32.xlu0 %v2321, 4
      %v2622 = vpop.permute.xlu0 %2621
      %2623 = vrot.lane.b32.xlu0 %v2322, 4
      %v2624 = vpop.permute.xlu0 %2623
      %2625 = vrot.lane.b32.xlu0 %v2323, 4
      %v2626 = vpop.permute.xlu0 %2625
      %2627 = vrot.lane.b32.xlu0 %v2324, 4
      %v2628 = vpop.permute.xlu0 %2627
      %2629 = vrot.lane.b32.xlu0 %v2325, 4
      %v2630 = vpop.permute.xlu0 %2629
      %2631 = vrot.lane.b32.xlu0 %v2326, 4
      %v2632 = vpop.permute.xlu0 %2631
      %2633 = vrot.lane.b32.xlu0 %v2327, 4
      %v2634 = vpop.permute.xlu0 %2633
      %2635 = vrot.lane.b32.xlu0 %v2328, 4
      %v2636 = vpop.permute.xlu0 %2635
      %2637 = vrot.lane.b32.xlu0 %v2329, 4
      %v2638 = vpop.permute.xlu0 %2637
      %2639 = vrot.lane.b32.xlu0 %v2330, 4
      %v2640 = vpop.permute.xlu0 %2639
      %2641 = vrot.lane.b32.xlu0 %v2331, 4
      %v2642 = vpop.permute.xlu0 %2641
      %2643 = vrot.lane.b32.xlu0 %v2332, 4
      %v2644 = vpop.permute.xlu0 %2643
      %2645 = vrot.lane.b32.xlu0 %v2333, 4
      %v2646 = vpop.permute.xlu0 %2645
      %2647 = vrot.lane.b32.xlu0 %v2334, 4
      %v2648 = vpop.permute.xlu0 %2647
      %2649 = vrot.lane.b32.xlu0 %v2335, 4
      %v2650 = vpop.permute.xlu0 %2649
      %2651 = vrot.lane.b32.xlu0 %v2336, 4
      %v2652 = vpop.permute.xlu0 %2651
      %2653 = vrot.lane.b32.xlu0 %v2337, 4
      %v2654 = vpop.permute.xlu0 %2653
      %2655 = vrot.lane.b32.xlu0 %v2338, 4
      %v2656 = vpop.permute.xlu0 %2655
      %2657 = vrot.lane.b32.xlu0 %v2339, 4
      %v2658 = vpop.permute.xlu0 %2657
      %2659 = vrot.lane.b32.xlu0 %v2340, 4
      %v2660 = vpop.permute.xlu0 %2659
      %2661 = vrot.lane.b32.xlu0 %v2341, 4
      %v2662 = vpop.permute.xlu0 %2661
      %2727 = vrot.lane.b32.xlu0 %v2342, 8
      %v2728 = vpop.permute.xlu0 %2727
      %2729 = vrot.lane.b32.xlu0 %v2343, 8
      %v2730 = vpop.permute.xlu0 %2729
      %2731 = vrot.lane.b32.xlu0 %v2344, 8
      %v2732 = vpop.permute.xlu0 %2731
      %2733 = vrot.lane.b32.xlu0 %v2345, 8
      %v2734 = vpop.permute.xlu0 %2733
      %2735 = vrot.lane.b32.xlu0 %v2346, 8
      %v2736 = vpop.permute.xlu0 %2735
      %2737 = vrot.lane.b32.xlu0 %v2347, 8
      %v2738 = vpop.permute.xlu0 %2737
      %2739 = vrot.lane.b32.xlu0 %v2348, 8
      %v2740 = vpop.permute.xlu0 %2739
      %2741 = vrot.lane.b32.xlu0 %v2349, 8
      %v2742 = vpop.permute.xlu0 %2741
      %2743 = vrot.lane.b32.xlu0 %v2350, 8
      %v2744 = vpop.permute.xlu0 %2743
      %2745 = vrot.lane.b32.xlu0 %v2351, 8
      %v2746 = vpop.permute.xlu0 %2745
      %2747 = vrot.lane.b32.xlu0 %v2352, 8
      %v2748 = vpop.permute.xlu0 %2747
      %2749 = vrot.lane.b32.xlu0 %v2353, 8
      %v2750 = vpop.permute.xlu0 %2749
      %2751 = vrot.lane.b32.xlu0 %v2354, 8
      %v2752 = vpop.permute.xlu0 %2751
      %2753 = vrot.lane.b32.xlu0 %v2355, 8
      %v2754 = vpop.permute.xlu0 %2753
      %2755 = vrot.lane.b32.xlu0 %v2356, 8
      %v2756 = vpop.permute.xlu0 %2755
      %2757 = vrot.lane.b32.xlu0 %v2357, 8
      %v2758 = vpop.permute.xlu0 %2757
      %2759 = vrot.lane.b32.xlu0 %v2358, 8
      %v2760 = vpop.permute.xlu0 %2759
      %2761 = vrot.lane.b32.xlu0 %v2359, 8
      %v2762 = vpop.permute.xlu0 %2761
      %2763 = vrot.lane.b32.xlu0 %v2360, 8
      %v2764 = vpop.permute.xlu0 %2763
      %2765 = vrot.lane.b32.xlu0 %v2361, 8
      %v2766 = vpop.permute.xlu0 %2765
      %2767 = vrot.lane.b32.xlu0 %v2362, 8
      %v2768 = vpop.permute.xlu0 %2767
      %2769 = vrot.lane.b32.xlu0 %v2363, 8
      %v2770 = vpop.permute.xlu0 %2769
      %2771 = vrot.lane.b32.xlu0 %v2364, 8
      %v2772 = vpop.permute.xlu0 %2771
      %2773 = vrot.lane.b32.xlu0 %v2365, 8
      %v2774 = vpop.permute.xlu0 %2773
      %2775 = vrot.lane.b32.xlu0 %v2366, 8
      %v2776 = vpop.permute.xlu0 %2775
      %2777 = vrot.lane.b32.xlu0 %v2367, 8
      %v2778 = vpop.permute.xlu0 %2777
      %2779 = vrot.lane.b32.xlu0 %v2368, 8
      %v2780 = vpop.permute.xlu0 %2779
      %2781 = vrot.lane.b32.xlu0 %v2369, 8
      %v2782 = vpop.permute.xlu0 %2781
      %2783 = vrot.lane.b32.xlu0 %v2370, 8
      %v2784 = vpop.permute.xlu0 %2783
      %2785 = vrot.lane.b32.xlu0 %v2371, 8
      %v2786 = vpop.permute.xlu0 %2785
      %2787 = vrot.lane.b32.xlu0 %v2372, 8
      %v2788 = vpop.permute.xlu0 %2787
      %2789 = vrot.lane.b32.xlu0 %v2373, 8
      %v2790 = vpop.permute.xlu0 %2789
      %2855 = vrot.lane.b32.xlu0 %v2374, 12
      %v2856 = vpop.permute.xlu0 %2855
      %2857 = vrot.lane.b32.xlu0 %v2375, 12
      %v2858 = vpop.permute.xlu0 %2857
      %2859 = vrot.lane.b32.xlu0 %v2376, 12
      %v2860 = vpop.permute.xlu0 %2859
      %2861 = vrot.lane.b32.xlu0 %v2377, 12
      %v2862 = vpop.permute.xlu0 %2861
      %2863 = vrot.lane.b32.xlu0 %v2378, 12
      %v2864 = vpop.permute.xlu0 %2863
      %2865 = vrot.lane.b32.xlu0 %v2379, 12
      %v2866 = vpop.permute.xlu0 %2865
      %2867 = vrot.lane.b32.xlu0 %v2380, 12
      %v2868 = vpop.permute.xlu0 %2867
      %2869 = vrot.lane.b32.xlu0 %v2381, 12
      %v2870 = vpop.permute.xlu0 %2869
      %2871 = vrot.lane.b32.xlu0 %v2382, 12
      %v2872 = vpop.permute.xlu0 %2871
      %2873 = vrot.lane.b32.xlu0 %v2383, 12
      %v2874 = vpop.permute.xlu0 %2873
      %2875 = vrot.lane.b32.xlu0 %v2384, 12
      %v2876 = vpop.permute.xlu0 %2875
      %2877 = vrot.lane.b32.xlu0 %v2385, 12
      %v2878 = vpop.permute.xlu0 %2877
      %2879 = vrot.lane.b32.xlu0 %v2386, 12
      %v2880 = vpop.permute.xlu0 %2879
      %2881 = vrot.lane.b32.xlu0 %v2387, 12
      %v2882 = vpop.permute.xlu0 %2881
      %2883 = vrot.lane.b32.xlu0 %v2388, 12
      %v2884 = vpop.permute.xlu0 %2883
      %2885 = vrot.lane.b32.xlu0 %v2389, 12
      %v2886 = vpop.permute.xlu0 %2885
      %2887 = vrot.lane.b32.xlu0 %v2390, 12
      %v2888 = vpop.permute.xlu0 %2887
      %2889 = vrot.lane.b32.xlu0 %v2391, 12
      %v2890 = vpop.permute.xlu0 %2889
      %2891 = vrot.lane.b32.xlu0 %v2392, 12
      %v2892 = vpop.permute.xlu0 %2891
      %2893 = vrot.lane.b32.xlu0 %v2393, 12
      %v2894 = vpop.permute.xlu0 %2893
      %2895 = vrot.lane.b32.xlu0 %v2394, 12
      %v2896 = vpop.permute.xlu0 %2895
      %2897 = vrot.lane.b32.xlu0 %v2395, 12
      %v2898 = vpop.permute.xlu0 %2897
      %2899 = vrot.lane.b32.xlu0 %v2396, 12
      %v2900 = vpop.permute.xlu0 %2899
      %2901 = vrot.lane.b32.xlu0 %v2397, 12
      %v2902 = vpop.permute.xlu0 %2901
      %2903 = vrot.lane.b32.xlu0 %v2398, 12
      %v2904 = vpop.permute.xlu0 %2903
      %2905 = vrot.lane.b32.xlu0 %v2399, 12
      %v2906 = vpop.permute.xlu0 %2905
      %2907 = vrot.lane.b32.xlu0 %v2400, 12
      %v2908 = vpop.permute.xlu0 %2907
      %2909 = vrot.lane.b32.xlu0 %v2401, 12
      %v2910 = vpop.permute.xlu0 %2909
      %2911 = vrot.lane.b32.xlu0 %v2402, 12
      %v2912 = vpop.permute.xlu0 %2911
      %2913 = vrot.lane.b32.xlu0 %v2403, 12
      %v2914 = vpop.permute.xlu0 %2913
      %2915 = vrot.lane.b32.xlu0 %v2404, 12
      %v2916 = vpop.permute.xlu0 %2915
      %2917 = vrot.lane.b32.xlu0 %v2405, 12
      %v2918 = vpop.permute.xlu0 %2917
      %2983 = vrot.lane.b32.xlu0 %v2406, 16
      %v2984 = vpop.permute.xlu0 %2983
      %2985 = vrot.lane.b32.xlu0 %v2407, 16
      %v2986 = vpop.permute.xlu0 %2985
      %2987 = vrot.lane.b32.xlu0 %v2408, 16
      %v2988 = vpop.permute.xlu0 %2987
      %2989 = vrot.lane.b32.xlu0 %v2409, 16
      %v2990 = vpop.permute.xlu0 %2989
      %2991 = vrot.lane.b32.xlu0 %v2410, 16
      %v2992 = vpop.permute.xlu0 %2991
      %2993 = vrot.lane.b32.xlu0 %v2411, 16
      %v2994 = vpop.permute.xlu0 %2993
      %2995 = vrot.lane.b32.xlu0 %v2412, 16
      %v2996 = vpop.permute.xlu0 %2995
      %2997 = vrot.lane.b32.xlu0 %v2413, 16
      %v2998 = vpop.permute.xlu0 %2997
      %2999 = vrot.lane.b32.xlu0 %v2414, 16
      %v3000 = vpop.permute.xlu0 %2999
      %3001 = vrot.lane.b32.xlu0 %v2415, 16
      %v3002 = vpop.permute.xlu0 %3001
      %3003 = vrot.lane.b32.xlu0 %v2416, 16
      %v3004 = vpop.permute.xlu0 %3003
      %3005 = vrot.lane.b32.xlu0 %v2417, 16
      %v3006 = vpop.permute.xlu0 %3005
      %3007 = vrot.lane.b32.xlu0 %v2418, 16
      %v3008 = vpop.permute.xlu0 %3007
      %3009 = vrot.lane.b32.xlu0 %v2419, 16
      %v3010 = vpop.permute.xlu0 %3009
      %3011 = vrot.lane.b32.xlu0 %v2420, 16
      %v3012 = vpop.permute.xlu0 %3011
      %3013 = vrot.lane.b32.xlu0 %v2421, 16
      %v3014 = vpop.permute.xlu0 %3013
      %3015 = vrot.lane.b32.xlu0 %v2422, 16
      %v3016 = vpop.permute.xlu0 %3015
      %3017 = vrot.lane.b32.xlu0 %v2423, 16
      %v3018 = vpop.permute.xlu0 %3017
      %3019 = vrot.lane.b32.xlu0 %v2424, 16
      %v3020 = vpop.permute.xlu0 %3019
      %3021 = vrot.lane.b32.xlu0 %v2425, 16
      %v3022 = vpop.permute.xlu0 %3021
      %3023 = vrot.lane.b32.xlu0 %v2426, 16
      %v3024 = vpop.permute.xlu0 %3023
      %3025 = vrot.lane.b32.xlu0 %v2427, 16
      %v3026 = vpop.permute.xlu0 %3025
      %3027 = vrot.lane.b32.xlu0 %v2428, 16
      %v3028 = vpop.permute.xlu0 %3027
      %3029 = vrot.lane.b32.xlu0 %v2429, 16
      %v3030 = vpop.permute.xlu0 %3029
      %3031 = vrot.lane.b32.xlu0 %v2430, 16
      %v3032 = vpop.permute.xlu0 %3031
      %3033 = vrot.lane.b32.xlu0 %v2431, 16
      %v3034 = vpop.permute.xlu0 %3033
      %3035 = vrot.lane.b32.xlu0 %v2432, 16
      %v3036 = vpop.permute.xlu0 %3035
      %3037 = vrot.lane.b32.xlu0 %v2433, 16
      %v3038 = vpop.permute.xlu0 %3037
      %3039 = vrot.lane.b32.xlu0 %v2434, 16
      %v3040 = vpop.permute.xlu0 %3039
      %3041 = vrot.lane.b32.xlu0 %v2435, 16
      %v3042 = vpop.permute.xlu0 %3041
      %3043 = vrot.lane.b32.xlu0 %v2436, 16
      %v3044 = vpop.permute.xlu0 %3043
      %3045 = vrot.lane.b32.xlu0 %v2437, 16
      %v3046 = vpop.permute.xlu0 %3045
      %3111 = vrot.lane.b32.xlu0 %v2438, 20
      %v3112 = vpop.permute.xlu0 %3111
      %3113 = vrot.lane.b32.xlu0 %v2439, 20
      %v3114 = vpop.permute.xlu0 %3113
      %3115 = vrot.lane.b32.xlu0 %v2440, 20
      %v3116 = vpop.permute.xlu0 %3115
      %3117 = vrot.lane.b32.xlu0 %v2441, 20
      %v3118 = vpop.permute.xlu0 %3117
      %3119 = vrot.lane.b32.xlu0 %v2442, 20
      %v3120 = vpop.permute.xlu0 %3119
      %3121 = vrot.lane.b32.xlu0 %v2443, 20
      %v3122 = vpop.permute.xlu0 %3121
      %3123 = vrot.lane.b32.xlu0 %v2444, 20
      %v3124 = vpop.permute.xlu0 %3123
      %3125 = vrot.lane.b32.xlu0 %v2445, 20
      %v3126 = vpop.permute.xlu0 %3125
      %3127 = vrot.lane.b32.xlu0 %v2446, 20
      %v3128 = vpop.permute.xlu0 %3127
      %3129 = vrot.lane.b32.xlu0 %v2447, 20
      %v3130 = vpop.permute.xlu0 %3129
      %3131 = vrot.lane.b32.xlu0 %v2448, 20
      %v3132 = vpop.permute.xlu0 %3131
      %3133 = vrot.lane.b32.xlu0 %v2449, 20
      %v3134 = vpop.permute.xlu0 %3133
      %3135 = vrot.lane.b32.xlu0 %v2450, 20
      %v3136 = vpop.permute.xlu0 %3135
      %3137 = vrot.lane.b32.xlu0 %v2451, 20
      %v3138 = vpop.permute.xlu0 %3137
      %3139 = vrot.lane.b32.xlu0 %v2452, 20
      %v3140 = vpop.permute.xlu0 %3139
      %3141 = vrot.lane.b32.xlu0 %v2453, 20
      %v3142 = vpop.permute.xlu0 %3141
      %3143 = vrot.lane.b32.xlu0 %v2454, 20
      %v3144 = vpop.permute.xlu0 %3143
      %3145 = vrot.lane.b32.xlu0 %v2455, 20
      %v3146 = vpop.permute.xlu0 %3145
      %3147 = vrot.lane.b32.xlu0 %v2456, 20
      %v3148 = vpop.permute.xlu0 %3147
      %3149 = vrot.lane.b32.xlu0 %v2457, 20
      %v3150 = vpop.permute.xlu0 %3149
      %3151 = vrot.lane.b32.xlu0 %v2458, 20
      %v3152 = vpop.permute.xlu0 %3151
      %3153 = vrot.lane.b32.xlu0 %v2459, 20
      %v3154 = vpop.permute.xlu0 %3153
      %3155 = vrot.lane.b32.xlu0 %v2460, 20
      %v3156 = vpop.permute.xlu0 %3155
      %3157 = vrot.lane.b32.xlu0 %v2461, 20
      %v3158 = vpop.permute.xlu0 %3157
      %3159 = vrot.lane.b32.xlu0 %v2462, 20
      %v3160 = vpop.permute.xlu0 %3159
      %3161 = vrot.lane.b32.xlu0 %v2463, 20
      %v3162 = vpop.permute.xlu0 %3161
      %3163 = vrot.lane.b32.xlu0 %v2464, 20
      %v3164 = vpop.permute.xlu0 %3163
      %3165 = vrot.lane.b32.xlu0 %v2465, 20
      %v3166 = vpop.permute.xlu0 %3165
      %3167 = vrot.lane.b32.xlu0 %v2466, 20
      %v3168 = vpop.permute.xlu0 %3167
      %3169 = vrot.lane.b32.xlu0 %v2467, 20
      %v3170 = vpop.permute.xlu0 %3169
      %3171 = vrot.lane.b32.xlu0 %v2468, 20
      %v3172 = vpop.permute.xlu0 %3171
      %3173 = vrot.lane.b32.xlu0 %v2469, 20
      %v3174 = vpop.permute.xlu0 %3173
      %3239 = vrot.lane.b32.xlu0 %v2471, 24
      %v3240 = vpop.permute.xlu0 %3239
      %3241 = vrot.lane.b32.xlu0 %v2472, 24
      %v3242 = vpop.permute.xlu0 %3241
      %3243 = vrot.lane.b32.xlu0 %v2473, 24
      %v3244 = vpop.permute.xlu0 %3243
      %3245 = vrot.lane.b32.xlu0 %v2474, 24
      %v3246 = vpop.permute.xlu0 %3245
      %3247 = vrot.lane.b32.xlu0 %v2475, 24
      %v3248 = vpop.permute.xlu0 %3247
      %3249 = vrot.lane.b32.xlu0 %v2476, 24
      %v3250 = vpop.permute.xlu0 %3249
      %3251 = vrot.lane.b32.xlu0 %v2477, 24
      %v3252 = vpop.permute.xlu0 %3251
      %3253 = vrot.lane.b32.xlu0 %v2478, 24
      %v3254 = vpop.permute.xlu0 %3253
      %3255 = vrot.lane.b32.xlu0 %v2479, 24
      %v3256 = vpop.permute.xlu0 %3255
      %3257 = vrot.lane.b32.xlu0 %v2480, 24
      %v3258 = vpop.permute.xlu0 %3257
      %3259 = vrot.lane.b32.xlu0 %v2481, 24
      %v3260 = vpop.permute.xlu0 %3259
      %3261 = vrot.lane.b32.xlu0 %v2482, 24
      %v3262 = vpop.permute.xlu0 %3261
      %3263 = vrot.lane.b32.xlu0 %v2483, 24
      %v3264 = vpop.permute.xlu0 %3263
      %3265 = vrot.lane.b32.xlu0 %v2484, 24
      %v3266 = vpop.permute.xlu0 %3265
      %3267 = vrot.lane.b32.xlu0 %v2485, 24
      %v3268 = vpop.permute.xlu0 %3267
      %3269 = vrot.lane.b32.xlu0 %v2486, 24
      %v3270 = vpop.permute.xlu0 %3269
      %3271 = vrot.lane.b32.xlu0 %v2487, 24
      %v3272 = vpop.permute.xlu0 %3271
      %3273 = vrot.lane.b32.xlu0 %v2488, 24
      %v3274 = vpop.permute.xlu0 %3273
      %3275 = vrot.lane.b32.xlu0 %v2489, 24
      %v3276 = vpop.permute.xlu0 %3275
      %3277 = vrot.lane.b32.xlu0 %v2490, 24
      %v3278 = vpop.permute.xlu0 %3277
      %3279 = vrot.lane.b32.xlu0 %v2491, 24
      %v3280 = vpop.permute.xlu0 %3279
      %3281 = vrot.lane.b32.xlu0 %v2492, 24
      %v3282 = vpop.permute.xlu0 %3281
      %3283 = vrot.lane.b32.xlu0 %v2493, 24
      %v3284 = vpop.permute.xlu0 %3283
      %3285 = vrot.lane.b32.xlu0 %v2494, 24
      %v3286 = vpop.permute.xlu0 %3285
      %3287 = vrot.lane.b32.xlu0 %v2495, 24
      %v3288 = vpop.permute.xlu0 %3287
      %3289 = vrot.lane.b32.xlu0 %v2496, 24
      %v3290 = vpop.permute.xlu0 %3289
      %3291 = vrot.lane.b32.xlu0 %v2497, 24
      %v3292 = vpop.permute.xlu0 %3291
      %3293 = vrot.lane.b32.xlu0 %v2498, 24
      %v3294 = vpop.permute.xlu0 %3293
      %3295 = vrot.lane.b32.xlu0 %v2499, 24
      %v3296 = vpop.permute.xlu0 %3295
      %3297 = vrot.lane.b32.xlu0 %v2500, 24
      %v3298 = vpop.permute.xlu0 %3297
      %3299 = vrot.lane.b32.xlu0 %v2501, 24
      %v3300 = vpop.permute.xlu0 %3299
      %3301 = vrot.lane.b32.xlu0 %v2502, 24
      %v3302 = vpop.permute.xlu0 %3301
      %3367 = vrot.lane.b32.xlu0 %v2503, 28
      %v3368 = vpop.permute.xlu0 %3367
      %3369 = vrot.lane.b32.xlu0 %v2504, 28
      %v3370 = vpop.permute.xlu0 %3369
      %3371 = vrot.lane.b32.xlu0 %v2505, 28
      %v3372 = vpop.permute.xlu0 %3371
      %3373 = vrot.lane.b32.xlu0 %v2506, 28
      %v3374 = vpop.permute.xlu0 %3373
      %3375 = vrot.lane.b32.xlu0 %v2507, 28
      %v3376 = vpop.permute.xlu0 %3375
      %3377 = vrot.lane.b32.xlu0 %v2508, 28
      %v3378 = vpop.permute.xlu0 %3377
      %3379 = vrot.lane.b32.xlu0 %v2509, 28
      %v3380 = vpop.permute.xlu0 %3379
      %3381 = vrot.lane.b32.xlu0 %v2510, 28
      %v3382 = vpop.permute.xlu0 %3381
      %3383 = vrot.lane.b32.xlu0 %v2511, 28
      %v3384 = vpop.permute.xlu0 %3383
      %3385 = vrot.lane.b32.xlu0 %v2512, 28
      %v3386 = vpop.permute.xlu0 %3385
      %3387 = vrot.lane.b32.xlu0 %v2513, 28
      %v3388 = vpop.permute.xlu0 %3387
      %3389 = vrot.lane.b32.xlu0 %v2514, 28
      %v3390 = vpop.permute.xlu0 %3389
      %3391 = vrot.lane.b32.xlu0 %v2515, 28
      %v3392 = vpop.permute.xlu0 %3391
      %3393 = vrot.lane.b32.xlu0 %v2516, 28
      %v3394 = vpop.permute.xlu0 %3393
      %3395 = vrot.lane.b32.xlu0 %v2517, 28
      %v3396 = vpop.permute.xlu0 %3395
      %3397 = vrot.lane.b32.xlu0 %v2518, 28
      %v3398 = vpop.permute.xlu0 %3397
      %3399 = vrot.lane.b32.xlu0 %v2519, 28
      %v3400 = vpop.permute.xlu0 %3399
      %3401 = vrot.lane.b32.xlu0 %v2520, 28
      %v3402 = vpop.permute.xlu0 %3401
      %3403 = vrot.lane.b32.xlu0 %v2521, 28
      %v3404 = vpop.permute.xlu0 %3403
      %3405 = vrot.lane.b32.xlu0 %v2522, 28
      %v3406 = vpop.permute.xlu0 %3405
      %3407 = vrot.lane.b32.xlu0 %v2523, 28
      %v3408 = vpop.permute.xlu0 %3407
      %3409 = vrot.lane.b32.xlu0 %v2524, 28
      %v3410 = vpop.permute.xlu0 %3409
      %3411 = vrot.lane.b32.xlu0 %v2525, 28
      %v3412 = vpop.permute.xlu0 %3411
      %3413 = vrot.lane.b32.xlu0 %v2526, 28
      %v3414 = vpop.permute.xlu0 %3413
      %3415 = vrot.lane.b32.xlu0 %v2527, 28
      %v3416 = vpop.permute.xlu0 %3415
      %3417 = vrot.lane.b32.xlu0 %v2528, 28
      %v3418 = vpop.permute.xlu0 %3417
      %3419 = vrot.lane.b32.xlu0 %v2529, 28
      %v3420 = vpop.permute.xlu0 %3419
      %3421 = vrot.lane.b32.xlu0 %v2530, 28
      %v3422 = vpop.permute.xlu0 %3421
      %3423 = vrot.lane.b32.xlu0 %v2531, 28
      %v3424 = vpop.permute.xlu0 %3423
      %3425 = vrot.lane.b32.xlu0 %v2532, 28
      %v3426 = vpop.permute.xlu0 %3425
      %3427 = vrot.lane.b32.xlu0 %v2533, 28
      %v3428 = vpop.permute.xlu0 %3427
      %3429 = vrot.lane.b32.xlu0 %v2534, 28
      %v3430 = vpop.permute.xlu0 %3429
      %3495 = vrot.lane.b32.xlu0 %v2535, 32
      %v3496 = vpop.permute.xlu0 %3495
      %3497 = vrot.lane.b32.xlu0 %v2536, 32
      %v3498 = vpop.permute.xlu0 %3497
      %3499 = vrot.lane.b32.xlu0 %v2537, 32
      %v3500 = vpop.permute.xlu0 %3499
      %3501 = vrot.lane.b32.xlu0 %v2538, 32
      %v3502 = vpop.permute.xlu0 %3501
      %3503 = vrot.lane.b32.xlu0 %v2539, 32
      %v3504 = vpop.permute.xlu0 %3503
      %3505 = vrot.lane.b32.xlu0 %v2540, 32
      %v3506 = vpop.permute.xlu0 %3505
      %3507 = vrot.lane.b32.xlu0 %v2541, 32
      %v3508 = vpop.permute.xlu0 %3507
      %3509 = vrot.lane.b32.xlu0 %v2542, 32
      %v3510 = vpop.permute.xlu0 %3509
      %3511 = vrot.lane.b32.xlu0 %v2543, 32
      %v3512 = vpop.permute.xlu0 %3511
      %3513 = vrot.lane.b32.xlu0 %v2544, 32
      %v3514 = vpop.permute.xlu0 %3513
      %3515 = vrot.lane.b32.xlu0 %v2545, 32
      %v3516 = vpop.permute.xlu0 %3515
      %3517 = vrot.lane.b32.xlu0 %v2546, 32
      %v3518 = vpop.permute.xlu0 %3517
      %3519 = vrot.lane.b32.xlu0 %v2547, 32
      %v3520 = vpop.permute.xlu0 %3519
      %3521 = vrot.lane.b32.xlu0 %v2548, 32
      %v3522 = vpop.permute.xlu0 %3521
      %3523 = vrot.lane.b32.xlu0 %v2549, 32
      %v3524 = vpop.permute.xlu0 %3523
      %3525 = vrot.lane.b32.xlu0 %v2550, 32
      %v3526 = vpop.permute.xlu0 %3525
      %3527 = vrot.lane.b32.xlu0 %v2551, 32
      %v3528 = vpop.permute.xlu0 %3527
      %3529 = vrot.lane.b32.xlu0 %v2552, 32
      %v3530 = vpop.permute.xlu0 %3529
      %3531 = vrot.lane.b32.xlu0 %v2553, 32
      %v3532 = vpop.permute.xlu0 %3531
      %3533 = vrot.lane.b32.xlu0 %v2554, 32
      %v3534 = vpop.permute.xlu0 %3533
      %3535 = vrot.lane.b32.xlu0 %v2555, 32
      %v3536 = vpop.permute.xlu0 %3535
      %3537 = vrot.lane.b32.xlu0 %v2556, 32
      %v3538 = vpop.permute.xlu0 %3537
      %3539 = vrot.lane.b32.xlu0 %v2557, 32
      %v3540 = vpop.permute.xlu0 %3539
      %3541 = vrot.lane.b32.xlu0 %v2558, 32
      %v3542 = vpop.permute.xlu0 %3541
      %3543 = vrot.lane.b32.xlu0 %v2559, 32
      %v3544 = vpop.permute.xlu0 %3543
      %3545 = vrot.lane.b32.xlu0 %v2560, 32
      %v3546 = vpop.permute.xlu0 %3545
      %3547 = vrot.lane.b32.xlu0 %v2561, 32
      %v3548 = vpop.permute.xlu0 %3547
      %3549 = vrot.lane.b32.xlu0 %v2562, 32
      %v3550 = vpop.permute.xlu0 %3549
      %3551 = vrot.lane.b32.xlu0 %v2563, 32
      %v3552 = vpop.permute.xlu0 %3551
      %3553 = vrot.lane.b32.xlu0 %v2564, 32
      %v3554 = vpop.permute.xlu0 %3553
      %3555 = vrot.lane.b32.xlu0 %v2565, 32
      %v3556 = vpop.permute.xlu0 %3555
      %3557 = vrot.lane.b32.xlu0 %v2566, 32
      %v3558 = vpop.permute.xlu0 %3557
      %v3591 = vsel %vm226, %v2278, %v2600
      %v3592 = vsel %vm226, %v2279, %v2602
      %v3593 = vsel %vm226, %v2280, %v2604
      %v3594 = vsel %vm226, %v2281, %v2606
      %v3595 = vsel %vm226, %v2282, %v2608
      %v3596 = vsel %vm226, %v2283, %v2610
      %v3597 = vsel %vm226, %v2284, %v2612
      %v3598 = vsel %vm226, %v2285, %v2614
      %v3599 = vsel %vm226, %v2286, %v2616
      %v3600 = vsel %vm226, %v2287, %v2618
      %v3601 = vsel %vm226, %v2288, %v2620
      %v3602 = vsel %vm226, %v2289, %v2622
      %v3603 = vsel %vm226, %v2290, %v2624
      %v3604 = vsel %vm226, %v2291, %v2626
      %v3605 = vsel %vm226, %v2292, %v2628
      %v3606 = vsel %vm226, %v2293, %v2630
      %v3607 = vsel %vm226, %v2294, %v2632
      %v3608 = vsel %vm226, %v2295, %v2634
      %v3609 = vsel %vm226, %v2296, %v2636
      %v3610 = vsel %vm226, %v2297, %v2638
      %v3611 = vsel %vm226, %v2298, %v2640
      %v3612 = vsel %vm226, %v2299, %v2642
      %v3613 = vsel %vm226, %v2300, %v2644
      %v3614 = vsel %vm226, %v2301, %v2646
      %v3615 = vsel %vm226, %v2302, %v2648
      %v3616 = vsel %vm226, %v2303, %v2650
      %v3617 = vsel %vm226, %v2304, %v2652
      %v3618 = vsel %vm226, %v2305, %v2654
      %v3619 = vsel %vm226, %v2306, %v2656
      %v3620 = vsel %vm226, %v2307, %v2658
      %v3621 = vsel %vm226, %v2308, %v2660
      %v3622 = vsel %vm226, %v2309, %v2662
      %v3623 = vsel %vm1682, %v3591, %v2728
      %v3624 = vsel %vm1682, %v3592, %v2730
      %v3625 = vsel %vm1682, %v3593, %v2732
      %v3626 = vsel %vm1682, %v3594, %v2734
      %v3627 = vsel %vm1682, %v3595, %v2736
      %v3628 = vsel %vm1682, %v3596, %v2738
      %v3629 = vsel %vm1682, %v3597, %v2740
      %v3630 = vsel %vm1682, %v3598, %v2742
      %v3631 = vsel %vm1682, %v3599, %v2744
      %v3632 = vsel %vm1682, %v3600, %v2746
      %v3633 = vsel %vm1682, %v3601, %v2748
      %v3634 = vsel %vm1682, %v3602, %v2750
      %v3635 = vsel %vm1682, %v3603, %v2752
      %v3636 = vsel %vm1682, %v3604, %v2754
      %v3637 = vsel %vm1682, %v3605, %v2756
      %v3638 = vsel %vm1682, %v3606, %v2758
      %v3639 = vsel %vm1682, %v3607, %v2760
      %v3640 = vsel %vm1682, %v3608, %v2762
      %v3641 = vsel %vm1682, %v3609, %v2764
      %v3642 = vsel %vm1682, %v3610, %v2766
      %v3643 = vsel %vm1682, %v3611, %v2768
      %v3644 = vsel %vm1682, %v3612, %v2770
      %v3645 = vsel %vm1682, %v3613, %v2772
      %v3646 = vsel %vm1682, %v3614, %v2774
      %v3647 = vsel %vm1682, %v3615, %v2776
      %v3648 = vsel %vm1682, %v3616, %v2778
      %v3649 = vsel %vm1682, %v3617, %v2780
      %v3650 = vsel %vm1682, %v3618, %v2782
      %v3651 = vsel %vm1682, %v3619, %v2784
      %v3652 = vsel %vm1682, %v3620, %v2786
      %v3653 = vsel %vm1682, %v3621, %v2788
      %v3654 = vsel %vm1682, %v3622, %v2790
      %v3655 = vsel %vm1715, %v3623, %v2856
      %v3656 = vsel %vm1715, %v3624, %v2858
      %v3657 = vsel %vm1715, %v3625, %v2860
      %v3658 = vsel %vm1715, %v3626, %v2862
      %v3659 = vsel %vm1715, %v3627, %v2864
      %v3660 = vsel %vm1715, %v3628, %v2866
      %v3661 = vsel %vm1715, %v3629, %v2868
      %v3662 = vsel %vm1715, %v3630, %v2870
      %v3663 = vsel %vm1715, %v3631, %v2872
      %v3664 = vsel %vm1715, %v3632, %v2874
      %v3665 = vsel %vm1715, %v3633, %v2876
      %v3666 = vsel %vm1715, %v3634, %v2878
      %v3667 = vsel %vm1715, %v3635, %v2880
      %v3668 = vsel %vm1715, %v3636, %v2882
      %v3669 = vsel %vm1715, %v3637, %v2884
      %v3670 = vsel %vm1715, %v3638, %v2886
      %v3671 = vsel %vm1715, %v3639, %v2888
      %v3672 = vsel %vm1715, %v3640, %v2890
      %v3673 = vsel %vm1715, %v3641, %v2892
      %v3674 = vsel %vm1715, %v3642, %v2894
      %v3675 = vsel %vm1715, %v3643, %v2896
      %v3676 = vsel %vm1715, %v3644, %v2898
      %v3677 = vsel %vm1715, %v3645, %v2900
      %v3678 = vsel %vm1715, %v3646, %v2902
      %v3679 = vsel %vm1715, %v3647, %v2904
      %v3680 = vsel %vm1715, %v3648, %v2906
      %v3681 = vsel %vm1715, %v3649, %v2908
      %v3682 = vsel %vm1715, %v3650, %v2910
      %v3683 = vsel %vm1715, %v3651, %v2912
      %v3684 = vsel %vm1715, %v3652, %v2914
      %v3685 = vsel %vm1715, %v3653, %v2916
      %v3686 = vsel %vm1715, %v3654, %v2918
      %v3687 = vsel %vm1748, %v3655, %v2984
      %v3688 = vsel %vm1748, %v3656, %v2986
      %v3689 = vsel %vm1748, %v3657, %v2988
      %v3690 = vsel %vm1748, %v3658, %v2990
      %v3691 = vsel %vm1748, %v3659, %v2992
      %v3692 = vsel %vm1748, %v3660, %v2994
      %v3693 = vsel %vm1748, %v3661, %v2996
      %v3694 = vsel %vm1748, %v3662, %v2998
      %v3695 = vsel %vm1748, %v3663, %v3000
      %v3696 = vsel %vm1748, %v3664, %v3002
      %v3697 = vsel %vm1748, %v3665, %v3004
      %v3698 = vsel %vm1748, %v3666, %v3006
      %v3699 = vsel %vm1748, %v3667, %v3008
      %v3700 = vsel %vm1748, %v3668, %v3010
      %v3701 = vsel %vm1748, %v3669, %v3012
      %v3702 = vsel %vm1748, %v3670, %v3014
      %v3703 = vsel %vm1748, %v3671, %v3016
      %v3704 = vsel %vm1748, %v3672, %v3018
      %v3705 = vsel %vm1748, %v3673, %v3020
      %v3706 = vsel %vm1748, %v3674, %v3022
      %v3707 = vsel %vm1748, %v3675, %v3024
      %v3708 = vsel %vm1748, %v3676, %v3026
      %v3709 = vsel %vm1748, %v3677, %v3028
      %v3710 = vsel %vm1748, %v3678, %v3030
      %v3711 = vsel %vm1748, %v3679, %v3032
      %v3712 = vsel %vm1748, %v3680, %v3034
      %v3713 = vsel %vm1748, %v3681, %v3036
      %v3714 = vsel %vm1748, %v3682, %v3038
      %v3715 = vsel %vm1748, %v3683, %v3040
      %v3716 = vsel %vm1748, %v3684, %v3042
      %v3717 = vsel %vm1748, %v3685, %v3044
      %v3718 = vsel %vm1748, %v3686, %v3046
      %v3719 = vsel %vm1781, %v3687, %v3112
      %v3720 = vsel %vm1781, %v3688, %v3114
      %v3721 = vsel %vm1781, %v3689, %v3116
      %v3722 = vsel %vm1781, %v3690, %v3118
      %v3723 = vsel %vm1781, %v3691, %v3120
      %v3724 = vsel %vm1781, %v3692, %v3122
      %v3725 = vsel %vm1781, %v3693, %v3124
      %v3726 = vsel %vm1781, %v3694, %v3126
      %v3727 = vsel %vm1781, %v3695, %v3128
      %v3728 = vsel %vm1781, %v3696, %v3130
      %v3729 = vsel %vm1781, %v3697, %v3132
      %v3730 = vsel %vm1781, %v3698, %v3134
      %v3731 = vsel %vm1781, %v3699, %v3136
      %v3732 = vsel %vm1781, %v3700, %v3138
      %v3733 = vsel %vm1781, %v3701, %v3140
      %v3734 = vsel %vm1781, %v3702, %v3142
      %v3735 = vsel %vm1781, %v3703, %v3144
      %v3736 = vsel %vm1781, %v3704, %v3146
      %v3737 = vsel %vm1781, %v3705, %v3148
      %v3738 = vsel %vm1781, %v3706, %v3150
      %v3739 = vsel %vm1781, %v3707, %v3152
      %v3740 = vsel %vm1781, %v3708, %v3154
      %v3741 = vsel %vm1781, %v3709, %v3156
      %v3742 = vsel %vm1781, %v3710, %v3158
      %v3743 = vsel %vm1781, %v3711, %v3160
      %v3744 = vsel %vm1781, %v3712, %v3162
      %v3745 = vsel %vm1781, %v3713, %v3164
      %v3746 = vsel %vm1781, %v3714, %v3166
      %v3747 = vsel %vm1781, %v3715, %v3168
      %v3748 = vsel %vm1781, %v3716, %v3170
      %v3749 = vsel %vm1781, %v3717, %v3172
      %v3750 = vsel %vm1781, %v3718, %v3174
      %v3751 = vsel %vm1814, %v3719, %v3240
      %v3752 = vsel %vm1814, %v3720, %v3242
      %v3753 = vsel %vm1814, %v3721, %v3244
      %v3754 = vsel %vm1814, %v3722, %v3246
      %v3755 = vsel %vm1814, %v3723, %v3248
      %v3756 = vsel %vm1814, %v3724, %v3250
      %v3757 = vsel %vm1814, %v3725, %v3252
      %v3758 = vsel %vm1814, %v3726, %v3254
      %v3759 = vsel %vm1814, %v3727, %v3256
      %v3760 = vsel %vm1814, %v3728, %v3258
      %v3761 = vsel %vm1814, %v3729, %v3260
      %v3762 = vsel %vm1814, %v3730, %v3262
      %v3763 = vsel %vm1814, %v3731, %v3264
      %v3764 = vsel %vm1814, %v3732, %v3266
      %v3765 = vsel %vm1814, %v3733, %v3268
      %v3766 = vsel %vm1814, %v3734, %v3270
      %v3767 = vsel %vm1814, %v3735, %v3272
      %v3768 = vsel %vm1814, %v3736, %v3274
      %v3769 = vsel %vm1814, %v3737, %v3276
      %v3770 = vsel %vm1814, %v3738, %v3278
      %v3771 = vsel %vm1814, %v3739, %v3280
      %v3772 = vsel %vm1814, %v3740, %v3282
      %v3773 = vsel %vm1814, %v3741, %v3284
      %v3774 = vsel %vm1814, %v3742, %v3286
      %v3775 = vsel %vm1814, %v3743, %v3288
      %v3776 = vsel %vm1814, %v3744, %v3290
      %v3777 = vsel %vm1814, %v3745, %v3292
      %v3778 = vsel %vm1814, %v3746, %v3294
      %v3779 = vsel %vm1814, %v3747, %v3296
      %v3780 = vsel %vm1814, %v3748, %v3298
      %v3781 = vsel %vm1814, %v3749, %v3300
      %v3782 = vsel %vm1814, %v3750, %v3302
      %v3783 = vsel %vm1847, %v3751, %v3368
      %v3784 = vsel %vm1847, %v3752, %v3370
      %v3785 = vsel %vm1847, %v3753, %v3372
      %v3786 = vsel %vm1847, %v3754, %v3374
      %v3787 = vsel %vm1847, %v3755, %v3376
      %v3788 = vsel %vm1847, %v3756, %v3378
      %v3789 = vsel %vm1847, %v3757, %v3380
      %v3790 = vsel %vm1847, %v3758, %v3382
      %v3791 = vsel %vm1847, %v3759, %v3384
      %v3792 = vsel %vm1847, %v3760, %v3386
      %v3793 = vsel %vm1847, %v3761, %v3388
      %v3794 = vsel %vm1847, %v3762, %v3390
      %v3795 = vsel %vm1847, %v3763, %v3392
      %v3796 = vsel %vm1847, %v3764, %v3394
      %v3797 = vsel %vm1847, %v3765, %v3396
      %v3798 = vsel %vm1847, %v3766, %v3398
      %v3799 = vsel %vm1847, %v3767, %v3400
      %v3800 = vsel %vm1847, %v3768, %v3402
      %v3801 = vsel %vm1847, %v3769, %v3404
      %v3802 = vsel %vm1847, %v3770, %v3406
      %v3803 = vsel %vm1847, %v3771, %v3408
      %v3804 = vsel %vm1847, %v3772, %v3410
      %v3805 = vsel %vm1847, %v3773, %v3412
      %v3806 = vsel %vm1847, %v3774, %v3414
      %v3807 = vsel %vm1847, %v3775, %v3416
      %v3808 = vsel %vm1847, %v3776, %v3418
      %v3809 = vsel %vm1847, %v3777, %v3420
      %v3810 = vsel %vm1847, %v3778, %v3422
      %v3811 = vsel %vm1847, %v3779, %v3424
      %v3812 = vsel %vm1847, %v3780, %v3426
      %v3813 = vsel %vm1847, %v3781, %v3428
      %v3814 = vsel %vm1847, %v3782, %v3430
      %v3815 = vsel %vm1880, %v3783, %v3496
      %v3816 = vsel %vm1880, %v3784, %v3498
      %v3817 = vsel %vm1880, %v3785, %v3500
      %v3818 = vsel %vm1880, %v3786, %v3502
      %v3819 = vsel %vm1880, %v3787, %v3504
      %v3820 = vsel %vm1880, %v3788, %v3506
      %v3821 = vsel %vm1880, %v3789, %v3508
      %v3822 = vsel %vm1880, %v3790, %v3510
      %v3823 = vsel %vm1880, %v3791, %v3512
      %v3824 = vsel %vm1880, %v3792, %v3514
      %v3825 = vsel %vm1880, %v3793, %v3516
      %v3826 = vsel %vm1880, %v3794, %v3518
      %v3827 = vsel %vm1880, %v3795, %v3520
      %v3828 = vsel %vm1880, %v3796, %v3522
      %v3829 = vsel %vm1880, %v3797, %v3524
      %v3830 = vsel %vm1880, %v3798, %v3526
      %v3831 = vsel %vm1880, %v3799, %v3528
      %v3832 = vsel %vm1880, %v3800, %v3530
      %v3833 = vsel %vm1880, %v3801, %v3532
      %v3834 = vsel %vm1880, %v3802, %v3534
      %v3835 = vsel %vm1880, %v3803, %v3536
      %v3836 = vsel %vm1880, %v3804, %v3538
      %v3837 = vsel %vm1880, %v3805, %v3540
      %v3838 = vsel %vm1880, %v3806, %v3542
      %v3839 = vsel %vm1880, %v3807, %v3544
      %v3840 = vsel %vm1880, %v3808, %v3546
      %v3841 = vsel %vm1880, %v3809, %v3548
      %v3842 = vsel %vm1880, %v3810, %v3550
      %v3843 = vsel %vm1880, %v3811, %v3552
      %v3844 = vsel %vm1880, %v3812, %v3554
      %v3845 = vsel %vm1880, %v3813, %v3556
      %v3846 = vsel %vm1880, %v3814, %v3558
      %v3847 = vpack.c.bf16 %v3816, %v3815
      %v3848 = vpack.c.bf16 %v3818, %v3817
      %v3849 = vpack.c.bf16 %v3820, %v3819
      %v3850 = vpack.c.bf16 %v3822, %v3821
      %v3851 = vpack.c.bf16 %v3824, %v3823
      %v3852 = vpack.c.bf16 %v3826, %v3825
      %v3853 = vpack.c.bf16 %v3828, %v3827
      %v3854 = vpack.c.bf16 %v3830, %v3829
      %v3855 = vpack.c.bf16 %v3832, %v3831
      %v3856 = vpack.c.bf16 %v3834, %v3833
      %v3857 = vpack.c.bf16 %v3836, %v3835
      %v3858 = vpack.c.bf16 %v3838, %v3837
      %v3859 = vpack.c.bf16 %v3840, %v3839
      %v3860 = vpack.c.bf16 %v3842, %v3841
      %v3861 = vpack.c.bf16 %v3844, %v3843
      %v3862 = vpack.c.bf16 %v3846, %v3845
      %v3863 = vld [vmem:[%s3] sm:$0xf]
      %v3864 = vld [vmem:[%s3 + $0x4] sm:$0xf]
      %v3865 = vld [vmem:[%s3 + $0x8] sm:$0xf]
      %v3866 = vld [vmem:[%s3 + $0xc] sm:$0xf]
      %v3867 = vld [vmem:[%s3 + $0x10] sm:$0x3]
      %v3868 = vld [vmem:[%s4] sm:$0x1]
      %v3870 = vlaneseq
      %v3871 = vshrl.u32 %v3870, 7
      %v3872 = vsub.s32 0, %v3871
      %v3873 = vrot.slane %v3868, %v3872
      %v3880 = vunpack.c.l.b16 %v3863
      %v3881 = vunpack.c.l.b16 %v3864
      %v3882 = vunpack.c.l.b16 %v3865
      %v3883 = vunpack.c.l.b16 %v3866
      %v3884 = vunpack.c.l.b16 %v3867
      %v3885 = vpack.c.b16 %v3881, %v3880
      %v3886 = vpack.c.b16 %v3883, %v3882
      %v3887 = vpack.c.b16 %v3884, %v3884
      %v3891 = vsel %vm1956, %v3847, 0
      %v3894 = vsel %vm1956, %v3848, 0
      %v3897 = vsel %vm1956, %v3849, 0
      %v3900 = vsel %vm1956, %v3850, 0
      %v3903 = vsel %vm1956, %v3851, 0
      %v3906 = vsel %vm1956, %v3852, 0
      %v3909 = vsel %vm1956, %v3853, 0
      %v3912 = vsel %vm1956, %v3854, 0
      %v3915 = vsel %vm1956, %v3855, 0
      %v3918 = vsel %vm1956, %v3856, 0
      %v3921 = vsel %vm1956, %v3857, 0
      %v3924 = vsel %vm1956, %v3858, 0
      %v3927 = vsel %vm1956, %v3859, 0
      %v3930 = vsel %vm1956, %v3860, 0
      %v3933 = vsel %vm1956, %v3861, 0
      %v3936 = vsel %vm1956, %v3862, 0
      %v3939 = vsel %vm2005, %v3887, 0
      %3941 = vmatprep.subr.bf16.mxu0 0
      %3942 = vmatpush1.bf16.msra.mxu0 0
      %3943 = vmatprep.subr.bf16.mxu0 0
      %3944 = vmatpush1.bf16.msra.mxu0 0
      %3945 = vmatprep.subr.bf16.mxu0 0
      %3946 = vmatpush1.bf16.msra.mxu0 0
      %3947 = vmatprep.subr.bf16.mxu0 0
      %3948 = vmatpush1.bf16.msra.mxu0 0
      %3949 = vmatprep.subr.bf16.mxu0 0
      %3950 = vmatpush1.bf16.msra.mxu0 0
      %3951 = vmatprep.subr.bf16.mxu0 0
      %3952 = vmatpush1.bf16.msra.mxu0 %v3939
      %3953 = vmatprep.subr.bf16.mxu0 0
      %3954 = vmatpush1.bf16.msra.mxu0 %v3886
      %3955 = vmatprep.subr.bf16.mxu0 0
      %3956 = vmatpush1.bf16.msra.mxu0 %v3885
      %3957 = vmatprep.subr.bf16.mxu0 0
      %3958 = vmatpush2.bf16.msra.mxu0 0
      %3959 = vmatprep.subr.bf16.mxu0 0
      %3960 = vmatpush2.bf16.msra.mxu0 0
      %3961 = vmatprep.subr.bf16.mxu0 0
      %3962 = vmatpush2.bf16.msra.mxu0 0
      %3963 = vmatprep.subr.bf16.mxu0 0
      %3964 = vmatpush2.bf16.msra.mxu0 0
      %3965 = vmatprep.subr.bf16.mxu0 0
      %3966 = vmatpush2.bf16.msra.mxu0 0
      %3967 = vmatprep.subr.bf16.mxu0 0
      %3968 = vmatpush2.bf16.msra.mxu0 0
      %3969 = vmatprep.subr.bf16.mxu0 0
      %3970 = vmatpush2.bf16.msra.mxu0 0
      %3971 = vmatprep.subr.bf16.mxu0 0
      %3972 = vmatpush2.bf16.msra.mxu0 0
      %3973 = vmatprep.mubr.bf16.mxu0 0
      %3974 = vmatmul.mubr.bf16.gmra.mxu0 %v3891
      %v3975 = vpop.f32.mrf.mxu0
      %v3976 = vadd.f32 %v3873, %v3975
      %v3977 = vpop.f32.mrf.mxu0
      %v3978 = vpop.f32.mrf.mxu0
      %v3979 = vadd.f32 %v3873, %v3978
      %v3980 = vpop.f32.mrf.mxu0
      %3981 = vmatprep.mubr.bf16.mxu0 0
      %3982 = vmatmul.mubr.bf16.gmra.mxu0 %v3894
      %v3983 = vpop.f32.mrf.mxu0
      %v3984 = vadd.f32 %v3873, %v3983
      %v3985 = vpop.f32.mrf.mxu0
      %v3986 = vpop.f32.mrf.mxu0
      %v3987 = vadd.f32 %v3873, %v3986
      %v3988 = vpop.f32.mrf.mxu0
      %3989 = vmatprep.mubr.bf16.mxu0 0
      %3990 = vmatmul.mubr.bf16.gmra.mxu0 %v3897
      %v3991 = vpop.f32.mrf.mxu0
      %v3992 = vadd.f32 %v3873, %v3991
      %v3993 = vpop.f32.mrf.mxu0
      %v3994 = vpop.f32.mrf.mxu0
      %v3995 = vadd.f32 %v3873, %v3994
      %v3996 = vpop.f32.mrf.mxu0
      %3997 = vmatprep.mubr.bf16.mxu0 0
      %3998 = vmatmul.mubr.bf16.gmra.mxu0 %v3900
      %v3999 = vpop.f32.mrf.mxu0
      %v4000 = vadd.f32 %v3873, %v3999
      %v4001 = vpop.f32.mrf.mxu0
      %v4002 = vpop.f32.mrf.mxu0
      %v4003 = vadd.f32 %v3873, %v4002
      %v4004 = vpop.f32.mrf.mxu0
      %4005 = vmatprep.mubr.bf16.mxu0 0
      %4006 = vmatmul.mubr.bf16.gmra.mxu0 %v3903
      %v4007 = vpop.f32.mrf.mxu0
      %v4008 = vadd.f32 %v3873, %v4007
      %v4009 = vpop.f32.mrf.mxu0
      %v4010 = vpop.f32.mrf.mxu0
      %v4011 = vadd.f32 %v3873, %v4010
      %v4012 = vpop.f32.mrf.mxu0
      %4013 = vmatprep.mubr.bf16.mxu0 0
      %4014 = vmatmul.mubr.bf16.gmra.mxu0 %v3906
      %v4015 = vpop.f32.mrf.mxu0
      %v4016 = vadd.f32 %v3873, %v4015
      %v4017 = vpop.f32.mrf.mxu0
      %v4018 = vpop.f32.mrf.mxu0
      %v4019 = vadd.f32 %v3873, %v4018
      %v4020 = vpop.f32.mrf.mxu0
      %4021 = vmatprep.mubr.bf16.mxu0 0
      %4022 = vmatmul.mubr.bf16.gmra.mxu0 %v3909
      %v4023 = vpop.f32.mrf.mxu0
      %v4024 = vadd.f32 %v3873, %v4023
      %v4025 = vpop.f32.mrf.mxu0
      %v4026 = vpop.f32.mrf.mxu0
      %v4027 = vadd.f32 %v3873, %v4026
      %v4028 = vpop.f32.mrf.mxu0
      %4029 = vmatprep.mubr.bf16.mxu0 0
      %4030 = vmatmul.mubr.bf16.gmra.mxu0 %v3912
      %v4031 = vpop.f32.mrf.mxu0
      %v4032 = vadd.f32 %v3873, %v4031
      %v4033 = vpop.f32.mrf.mxu0
      %v4034 = vpop.f32.mrf.mxu0
      %v4035 = vadd.f32 %v3873, %v4034
      %v4036 = vpop.f32.mrf.mxu0
      %4037 = vmatprep.mubr.bf16.mxu0 0
      %4038 = vmatmul.mubr.bf16.gmra.mxu0 %v3915
      %v4039 = vpop.f32.mrf.mxu0
      %v4040 = vadd.f32 %v3873, %v4039
      %v4041 = vpop.f32.mrf.mxu0
      %v4042 = vpop.f32.mrf.mxu0
      %v4043 = vadd.f32 %v3873, %v4042
      %v4044 = vpop.f32.mrf.mxu0
      %4045 = vmatprep.mubr.bf16.mxu0 0
      %4046 = vmatmul.mubr.bf16.gmra.mxu0 %v3918
      %v4047 = vpop.f32.mrf.mxu0
      %v4048 = vadd.f32 %v3873, %v4047
      %v4049 = vpop.f32.mrf.mxu0
      %v4050 = vpop.f32.mrf.mxu0
      %v4051 = vadd.f32 %v3873, %v4050
      %v4052 = vpop.f32.mrf.mxu0
      %4053 = vmatprep.mubr.bf16.mxu0 0
      %4054 = vmatmul.mubr.bf16.gmra.mxu0 %v3921
      %v4055 = vpop.f32.mrf.mxu0
      %v4056 = vadd.f32 %v3873, %v4055
      %v4057 = vpop.f32.mrf.mxu0
      %v4058 = vpop.f32.mrf.mxu0
      %v4059 = vadd.f32 %v3873, %v4058
      %v4060 = vpop.f32.mrf.mxu0
      %4061 = vmatprep.mubr.bf16.mxu0 0
      %4062 = vmatmul.mubr.bf16.gmra.mxu0 %v3924
      %v4063 = vpop.f32.mrf.mxu0
      %v4064 = vadd.f32 %v3873, %v4063
      %v4065 = vpop.f32.mrf.mxu0
      %v4066 = vpop.f32.mrf.mxu0
      %v4067 = vadd.f32 %v3873, %v4066
      %v4068 = vpop.f32.mrf.mxu0
      %4069 = vmatprep.mubr.bf16.mxu0 0
      %4070 = vmatmul.mubr.bf16.gmra.mxu0 %v3927
      %v4071 = vpop.f32.mrf.mxu0
      %v4072 = vadd.f32 %v3873, %v4071
      %v4073 = vpop.f32.mrf.mxu0
      %v4074 = vpop.f32.mrf.mxu0
      %v4075 = vadd.f32 %v3873, %v4074
      %v4076 = vpop.f32.mrf.mxu0
      %4077 = vmatprep.mubr.bf16.mxu0 0
      %4078 = vmatmul.mubr.bf16.gmra.mxu0 %v3930
      %v4079 = vpop.f32.mrf.mxu0
      %v4080 = vadd.f32 %v3873, %v4079
      %v4081 = vpop.f32.mrf.mxu0
      %v4082 = vpop.f32.mrf.mxu0
      %v4083 = vadd.f32 %v3873, %v4082
      %v4084 = vpop.f32.mrf.mxu0
      %4085 = vmatprep.mubr.bf16.mxu0 0
      %4086 = vmatmul.mubr.bf16.gmra.mxu0 %v3933
      %v4087 = vpop.f32.mrf.mxu0
      %v4088 = vadd.f32 %v3873, %v4087
      %v4089 = vpop.f32.mrf.mxu0
      %v4090 = vpop.f32.mrf.mxu0
      %v4091 = vadd.f32 %v3873, %v4090
      %v4092 = vpop.f32.mrf.mxu0
      %4093 = vmatprep.mubr.bf16.mxu0 0
      %4094 = vmatmul.mubr.bf16.gmra.mxu0 %v3936
      %v4095 = vpop.f32.mrf.mxu0
      %v4096 = vadd.f32 %v3873, %v4095
      %v4097 = vpop.f32.mrf.mxu0
      %v4098 = vpop.f32.mrf.mxu0
      %v4099 = vadd.f32 %v3873, %v4098
      %v4100 = vpop.f32.mrf.mxu0
      %4101 = vdwg.mxu0
      %v4102 = vadd.f32 %v272, %v3976
      %v4103 = vadd.f32 %v273, %v3979
      %v4104 = vadd.f32 %v274, %v3984
      %v4105 = vadd.f32 %v275, %v3987
      %v4106 = vadd.f32 %v276, %v3992
      %v4107 = vadd.f32 %v277, %v3995
      %v4108 = vadd.f32 %v278, %v4000
      %v4109 = vadd.f32 %v279, %v4003
      %v4110 = vadd.f32 %v280, %v4008
      %v4111 = vadd.f32 %v281, %v4011
      %v4112 = vadd.f32 %v282, %v4016
      %v4113 = vadd.f32 %v283, %v4019
      %v4114 = vadd.f32 %v284, %v4024
      %v4115 = vadd.f32 %v285, %v4027
      %v4116 = vadd.f32 %v286, %v4032
      %v4117 = vadd.f32 %v287, %v4035
      %v4118 = vadd.f32 %v288, %v4040
      %v4119 = vadd.f32 %v289, %v4043
      %v4120 = vadd.f32 %v290, %v4048
      %v4121 = vadd.f32 %v291, %v4051
      %v4122 = vadd.f32 %v292, %v4056
      %v4123 = vadd.f32 %v293, %v4059
      %v4124 = vadd.f32 %v294, %v4064
      %v4125 = vadd.f32 %v295, %v4067
      %v4126 = vadd.f32 %v296, %v4072
      %v4127 = vadd.f32 %v297, %v4075
      %v4128 = vadd.f32 %v298, %v4080
      %v4129 = vadd.f32 %v299, %v4083
      %v4130 = vadd.f32 %v300, %v4088
      %v4131 = vadd.f32 %v301, %v4091
      %v4132 = vadd.f32 %v302, %v4096
      %v4133 = vadd.f32 %v303, %v4099
      %v4134 = vtanh.pop %v4102
      %v4135 = vtanh.pop %v4103
      %v4136 = vtanh.pop %v4104
      %v4137 = vtanh.pop %v4105
      %v4138 = vtanh.pop %v4106
      %v4139 = vtanh.pop %v4107
      %v4140 = vtanh.pop %v4108
      %v4141 = vtanh.pop %v4109
      %v4142 = vtanh.pop %v4110
      %v4143 = vtanh.pop %v4111
      %v4144 = vtanh.pop %v4112
      %v4145 = vtanh.pop %v4113
      %v4146 = vtanh.pop %v4114
      %v4147 = vtanh.pop %v4115
      %v4148 = vtanh.pop %v4116
      %v4149 = vtanh.pop %v4117
      %v4150 = vtanh.pop %v4118
      %v4151 = vtanh.pop %v4119
      %v4152 = vtanh.pop %v4120
      %v4153 = vtanh.pop %v4121
      %v4154 = vtanh.pop %v4122
      %v4155 = vtanh.pop %v4123
      %v4156 = vtanh.pop %v4124
      %v4157 = vtanh.pop %v4125
      %v4158 = vtanh.pop %v4126
      %v4159 = vtanh.pop %v4127
      %v4160 = vtanh.pop %v4128
      %v4161 = vtanh.pop %v4129
      %v4162 = vtanh.pop %v4130
      %v4163 = vtanh.pop %v4131
      %v4164 = vtanh.pop %v4132
      %v4165 = vtanh.pop %v4133
      %4166 = vst.msk [vmem:[%s224] sm:$0xff] %vm226, %v4134
      %4167 = vst.msk [vmem:[%s224 + $0x8] sm:$0xff] %vm226, %v4135
      %4168 = vst.msk [vmem:[%s224 + $0x10] sm:$0xff] %vm226, %v4136
      %4169 = vst.msk [vmem:[%s224 + $0x18] sm:$0xff] %vm226, %v4137
      %4170 = vst.msk [vmem:[%s224 + $0x20] sm:$0xff] %vm226, %v4138
      %4171 = vst.msk [vmem:[%s224 + $0x28] sm:$0xff] %vm226, %v4139
      %4172 = vst.msk [vmem:[%s224 + $0x30] sm:$0xff] %vm226, %v4140
      %4173 = vst.msk [vmem:[%s224 + $0x38] sm:$0xff] %vm226, %v4141
      %4174 = vst.msk [vmem:[%s224 + $0x40] sm:$0xff] %vm226, %v4142
      %4175 = vst.msk [vmem:[%s224 + $0x48] sm:$0xff] %vm226, %v4143
      %4176 = vst.msk [vmem:[%s224 + $0x50] sm:$0xff] %vm226, %v4144
      %4177 = vst.msk [vmem:[%s224 + $0x58] sm:$0xff] %vm226, %v4145
      %4178 = vst.msk [vmem:[%s224 + $0x60] sm:$0xff] %vm226, %v4146
      %4179 = vst.msk [vmem:[%s224 + $0x68] sm:$0xff] %vm226, %v4147
      %4180 = vst.msk [vmem:[%s224 + $0x70] sm:$0xff] %vm226, %v4148
      %4181 = vst.msk [vmem:[%s224 + $0x78] sm:$0xff] %vm226, %v4149
      %4182 = vst.msk [vmem:[%s224 + $0x80] sm:$0xff] %vm226, %v4150
      %4183 = vst.msk [vmem:[%s224 + $0x88] sm:$0xff] %vm226, %v4151
      %4184 = vst.msk [vmem:[%s224 + $0x90] sm:$0xff] %vm226, %v4152
      %4185 = vst.msk [vmem:[%s224 + $0x98] sm:$0xff] %vm226, %v4153
      %4186 = vst.msk [vmem:[%s224 + $0xa0] sm:$0xff] %vm226, %v4154
      %4187 = vst.msk [vmem:[%s224 + $0xa8] sm:$0xff] %vm226, %v4155
      %4188 = vst.msk [vmem:[%s224 + $0xb0] sm:$0xff] %vm226, %v4156
      %4189 = vst.msk [vmem:[%s224 + $0xb8] sm:$0xff] %vm226, %v4157
      %4190 = vst.msk [vmem:[%s224 + $0xc0] sm:$0xff] %vm226, %v4158
      %4191 = vst.msk [vmem:[%s224 + $0xc8] sm:$0xff] %vm226, %v4159
      %4192 = vst.msk [vmem:[%s224 + $0xd0] sm:$0xff] %vm226, %v4160
      %4193 = vst.msk [vmem:[%s224 + $0xd8] sm:$0xff] %vm226, %v4161
      %4194 = vst.msk [vmem:[%s224 + $0xe0] sm:$0xff] %vm226, %v4162
      %4195 = vst.msk [vmem:[%s224 + $0xe8] sm:$0xff] %vm226, %v4163
      %4196 = vst.msk [vmem:[%s224 + $0xf0] sm:$0xff] %vm226, %v4164
      %4197 = vst.msk [vmem:[%s224 + $0xf8] sm:$0xff] %vm226, %v4165
      %p4198 = scmp.lt.s32.totalorder %s16, 1
      %s4199 = scalar_select %p4198, %s16, 1
      %s4200 = smul.addr %s4199, 32
      %s4201 = smul.addr %s4200, 8
      %s4202 = scalar_lea.vmem %s5, %s4201
      // Predicated region
      $region41: #{tpu_custom_call.1} parent=39 // pred_check
        %p4203 = pneg %p144
      $region42: #{tpu_custom_call.1} parent=39 // pred_check_branch
        %4205 = sbr.rel (%p4203) target = $region44
      $region43: #{tpu_custom_call.1} parent=39 // pred_region
        _
      $region44: #{tpu_custom_call.1} parent=39 // pred_fallthru
        _
    $region40: #{tpu_custom_call.1} parent=5 // pred_fallthru
      _
    %p4206 = scmp.le.s32.totalorder 2, %s11
    // Predicated region
    $region45: #{tpu_custom_call.1} parent=5 // pred_check
      %p4207 = pneg %p4206
    $region46: #{tpu_custom_call.1} parent=5 // pred_check_branch
      %4209 = sbr.rel (%p4207) target = $region48
    $region47: #{tpu_custom_call.1} parent=5 // pred_region
      %s4210 = ssub.s32 %s11, 2
      // Predicated region
      $region49: #{tpu_custom_call.1} parent=47 // pred_check
        %p4211 = pneg %p150
      $region50: #{tpu_custom_call.1} parent=47 // pred_check_branch
        %4213 = sbr.rel (%p4211) target = $region52
      $region51: #{tpu_custom_call.1} parent=47 // pred_region
        %p4214 = scmp.lt.s32.totalorder %s17, 1
        %s4215 = scalar_select %p4214, %s17, 1
        %s4216 = smul.addr %s4215, 32
        %s4217 = smul.addr %s4216, 8
        %s4218 = scalar_lea.vmem %s5, %s4217
      $region52: #{tpu_custom_call.1} parent=47 // pred_fallthru
        _
    $region48: #{tpu_custom_call.1} parent=5 // pred_fallthru
      _
  $region6: #{tpu_custom_call.1} parent=0 // loop_footer
    %s15 = sadd.s32 1, %s11
  $region7: #{tpu_custom_call.1} parent=0 // loop_footer_branch
    %10 = sbr.rel target = $region3
  $region8: #{tpu_custom_call.1} parent=0 // loop_exit
    _

// kernel: tpu_custom_call.1
$region0: #{tpu_custom_call.1}
  #allocation0 [shape = 'u32[]', space=smem, size = 0x4, offset = 0x4, fixed_abs, tag = 'smem constant byte address 0x4 - core index']
  #allocation1 [shape = 'u32[144,128]{1,0:T(1,128)}', space=vmem, size = 0x12000, scoped, tag = 'internal scratch']
  #allocation2 [shape = 'f32[18,18,4]{2,1,0:T(8,128)}', space=vmem, size = 0x36000, scoped, tag = 'scratch operand']
  #allocation3 [shape = 'f32[18,18,4]{2,1,0:T(8,128)}', space=vmem, size = 0x36000, scoped, tag = 'scratch operand']
  %s0 = inlined_call_operand.vmem [shape: f32[2,16,16,4], index: 0, kind: input, shape index: {}]
  %s1 = inlined_call_operand.vmem [shape: bf16[36,4], index: 1, kind: input, shape index: {}]
  %s2 = inlined_call_operand.vmem [shape: f32[1,1,4], index: 2, kind: input, shape index: {}]
  %s3 = inlined_call_operand.vmem [shape: bf16[36,4], index: 3, kind: input, shape index: {}]
  %s4 = inlined_call_operand.vmem [shape: f32[1,1,4], index: 4, kind: input, shape index: {}]
  %s5 = inlined_call_operand.vmem [shape: f32[2,16,16,4], index: 5, kind: output, shape index: {}]
  %s6 = sld [smem:[#allocation0]]
  $region53: #{tpu_custom_call.1} parent=0
    _
  %s8 = ssub.s32 1, %s6
  %s9 = scalar_select 0, %s8, %s6
  loop: start=0, step=1, limit=4
  $region2: #{tpu_custom_call.1} parent=0 // loop_pre_header
    _
  $region3: #{tpu_custom_call.1} parent=0 // loop_header
    %s11 = sphi 0, %s15
    %p12 = scmp.ge.s32.totalorder %s11, 4
    %s21 = sphi 0, %s23
    %s24 = sphi 0, %s21
    %s25 = sphi 0, %s24
    %s41 = sphi 0, %s25
    %s45 = sphi 0, %s45
    %s47 = sphi 0, %s45
    %s48 = sphi 0, %s47
    %s62 = sphi 0, %s48
    %s66 = sphi 0, %s66
    %s68 = sphi 0, %s66
    %s69 = sphi 0, %s68
    %s83 = sphi 0, %s69
    %s87 = sphi 0, %s87
    %s89 = sphi 0, %s87
    %s90 = sphi 0, %s89
    %s104 = sphi 0, %s90
    %s108 = sphi 0, %s108
    %s110 = sphi 0, %s108
    %s111 = sphi 0, %s110
    %s125 = sphi 0, %s111
    %s131 = sphi 0, %s133
    %s134 = sphi 0, %s131
    %s135 = sphi 0, %s134
    %s151 = sphi 0, %s135
  $region4: #{tpu_custom_call.1} parent=0 // loop_header_branch
    %14 = sbr.rel (%p12) target = $region8
  $region5: #{tpu_custom_call.1} parent=0 // loop_body
    %s16 = ssub.s32 %s11, 1
    %s17 = ssub.s32 %s11, 2
    %s18 = sadd.s32 %s11, 1
    %s19 = ssub.s32 %s11, %s18
    %p20 = scmp.eq.s32.totalorder %s19, 0
    %s22 = sadd.s32 %s21, 1
    %s23 = scalar_select %p20, %s21, %s22
    %p26 = pneg %p20
    %p27 = scmp.eq.s32.totalorder %s11, 1
    %p28 = por %p26, %p27
    %p29 = scmp.ne.s32.totalorder %s21, %s24
    %p30 = scmp.eq.s32.totalorder %s11, 0
    %p31 = por %p29, %p30
    %p32 = scmp.ne.s32.totalorder %s21, %s24
    %p33 = scmp.eq.s32.totalorder %s16, 1
    %p34 = por %p32, %p33
    %p35 = scmp.ne.s32.totalorder %s24, %s25
    %p36 = scmp.eq.s32.totalorder %s16, 0
    %p37 = por %p35, %p36
    %p38 = scmp.ne.s32.totalorder %s24, %s25
    %p39 = scmp.eq.s32.totalorder %s17, 1
    %p40 = por %p38, %p39
    %p42 = scmp.ne.s32.totalorder %s25, %s41
    %p43 = scmp.eq.s32.totalorder %s17, 0
    %p44 = por %p42, %p43
    %s46 = sadd.s32 %s45, 1
    %p49 = scmp.eq.s32.totalorder %s11, 1
    %p50 = scmp.ne.s32.totalorder %s45, %s47
    %p51 = scmp.eq.s32.totalorder %s11, 0
    %p52 = por %p50, %p51
    %p53 = scmp.ne.s32.totalorder %s45, %s47
    %p54 = scmp.eq.s32.totalorder %s16, 1
    %p55 = por %p53, %p54
    %p56 = scmp.ne.s32.totalorder %s47, %s48
    %p57 = scmp.eq.s32.totalorder %s16, 0
    %p58 = por %p56, %p57
    %p59 = scmp.ne.s32.totalorder %s47, %s48
    %p60 = scmp.eq.s32.totalorder %s17, 1
    %p61 = por %p59, %p60
    %p63 = scmp.ne.s32.totalorder %s48, %s62
    %p64 = scmp.eq.s32.totalorder %s17, 0
    %p65 = por %p63, %p64
    %s67 = sadd.s32 %s66, 1
    %p70 = scmp.eq.s32.totalorder %s11, 1
    %p71 = scmp.ne.s32.totalorder %s66, %s68
    %p72 = scmp.eq.s32.totalorder %s11, 0
    %p73 = por %p71, %p72
    %p74 = scmp.ne.s32.totalorder %s66, %s68
    %p75 = scmp.eq.s32.totalorder %s16, 1
    %p76 = por %p74, %p75
    %p77 = scmp.ne.s32.totalorder %s68, %s69
    %p78 = scmp.eq.s32.totalorder %s16, 0
    %p79 = por %p77, %p78
    %p80 = scmp.ne.s32.totalorder %s68, %s69
    %p81 = scmp.eq.s32.totalorder %s17, 1
    %p82 = por %p80, %p81
    %p84 = scmp.ne.s32.totalorder %s69, %s83
    %p85 = scmp.eq.s32.totalorder %s17, 0
    %p86 = por %p84, %p85
    %s88 = sadd.s32 %s87, 1
    %p91 = scmp.eq.s32.totalorder %s11, 1
    %p92 = scmp.ne.s32.totalorder %s87, %s89
    %p93 = scmp.eq.s32.totalorder %s11, 0
    %p94 = por %p92, %p93
    %p95 = scmp.ne.s32.totalorder %s87, %s89
    %p96 = scmp.eq.s32.totalorder %s16, 1
    %p97 = por %p95, %p96
    %p98 = scmp.ne.s32.totalorder %s89, %s90
    %p99 = scmp.eq.s32.totalorder %s16, 0
    %p100 = por %p98, %p99
    %p101 = scmp.ne.s32.totalorder %s89, %s90
    %p102 = scmp.eq.s32.totalorder %s17, 1
    %p103 = por %p101, %p102
    %p105 = scmp.ne.s32.totalorder %s90, %s104
    %p106 = scmp.eq.s32.totalorder %s17, 0
    %p107 = por %p105, %p106
    %s109 = sadd.s32 %s108, 1
    %p112 = scmp.eq.s32.totalorder %s11, 1
    %p113 = scmp.ne.s32.totalorder %s108, %s110
    %p114 = scmp.eq.s32.totalorder %s11, 0
    %p115 = por %p113, %p114
    %p116 = scmp.ne.s32.totalorder %s108, %s110
    %p117 = scmp.eq.s32.totalorder %s16, 1
    %p118 = por %p116, %p117
    %p119 = scmp.ne.s32.totalorder %s110, %s111
    %p120 = scmp.eq.s32.totalorder %s16, 0
    %p121 = por %p119, %p120
    %p122 = scmp.ne.s32.totalorder %s110, %s111
    %p123 = scmp.eq.s32.totalorder %s17, 1
    %p124 = por %p122, %p123
    %p126 = scmp.ne.s32.totalorder %s111, %s125
    %p127 = scmp.eq.s32.totalorder %s17, 0
    %p128 = por %p126, %p127
    %s129 = ssub.s32 %s11, %s18
    %p130 = scmp.eq.s32.totalorder %s129, 0
    %s132 = sadd.s32 %s131, 1
    %s133 = scalar_select %p130, %s131, %s132
    %p136 = pneg %p130
    %p137 = scmp.eq.s32.totalorder %s11, 1
    %p138 = por %p136, %p137
    %p139 = scmp.ne.s32.totalorder %s131, %s134
    %p140 = scmp.eq.s32.totalorder %s11, 0
    %p141 = por %p139, %p140
    %p142 = scmp.ne.s32.totalorder %s131, %s134
    %p143 = scmp.eq.s32.totalorder %s16, 1
    %p144 = por %p142, %p143
    %p145 = scmp.ne.s32.totalorder %s134, %s135
    %p146 = scmp.eq.s32.totalorder %s16, 0
    %p147 = por %p145, %p146
    %p148 = scmp.ne.s32.totalorder %s134, %s135
    %p149 = scmp.eq.s32.totalorder %s17, 1
    %p150 = por %p148, %p149
    %p152 = scmp.ne.s32.totalorder %s135, %s151
    %p153 = scmp.eq.s32.totalorder %s17, 0
    %p154 = por %p152, %p153
    %p155 = scmp.le.s32.totalorder 1, %s11
    %p156 = scmp.lt.s32.totalorder %s11, 3
    %p157 = pnand %p155, %p156
    %p158 = pneg %p157
    // Predicated region
    $region9: #{tpu_custom_call.1} parent=5 // pred_check
      _
    $region10: #{tpu_custom_call.1} parent=5 // pred_check_branch
      %160 = sbr.rel (%p157) target = $region12
    $region11: #{tpu_custom_call.1} parent=5 // pred_region
      %s161 = ssub.s32 %s11, 1
      // Predicated region
      $region13: #{tpu_custom_call.1} parent=11 // pred_check
        %p162 = pneg %p58
      $region14: #{tpu_custom_call.1} parent=11 // pred_check_branch
        %164 = sbr.rel (%p162) target = $region16
      $region15: #{tpu_custom_call.1} parent=11 // pred_region
        _
      $region16: #{tpu_custom_call.1} parent=11 // pred_fallthru
        _
      // Predicated region
      $region17: #{tpu_custom_call.1} parent=11 // pred_check
        %p165 = pneg %p79
      $region18: #{tpu_custom_call.1} parent=11 // pred_check_branch
        %167 = sbr.rel (%p165) target = $region20
      $region19: #{tpu_custom_call.1} parent=11 // pred_region
        _
      $region20: #{tpu_custom_call.1} parent=11 // pred_fallthru
        _
      // Predicated region
      $region21: #{tpu_custom_call.1} parent=11 // pred_check
        %p168 = pneg %p100
      $region22: #{tpu_custom_call.1} parent=11 // pred_check_branch
        %170 = sbr.rel (%p168) target = $region24
      $region23: #{tpu_custom_call.1} parent=11 // pred_region
        _
      $region24: #{tpu_custom_call.1} parent=11 // pred_fallthru
        _
      // Predicated region
      $region25: #{tpu_custom_call.1} parent=11 // pred_check
        %p171 = pneg %p121
      $region26: #{tpu_custom_call.1} parent=11 // pred_check_branch
        %173 = sbr.rel (%p171) target = $region28
      $region27: #{tpu_custom_call.1} parent=11 // pred_region
        _
      $region28: #{tpu_custom_call.1} parent=11 // pred_fallthru
        _
    $region12: #{tpu_custom_call.1} parent=5 // pred_fallthru
      _
    %p174 = scmp.lt.s32.totalorder %s11, 2
    // Predicated region
    $region29: #{tpu_custom_call.1} parent=5 // pred_check
      %p175 = pneg %p174
    $region30: #{tpu_custom_call.1} parent=5 // pred_check_branch
      %177 = sbr.rel (%p175) target = $region32
    $region31: #{tpu_custom_call.1} parent=5 // pred_region
      // Predicated region
      $region33: #{tpu_custom_call.1} parent=31 // pred_check
        %p178 = pneg %p31
      $region34: #{tpu_custom_call.1} parent=31 // pred_check_branch
        %180 = sbr.rel (%p178) target = $region36
      $region35: #{tpu_custom_call.1} parent=31 // pred_region
        %p181 = scmp.lt.s32.totalorder %s11, 1
        %s182 = scalar_select %p181, %s11, 1
        %s183 = smul.addr %s182, 32
        %s184 = smul.addr %s183, 8
        %s185 = scalar_lea.vmem %s0, %s184
      $region36: #{tpu_custom_call.1} parent=31 // pred_fallthru
        _
    $region32: #{tpu_custom_call.1} parent=5 // pred_fallthru
      _
    %p186 = scmp.le.s32.totalorder 1, %s11
    %p187 = scmp.lt.s32.totalorder %s11, 3
    %p188 = pnand %p186, %p187
    %p189 = pneg %p188
    // Predicated region
    $region37: #{tpu_custom_call.1} parent=5 // pred_check
      _
    $region38: #{tpu_custom_call.1} parent=5 // pred_check_branch
      %191 = sbr.rel (%p188) target = $region40
    $region39: #{tpu_custom_call.1} parent=5 // pred_region
      %s192 = ssub.s32 %s11, 1
      %p193 = scmp.lt.s32.totalorder %s16, 1
      %s194 = scalar_select %p193, %s16, 1
      %s195 = smul.addr %s194, 32
      %s196 = smul.addr %s195, 8
      %s197 = scalar_lea.vmem %s0, %s196
      %p198 = pneg %p37
      %p199 = pneg %p34
      %p200 = pneg %p58
      %p201 = pneg %p55
      %p202 = pneg %p79
      %p203 = pneg %p76
      %p204 = pneg %p100
      %p205 = pneg %p97
      %p206 = pneg %p121
      %p207 = pneg %p118
      %p208 = pneg %p147
      %p209 = pneg %p144
      %p210 = scmp.lt.s32.totalorder %s16, 1
      %s211 = scalar_select %p210, %s16, 1
      %s212 = smul.addr %s211, 32
      %s213 = smul.addr %s212, 8
      %s214 = scalar_lea.vmem %s5, %s213
      %p215 = scmp.lt.s32.totalorder %s16, 1
      %s216 = scalar_select %p215, %s16, 1
      %s217 = smul.addr %s216, 32
      %s218 = smul.addr %s217, 8
      %s219 = scalar_lea.vmem %s0, %s218
      %p220 = scmp.lt.s32.totalorder %s16, 1
      %s221 = scalar_select %p220, %s16, 1
      %s222 = smul.addr %s221, 32
      %s223 = smul.addr %s222, 8
      %s224 = scalar_lea.vmem %s5, %s223
      %vm226 = vcmask 31744
      %227 = vst.msk [vmem:[#allocation2] sm:$0xff] %vm226, 0.0
      %228 = vst.msk [vmem:[#allocation2 + $0x8] sm:$0xff] %vm226, 0.0
      %vm229 = vcmask 25600
      %230 = vst.msk [vmem:[#allocation2 + $0x10] sm:$0x3] %vm229, 0.0
      %s231 = scalar_lea.vmem [#allocation2], 408
      %232 = vst.msk [vmem:[%s231] sm:$0xff] %vm226, 0.0
      %233 = vst.msk [vmem:[%s231 + $0x8] sm:$0xff] %vm226, 0.0
      %234 = vst.msk [vmem:[%s231 + $0x10] sm:$0x3] %vm229, 0.0
      %vm235 = vcmask 24576
      %236 = vst.msk [vmem:[#allocation2] sm:$0x1] %vm235, 0.0
      %237 = vst.msk [vmem:[#allocation2 + $0x18] sm:$0x1] %vm235, 0.0
      %238 = vst.msk [vmem:[#allocation2 + $0x30] sm:$0x1] %vm235, 0.0
      %239 = vst.msk [vmem:[#allocation2 + $0x48] sm:$0x1] %vm235, 0.0
      %240 = vst.msk [vmem:[#allocation2 + $0x60] sm:$0x1] %vm235, 0.0
      %241 = vst.msk [vmem:[#allocation2 + $0x78] sm:$0x1] %vm235, 0.0
      %242 = vst.msk [vmem:[#allocation2 + $0x90] sm:$0x1] %vm235, 0.0
      %243 = vst.msk [vmem:[#allocation2 + $0xa8] sm:$0x1] %vm235, 0.0
      %244 = vst.msk [vmem:[#allocation2 + $0xc0] sm:$0x1] %vm235, 0.0
      %245 = vst.msk [vmem:[#allocation2 + $0xd8] sm:$0x1] %vm235, 0.0
      %246 = vst.msk [vmem:[#allocation2 + $0xf0] sm:$0x1] %vm235, 0.0
      %247 = vst.msk [vmem:[#allocation2 + $0x108] sm:$0x1] %vm235, 0.0
      %248 = vst.msk [vmem:[#allocation2 + $0x120] sm:$0x1] %vm235, 0.0
      %249 = vst.msk [vmem:[#allocation2 + $0x138] sm:$0x1] %vm235, 0.0
      %250 = vst.msk [vmem:[#allocation2 + $0x150] sm:$0x1] %vm235, 0.0
      %251 = vst.msk [vmem:[#allocation2 + $0x168] sm:$0x1] %vm235, 0.0
      %252 = vst.msk [vmem:[#allocation2 + $0x180] sm:$0x1] %vm235, 0.0
      %253 = vst.msk [vmem:[#allocation2 + $0x198] sm:$0x1] %vm235, 0.0
      %254 = vst.msk [vmem:[#allocation2 + $0x11] sm:$0x1] %vm235, 0.0
      %255 = vst.msk [vmem:[#allocation2 + $0x29] sm:$0x1] %vm235, 0.0
      %256 = vst.msk [vmem:[#allocation2 + $0x41] sm:$0x1] %vm235, 0.0
      %257 = vst.msk [vmem:[#allocation2 + $0x59] sm:$0x1] %vm235, 0.0
      %258 = vst.msk [vmem:[#allocation2 + $0x71] sm:$0x1] %vm235, 0.0
      %259 = vst.msk [vmem:[#allocation2 + $0x89] sm:$0x1] %vm235, 0.0
      %260 = vst.msk [vmem:[#allocation2 + $0xa1] sm:$0x1] %vm235, 0.0
      %261 = vst.msk [vmem:[#allocation2 + $0xb9] sm:$0x1] %vm235, 0.0
      %262 = vst.msk [vmem:[#allocation2 + $0xd1] sm:$0x1] %vm235, 0.0
      %263 = vst.msk [vmem:[#allocation2 + $0xe9] sm:$0x1] %vm235, 0.0
      %264 = vst.msk [vmem:[#allocation2 + $0x101] sm:$0x1] %vm235, 0.0
      %265 = vst.msk [vmem:[#allocation2 + $0x119] sm:$0x1] %vm235, 0.0
      %266 = vst.msk [vmem:[#allocation2 + $0x131] sm:$0x1] %vm235, 0.0
      %267 = vst.msk [vmem:[#allocation2 + $0x149] sm:$0x1] %vm235, 0.0
      %268 = vst.msk [vmem:[#allocation2 + $0x161] sm:$0x1] %vm235, 0.0
      %269 = vst.msk [vmem:[#allocation2 + $0x179] sm:$0x1] %vm235, 0.0
      %270 = vst.msk [vmem:[#allocation2 + $0x191] sm:$0x1] %vm235, 0.0
      %271 = vst.msk [vmem:[#allocation2 + $0x1a9] sm:$0x1] %vm235, 0.0
      %v272 = vld [vmem:[%s219] sm:$0xff]
      %v273 = vld [vmem:[%s219 + $0x8] sm:$0xff]
      %v274 = vld [vmem:[%s219 + $0x10] sm:$0xff]
      %v275 = vld [vmem:[%s219 + $0x18] sm:$0xff]
      %v276 = vld [vmem:[%s219 + $0x20] sm:$0xff]
      %v277 = vld [vmem:[%s219 + $0x28] sm:$0xff]
      %v278 = vld [vmem:[%s219 + $0x30] sm:$0xff]
      %v279 = vld [vmem:[%s219 + $0x38] sm:$0xff]
      %v280 = vld [vmem:[%s219 + $0x40] sm:$0xff]
      %v281 = vld [vmem:[%s219 + $0x48] sm:$0xff]
      %v282 = vld [vmem:[%s219 + $0x50] sm:$0xff]
      %v283 = vld [vmem:[%s219 + $0x58] sm:$0xff]
      %v284 = vld [vmem:[%s219 + $0x60] sm:$0xff]
      %v285 = vld [vmem:[%s219 + $0x68] sm:$0xff]
      %v286 = vld [vmem:[%s219 + $0x70] sm:$0xff]
      %v287 = vld [vmem:[%s219 + $0x78] sm:$0xff]
      %v288 = vld [vmem:[%s219 + $0x80] sm:$0xff]
      %v289 = vld [vmem:[%s219 + $0x88] sm:$0xff]
      %v290 = vld [vmem:[%s219 + $0x90] sm:$0xff]
      %v291 = vld [vmem:[%s219 + $0x98] sm:$0xff]
      %v292 = vld [vmem:[%s219 + $0xa0] sm:$0xff]
      %v293 = vld [vmem:[%s219 + $0xa8] sm:$0xff]
      %v294 = vld [vmem:[%s219 + $0xb0] sm:$0xff]
      %v295 = vld [vmem:[%s219 + $0xb8] sm:$0xff]
      %v296 = vld [vmem:[%s219 + $0xc0] sm:$0xff]
      %v297 = vld [vmem:[%s219 + $0xc8] sm:$0xff]
      %v298 = vld [vmem:[%s219 + $0xd0] sm:$0xff]
      %v299 = vld [vmem:[%s219 + $0xd8] sm:$0xff]
      %v300 = vld [vmem:[%s219 + $0xe0] sm:$0xff]
      %v301 = vld [vmem:[%s219 + $0xe8] sm:$0xff]
      %v302 = vld [vmem:[%s219 + $0xf0] sm:$0xff]
      %v303 = vld [vmem:[%s219 + $0xf8] sm:$0xff]
      %s304 = scalar_lea.vmem [#allocation2], 24
      %305 = vst.msk [vmem:[%s304 + $0x1] sm:$0xff] %vm226, %v272
      %306 = vst.msk [vmem:[%s304 + $0x9] sm:$0xff] %vm226, %v273
      %307 = vst.msk [vmem:[%s304 + $0x19] sm:$0xff] %vm226, %v274
      %308 = vst.msk [vmem:[%s304 + $0x21] sm:$0xff] %vm226, %v275
      %309 = vst.msk [vmem:[%s304 + $0x31] sm:$0xff] %vm226, %v276
      %310 = vst.msk [vmem:[%s304 + $0x39] sm:$0xff] %vm226, %v277
      %311 = vst.msk [vmem:[%s304 + $0x49] sm:$0xff] %vm226, %v278
      %312 = vst.msk [vmem:[%s304 + $0x51] sm:$0xff] %vm226, %v279
      %313 = vst.msk [vmem:[%s304 + $0x61] sm:$0xff] %vm226, %v280
      %314 = vst.msk [vmem:[%s304 + $0x69] sm:$0xff] %vm226, %v281
      %315 = vst.msk [vmem:[%s304 + $0x79] sm:$0xff] %vm226, %v282
      %316 = vst.msk [vmem:[%s304 + $0x81] sm:$0xff] %vm226, %v283
      %317 = vst.msk [vmem:[%s304 + $0x91] sm:$0xff] %vm226, %v284
      %318 = vst.msk [vmem:[%s304 + $0x99] sm:$0xff] %vm226, %v285
      %319 = vst.msk [vmem:[%s304 + $0xa9] sm:$0xff] %vm226, %v286
      %320 = vst.msk [vmem:[%s304 + $0xb1] sm:$0xff] %vm226, %v287
      %321 = vst.msk [vmem:[%s304 + $0xc1] sm:$0xff] %vm226, %v288
      %322 = vst.msk [vmem:[%s304 + $0xc9] sm:$0xff] %vm226, %v289
      %323 = vst.msk [vmem:[%s304 + $0xd9] sm:$0xff] %vm226, %v290
      %324 = vst.msk [vmem:[%s304 + $0xe1] sm:$0xff] %vm226, %v291
      %325 = vst.msk [vmem:[%s304 + $0xf1] sm:$0xff] %vm226, %v292
      %326 = vst.msk [vmem:[%s304 + $0xf9] sm:$0xff] %vm226, %v293
      %327 = vst.msk [vmem:[%s304 + $0x109] sm:$0xff] %vm226, %v294
      %328 = vst.msk [vmem:[%s304 + $0x111] sm:$0xff] %vm226, %v295
      %329 = vst.msk [vmem:[%s304 + $0x121] sm:$0xff] %vm226, %v296
      %330 = vst.msk [vmem:[%s304 + $0x129] sm:$0xff] %vm226, %v297
      %331 = vst.msk [vmem:[%s304 + $0x139] sm:$0xff] %vm226, %v298
      %332 = vst.msk [vmem:[%s304 + $0x141] sm:$0xff] %vm226, %v299
      %333 = vst.msk [vmem:[%s304 + $0x151] sm:$0xff] %vm226, %v300
      %334 = vst.msk [vmem:[%s304 + $0x159] sm:$0xff] %vm226, %v301
      %335 = vst.msk [vmem:[%s304 + $0x169] sm:$0xff] %vm226, %v302
      %336 = vst.msk [vmem:[%s304 + $0x171] sm:$0xff] %vm226, %v303
      %v337 = vld [vmem:[#allocation2] sm:$0xff]
      %v338 = vld [vmem:[#allocation2 + $0x8] sm:$0xff]
      %v339 = vld [vmem:[#allocation2 + $0x18] sm:$0xff]
      %v340 = vld [vmem:[#allocation2 + $0x20] sm:$0xff]
      %v341 = vld [vmem:[#allocation2 + $0x30] sm:$0xff]
      %v342 = vld [vmem:[#allocation2 + $0x38] sm:$0xff]
      %v343 = vld [vmem:[#allocation2 + $0x48] sm:$0xff]
      %v344 = vld [vmem:[#allocation2 + $0x50] sm:$0xff]
      %v345 = vld [vmem:[#allocation2 + $0x60] sm:$0xff]
      %v346 = vld [vmem:[#allocation2 + $0x68] sm:$0xff]
      %v347 = vld [vmem:[#allocation2 + $0x78] sm:$0xff]
      %v348 = vld [vmem:[#allocation2 + $0x80] sm:$0xff]
      %v349 = vld [vmem:[#allocation2 + $0x90] sm:$0xff]
      %v350 = vld [vmem:[#allocation2 + $0x98] sm:$0xff]
      %v351 = vld [vmem:[#allocation2 + $0xa8] sm:$0xff]
      %v352 = vld [vmem:[#allocation2 + $0xb0] sm:$0xff]
      %v353 = vld [vmem:[#allocation2 + $0xc0] sm:$0xff]
      %v354 = vld [vmem:[#allocation2 + $0xc8] sm:$0xff]
      %v355 = vld [vmem:[#allocation2 + $0xd8] sm:$0xff]
      %v356 = vld [vmem:[#allocation2 + $0xe0] sm:$0xff]
      %v357 = vld [vmem:[#allocation2 + $0xf0] sm:$0xff]
      %v358 = vld [vmem:[#allocation2 + $0xf8] sm:$0xff]
      %v359 = vld [vmem:[#allocation2 + $0x108] sm:$0xff]
      %v360 = vld [vmem:[#allocation2 + $0x110] sm:$0xff]
      %v361 = vld [vmem:[#allocation2 + $0x120] sm:$0xff]
      %v362 = vld [vmem:[#allocation2 + $0x128] sm:$0xff]
      %v363 = vld [vmem:[#allocation2 + $0x138] sm:$0xff]
      %v364 = vld [vmem:[#allocation2 + $0x140] sm:$0xff]
      %v365 = vld [vmem:[#allocation2 + $0x150] sm:$0xff]
      %v366 = vld [vmem:[#allocation2 + $0x158] sm:$0xff]
      %v367 = vld [vmem:[#allocation2 + $0x168] sm:$0xff]
      %v368 = vld [vmem:[#allocation2 + $0x170] sm:$0xff]
      %v369 = vld [vmem:[#allocation2 + $0x1] sm:$0xff]
      %v370 = vld [vmem:[#allocation2 + $0x9] sm:$0xff]
      %v371 = vld [vmem:[#allocation2 + $0x19] sm:$0xff]
      %v372 = vld [vmem:[#allocation2 + $0x21] sm:$0xff]
      %v373 = vld [vmem:[#allocation2 + $0x31] sm:$0xff]
      %v374 = vld [vmem:[#allocation2 + $0x39] sm:$0xff]
      %v375 = vld [vmem:[#allocation2 + $0x49] sm:$0xff]
      %v376 = vld [vmem:[#allocation2 + $0x51] sm:$0xff]
      %v377 = vld [vmem:[#allocation2 + $0x61] sm:$0xff]
      %v378 = vld [vmem:[#allocation2 + $0x69] sm:$0xff]
      %v379 = vld [vmem:[#allocation2 + $0x79] sm:$0xff]
      %v380 = vld [vmem:[#allocation2 + $0x81] sm:$0xff]
      %v381 = vld [vmem:[#allocation2 + $0x91] sm:$0xff]
      %v382 = vld [vmem:[#allocation2 + $0x99] sm:$0xff]
      %v383 = vld [vmem:[#allocation2 + $0xa9] sm:$0xff]
      %v384 = vld [vmem:[#allocation2 + $0xb1] sm:$0xff]
      %v385 = vld [vmem:[#allocation2 + $0xc1] sm:$0xff]
      %v386 = vld [vmem:[#allocation2 + $0xc9] sm:$0xff]
      %v387 = vld [vmem:[#allocation2 + $0xd9] sm:$0xff]
      %v388 = vld [vmem:[#allocation2 + $0xe1] sm:$0xff]
      %v389 = vld [vmem:[#allocation2 + $0xf1] sm:$0xff]
      %v390 = vld [vmem:[#allocation2 + $0xf9] sm:$0xff]
      %v391 = vld [vmem:[#allocation2 + $0x109] sm:$0xff]
      %v392 = vld [vmem:[#allocation2 + $0x111] sm:$0xff]
      %v393 = vld [vmem:[#allocation2 + $0x121] sm:$0xff]
      %v394 = vld [vmem:[#allocation2 + $0x129] sm:$0xff]
      %v395 = vld [vmem:[#allocation2 + $0x139] sm:$0xff]
      %v396 = vld [vmem:[#allocation2 + $0x141] sm:$0xff]
      %v397 = vld [vmem:[#allocation2 + $0x151] sm:$0xff]
      %v398 = vld [vmem:[#allocation2 + $0x159] sm:$0xff]
      %v399 = vld [vmem:[#allocation2 + $0x169] sm:$0xff]
      %v400 = vld [vmem:[#allocation2 + $0x171] sm:$0xff]
      %v401 = vld [vmem:[#allocation2 + $0x2] sm:$0xff]
      %v402 = vld [vmem:[#allocation2 + $0xa] sm:$0xff]
      %v403 = vld [vmem:[#allocation2 + $0x1a] sm:$0xff]
      %v404 = vld [vmem:[#allocation2 + $0x22] sm:$0xff]
      %v405 = vld [vmem:[#allocation2 + $0x32] sm:$0xff]
      %v406 = vld [vmem:[#allocation2 + $0x3a] sm:$0xff]
      %v407 = vld [vmem:[#allocation2 + $0x4a] sm:$0xff]
      %v408 = vld [vmem:[#allocation2 + $0x52] sm:$0xff]
      %v409 = vld [vmem:[#allocation2 + $0x62] sm:$0xff]
      %v410 = vld [vmem:[#allocation2 + $0x6a] sm:$0xff]
      %v411 = vld [vmem:[#allocation2 + $0x7a] sm:$0xff]
      %v412 = vld [vmem:[#allocation2 + $0x82] sm:$0xff]
      %v413 = vld [vmem:[#allocation2 + $0x92] sm:$0xff]
      %v414 = vld [vmem:[#allocation2 + $0x9a] sm:$0xff]
      %v415 = vld [vmem:[#allocation2 + $0xaa] sm:$0xff]
      %v416 = vld [vmem:[#allocation2 + $0xb2] sm:$0xff]
      %v417 = vld [vmem:[#allocation2 + $0xc2] sm:$0xff]
      %v418 = vld [vmem:[#allocation2 + $0xca] sm:$0xff]
      %v419 = vld [vmem:[#allocation2 + $0xda] sm:$0xff]
      %v420 = vld [vmem:[#allocation2 + $0xe2] sm:$0xff]
      %v421 = vld [vmem:[#allocation2 + $0xf2] sm:$0xff]
      %v422 = vld [vmem:[#allocation2 + $0xfa] sm:$0xff]
      %v423 = vld [vmem:[#allocation2 + $0x10a] sm:$0xff]
      %v424 = vld [vmem:[#allocation2 + $0x112] sm:$0xff]
      %v425 = vld [vmem:[#allocation2 + $0x122] sm:$0xff]
      %v426 = vld [vmem:[#allocation2 + $0x12a] sm:$0xff]
      %v427 = vld [vmem:[#allocation2 + $0x13a] sm:$0xff]
      %v428 = vld [vmem:[#allocation2 + $0x142] sm:$0xff]
      %v429 = vld [vmem:[#allocation2 + $0x152] sm:$0xff]
      %v430 = vld [vmem:[#allocation2 + $0x15a] sm:$0xff]
      %v431 = vld [vmem:[#allocation2 + $0x16a] sm:$0xff]
      %v432 = vld [vmem:[#allocation2 + $0x172] sm:$0xff]
      %v433 = vld [vmem:[%s304] sm:$0xff]
      %v434 = vld [vmem:[%s304 + $0x8] sm:$0xff]
      %v435 = vld [vmem:[%s304 + $0x18] sm:$0xff]
      %v436 = vld [vmem:[%s304 + $0x20] sm:$0xff]
      %v437 = vld [vmem:[%s304 + $0x30] sm:$0xff]
      %v438 = vld [vmem:[%s304 + $0x38] sm:$0xff]
      %v439 = vld [vmem:[%s304 + $0x48] sm:$0xff]
      %v440 = vld [vmem:[%s304 + $0x50] sm:$0xff]
      %v441 = vld [vmem:[%s304 + $0x60] sm:$0xff]
      %v442 = vld [vmem:[%s304 + $0x68] sm:$0xff]
      %v443 = vld [vmem:[%s304 + $0x78] sm:$0xff]
      %v444 = vld [vmem:[%s304 + $0x80] sm:$0xff]
      %v445 = vld [vmem:[%s304 + $0x90] sm:$0xff]
      %v446 = vld [vmem:[%s304 + $0x98] sm:$0xff]
      %v447 = vld [vmem:[%s304 + $0xa8] sm:$0xff]
      %v448 = vld [vmem:[%s304 + $0xb0] sm:$0xff]
      %v449 = vld [vmem:[%s304 + $0xc0] sm:$0xff]
      %v450 = vld [vmem:[%s304 + $0xc8] sm:$0xff]
      %v451 = vld [vmem:[%s304 + $0xd8] sm:$0xff]
      %v452 = vld [vmem:[%s304 + $0xe0] sm:$0xff]
      %v453 = vld [vmem:[%s304 + $0xf0] sm:$0xff]
      %v454 = vld [vmem:[%s304 + $0xf8] sm:$0xff]
      %v455 = vld [vmem:[%s304 + $0x108] sm:$0xff]
      %v456 = vld [vmem:[%s304 + $0x110] sm:$0xff]
      %v457 = vld [vmem:[%s304 + $0x120] sm:$0xff]
      %v458 = vld [vmem:[%s304 + $0x128] sm:$0xff]
      %v459 = vld [vmem:[%s304 + $0x138] sm:$0xff]
      %v460 = vld [vmem:[%s304 + $0x140] sm:$0xff]
      %v461 = vld [vmem:[%s304 + $0x150] sm:$0xff]
      %v462 = vld [vmem:[%s304 + $0x158] sm:$0xff]
      %v463 = vld [vmem:[%s304 + $0x168] sm:$0xff]
      %v464 = vld [vmem:[%s304 + $0x170] sm:$0xff]
      %v465 = vld [vmem:[%s304 + $0x1] sm:$0xff]
      %v466 = vld [vmem:[%s304 + $0x9] sm:$0xff]
      %v467 = vld [vmem:[%s304 + $0x19] sm:$0xff]
      %v468 = vld [vmem:[%s304 + $0x21] sm:$0xff]
      %v469 = vld [vmem:[%s304 + $0x31] sm:$0xff]
      %v470 = vld [vmem:[%s304 + $0x39] sm:$0xff]
      %v471 = vld [vmem:[%s304 + $0x49] sm:$0xff]
      %v472 = vld [vmem:[%s304 + $0x51] sm:$0xff]
      %v473 = vld [vmem:[%s304 + $0x61] sm:$0xff]
      %v474 = vld [vmem:[%s304 + $0x69] sm:$0xff]
      %v475 = vld [vmem:[%s304 + $0x79] sm:$0xff]
      %v476 = vld [vmem:[%s304 + $0x81] sm:$0xff]
      %v477 = vld [vmem:[%s304 + $0x91] sm:$0xff]
      %v478 = vld [vmem:[%s304 + $0x99] sm:$0xff]
      %v479 = vld [vmem:[%s304 + $0xa9] sm:$0xff]
      %v480 = vld [vmem:[%s304 + $0xb1] sm:$0xff]
      %v481 = vld [vmem:[%s304 + $0xc1] sm:$0xff]
      %v482 = vld [vmem:[%s304 + $0xc9] sm:$0xff]
      %v483 = vld [vmem:[%s304 + $0xd9] sm:$0xff]
      %v484 = vld [vmem:[%s304 + $0xe1] sm:$0xff]
      %v485 = vld [vmem:[%s304 + $0xf1] sm:$0xff]
      %v486 = vld [vmem:[%s304 + $0xf9] sm:$0xff]
      %v487 = vld [vmem:[%s304 + $0x109] sm:$0xff]
      %v488 = vld [vmem:[%s304 + $0x111] sm:$0xff]
      %v489 = vld [vmem:[%s304 + $0x121] sm:$0xff]
      %v490 = vld [vmem:[%s304 + $0x129] sm:$0xff]
      %v491 = vld [vmem:[%s304 + $0x139] sm:$0xff]
      %v492 = vld [vmem:[%s304 + $0x141] sm:$0xff]
      %v493 = vld [vmem:[%s304 + $0x151] sm:$0xff]
      %v494 = vld [vmem:[%s304 + $0x159] sm:$0xff]
      %v495 = vld [vmem:[%s304 + $0x169] sm:$0xff]
      %v496 = vld [vmem:[%s304 + $0x171] sm:$0xff]
      %v497 = vld [vmem:[%s304 + $0x2] sm:$0xff]
      %v498 = vld [vmem:[%s304 + $0xa] sm:$0xff]
      %v499 = vld [vmem:[%s304 + $0x1a] sm:$0xff]
      %v500 = vld [vmem:[%s304 + $0x22] sm:$0xff]
      %v501 = vld [vmem:[%s304 + $0x32] sm:$0xff]
      %v502 = vld [vmem:[%s304 + $0x3a] sm:$0xff]
      %v503 = vld [vmem:[%s304 + $0x4a] sm:$0xff]
      %v504 = vld [vmem:[%s304 + $0x52] sm:$0xff]
      %v505 = vld [vmem:[%s304 + $0x62] sm:$0xff]
      %v506 = vld [vmem:[%s304 + $0x6a] sm:$0xff]
      %v507 = vld [vmem:[%s304 + $0x7a] sm:$0xff]
      %v508 = vld [vmem:[%s304 + $0x82] sm:$0xff]
      %v509 = vld [vmem:[%s304 + $0x92] sm:$0xff]
      %v510 = vld [vmem:[%s304 + $0x9a] sm:$0xff]
      %v511 = vld [vmem:[%s304 + $0xaa] sm:$0xff]
      %v512 = vld [vmem:[%s304 + $0xb2] sm:$0xff]
      %v513 = vld [vmem:[%s304 + $0xc2] sm:$0xff]
      %v514 = vld [vmem:[%s304 + $0xca] sm:$0xff]
      %v515 = vld [vmem:[%s304 + $0xda] sm:$0xff]
      %v516 = vld [vmem:[%s304 + $0xe2] sm:$0xff]
      %v517 = vld [vmem:[%s304 + $0xf2] sm:$0xff]
      %v518 = vld [vmem:[%s304 + $0xfa] sm:$0xff]
      %v519 = vld [vmem:[%s304 + $0x10a] sm:$0xff]
      %v520 = vld [vmem:[%s304 + $0x112] sm:$0xff]
      %v521 = vld [vmem:[%s304 + $0x122] sm:$0xff]
      %v522 = vld [vmem:[%s304 + $0x12a] sm:$0xff]
      %v523 = vld [vmem:[%s304 + $0x13a] sm:$0xff]
      %v524 = vld [vmem:[%s304 + $0x142] sm:$0xff]
      %v525 = vld [vmem:[%s304 + $0x152] sm:$0xff]
      %v526 = vld [vmem:[%s304 + $0x15a] sm:$0xff]
      %v527 = vld [vmem:[%s304 + $0x16a] sm:$0xff]
      %v528 = vld [vmem:[%s304 + $0x172] sm:$0xff]
      %s529 = scalar_lea.vmem [#allocation2], 48
      %v530 = vld [vmem:[%s529] sm:$0xff]
      %v531 = vld [vmem:[%s529 + $0x8] sm:$0xff]
      %v532 = vld [vmem:[%s529 + $0x18] sm:$0xff]
      %v533 = vld [vmem:[%s529 + $0x20] sm:$0xff]
      %v534 = vld [vmem:[%s529 + $0x30] sm:$0xff]
      %v535 = vld [vmem:[%s529 + $0x38] sm:$0xff]
      %v536 = vld [vmem:[%s529 + $0x48] sm:$0xff]
      %v537 = vld [vmem:[%s529 + $0x50] sm:$0xff]
      %v538 = vld [vmem:[%s529 + $0x60] sm:$0xff]
      %v539 = vld [vmem:[%s529 + $0x68] sm:$0xff]
      %v540 = vld [vmem:[%s529 + $0x78] sm:$0xff]
      %v541 = vld [vmem:[%s529 + $0x80] sm:$0xff]
      %v542 = vld [vmem:[%s529 + $0x90] sm:$0xff]
      %v543 = vld [vmem:[%s529 + $0x98] sm:$0xff]
      %v544 = vld [vmem:[%s529 + $0xa8] sm:$0xff]
      %v545 = vld [vmem:[%s529 + $0xb0] sm:$0xff]
      %v546 = vld [vmem:[%s529 + $0xc0] sm:$0xff]
      %v547 = vld [vmem:[%s529 + $0xc8] sm:$0xff]
      %v548 = vld [vmem:[%s529 + $0xd8] sm:$0xff]
      %v549 = vld [vmem:[%s529 + $0xe0] sm:$0xff]
      %v550 = vld [vmem:[%s529 + $0xf0] sm:$0xff]
      %v551 = vld [vmem:[%s529 + $0xf8] sm:$0xff]
      %v552 = vld [vmem:[%s529 + $0x108] sm:$0xff]
      %v553 = vld [vmem:[%s529 + $0x110] sm:$0xff]
      %v554 = vld [vmem:[%s529 + $0x120] sm:$0xff]
      %v555 = vld [vmem:[%s529 + $0x128] sm:$0xff]
      %v556 = vld [vmem:[%s529 + $0x138] sm:$0xff]
      %v557 = vld [vmem:[%s529 + $0x140] sm:$0xff]
      %v558 = vld [vmem:[%s529 + $0x150] sm:$0xff]
      %v559 = vld [vmem:[%s529 + $0x158] sm:$0xff]
      %v560 = vld [vmem:[%s529 + $0x168] sm:$0xff]
      %v561 = vld [vmem:[%s529 + $0x170] sm:$0xff]
      %v562 = vld [vmem:[%s529 + $0x1] sm:$0xff]
      %v563 = vld [vmem:[%s529 + $0x9] sm:$0xff]
      %v564 = vld [vmem:[%s529 + $0x19] sm:$0xff]
      %v565 = vld [vmem:[%s529 + $0x21] sm:$0xff]
      %v566 = vld [vmem:[%s529 + $0x31] sm:$0xff]
      %v567 = vld [vmem:[%s529 + $0x39] sm:$0xff]
      %v568 = vld [vmem:[%s529 + $0x49] sm:$0xff]
      %v569 = vld [vmem:[%s529 + $0x51] sm:$0xff]
      %v570 = vld [vmem:[%s529 + $0x61] sm:$0xff]
      %v571 = vld [vmem:[%s529 + $0x69] sm:$0xff]
      %v572 = vld [vmem:[%s529 + $0x79] sm:$0xff]
      %v573 = vld [vmem:[%s529 + $0x81] sm:$0xff]
      %v574 = vld [vmem:[%s529 + $0x91] sm:$0xff]
      %v575 = vld [vmem:[%s529 + $0x99] sm:$0xff]
      %v576 = vld [vmem:[%s529 + $0xa9] sm:$0xff]
      %v577 = vld [vmem:[%s529 + $0xb1] sm:$0xff]
      %v578 = vld [vmem:[%s529 + $0xc1] sm:$0xff]
      %v579 = vld [vmem:[%s529 + $0xc9] sm:$0xff]
      %v580 = vld [vmem:[%s529 + $0xd9] sm:$0xff]
      %v581 = vld [vmem:[%s529 + $0xe1] sm:$0xff]
      %v582 = vld [vmem:[%s529 + $0xf1] sm:$0xff]
      %v583 = vld [vmem:[%s529 + $0xf9] sm:$0xff]
      %v584 = vld [vmem:[%s529 + $0x109] sm:$0xff]
      %v585 = vld [vmem:[%s529 + $0x111] sm:$0xff]
      %v586 = vld [vmem:[%s529 + $0x121] sm:$0xff]
      %v587 = vld [vmem:[%s529 + $0x129] sm:$0xff]
      %v588 = vld [vmem:[%s529 + $0x139] sm:$0xff]
      %v589 = vld [vmem:[%s529 + $0x141] sm:$0xff]
      %v590 = vld [vmem:[%s529 + $0x151] sm:$0xff]
      %v591 = vld [vmem:[%s529 + $0x159] sm:$0xff]
      %v592 = vld [vmem:[%s529 + $0x169] sm:$0xff]
      %v593 = vld [vmem:[%s529 + $0x171] sm:$0xff]
      %v594 = vld [vmem:[%s529 + $0x2] sm:$0xff]
      %v595 = vld [vmem:[%s529 + $0xa] sm:$0xff]
      %v596 = vld [vmem:[%s529 + $0x1a] sm:$0xff]
      %v597 = vld [vmem:[%s529 + $0x22] sm:$0xff]
      %v598 = vld [vmem:[%s529 + $0x32] sm:$0xff]
      %v599 = vld [vmem:[%s529 + $0x3a] sm:$0xff]
      %v600 = vld [vmem:[%s529 + $0x4a] sm:$0xff]
      %v601 = vld [vmem:[%s529 + $0x52] sm:$0xff]
      %v602 = vld [vmem:[%s529 + $0x62] sm:$0xff]
      %v603 = vld [vmem:[%s529 + $0x6a] sm:$0xff]
      %v604 = vld [vmem:[%s529 + $0x7a] sm:$0xff]
      %v605 = vld [vmem:[%s529 + $0x82] sm:$0xff]
      %v606 = vld [vmem:[%s529 + $0x92] sm:$0xff]
      %v607 = vld [vmem:[%s529 + $0x9a] sm:$0xff]
      %v608 = vld [vmem:[%s529 + $0xaa] sm:$0xff]
      %v609 = vld [vmem:[%s529 + $0xb2] sm:$0xff]
      %v610 = vld [vmem:[%s529 + $0xc2] sm:$0xff]
      %v611 = vld [vmem:[%s529 + $0xca] sm:$0xff]
      %v612 = vld [vmem:[%s529 + $0xda] sm:$0xff]
      %v613 = vld [vmem:[%s529 + $0xe2] sm:$0xff]
      %v614 = vld [vmem:[%s529 + $0xf2] sm:$0xff]
      %v615 = vld [vmem:[%s529 + $0xfa] sm:$0xff]
      %v616 = vld [vmem:[%s529 + $0x10a] sm:$0xff]
      %v617 = vld [vmem:[%s529 + $0x112] sm:$0xff]
      %v618 = vld [vmem:[%s529 + $0x122] sm:$0xff]
      %v619 = vld [vmem:[%s529 + $0x12a] sm:$0xff]
      %v620 = vld [vmem:[%s529 + $0x13a] sm:$0xff]
      %v621 = vld [vmem:[%s529 + $0x142] sm:$0xff]
      %v622 = vld [vmem:[%s529 + $0x152] sm:$0xff]
      %v623 = vld [vmem:[%s529 + $0x15a] sm:$0xff]
      %v624 = vld [vmem:[%s529 + $0x16a] sm:$0xff]
      %v625 = vld [vmem:[%s529 + $0x172] sm:$0xff]
      %v626 = vpack.c.bf16 %v338, %v337
      %v627 = vpack.c.bf16 %v340, %v339
      %v628 = vpack.c.bf16 %v342, %v341
      %v629 = vpack.c.bf16 %v344, %v343
      %v630 = vpack.c.bf16 %v346, %v345
      %v631 = vpack.c.bf16 %v348, %v347
      %v632 = vpack.c.bf16 %v350, %v349
      %v633 = vpack.c.bf16 %v352, %v351
      %v634 = vpack.c.bf16 %v354, %v353
      %v635 = vpack.c.bf16 %v356, %v355
      %v636 = vpack.c.bf16 %v358, %v357
      %v637 = vpack.c.bf16 %v360, %v359
      %v638 = vpack.c.bf16 %v362, %v361
      %v639 = vpack.c.bf16 %v364, %v363
      %v640 = vpack.c.bf16 %v366, %v365
      %v641 = vpack.c.bf16 %v368, %v367
      %v642 = vld [vmem:[%s1] sm:$0x3]
      %v643 = vpack.c.bf16 %v370, %v369
      %v644 = vpack.c.bf16 %v372, %v371
      %v645 = vpack.c.bf16 %v374, %v373
      %v646 = vpack.c.bf16 %v376, %v375
      %v647 = vpack.c.bf16 %v378, %v377
      %v648 = vpack.c.bf16 %v380, %v379
      %v649 = vpack.c.bf16 %v382, %v381
      %v650 = vpack.c.bf16 %v384, %v383
      %v651 = vpack.c.bf16 %v386, %v385
      %v652 = vpack.c.bf16 %v388, %v387
      %v653 = vpack.c.bf16 %v390, %v389
      %v654 = vpack.c.bf16 %v392, %v391
      %v655 = vpack.c.bf16 %v394, %v393
      %v656 = vpack.c.bf16 %v396, %v395
      %v657 = vpack.c.bf16 %v398, %v397
      %v658 = vpack.c.bf16 %v400, %v399
      %v659 = vld [vmem:[%s1] sm:$0xc]
      %v661 = vunpack.c.l.b16 %v659
      %v662 = vpack.c.b16 %v661, %v661
      %v663 = vrot.slane %v662, 2
      %v665 = vsel %vm226, %v643, 0
      %v668 = vsel %vm226, %v644, 0
      %v671 = vsel %vm226, %v645, 0
      %v674 = vsel %vm226, %v646, 0
      %v677 = vsel %vm226, %v647, 0
      %v680 = vsel %vm226, %v648, 0
      %v683 = vsel %vm226, %v649, 0
      %v686 = vsel %vm226, %v650, 0
      %v689 = vsel %vm226, %v651, 0
      %v692 = vsel %vm226, %v652, 0
      %v695 = vsel %vm226, %v653, 0
      %v698 = vsel %vm226, %v654, 0
      %v701 = vsel %vm226, %v655, 0
      %v704 = vsel %vm226, %v656, 0
      %v707 = vsel %vm226, %v657, 0
      %v710 = vsel %vm226, %v658, 0
      %vm712 = vcmask 1041408
      %v714 = vsel %vm712, %v663, 0
      %716 = vmatprep.subr.bf16.mxu0 0
      %717 = vmatpush1.bf16.msra.mxu0 0
      %718 = vmatprep.subr.bf16.mxu0 0
      %719 = vmatpush1.bf16.msra.mxu0 0
      %720 = vmatprep.subr.bf16.mxu0 0
      %721 = vmatpush1.bf16.msra.mxu0 0
      %722 = vmatprep.subr.bf16.mxu0 0
      %723 = vmatpush1.bf16.msra.mxu0 0
      %724 = vmatprep.subr.bf16.mxu0 0
      %725 = vmatpush1.bf16.msra.mxu0 0
      %726 = vmatprep.subr.bf16.mxu0 0
      %727 = vmatpush1.bf16.msra.mxu0 0
      %728 = vmatprep.subr.bf16.mxu0 0
      %729 = vmatpush1.bf16.msra.mxu0 0
      %730 = vmatprep.subr.bf16.mxu0 0
      %731 = vmatpush1.bf16.msra.mxu0 %v714
      %732 = vmatprep.subr.bf16.mxu0 0
      %733 = vmatpush2.bf16.msra.mxu0 0
      %734 = vmatprep.subr.bf16.mxu0 0
      %735 = vmatpush2.bf16.msra.mxu0 0
      %736 = vmatprep.subr.bf16.mxu0 0
      %737 = vmatpush2.bf16.msra.mxu0 0
      %738 = vmatprep.subr.bf16.mxu0 0
      %739 = vmatpush2.bf16.msra.mxu0 0
      %740 = vmatprep.subr.bf16.mxu0 0
      %741 = vmatpush2.bf16.msra.mxu0 0
      %742 = vmatprep.subr.bf16.mxu0 0
      %743 = vmatpush2.bf16.msra.mxu0 0
      %744 = vmatprep.subr.bf16.mxu0 0
      %745 = vmatpush2.bf16.msra.mxu0 0
      %746 = vmatprep.subr.bf16.mxu0 0
      %747 = vmatpush2.bf16.msra.mxu0 0
      %748 = vmatprep.mubr.bf16.mxu0 0
      %749 = vmatmul.mubr.bf16.gmra.mxu0 %v665
      %v750 = vpop.f32.mrf.mxu0
      %v751 = vadd.f32 0.0, %v750
      %v752 = vpop.f32.mrf.mxu0
      %v753 = vpop.f32.mrf.mxu0
      %v754 = vadd.f32 0.0, %v753
      %v755 = vpop.f32.mrf.mxu0
      %756 = vmatprep.mubr.bf16.mxu0 0
      %757 = vmatmul.mubr.bf16.gmra.mxu0 %v668
      %v758 = vpop.f32.mrf.mxu0
      %v759 = vadd.f32 0.0, %v758
      %v760 = vpop.f32.mrf.mxu0
      %v761 = vpop.f32.mrf.mxu0
      %v762 = vadd.f32 0.0, %v761
      %v763 = vpop.f32.mrf.mxu0
      %764 = vmatprep.mubr.bf16.mxu0 0
      %765 = vmatmul.mubr.bf16.gmra.mxu0 %v671
      %v766 = vpop.f32.mrf.mxu0
      %v767 = vadd.f32 0.0, %v766
      %v768 = vpop.f32.mrf.mxu0
      %v769 = vpop.f32.mrf.mxu0
      %v770 = vadd.f32 0.0, %v769
      %v771 = vpop.f32.mrf.mxu0
      %772 = vmatprep.mubr.bf16.mxu0 0
      %773 = vmatmul.mubr.bf16.gmra.mxu0 %v674
      %v774 = vpop.f32.mrf.mxu0
      %v775 = vadd.f32 0.0, %v774
      %v776 = vpop.f32.mrf.mxu0
      %v777 = vpop.f32.mrf.mxu0
      %v778 = vadd.f32 0.0, %v777
      %v779 = vpop.f32.mrf.mxu0
      %780 = vmatprep.mubr.bf16.mxu0 0
      %781 = vmatmul.mubr.bf16.gmra.mxu0 %v677
      %v782 = vpop.f32.mrf.mxu0
      %v783 = vadd.f32 0.0, %v782
      %v784 = vpop.f32.mrf.mxu0
      %v785 = vpop.f32.mrf.mxu0
      %v786 = vadd.f32 0.0, %v785
      %v787 = vpop.f32.mrf.mxu0
      %788 = vmatprep.mubr.bf16.mxu0 0
      %789 = vmatmul.mubr.bf16.gmra.mxu0 %v680
      %v790 = vpop.f32.mrf.mxu0
      %v791 = vadd.f32 0.0, %v790
      %v792 = vpop.f32.mrf.mxu0
      %v793 = vpop.f32.mrf.mxu0
      %v794 = vadd.f32 0.0, %v793
      %v795 = vpop.f32.mrf.mxu0
      %796 = vmatprep.mubr.bf16.mxu0 0
      %797 = vmatmul.mubr.bf16.gmra.mxu0 %v683
      %v798 = vpop.f32.mrf.mxu0
      %v799 = vadd.f32 0.0, %v798
      %v800 = vpop.f32.mrf.mxu0
      %v801 = vpop.f32.mrf.mxu0
      %v802 = vadd.f32 0.0, %v801
      %v803 = vpop.f32.mrf.mxu0
      %804 = vmatprep.mubr.bf16.mxu0 0
      %805 = vmatmul.mubr.bf16.gmra.mxu0 %v686
      %v806 = vpop.f32.mrf.mxu0
      %v807 = vadd.f32 0.0, %v806
      %v808 = vpop.f32.mrf.mxu0
      %v809 = vpop.f32.mrf.mxu0
      %v810 = vadd.f32 0.0, %v809
      %v811 = vpop.f32.mrf.mxu0
      %812 = vmatprep.mubr.bf16.mxu0 0
      %813 = vmatmul.mubr.bf16.gmra.mxu0 %v689
      %v814 = vpop.f32.mrf.mxu0
      %v815 = vadd.f32 0.0, %v814
      %v816 = vpop.f32.mrf.mxu0
      %v817 = vpop.f32.mrf.mxu0
      %v818 = vadd.f32 0.0, %v817
      %v819 = vpop.f32.mrf.mxu0
      %820 = vmatprep.mubr.bf16.mxu0 0
      %821 = vmatmul.mubr.bf16.gmra.mxu0 %v692
      %v822 = vpop.f32.mrf.mxu0
      %v823 = vadd.f32 0.0, %v822
      %v824 = vpop.f32.mrf.mxu0
      %v825 = vpop.f32.mrf.mxu0
      %v826 = vadd.f32 0.0, %v825
      %v827 = vpop.f32.mrf.mxu0
      %828 = vmatprep.mubr.bf16.mxu0 0
      %829 = vmatmul.mubr.bf16.gmra.mxu0 %v695
      %v830 = vpop.f32.mrf.mxu0
      %v831 = vadd.f32 0.0, %v830
      %v832 = vpop.f32.mrf.mxu0
      %v833 = vpop.f32.mrf.mxu0
      %v834 = vadd.f32 0.0, %v833
      %v835 = vpop.f32.mrf.mxu0
      %836 = vmatprep.mubr.bf16.mxu0 0
      %837 = vmatmul.mubr.bf16.gmra.mxu0 %v698
      %v838 = vpop.f32.mrf.mxu0
      %v839 = vadd.f32 0.0, %v838
      %v840 = vpop.f32.mrf.mxu0
      %v841 = vpop.f32.mrf.mxu0
      %v842 = vadd.f32 0.0, %v841
      %v843 = vpop.f32.mrf.mxu0
      %844 = vmatprep.mubr.bf16.mxu0 0
      %845 = vmatmul.mubr.bf16.gmra.mxu0 %v701
      %v846 = vpop.f32.mrf.mxu0
      %v847 = vadd.f32 0.0, %v846
      %v848 = vpop.f32.mrf.mxu0
      %v849 = vpop.f32.mrf.mxu0
      %v850 = vadd.f32 0.0, %v849
      %v851 = vpop.f32.mrf.mxu0
      %852 = vmatprep.mubr.bf16.mxu0 0
      %853 = vmatmul.mubr.bf16.gmra.mxu0 %v704
      %v854 = vpop.f32.mrf.mxu0
      %v855 = vadd.f32 0.0, %v854
      %v856 = vpop.f32.mrf.mxu0
      %v857 = vpop.f32.mrf.mxu0
      %v858 = vadd.f32 0.0, %v857
      %v859 = vpop.f32.mrf.mxu0
      %860 = vmatprep.mubr.bf16.mxu0 0
      %861 = vmatmul.mubr.bf16.gmra.mxu0 %v707
      %v862 = vpop.f32.mrf.mxu0
      %v863 = vadd.f32 0.0, %v862
      %v864 = vpop.f32.mrf.mxu0
      %v865 = vpop.f32.mrf.mxu0
      %v866 = vadd.f32 0.0, %v865
      %v867 = vpop.f32.mrf.mxu0
      %868 = vmatprep.mubr.bf16.mxu0 0
      %869 = vmatmul.mubr.bf16.gmra.mxu0 %v710
      %v870 = vpop.f32.mrf.mxu0
      %v871 = vadd.f32 0.0, %v870
      %v872 = vpop.f32.mrf.mxu0
      %v873 = vpop.f32.mrf.mxu0
      %v874 = vadd.f32 0.0, %v873
      %v875 = vpop.f32.mrf.mxu0
      %876 = vdwg.mxu0
      %v878 = vsel %vm226, %v626, 0
      %v881 = vsel %vm226, %v627, 0
      %v884 = vsel %vm226, %v628, 0
      %v887 = vsel %vm226, %v629, 0
      %v890 = vsel %vm226, %v630, 0
      %v893 = vsel %vm226, %v631, 0
      %v896 = vsel %vm226, %v632, 0
      %v899 = vsel %vm226, %v633, 0
      %v902 = vsel %vm226, %v634, 0
      %v905 = vsel %vm226, %v635, 0
      %v908 = vsel %vm226, %v636, 0
      %v911 = vsel %vm226, %v637, 0
      %v914 = vsel %vm226, %v638, 0
      %v917 = vsel %vm226, %v639, 0
      %v920 = vsel %vm226, %v640, 0
      %v923 = vsel %vm226, %v641, 0
      %v926 = vsel %vm712, %v642, 0
      %928 = vmatprep.subr.bf16.mxu0 0
      %929 = vmatpush1.bf16.msra.mxu0 0
      %930 = vmatprep.subr.bf16.mxu0 0
      %931 = vmatpush1.bf16.msra.mxu0 0
      %932 = vmatprep.subr.bf16.mxu0 0
      %933 = vmatpush1.bf16.msra.mxu0 0
      %934 = vmatprep.subr.bf16.mxu0 0
      %935 = vmatpush1.bf16.msra.mxu0 0
      %936 = vmatprep.subr.bf16.mxu0 0
      %937 = vmatpush1.bf16.msra.mxu0 0
      %938 = vmatprep.subr.bf16.mxu0 0
      %939 = vmatpush1.bf16.msra.mxu0 0
      %940 = vmatprep.subr.bf16.mxu0 0
      %941 = vmatpush1.bf16.msra.mxu0 0
      %942 = vmatprep.subr.bf16.mxu0 0
      %943 = vmatpush1.bf16.msra.mxu0 %v926
      %944 = vmatprep.subr.bf16.mxu0 0
      %945 = vmatpush2.bf16.msra.mxu0 0
      %946 = vmatprep.subr.bf16.mxu0 0
      %947 = vmatpush2.bf16.msra.mxu0 0
      %948 = vmatprep.subr.bf16.mxu0 0
      %949 = vmatpush2.bf16.msra.mxu0 0
      %950 = vmatprep.subr.bf16.mxu0 0
      %951 = vmatpush2.bf16.msra.mxu0 0
      %952 = vmatprep.subr.bf16.mxu0 0
      %953 = vmatpush2.bf16.msra.mxu0 0
      %954 = vmatprep.subr.bf16.mxu0 0
      %955 = vmatpush2.bf16.msra.mxu0 0
      %956 = vmatprep.subr.bf16.mxu0 0
      %957 = vmatpush2.bf16.msra.mxu0 0
      %958 = vmatprep.subr.bf16.mxu0 0
      %959 = vmatpush2.bf16.msra.mxu0 0
      %960 = vmatprep.mubr.bf16.mxu0 0
      %961 = vmatmul.mubr.bf16.gmra.mxu0 %v878
      %v962 = vpop.f32.mrf.mxu0
      %v963 = vadd.f32 %v751, %v962
      %v964 = vpop.f32.mrf.mxu0
      %v965 = vpop.f32.mrf.mxu0
      %v966 = vadd.f32 %v754, %v965
      %v967 = vpop.f32.mrf.mxu0
      %968 = vmatprep.mubr.bf16.mxu0 0
      %969 = vmatmul.mubr.bf16.gmra.mxu0 %v881
      %v970 = vpop.f32.mrf.mxu0
      %v971 = vadd.f32 %v759, %v970
      %v972 = vpop.f32.mrf.mxu0
      %v973 = vpop.f32.mrf.mxu0
      %v974 = vadd.f32 %v762, %v973
      %v975 = vpop.f32.mrf.mxu0
      %976 = vmatprep.mubr.bf16.mxu0 0
      %977 = vmatmul.mubr.bf16.gmra.mxu0 %v884
      %v978 = vpop.f32.mrf.mxu0
      %v979 = vadd.f32 %v767, %v978
      %v980 = vpop.f32.mrf.mxu0
      %v981 = vpop.f32.mrf.mxu0
      %v982 = vadd.f32 %v770, %v981
      %v983 = vpop.f32.mrf.mxu0
      %984 = vmatprep.mubr.bf16.mxu0 0
      %985 = vmatmul.mubr.bf16.gmra.mxu0 %v887
      %v986 = vpop.f32.mrf.mxu0
      %v987 = vadd.f32 %v775, %v986
      %v988 = vpop.f32.mrf.mxu0
      %v989 = vpop.f32.mrf.mxu0
      %v990 = vadd.f32 %v778, %v989
      %v991 = vpop.f32.mrf.mxu0
      %992 = vmatprep.mubr.bf16.mxu0 0
      %993 = vmatmul.mubr.bf16.gmra.mxu0 %v890
      %v994 = vpop.f32.mrf.mxu0
      %v995 = vadd.f32 %v783, %v994
      %v996 = vpop.f32.mrf.mxu0
      %v997 = vpop.f32.mrf.mxu0
      %v998 = vadd.f32 %v786, %v997
      %v999 = vpop.f32.mrf.mxu0
      %1000 = vmatprep.mubr.bf16.mxu0 0
      %1001 = vmatmul.mubr.bf16.gmra.mxu0 %v893
      %v1002 = vpop.f32.mrf.mxu0
      %v1003 = vadd.f32 %v791, %v1002
      %v1004 = vpop.f32.mrf.mxu0
      %v1005 = vpop.f32.mrf.mxu0
      %v1006 = vadd.f32 %v794, %v1005
      %v1007 = vpop.f32.mrf.mxu0
      %1008 = vmatprep.mubr.bf16.mxu0 0
      %1009 = vmatmul.mubr.bf16.gmra.mxu0 %v896
      %v1010 = vpop.f32.mrf.mxu0
      %v1011 = vadd.f32 %v799, %v1010
      %v1012 = vpop.f32.mrf.mxu0
      %v1013 = vpop.f32.mrf.mxu0
      %v1014 = vadd.f32 %v802, %v1013
      %v1015 = vpop.f32.mrf.mxu0
      %1016 = vmatprep.mubr.bf16.mxu0 0
      %1017 = vmatmul.mubr.bf16.gmra.mxu0 %v899
      %v1018 = vpop.f32.mrf.mxu0
      %v1019 = vadd.f32 %v807, %v1018
      %v1020 = vpop.f32.mrf.mxu0
      %v1021 = vpop.f32.mrf.mxu0
      %v1022 = vadd.f32 %v810, %v1021
      %v1023 = vpop.f32.mrf.mxu0
      %1024 = vmatprep.mubr.bf16.mxu0 0
      %1025 = vmatmul.mubr.bf16.gmra.mxu0 %v902
      %v1026 = vpop.f32.mrf.mxu0
      %v1027 = vadd.f32 %v815, %v1026
      %v1028 = vpop.f32.mrf.mxu0
      %v1029 = vpop.f32.mrf.mxu0
      %v1030 = vadd.f32 %v818, %v1029
      %v1031 = vpop.f32.mrf.mxu0
      %1032 = vmatprep.mubr.bf16.mxu0 0
      %1033 = vmatmul.mubr.bf16.gmra.mxu0 %v905
      %v1034 = vpop.f32.mrf.mxu0
      %v1035 = vadd.f32 %v823, %v1034
      %v1036 = vpop.f32.mrf.mxu0
      %v1037 = vpop.f32.mrf.mxu0
      %v1038 = vadd.f32 %v826, %v1037
      %v1039 = vpop.f32.mrf.mxu0
      %1040 = vmatprep.mubr.bf16.mxu0 0
      %1041 = vmatmul.mubr.bf16.gmra.mxu0 %v908
      %v1042 = vpop.f32.mrf.mxu0
      %v1043 = vadd.f32 %v831, %v1042
      %v1044 = vpop.f32.mrf.mxu0
      %v1045 = vpop.f32.mrf.mxu0
      %v1046 = vadd.f32 %v834, %v1045
      %v1047 = vpop.f32.mrf.mxu0
      %1048 = vmatprep.mubr.bf16.mxu0 0
      %1049 = vmatmul.mubr.bf16.gmra.mxu0 %v911
      %v1050 = vpop.f32.mrf.mxu0
      %v1051 = vadd.f32 %v839, %v1050
      %v1052 = vpop.f32.mrf.mxu0
      %v1053 = vpop.f32.mrf.mxu0
      %v1054 = vadd.f32 %v842, %v1053
      %v1055 = vpop.f32.mrf.mxu0
      %1056 = vmatprep.mubr.bf16.mxu0 0
      %1057 = vmatmul.mubr.bf16.gmra.mxu0 %v914
      %v1058 = vpop.f32.mrf.mxu0
      %v1059 = vadd.f32 %v847, %v1058
      %v1060 = vpop.f32.mrf.mxu0
      %v1061 = vpop.f32.mrf.mxu0
      %v1062 = vadd.f32 %v850, %v1061
      %v1063 = vpop.f32.mrf.mxu0
      %1064 = vmatprep.mubr.bf16.mxu0 0
      %1065 = vmatmul.mubr.bf16.gmra.mxu0 %v917
      %v1066 = vpop.f32.mrf.mxu0
      %v1067 = vadd.f32 %v855, %v1066
      %v1068 = vpop.f32.mrf.mxu0
      %v1069 = vpop.f32.mrf.mxu0
      %v1070 = vadd.f32 %v858, %v1069
      %v1071 = vpop.f32.mrf.mxu0
      %1072 = vmatprep.mubr.bf16.mxu0 0
      %1073 = vmatmul.mubr.bf16.gmra.mxu0 %v920
      %v1074 = vpop.f32.mrf.mxu0
      %v1075 = vadd.f32 %v863, %v1074
      %v1076 = vpop.f32.mrf.mxu0
      %v1077 = vpop.f32.mrf.mxu0
      %v1078 = vadd.f32 %v866, %v1077
      %v1079 = vpop.f32.mrf.mxu0
      %1080 = vmatprep.mubr.bf16.mxu0 0
      %1081 = vmatmul.mubr.bf16.gmra.mxu0 %v923
      %v1082 = vpop.f32.mrf.mxu0
      %v1083 = vadd.f32 %v871, %v1082
      %v1084 = vpop.f32.mrf.mxu0
      %v1085 = vpop.f32.mrf.mxu0
      %v1086 = vadd.f32 %v874, %v1085
      %v1087 = vpop.f32.mrf.mxu0
      %1088 = vdwg.mxu0
      %v1089 = vpack.c.bf16 %v402, %v401
      %v1090 = vpack.c.bf16 %v404, %v403
      %v1091 = vpack.c.bf16 %v406, %v405
      %v1092 = vpack.c.bf16 %v408, %v407
      %v1093 = vpack.c.bf16 %v410, %v409
      %v1094 = vpack.c.bf16 %v412, %v411
      %v1095 = vpack.c.bf16 %v414, %v413
      %v1096 = vpack.c.bf16 %v416, %v415
      %v1097 = vpack.c.bf16 %v418, %v417
      %v1098 = vpack.c.bf16 %v420, %v419
      %v1099 = vpack.c.bf16 %v422, %v421
      %v1100 = vpack.c.bf16 %v424, %v423
      %v1101 = vpack.c.bf16 %v426, %v425
      %v1102 = vpack.c.bf16 %v428, %v427
      %v1103 = vpack.c.bf16 %v430, %v429
      %v1104 = vpack.c.bf16 %v432, %v431
      %v1105 = vld [vmem:[%s1 + $0x4] sm:$0x3]
      %v1107 = vsel %vm226, %v1089, 0
      %v1110 = vsel %vm226, %v1090, 0
      %v1113 = vsel %vm226, %v1091, 0
      %v1116 = vsel %vm226, %v1092, 0
      %v1119 = vsel %vm226, %v1093, 0
      %v1122 = vsel %vm226, %v1094, 0
      %v1125 = vsel %vm226, %v1095, 0
      %v1128 = vsel %vm226, %v1096, 0
      %v1131 = vsel %vm226, %v1097, 0
      %v1134 = vsel %vm226, %v1098, 0
      %v1137 = vsel %vm226, %v1099, 0
      %v1140 = vsel %vm226, %v1100, 0
      %v1143 = vsel %vm226, %v1101, 0
      %v1146 = vsel %vm226, %v1102, 0
      %v1149 = vsel %vm226, %v1103, 0
      %v1152 = vsel %vm226, %v1104, 0
      %v1155 = vsel %vm712, %v1105, 0
      %1157 = vmatprep.subr.bf16.mxu0 0
      %1158 = vmatpush1.bf16.msra.mxu0 0
      %1159 = vmatprep.subr.bf16.mxu0 0
      %1160 = vmatpush1.bf16.msra.mxu0 0
      %1161 = vmatprep.subr.bf16.mxu0 0
      %1162 = vmatpush1.bf16.msra.mxu0 0
      %1163 = vmatprep.subr.bf16.mxu0 0
      %1164 = vmatpush1.bf16.msra.mxu0 0
      %1165 = vmatprep.subr.bf16.mxu0 0
      %1166 = vmatpush1.bf16.msra.mxu0 0
      %1167 = vmatprep.subr.bf16.mxu0 0
      %1168 = vmatpush1.bf16.msra.mxu0 0
      %1169 = vmatprep.subr.bf16.mxu0 0
      %1170 = vmatpush1.bf16.msra.mxu0 0
      %1171 = vmatprep.subr.bf16.mxu0 0
      %1172 = vmatpush1.bf16.msra.mxu0 %v1155
      %1173 = vmatprep.subr.bf16.mxu0 0
      %1174 = vmatpush2.bf16.msra.mxu0 0
      %1175 = vmatprep.subr.bf16.mxu0 0
      %1176 = vmatpush2.bf16.msra.mxu0 0
      %1177 = vmatprep.subr.bf16.mxu0 0
      %1178 = vmatpush2.bf16.msra.mxu0 0
      %1179 = vmatprep.subr.bf16.mxu0 0
      %1180 = vmatpush2.bf16.msra.mxu0 0
      %1181 = vmatprep.subr.bf16.mxu0 0
      %1182 = vmatpush2.bf16.msra.mxu0 0
      %1183 = vmatprep.subr.bf16.mxu0 0
      %1184 = vmatpush2.bf16.msra.mxu0 0
      %1185 = vmatprep.subr.bf16.mxu0 0
      %1186 = vmatpush2.bf16.msra.mxu0 0
      %1187 = vmatprep.subr.bf16.mxu0 0
      %1188 = vmatpush2.bf16.msra.mxu0 0
      %1189 = vmatprep.mubr.bf16.mxu0 0
      %1190 = vmatmul.mubr.bf16.gmra.mxu0 %v1107
      %v1191 = vpop.f32.mrf.mxu0
      %v1192 = vadd.f32 0.0, %v1191
      %v1193 = vpop.f32.mrf.mxu0
      %v1194 = vpop.f32.mrf.mxu0
      %v1195 = vadd.f32 0.0, %v1194
      %v1196 = vpop.f32.mrf.mxu0
      %1197 = vmatprep.mubr.bf16.mxu0 0
      %1198 = vmatmul.mubr.bf16.gmra.mxu0 %v1110
      %v1199 = vpop.f32.mrf.mxu0
      %v1200 = vadd.f32 0.0, %v1199
      %v1201 = vpop.f32.mrf.mxu0
      %v1202 = vpop.f32.mrf.mxu0
      %v1203 = vadd.f32 0.0, %v1202
      %v1204 = vpop.f32.mrf.mxu0
      %1205 = vmatprep.mubr.bf16.mxu0 0
      %1206 = vmatmul.mubr.bf16.gmra.mxu0 %v1113
      %v1207 = vpop.f32.mrf.mxu0
      %v1208 = vadd.f32 0.0, %v1207
      %v1209 = vpop.f32.mrf.mxu0
      %v1210 = vpop.f32.mrf.mxu0
      %v1211 = vadd.f32 0.0, %v1210
      %v1212 = vpop.f32.mrf.mxu0
      %1213 = vmatprep.mubr.bf16.mxu0 0
      %1214 = vmatmul.mubr.bf16.gmra.mxu0 %v1116
      %v1215 = vpop.f32.mrf.mxu0
      %v1216 = vadd.f32 0.0, %v1215
      %v1217 = vpop.f32.mrf.mxu0
      %v1218 = vpop.f32.mrf.mxu0
      %v1219 = vadd.f32 0.0, %v1218
      %v1220 = vpop.f32.mrf.mxu0
      %1221 = vmatprep.mubr.bf16.mxu0 0
      %1222 = vmatmul.mubr.bf16.gmra.mxu0 %v1119
      %v1223 = vpop.f32.mrf.mxu0
      %v1224 = vadd.f32 0.0, %v1223
      %v1225 = vpop.f32.mrf.mxu0
      %v1226 = vpop.f32.mrf.mxu0
      %v1227 = vadd.f32 0.0, %v1226
      %v1228 = vpop.f32.mrf.mxu0
      %1229 = vmatprep.mubr.bf16.mxu0 0
      %1230 = vmatmul.mubr.bf16.gmra.mxu0 %v1122
      %v1231 = vpop.f32.mrf.mxu0
      %v1232 = vadd.f32 0.0, %v1231
      %v1233 = vpop.f32.mrf.mxu0
      %v1234 = vpop.f32.mrf.mxu0
      %v1235 = vadd.f32 0.0, %v1234
      %v1236 = vpop.f32.mrf.mxu0
      %1237 = vmatprep.mubr.bf16.mxu0 0
      %1238 = vmatmul.mubr.bf16.gmra.mxu0 %v1125
      %v1239 = vpop.f32.mrf.mxu0
      %v1240 = vadd.f32 0.0, %v1239
      %v1241 = vpop.f32.mrf.mxu0
      %v1242 = vpop.f32.mrf.mxu0
      %v1243 = vadd.f32 0.0, %v1242
      %v1244 = vpop.f32.mrf.mxu0
      %1245 = vmatprep.mubr.bf16.mxu0 0
      %1246 = vmatmul.mubr.bf16.gmra.mxu0 %v1128
      %v1247 = vpop.f32.mrf.mxu0
      %v1248 = vadd.f32 0.0, %v1247
      %v1249 = vpop.f32.mrf.mxu0
      %v1250 = vpop.f32.mrf.mxu0
      %v1251 = vadd.f32 0.0, %v1250
      %v1252 = vpop.f32.mrf.mxu0
      %1253 = vmatprep.mubr.bf16.mxu0 0
      %1254 = vmatmul.mubr.bf16.gmra.mxu0 %v1131
      %v1255 = vpop.f32.mrf.mxu0
      %v1256 = vadd.f32 0.0, %v1255
      %v1257 = vpop.f32.mrf.mxu0
      %v1258 = vpop.f32.mrf.mxu0
      %v1259 = vadd.f32 0.0, %v1258
      %v1260 = vpop.f32.mrf.mxu0
      %1261 = vmatprep.mubr.bf16.mxu0 0
      %1262 = vmatmul.mubr.bf16.gmra.mxu0 %v1134
      %v1263 = vpop.f32.mrf.mxu0
      %v1264 = vadd.f32 0.0, %v1263
      %v1265 = vpop.f32.mrf.mxu0
      %v1266 = vpop.f32.mrf.mxu0
      %v1267 = vadd.f32 0.0, %v1266
      %v1268 = vpop.f32.mrf.mxu0
      %1269 = vmatprep.mubr.bf16.mxu0 0
      %1270 = vmatmul.mubr.bf16.gmra.mxu0 %v1137
      %v1271 = vpop.f32.mrf.mxu0
      %v1272 = vadd.f32 0.0, %v1271
      %v1273 = vpop.f32.mrf.mxu0
      %v1274 = vpop.f32.mrf.mxu0
      %v1275 = vadd.f32 0.0, %v1274
      %v1276 = vpop.f32.mrf.mxu0
      %1277 = vmatprep.mubr.bf16.mxu0 0
      %1278 = vmatmul.mubr.bf16.gmra.mxu0 %v1140
      %v1279 = vpop.f32.mrf.mxu0
      %v1280 = vadd.f32 0.0, %v1279
      %v1281 = vpop.f32.mrf.mxu0
      %v1282 = vpop.f32.mrf.mxu0
      %v1283 = vadd.f32 0.0, %v1282
      %v1284 = vpop.f32.mrf.mxu0
      %1285 = vmatprep.mubr.bf16.mxu0 0
      %1286 = vmatmul.mubr.bf16.gmra.mxu0 %v1143
      %v1287 = vpop.f32.mrf.mxu0
      %v1288 = vadd.f32 0.0, %v1287
      %v1289 = vpop.f32.mrf.mxu0
      %v1290 = vpop.f32.mrf.mxu0
      %v1291 = vadd.f32 0.0, %v1290
      %v1292 = vpop.f32.mrf.mxu0
      %1293 = vmatprep.mubr.bf16.mxu0 0
      %1294 = vmatmul.mubr.bf16.gmra.mxu0 %v1146
      %v1295 = vpop.f32.mrf.mxu0
      %v1296 = vadd.f32 0.0, %v1295
      %v1297 = vpop.f32.mrf.mxu0
      %v1298 = vpop.f32.mrf.mxu0
      %v1299 = vadd.f32 0.0, %v1298
      %v1300 = vpop.f32.mrf.mxu0
      %1301 = vmatprep.mubr.bf16.mxu0 0
      %1302 = vmatmul.mubr.bf16.gmra.mxu0 %v1149
      %v1303 = vpop.f32.mrf.mxu0
      %v1304 = vadd.f32 0.0, %v1303
      %v1305 = vpop.f32.mrf.mxu0
      %v1306 = vpop.f32.mrf.mxu0
      %v1307 = vadd.f32 0.0, %v1306
      %v1308 = vpop.f32.mrf.mxu0
      %1309 = vmatprep.mubr.bf16.mxu0 0
      %1310 = vmatmul.mubr.bf16.gmra.mxu0 %v1152
      %v1311 = vpop.f32.mrf.mxu0
      %v1312 = vadd.f32 0.0, %v1311
      %v1313 = vpop.f32.mrf.mxu0
      %v1314 = vpop.f32.mrf.mxu0
      %v1315 = vadd.f32 0.0, %v1314
      %v1316 = vpop.f32.mrf.mxu0
      %1317 = vdwg.mxu0
      %v1318 = vadd.f32 %v963, %v1192
      %v1319 = vadd.f32 %v966, %v1195
      %v1320 = vadd.f32 %v971, %v1200
      %v1321 = vadd.f32 %v974, %v1203
      %v1322 = vadd.f32 %v979, %v1208
      %v1323 = vadd.f32 %v982, %v1211
      %v1324 = vadd.f32 %v987, %v1216
      %v1325 = vadd.f32 %v990, %v1219
      %v1326 = vadd.f32 %v995, %v1224
      %v1327 = vadd.f32 %v998, %v1227
      %v1328 = vadd.f32 %v1003, %v1232
      %v1329 = vadd.f32 %v1006, %v1235
      %v1330 = vadd.f32 %v1011, %v1240
      %v1331 = vadd.f32 %v1014, %v1243
      %v1332 = vadd.f32 %v1019, %v1248
      %v1333 = vadd.f32 %v1022, %v1251
      %v1334 = vadd.f32 %v1027, %v1256
      %v1335 = vadd.f32 %v1030, %v1259
      %v1336 = vadd.f32 %v1035, %v1264
      %v1337 = vadd.f32 %v1038, %v1267
      %v1338 = vadd.f32 %v1043, %v1272
      %v1339 = vadd.f32 %v1046, %v1275
      %v1340 = vadd.f32 %v1051, %v1280
      %v1341 = vadd.f32 %v1054, %v1283
      %v1342 = vadd.f32 %v1059, %v1288
      %v1343 = vadd.f32 %v1062, %v1291
      %v1344 = vadd.f32 %v1067, %v1296
      %v1345 = vadd.f32 %v1070, %v1299
      %v1346 = vadd.f32 %v1075, %v1304
      %v1347 = vadd.f32 %v1078, %v1307
      %v1348 = vadd.f32 %v1083, %v1312
      %v1349 = vadd.f32 %v1086, %v1315
      %v1350 = vpack.c.bf16 %v434, %v433
      %v1351 = vpack.c.bf16 %v436, %v435
      %v1352 = vpack.c.bf16 %v438, %v437
      %v1353 = vpack.c.bf16 %v440, %v439
      %v1354 = vpack.c.bf16 %v442, %v441
      %v1355 = vpack.c.bf16 %v444, %v443
      %v1356 = vpack.c.bf16 %v446, %v445
      %v1357 = vpack.c.bf16 %v448, %v447
      %v1358 = vpack.c.bf16 %v450, %v449
      %v1359 = vpack.c.bf16 %v452, %v451
      %v1360 = vpack.c.bf16 %v454, %v453
      %v1361 = vpack.c.bf16 %v456, %v455
      %v1362 = vpack.c.bf16 %v458, %v457
      %v1363 = vpack.c.bf16 %v460, %v459
      %v1364 = vpack.c.bf16 %v462, %v461
      %v1365 = vpack.c.bf16 %v464, %v463
      %v1366 = vld [vmem:[%s1 + $0x4] sm:$0xc]
      %v1368 = vunpack.c.l.b16 %v1366
      %v1369 = vpack.c.b16 %v1368, %v1368
      %v1370 = vrot.slane %v1369, 2
      %v1372 = vsel %vm226, %v1350, 0
      %v1375 = vsel %vm226, %v1351, 0
      %v1378 = vsel %vm226, %v1352, 0
      %v1381 = vsel %vm226, %v1353, 0
      %v1384 = vsel %vm226, %v1354, 0
      %v1387 = vsel %vm226, %v1355, 0
      %v1390 = vsel %vm226, %v1356, 0
      %v1393 = vsel %vm226, %v1357, 0
      %v1396 = vsel %vm226, %v1358, 0
      %v1399 = vsel %vm226, %v1359, 0
      %v1402 = vsel %vm226, %v1360, 0
      %v1405 = vsel %vm226, %v1361, 0
      %v1408 = vsel %vm226, %v1362, 0
      %v1411 = vsel %vm226, %v1363, 0
      %v1414 = vsel %vm226, %v1364, 0
      %v1417 = vsel %vm226, %v1365, 0
      %v1420 = vsel %vm712, %v1370, 0
      %1422 = vmatprep.subr.bf16.mxu0 0
      %1423 = vmatpush1.bf16.msra.mxu0 0
      %1424 = vmatprep.subr.bf16.mxu0 0
      %1425 = vmatpush1.bf16.msra.mxu0 0
      %1426 = vmatprep.subr.bf16.mxu0 0
      %1427 = vmatpush1.bf16.msra.mxu0 0
      %1428 = vmatprep.subr.bf16.mxu0 0
      %1429 = vmatpush1.bf16.msra.mxu0 0
      %1430 = vmatprep.subr.bf16.mxu0 0
      %1431 = vmatpush1.bf16.msra.mxu0 0
      %1432 = vmatprep.subr.bf16.mxu0 0
      %1433 = vmatpush1.bf16.msra.mxu0 0
      %1434 = vmatprep.subr.bf16.mxu0 0
      %1435 = vmatpush1.bf16.msra.mxu0 0
      %1436 = vmatprep.subr.bf16.mxu0 0
      %1437 = vmatpush1.bf16.msra.mxu0 %v1420
      %1438 = vmatprep.subr.bf16.mxu0 0
      %1439 = vmatpush2.bf16.msra.mxu0 0
      %1440 = vmatprep.subr.bf16.mxu0 0
      %1441 = vmatpush2.bf16.msra.mxu0 0
      %1442 = vmatprep.subr.bf16.mxu0 0
      %1443 = vmatpush2.bf16.msra.mxu0 0
      %1444 = vmatprep.subr.bf16.mxu0 0
      %1445 = vmatpush2.bf16.msra.mxu0 0
      %1446 = vmatprep.subr.bf16.mxu0 0
      %1447 = vmatpush2.bf16.msra.mxu0 0
      %1448 = vmatprep.subr.bf16.mxu0 0
      %1449 = vmatpush2.bf16.msra.mxu0 0
      %1450 = vmatprep.subr.bf16.mxu0 0
      %1451 = vmatpush2.bf16.msra.mxu0 0
      %1452 = vmatprep.subr.bf16.mxu0 0
      %1453 = vmatpush2.bf16.msra.mxu0 0
      %1454 = vmatprep.mubr.bf16.mxu0 0
      %1455 = vmatmul.mubr.bf16.gmra.mxu0 %v1372
      %v1456 = vpop.f32.mrf.mxu0
      %v1457 = vadd.f32 0.0, %v1456
      %v1458 = vpop.f32.mrf.mxu0
      %v1459 = vpop.f32.mrf.mxu0
      %v1460 = vadd.f32 0.0, %v1459
      %v1461 = vpop.f32.mrf.mxu0
      %1462 = vmatprep.mubr.bf16.mxu0 0
      %1463 = vmatmul.mubr.bf16.gmra.mxu0 %v1375
      %v1464 = vpop.f32.mrf.mxu0
      %v1465 = vadd.f32 0.0, %v1464
      %v1466 = vpop.f32.mrf.mxu0
      %v1467 = vpop.f32.mrf.mxu0
      %v1468 = vadd.f32 0.0, %v1467
      %v1469 = vpop.f32.mrf.mxu0
      %1470 = vmatprep.mubr.bf16.mxu0 0
      %1471 = vmatmul.mubr.bf16.gmra.mxu0 %v1378
      %v1472 = vpop.f32.mrf.mxu0
      %v1473 = vadd.f32 0.0, %v1472
      %v1474 = vpop.f32.mrf.mxu0
      %v1475 = vpop.f32.mrf.mxu0
      %v1476 = vadd.f32 0.0, %v1475
      %v1477 = vpop.f32.mrf.mxu0
      %1478 = vmatprep.mubr.bf16.mxu0 0
      %1479 = vmatmul.mubr.bf16.gmra.mxu0 %v1381
      %v1480 = vpop.f32.mrf.mxu0
      %v1481 = vadd.f32 0.0, %v1480
      %v1482 = vpop.f32.mrf.mxu0
      %v1483 = vpop.f32.mrf.mxu0
      %v1484 = vadd.f32 0.0, %v1483
      %v1485 = vpop.f32.mrf.mxu0
      %1486 = vmatprep.mubr.bf16.mxu0 0
      %1487 = vmatmul.mubr.bf16.gmra.mxu0 %v1384
      %v1488 = vpop.f32.mrf.mxu0
      %v1489 = vadd.f32 0.0, %v1488
      %v1490 = vpop.f32.mrf.mxu0
      %v1491 = vpop.f32.mrf.mxu0
      %v1492 = vadd.f32 0.0, %v1491
      %v1493 = vpop.f32.mrf.mxu0
      %1494 = vmatprep.mubr.bf16.mxu0 0
      %1495 = vmatmul.mubr.bf16.gmra.mxu0 %v1387
      %v1496 = vpop.f32.mrf.mxu0
      %v1497 = vadd.f32 0.0, %v1496
      %v1498 = vpop.f32.mrf.mxu0
      %v1499 = vpop.f32.mrf.mxu0
      %v1500 = vadd.f32 0.0, %v1499
      %v1501 = vpop.f32.mrf.mxu0
      %1502 = vmatprep.mubr.bf16.mxu0 0
      %1503 = vmatmul.mubr.bf16.gmra.mxu0 %v1390
      %v1504 = vpop.f32.mrf.mxu0
      %v1505 = vadd.f32 0.0, %v1504
      %v1506 = vpop.f32.mrf.mxu0
      %v1507 = vpop.f32.mrf.mxu0
      %v1508 = vadd.f32 0.0, %v1507
      %v1509 = vpop.f32.mrf.mxu0
      %1510 = vmatprep.mubr.bf16.mxu0 0
      %1511 = vmatmul.mubr.bf16.gmra.mxu0 %v1393
      %v1512 = vpop.f32.mrf.mxu0
      %v1513 = vadd.f32 0.0, %v1512
      %v1514 = vpop.f32.mrf.mxu0
      %v1515 = vpop.f32.mrf.mxu0
      %v1516 = vadd.f32 0.0, %v1515
      %v1517 = vpop.f32.mrf.mxu0
      %1518 = vmatprep.mubr.bf16.mxu0 0
      %1519 = vmatmul.mubr.bf16.gmra.mxu0 %v1396
      %v1520 = vpop.f32.mrf.mxu0
      %v1521 = vadd.f32 0.0, %v1520
      %v1522 = vpop.f32.mrf.mxu0
      %v1523 = vpop.f32.mrf.mxu0
      %v1524 = vadd.f32 0.0, %v1523
      %v1525 = vpop.f32.mrf.mxu0
      %1526 = vmatprep.mubr.bf16.mxu0 0
      %1527 = vmatmul.mubr.bf16.gmra.mxu0 %v1399
      %v1528 = vpop.f32.mrf.mxu0
      %v1529 = vadd.f32 0.0, %v1528
      %v1530 = vpop.f32.mrf.mxu0
      %v1531 = vpop.f32.mrf.mxu0
      %v1532 = vadd.f32 0.0, %v1531
      %v1533 = vpop.f32.mrf.mxu0
      %1534 = vmatprep.mubr.bf16.mxu0 0
      %1535 = vmatmul.mubr.bf16.gmra.mxu0 %v1402
      %v1536 = vpop.f32.mrf.mxu0
      %v1537 = vadd.f32 0.0, %v1536
      %v1538 = vpop.f32.mrf.mxu0
      %v1539 = vpop.f32.mrf.mxu0
      %v1540 = vadd.f32 0.0, %v1539
      %v1541 = vpop.f32.mrf.mxu0
      %1542 = vmatprep.mubr.bf16.mxu0 0
      %1543 = vmatmul.mubr.bf16.gmra.mxu0 %v1405
      %v1544 = vpop.f32.mrf.mxu0
      %v1545 = vadd.f32 0.0, %v1544
      %v1546 = vpop.f32.mrf.mxu0
      %v1547 = vpop.f32.mrf.mxu0
      %v1548 = vadd.f32 0.0, %v1547
      %v1549 = vpop.f32.mrf.mxu0
      %1550 = vmatprep.mubr.bf16.mxu0 0
      %1551 = vmatmul.mubr.bf16.gmra.mxu0 %v1408
      %v1552 = vpop.f32.mrf.mxu0
      %v1553 = vadd.f32 0.0, %v1552
      %v1554 = vpop.f32.mrf.mxu0
      %v1555 = vpop.f32.mrf.mxu0
      %v1556 = vadd.f32 0.0, %v1555
      %v1557 = vpop.f32.mrf.mxu0
      %1558 = vmatprep.mubr.bf16.mxu0 0
      %1559 = vmatmul.mubr.bf16.gmra.mxu0 %v1411
      %v1560 = vpop.f32.mrf.mxu0
      %v1561 = vadd.f32 0.0, %v1560
      %v1562 = vpop.f32.mrf.mxu0
      %v1563 = vpop.f32.mrf.mxu0
      %v1564 = vadd.f32 0.0, %v1563
      %v1565 = vpop.f32.mrf.mxu0
      %1566 = vmatprep.mubr.bf16.mxu0 0
      %1567 = vmatmul.mubr.bf16.gmra.mxu0 %v1414
      %v1568 = vpop.f32.mrf.mxu0
      %v1569 = vadd.f32 0.0, %v1568
      %v1570 = vpop.f32.mrf.mxu0
      %v1571 = vpop.f32.mrf.mxu0
      %v1572 = vadd.f32 0.0, %v1571
      %v1573 = vpop.f32.mrf.mxu0
      %1574 = vmatprep.mubr.bf16.mxu0 0
      %1575 = vmatmul.mubr.bf16.gmra.mxu0 %v1417
      %v1576 = vpop.f32.mrf.mxu0
      %v1577 = vadd.f32 0.0, %v1576
      %v1578 = vpop.f32.mrf.mxu0
      %v1579 = vpop.f32.mrf.mxu0
      %v1580 = vadd.f32 0.0, %v1579
      %v1581 = vpop.f32.mrf.mxu0
      %1582 = vdwg.mxu0
      %v1583 = vadd.f32 %v1318, %v1457
      %v1584 = vadd.f32 %v1319, %v1460
      %v1585 = vadd.f32 %v1320, %v1465
      %v1586 = vadd.f32 %v1321, %v1468
      %v1587 = vadd.f32 %v1322, %v1473
      %v1588 = vadd.f32 %v1323, %v1476
      %v1589 = vadd.f32 %v1324, %v1481
      %v1590 = vadd.f32 %v1325, %v1484
      %v1591 = vadd.f32 %v1326, %v1489
      %v1592 = vadd.f32 %v1327, %v1492
      %v1593 = vadd.f32 %v1328, %v1497
      %v1594 = vadd.f32 %v1329, %v1500
      %v1595 = vadd.f32 %v1330, %v1505
      %v1596 = vadd.f32 %v1331, %v1508
      %v1597 = vadd.f32 %v1332, %v1513
      %v1598 = vadd.f32 %v1333, %v1516
      %v1599 = vadd.f32 %v1334, %v1521
      %v1600 = vadd.f32 %v1335, %v1524
      %v1601 = vadd.f32 %v1336, %v1529
      %v1602 = vadd.f32 %v1337, %v1532
      %v1603 = vadd.f32 %v1338, %v1537
      %v1604 = vadd.f32 %v1339, %v1540
      %v1605 = vadd.f32 %v1340, %v1545
      %v1606 = vadd.f32 %v1341, %v1548
      %v1607 = vadd.f32 %v1342, %v1553
      %v1608 = vadd.f32 %v1343, %v1556
      %v1609 = vadd.f32 %v1344, %v1561
      %v1610 = vadd.f32 %v1345, %v1564
      %v1611 = vadd.f32 %v1346, %v1569
      %v1612 = vadd.f32 %v1347, %v1572
      %v1613 = vadd.f32 %v1348, %v1577
      %v1614 = vadd.f32 %v1349, %v1580
      %v1615 = vpack.c.bf16 %v466, %v465
      %v1616 = vpack.c.bf16 %v468, %v467
      %v1617 = vpack.c.bf16 %v470, %v469
      %v1618 = vpack.c.bf16 %v472, %v471
      %v1619 = vpack.c.bf16 %v474, %v473
      %v1620 = vpack.c.bf16 %v476, %v475
      %v1621 = vpack.c.bf16 %v478, %v477
      %v1622 = vpack.c.bf16 %v480, %v479
      %v1623 = vpack.c.bf16 %v482, %v481
      %v1624 = vpack.c.bf16 %v484, %v483
      %v1625 = vpack.c.bf16 %v486, %v485
      %v1626 = vpack.c.bf16 %v488, %v487
      %v1627 = vpack.c.bf16 %v490, %v489
      %v1628 = vpack.c.bf16 %v492, %v491
      %v1629 = vpack.c.bf16 %v494, %v493
      %v1630 = vpack.c.bf16 %v496, %v495
      %v1631 = vld [vmem:[%s1 + $0x8] sm:$0x3]
      %v1633 = vsel %vm226, %v1615, 0
      %v1636 = vsel %vm226, %v1616, 0
      %v1639 = vsel %vm226, %v1617, 0
      %v1642 = vsel %vm226, %v1618, 0
      %v1645 = vsel %vm226, %v1619, 0
      %v1648 = vsel %vm226, %v1620, 0
      %v1651 = vsel %vm226, %v1621, 0
      %v1654 = vsel %vm226, %v1622, 0
      %v1657 = vsel %vm226, %v1623, 0
      %v1660 = vsel %vm226, %v1624, 0
      %v1663 = vsel %vm226, %v1625, 0
      %v1666 = vsel %vm226, %v1626, 0
      %v1669 = vsel %vm226, %v1627, 0
      %v1672 = vsel %vm226, %v1628, 0
      %v1675 = vsel %vm226, %v1629, 0
      %v1678 = vsel %vm226, %v1630, 0
      %v1681 = vsel %vm712, %v1631, 0
      %1683 = vmatprep.subr.bf16.mxu0 0
      %1684 = vmatpush1.bf16.msra.mxu0 0
      %1685 = vmatprep.subr.bf16.mxu0 0
      %1686 = vmatpush1.bf16.msra.mxu0 0
      %1687 = vmatprep.subr.bf16.mxu0 0
      %1688 = vmatpush1.bf16.msra.mxu0 0
      %1689 = vmatprep.subr.bf16.mxu0 0
      %1690 = vmatpush1.bf16.msra.mxu0 0
      %1691 = vmatprep.subr.bf16.mxu0 0
      %1692 = vmatpush1.bf16.msra.mxu0 0
      %1693 = vmatprep.subr.bf16.mxu0 0
      %1694 = vmatpush1.bf16.msra.mxu0 0
      %1695 = vmatprep.subr.bf16.mxu0 0
      %1696 = vmatpush1.bf16.msra.mxu0 0
      %1697 = vmatprep.subr.bf16.mxu0 0
      %1698 = vmatpush1.bf16.msra.mxu0 %v1681
      %1699 = vmatprep.subr.bf16.mxu0 0
      %1700 = vmatpush2.bf16.msra.mxu0 0
      %1701 = vmatprep.subr.bf16.mxu0 0
      %1702 = vmatpush2.bf16.msra.mxu0 0
      %1703 = vmatprep.subr.bf16.mxu0 0
      %1704 = vmatpush2.bf16.msra.mxu0 0
      %1705 = vmatprep.subr.bf16.mxu0 0
      %1706 = vmatpush2.bf16.msra.mxu0 0
      %1707 = vmatprep.subr.bf16.mxu0 0
      %1708 = vmatpush2.bf16.msra.mxu0 0
      %1709 = vmatprep.subr.bf16.mxu0 0
      %1710 = vmatpush2.bf16.msra.mxu0 0
      %1711 = vmatprep.subr.bf16.mxu0 0
      %1712 = vmatpush2.bf16.msra.mxu0 0
      %1713 = vmatprep.subr.bf16.mxu0 0
      %1714 = vmatpush2.bf16.msra.mxu0 0
      %1715 = vmatprep.mubr.bf16.mxu0 0
      %1716 = vmatmul.mubr.bf16.gmra.mxu0 %v1633
      %v1717 = vpop.f32.mrf.mxu0
      %v1718 = vadd.f32 0.0, %v1717
      %v1719 = vpop.f32.mrf.mxu0
      %v1720 = vpop.f32.mrf.mxu0
      %v1721 = vadd.f32 0.0, %v1720
      %v1722 = vpop.f32.mrf.mxu0
      %1723 = vmatprep.mubr.bf16.mxu0 0
      %1724 = vmatmul.mubr.bf16.gmra.mxu0 %v1636
      %v1725 = vpop.f32.mrf.mxu0
      %v1726 = vadd.f32 0.0, %v1725
      %v1727 = vpop.f32.mrf.mxu0
      %v1728 = vpop.f32.mrf.mxu0
      %v1729 = vadd.f32 0.0, %v1728
      %v1730 = vpop.f32.mrf.mxu0
      %1731 = vmatprep.mubr.bf16.mxu0 0
      %1732 = vmatmul.mubr.bf16.gmra.mxu0 %v1639
      %v1733 = vpop.f32.mrf.mxu0
      %v1734 = vadd.f32 0.0, %v1733
      %v1735 = vpop.f32.mrf.mxu0
      %v1736 = vpop.f32.mrf.mxu0
      %v1737 = vadd.f32 0.0, %v1736
      %v1738 = vpop.f32.mrf.mxu0
      %1739 = vmatprep.mubr.bf16.mxu0 0
      %1740 = vmatmul.mubr.bf16.gmra.mxu0 %v1642
      %v1741 = vpop.f32.mrf.mxu0
      %v1742 = vadd.f32 0.0, %v1741
      %v1743 = vpop.f32.mrf.mxu0
      %v1744 = vpop.f32.mrf.mxu0
      %v1745 = vadd.f32 0.0, %v1744
      %v1746 = vpop.f32.mrf.mxu0
      %1747 = vmatprep.mubr.bf16.mxu0 0
      %1748 = vmatmul.mubr.bf16.gmra.mxu0 %v1645
      %v1749 = vpop.f32.mrf.mxu0
      %v1750 = vadd.f32 0.0, %v1749
      %v1751 = vpop.f32.mrf.mxu0
      %v1752 = vpop.f32.mrf.mxu0
      %v1753 = vadd.f32 0.0, %v1752
      %v1754 = vpop.f32.mrf.mxu0
      %1755 = vmatprep.mubr.bf16.mxu0 0
      %1756 = vmatmul.mubr.bf16.gmra.mxu0 %v1648
      %v1757 = vpop.f32.mrf.mxu0
      %v1758 = vadd.f32 0.0, %v1757
      %v1759 = vpop.f32.mrf.mxu0
      %v1760 = vpop.f32.mrf.mxu0
      %v1761 = vadd.f32 0.0, %v1760
      %v1762 = vpop.f32.mrf.mxu0
      %1763 = vmatprep.mubr.bf16.mxu0 0
      %1764 = vmatmul.mubr.bf16.gmra.mxu0 %v1651
      %v1765 = vpop.f32.mrf.mxu0
      %v1766 = vadd.f32 0.0, %v1765
      %v1767 = vpop.f32.mrf.mxu0
      %v1768 = vpop.f32.mrf.mxu0
      %v1769 = vadd.f32 0.0, %v1768
      %v1770 = vpop.f32.mrf.mxu0
      %1771 = vmatprep.mubr.bf16.mxu0 0
      %1772 = vmatmul.mubr.bf16.gmra.mxu0 %v1654
      %v1773 = vpop.f32.mrf.mxu0
      %v1774 = vadd.f32 0.0, %v1773
      %v1775 = vpop.f32.mrf.mxu0
      %v1776 = vpop.f32.mrf.mxu0
      %v1777 = vadd.f32 0.0, %v1776
      %v1778 = vpop.f32.mrf.mxu0
      %1779 = vmatprep.mubr.bf16.mxu0 0
      %1780 = vmatmul.mubr.bf16.gmra.mxu0 %v1657
      %v1781 = vpop.f32.mrf.mxu0
      %v1782 = vadd.f32 0.0, %v1781
      %v1783 = vpop.f32.mrf.mxu0
      %v1784 = vpop.f32.mrf.mxu0
      %v1785 = vadd.f32 0.0, %v1784
      %v1786 = vpop.f32.mrf.mxu0
      %1787 = vmatprep.mubr.bf16.mxu0 0
      %1788 = vmatmul.mubr.bf16.gmra.mxu0 %v1660
      %v1789 = vpop.f32.mrf.mxu0
      %v1790 = vadd.f32 0.0, %v1789
      %v1791 = vpop.f32.mrf.mxu0
      %v1792 = vpop.f32.mrf.mxu0
      %v1793 = vadd.f32 0.0, %v1792
      %v1794 = vpop.f32.mrf.mxu0
      %1795 = vmatprep.mubr.bf16.mxu0 0
      %1796 = vmatmul.mubr.bf16.gmra.mxu0 %v1663
      %v1797 = vpop.f32.mrf.mxu0
      %v1798 = vadd.f32 0.0, %v1797
      %v1799 = vpop.f32.mrf.mxu0
      %v1800 = vpop.f32.mrf.mxu0
      %v1801 = vadd.f32 0.0, %v1800
      %v1802 = vpop.f32.mrf.mxu0
      %1803 = vmatprep.mubr.bf16.mxu0 0
      %1804 = vmatmul.mubr.bf16.gmra.mxu0 %v1666
      %v1805 = vpop.f32.mrf.mxu0
      %v1806 = vadd.f32 0.0, %v1805
      %v1807 = vpop.f32.mrf.mxu0
      %v1808 = vpop.f32.mrf.mxu0
      %v1809 = vadd.f32 0.0, %v1808
      %v1810 = vpop.f32.mrf.mxu0
      %1811 = vmatprep.mubr.bf16.mxu0 0
      %1812 = vmatmul.mubr.bf16.gmra.mxu0 %v1669
      %v1813 = vpop.f32.mrf.mxu0
      %v1814 = vadd.f32 0.0, %v1813
      %v1815 = vpop.f32.mrf.mxu0
      %v1816 = vpop.f32.mrf.mxu0
      %v1817 = vadd.f32 0.0, %v1816
      %v1818 = vpop.f32.mrf.mxu0
      %1819 = vmatprep.mubr.bf16.mxu0 0
      %1820 = vmatmul.mubr.bf16.gmra.mxu0 %v1672
      %v1821 = vpop.f32.mrf.mxu0
      %v1822 = vadd.f32 0.0, %v1821
      %v1823 = vpop.f32.mrf.mxu0
      %v1824 = vpop.f32.mrf.mxu0
      %v1825 = vadd.f32 0.0, %v1824
      %v1826 = vpop.f32.mrf.mxu0
      %1827 = vmatprep.mubr.bf16.mxu0 0
      %1828 = vmatmul.mubr.bf16.gmra.mxu0 %v1675
      %v1829 = vpop.f32.mrf.mxu0
      %v1830 = vadd.f32 0.0, %v1829
      %v1831 = vpop.f32.mrf.mxu0
      %v1832 = vpop.f32.mrf.mxu0
      %v1833 = vadd.f32 0.0, %v1832
      %v1834 = vpop.f32.mrf.mxu0
      %1835 = vmatprep.mubr.bf16.mxu0 0
      %1836 = vmatmul.mubr.bf16.gmra.mxu0 %v1678
      %v1837 = vpop.f32.mrf.mxu0
      %v1838 = vadd.f32 0.0, %v1837
      %v1839 = vpop.f32.mrf.mxu0
      %v1840 = vpop.f32.mrf.mxu0
      %v1841 = vadd.f32 0.0, %v1840
      %v1842 = vpop.f32.mrf.mxu0
      %1843 = vdwg.mxu0
      %v1844 = vadd.f32 %v1583, %v1718
      %v1845 = vadd.f32 %v1584, %v1721
      %v1846 = vadd.f32 %v1585, %v1726
      %v1847 = vadd.f32 %v1586, %v1729
      %v1848 = vadd.f32 %v1587, %v1734
      %v1849 = vadd.f32 %v1588, %v1737
      %v1850 = vadd.f32 %v1589, %v1742
      %v1851 = vadd.f32 %v1590, %v1745
      %v1852 = vadd.f32 %v1591, %v1750
      %v1853 = vadd.f32 %v1592, %v1753
      %v1854 = vadd.f32 %v1593, %v1758
      %v1855 = vadd.f32 %v1594, %v1761
      %v1856 = vadd.f32 %v1595, %v1766
      %v1857 = vadd.f32 %v1596, %v1769
      %v1858 = vadd.f32 %v1597, %v1774
      %v1859 = vadd.f32 %v1598, %v1777
      %v1860 = vadd.f32 %v1599, %v1782
      %v1861 = vadd.f32 %v1600, %v1785
      %v1862 = vadd.f32 %v1601, %v1790
      %v1863 = vadd.f32 %v1602, %v1793
      %v1864 = vadd.f32 %v1603, %v1798
      %v1865 = vadd.f32 %v1604, %v1801
      %v1866 = vadd.f32 %v1605, %v1806
      %v1867 = vadd.f32 %v1606, %v1809
      %v1868 = vadd.f32 %v1607, %v1814
      %v1869 = vadd.f32 %v1608, %v1817
      %v1870 = vadd.f32 %v1609, %v1822
      %v1871 = vadd.f32 %v1610, %v1825
      %v1872 = vadd.f32 %v1611, %v1830
      %v1873 = vadd.f32 %v1612, %v1833
      %v1874 = vadd.f32 %v1613, %v1838
      %v1875 = vadd.f32 %v1614, %v1841
      %v1876 = vpack.c.bf16 %v498, %v497
      %v1877 = vpack.c.bf16 %v500, %v499
      %v1878 = vpack.c.bf16 %v502, %v501
      %v1879 = vpack.c.bf16 %v504, %v503
      %v1880 = vpack.c.bf16 %v506, %v505
      %v1881 = vpack.c.bf16 %v508, %v507
      %v1882 = vpack.c.bf16 %v510, %v509
      %v1883 = vpack.c.bf16 %v512, %v511
      %v1884 = vpack.c.bf16 %v514, %v513
      %v1885 = vpack.c.bf16 %v516, %v515
      %v1886 = vpack.c.bf16 %v518, %v517
      %v1887 = vpack.c.bf16 %v520, %v519
      %v1888 = vpack.c.bf16 %v522, %v521
      %v1889 = vpack.c.bf16 %v524, %v523
      %v1890 = vpack.c.bf16 %v526, %v525
      %v1891 = vpack.c.bf16 %v528, %v527
      %v1892 = vld [vmem:[%s1 + $0x8] sm:$0xc]
      %v1894 = vunpack.c.l.b16 %v1892
      %v1895 = vpack.c.b16 %v1894, %v1894
      %v1896 = vrot.slane %v1895, 2
      %v1898 = vsel %vm226, %v1876, 0
      %v1901 = vsel %vm226, %v1877, 0
      %v1904 = vsel %vm226, %v1878, 0
      %v1907 = vsel %vm226, %v1879, 0
      %v1910 = vsel %vm226, %v1880, 0
      %v1913 = vsel %vm226, %v1881, 0
      %v1916 = vsel %vm226, %v1882, 0
      %v1919 = vsel %vm226, %v1883, 0
      %v1922 = vsel %vm226, %v1884, 0
      %v1925 = vsel %vm226, %v1885, 0
      %v1928 = vsel %vm226, %v1886, 0
      %v1931 = vsel %vm226, %v1887, 0
      %v1934 = vsel %vm226, %v1888, 0
      %v1937 = vsel %vm226, %v1889, 0
      %v1940 = vsel %vm226, %v1890, 0
      %v1943 = vsel %vm226, %v1891, 0
      %v1946 = vsel %vm712, %v1896, 0
      %1948 = vmatprep.subr.bf16.mxu0 0
      %1949 = vmatpush1.bf16.msra.mxu0 0
      %1950 = vmatprep.subr.bf16.mxu0 0
      %1951 = vmatpush1.bf16.msra.mxu0 0
      %1952 = vmatprep.subr.bf16.mxu0 0
      %1953 = vmatpush1.bf16.msra.mxu0 0
      %1954 = vmatprep.subr.bf16.mxu0 0
      %1955 = vmatpush1.bf16.msra.mxu0 0
      %1956 = vmatprep.subr.bf16.mxu0 0
      %1957 = vmatpush1.bf16.msra.mxu0 0
      %1958 = vmatprep.subr.bf16.mxu0 0
      %1959 = vmatpush1.bf16.msra.mxu0 0
      %1960 = vmatprep.subr.bf16.mxu0 0
      %1961 = vmatpush1.bf16.msra.mxu0 0
      %1962 = vmatprep.subr.bf16.mxu0 0
      %1963 = vmatpush1.bf16.msra.mxu0 %v1946
      %1964 = vmatprep.subr.bf16.mxu0 0
      %1965 = vmatpush2.bf16.msra.mxu0 0
      %1966 = vmatprep.subr.bf16.mxu0 0
      %1967 = vmatpush2.bf16.msra.mxu0 0
      %1968 = vmatprep.subr.bf16.mxu0 0
      %1969 = vmatpush2.bf16.msra.mxu0 0
      %1970 = vmatprep.subr.bf16.mxu0 0
      %1971 = vmatpush2.bf16.msra.mxu0 0
      %1972 = vmatprep.subr.bf16.mxu0 0
      %1973 = vmatpush2.bf16.msra.mxu0 0
      %1974 = vmatprep.subr.bf16.mxu0 0
      %1975 = vmatpush2.bf16.msra.mxu0 0
      %1976 = vmatprep.subr.bf16.mxu0 0
      %1977 = vmatpush2.bf16.msra.mxu0 0
      %1978 = vmatprep.subr.bf16.mxu0 0
      %1979 = vmatpush2.bf16.msra.mxu0 0
      %1980 = vmatprep.mubr.bf16.mxu0 0
      %1981 = vmatmul.mubr.bf16.gmra.mxu0 %v1898
      %v1982 = vpop.f32.mrf.mxu0
      %v1983 = vadd.f32 0.0, %v1982
      %v1984 = vpop.f32.mrf.mxu0
      %v1985 = vpop.f32.mrf.mxu0
      %v1986 = vadd.f32 0.0, %v1985
      %v1987 = vpop.f32.mrf.mxu0
      %1988 = vmatprep.mubr.bf16.mxu0 0
      %1989 = vmatmul.mubr.bf16.gmra.mxu0 %v1901
      %v1990 = vpop.f32.mrf.mxu0
      %v1991 = vadd.f32 0.0, %v1990
      %v1992 = vpop.f32.mrf.mxu0
      %v1993 = vpop.f32.mrf.mxu0
      %v1994 = vadd.f32 0.0, %v1993
      %v1995 = vpop.f32.mrf.mxu0
      %1996 = vmatprep.mubr.bf16.mxu0 0
      %1997 = vmatmul.mubr.bf16.gmra.mxu0 %v1904
      %v1998 = vpop.f32.mrf.mxu0
      %v1999 = vadd.f32 0.0, %v1998
      %v2000 = vpop.f32.mrf.mxu0
      %v2001 = vpop.f32.mrf.mxu0
      %v2002 = vadd.f32 0.0, %v2001
      %v2003 = vpop.f32.mrf.mxu0
      %2004 = vmatprep.mubr.bf16.mxu0 0
      %2005 = vmatmul.mubr.bf16.gmra.mxu0 %v1907
      %v2006 = vpop.f32.mrf.mxu0
      %v2007 = vadd.f32 0.0, %v2006
      %v2008 = vpop.f32.mrf.mxu0
      %v2009 = vpop.f32.mrf.mxu0
      %v2010 = vadd.f32 0.0, %v2009
      %v2011 = vpop.f32.mrf.mxu0
      %2012 = vmatprep.mubr.bf16.mxu0 0
      %2013 = vmatmul.mubr.bf16.gmra.mxu0 %v1910
      %v2014 = vpop.f32.mrf.mxu0
      %v2015 = vadd.f32 0.0, %v2014
      %v2016 = vpop.f32.mrf.mxu0
      %v2017 = vpop.f32.mrf.mxu0
      %v2018 = vadd.f32 0.0, %v2017
      %v2019 = vpop.f32.mrf.mxu0
      %2020 = vmatprep.mubr.bf16.mxu0 0
      %2021 = vmatmul.mubr.bf16.gmra.mxu0 %v1913
      %v2022 = vpop.f32.mrf.mxu0
      %v2023 = vadd.f32 0.0, %v2022
      %v2024 = vpop.f32.mrf.mxu0
      %v2025 = vpop.f32.mrf.mxu0
      %v2026 = vadd.f32 0.0, %v2025
      %v2027 = vpop.f32.mrf.mxu0
      %2028 = vmatprep.mubr.bf16.mxu0 0
      %2029 = vmatmul.mubr.bf16.gmra.mxu0 %v1916
      %v2030 = vpop.f32.mrf.mxu0
      %v2031 = vadd.f32 0.0, %v2030
      %v2032 = vpop.f32.mrf.mxu0
      %v2033 = vpop.f32.mrf.mxu0
      %v2034 = vadd.f32 0.0, %v2033
      %v2035 = vpop.f32.mrf.mxu0
      %2036 = vmatprep.mubr.bf16.mxu0 0
      %2037 = vmatmul.mubr.bf16.gmra.mxu0 %v1919
      %v2038 = vpop.f32.mrf.mxu0
      %v2039 = vadd.f32 0.0, %v2038
      %v2040 = vpop.f32.mrf.mxu0
      %v2041 = vpop.f32.mrf.mxu0
      %v2042 = vadd.f32 0.0, %v2041
      %v2043 = vpop.f32.mrf.mxu0
      %2044 = vmatprep.mubr.bf16.mxu0 0
      %2045 = vmatmul.mubr.bf16.gmra.mxu0 %v1922
      %v2046 = vpop.f32.mrf.mxu0
      %v2047 = vadd.f32 0.0, %v2046
      %v2048 = vpop.f32.mrf.mxu0
      %v2049 = vpop.f32.mrf.mxu0
      %v2050 = vadd.f32 0.0, %v2049
      %v2051 = vpop.f32.mrf.mxu0
      %2052 = vmatprep.mubr.bf16.mxu0 0
      %2053 = vmatmul.mubr.bf16.gmra.mxu0 %v1925
      %v2054 = vpop.f32.mrf.mxu0
      %v2055 = vadd.f32 0.0, %v2054
      %v2056 = vpop.f32.mrf.mxu0
      %v2057 = vpop.f32.mrf.mxu0
      %v2058 = vadd.f32 0.0, %v2057
      %v2059 = vpop.f32.mrf.mxu0
      %2060 = vmatprep.mubr.bf16.mxu0 0
      %2061 = vmatmul.mubr.bf16.gmra.mxu0 %v1928
      %v2062 = vpop.f32.mrf.mxu0
      %v2063 = vadd.f32 0.0, %v2062
      %v2064 = vpop.f32.mrf.mxu0
      %v2065 = vpop.f32.mrf.mxu0
      %v2066 = vadd.f32 0.0, %v2065
      %v2067 = vpop.f32.mrf.mxu0
      %2068 = vmatprep.mubr.bf16.mxu0 0
      %2069 = vmatmul.mubr.bf16.gmra.mxu0 %v1931
      %v2070 = vpop.f32.mrf.mxu0
      %v2071 = vadd.f32 0.0, %v2070
      %v2072 = vpop.f32.mrf.mxu0
      %v2073 = vpop.f32.mrf.mxu0
      %v2074 = vadd.f32 0.0, %v2073
      %v2075 = vpop.f32.mrf.mxu0
      %2076 = vmatprep.mubr.bf16.mxu0 0
      %2077 = vmatmul.mubr.bf16.gmra.mxu0 %v1934
      %v2078 = vpop.f32.mrf.mxu0
      %v2079 = vadd.f32 0.0, %v2078
      %v2080 = vpop.f32.mrf.mxu0
      %v2081 = vpop.f32.mrf.mxu0
      %v2082 = vadd.f32 0.0, %v2081
      %v2083 = vpop.f32.mrf.mxu0
      %2084 = vmatprep.mubr.bf16.mxu0 0
      %2085 = vmatmul.mubr.bf16.gmra.mxu0 %v1937
      %v2086 = vpop.f32.mrf.mxu0
      %v2087 = vadd.f32 0.0, %v2086
      %v2088 = vpop.f32.mrf.mxu0
      %v2089 = vpop.f32.mrf.mxu0
      %v2090 = vadd.f32 0.0, %v2089
      %v2091 = vpop.f32.mrf.mxu0
      %2092 = vmatprep.mubr.bf16.mxu0 0
      %2093 = vmatmul.mubr.bf16.gmra.mxu0 %v1940
      %v2094 = vpop.f32.mrf.mxu0
      %v2095 = vadd.f32 0.0, %v2094
      %v2096 = vpop.f32.mrf.mxu0
      %v2097 = vpop.f32.mrf.mxu0
      %v2098 = vadd.f32 0.0, %v2097
      %v2099 = vpop.f32.mrf.mxu0
      %2100 = vmatprep.mubr.bf16.mxu0 0
      %2101 = vmatmul.mubr.bf16.gmra.mxu0 %v1943
      %v2102 = vpop.f32.mrf.mxu0
      %v2103 = vadd.f32 0.0, %v2102
      %v2104 = vpop.f32.mrf.mxu0
      %v2105 = vpop.f32.mrf.mxu0
      %v2106 = vadd.f32 0.0, %v2105
      %v2107 = vpop.f32.mrf.mxu0
      %2108 = vdwg.mxu0
      %v2109 = vadd.f32 %v1844, %v1983
      %v2110 = vadd.f32 %v1845, %v1986
      %v2111 = vadd.f32 %v1846, %v1991
      %v2112 = vadd.f32 %v1847, %v1994
      %v2113 = vadd.f32 %v1848, %v1999
      %v2114 = vadd.f32 %v1849, %v2002
      %v2115 = vadd.f32 %v1850, %v2007
      %v2116 = vadd.f32 %v1851, %v2010
      %v2117 = vadd.f32 %v1852, %v2015
      %v2118 = vadd.f32 %v1853, %v2018
      %v2119 = vadd.f32 %v1854, %v2023
      %v2120 = vadd.f32 %v1855, %v2026
      %v2121 = vadd.f32 %v1856, %v2031
      %v2122 = vadd.f32 %v1857, %v2034
      %v2123 = vadd.f32 %v1858, %v2039
      %v2124 = vadd.f32 %v1859, %v2042
      %v2125 = vadd.f32 %v1860, %v2047
      %v2126 = vadd.f32 %v1861, %v2050
      %v2127 = vadd.f32 %v1862, %v2055
      %v2128 = vadd.f32 %v1863, %v2058
      %v2129 = vadd.f32 %v1864, %v2063
      %v2130 = vadd.f32 %v1865, %v2066
      %v2131 = vadd.f32 %v1866, %v2071
      %v2132 = vadd.f32 %v1867, %v2074
      %v2133 = vadd.f32 %v1868, %v2079
      %v2134 = vadd.f32 %v1869, %v2082
      %v2135 = vadd.f32 %v1870, %v2087
      %v2136 = vadd.f32 %v1871, %v2090
      %v2137 = vadd.f32 %v1872, %v2095
      %v2138 = vadd.f32 %v1873, %v2098
      %v2139 = vadd.f32 %v1874, %v2103
      %v2140 = vadd.f32 %v1875, %v2106
      %v2141 = vpack.c.bf16 %v531, %v530
      %v2142 = vpack.c.bf16 %v533, %v532
      %v2143 = vpack.c.bf16 %v535, %v534
      %v2144 = vpack.c.bf16 %v537, %v536
      %v2145 = vpack.c.bf16 %v539, %v538
      %v2146 = vpack.c.bf16 %v541, %v540
      %v2147 = vpack.c.bf16 %v543, %v542
      %v2148 = vpack.c.bf16 %v545, %v544
      %v2149 = vpack.c.bf16 %v547, %v546
      %v2150 = vpack.c.bf16 %v549, %v548
      %v2151 = vpack.c.bf16 %v551, %v550
      %v2152 = vpack.c.bf16 %v553, %v552
      %v2153 = vpack.c.bf16 %v555, %v554
      %v2154 = vpack.c.bf16 %v557, %v556
      %v2155 = vpack.c.bf16 %v559, %v558
      %v2156 = vpack.c.bf16 %v561, %v560
      %v2157 = vld [vmem:[%s1 + $0xc] sm:$0x3]
      %v2159 = vsel %vm226, %v2141, 0
      %v2162 = vsel %vm226, %v2142, 0
      %v2165 = vsel %vm226, %v2143, 0
      %v2168 = vsel %vm226, %v2144, 0
      %v2171 = vsel %vm226, %v2145, 0
      %v2174 = vsel %vm226, %v2146, 0
      %v2177 = vsel %vm226, %v2147, 0
      %v2180 = vsel %vm226, %v2148, 0
      %v2183 = vsel %vm226, %v2149, 0
      %v2186 = vsel %vm226, %v2150, 0
      %v2189 = vsel %vm226, %v2151, 0
      %v2192 = vsel %vm226, %v2152, 0
      %v2195 = vsel %vm226, %v2153, 0
      %v2198 = vsel %vm226, %v2154, 0
      %v2201 = vsel %vm226, %v2155, 0
      %v2204 = vsel %vm226, %v2156, 0
      %v2207 = vsel %vm712, %v2157, 0
      %2209 = vmatprep.subr.bf16.mxu0 0
      %2210 = vmatpush1.bf16.msra.mxu0 0
      %2211 = vmatprep.subr.bf16.mxu0 0
      %2212 = vmatpush1.bf16.msra.mxu0 0
      %2213 = vmatprep.subr.bf16.mxu0 0
      %2214 = vmatpush1.bf16.msra.mxu0 0
      %2215 = vmatprep.subr.bf16.mxu0 0
      %2216 = vmatpush1.bf16.msra.mxu0 0
      %2217 = vmatprep.subr.bf16.mxu0 0
      %2218 = vmatpush1.bf16.msra.mxu0 0
      %2219 = vmatprep.subr.bf16.mxu0 0
      %2220 = vmatpush1.bf16.msra.mxu0 0
      %2221 = vmatprep.subr.bf16.mxu0 0
      %2222 = vmatpush1.bf16.msra.mxu0 0
      %2223 = vmatprep.subr.bf16.mxu0 0
      %2224 = vmatpush1.bf16.msra.mxu0 %v2207
      %2225 = vmatprep.subr.bf16.mxu0 0
      %2226 = vmatpush2.bf16.msra.mxu0 0
      %2227 = vmatprep.subr.bf16.mxu0 0
      %2228 = vmatpush2.bf16.msra.mxu0 0
      %2229 = vmatprep.subr.bf16.mxu0 0
      %2230 = vmatpush2.bf16.msra.mxu0 0
      %2231 = vmatprep.subr.bf16.mxu0 0
      %2232 = vmatpush2.bf16.msra.mxu0 0
      %2233 = vmatprep.subr.bf16.mxu0 0
      %2234 = vmatpush2.bf16.msra.mxu0 0
      %2235 = vmatprep.subr.bf16.mxu0 0
      %2236 = vmatpush2.bf16.msra.mxu0 0
      %2237 = vmatprep.subr.bf16.mxu0 0
      %2238 = vmatpush2.bf16.msra.mxu0 0
      %2239 = vmatprep.subr.bf16.mxu0 0
      %2240 = vmatpush2.bf16.msra.mxu0 0
      %2241 = vmatprep.mubr.bf16.mxu0 0
      %2242 = vmatmul.mubr.bf16.gmra.mxu0 %v2159
      %v2243 = vpop.f32.mrf.mxu0
      %v2244 = vadd.f32 0.0, %v2243
      %v2245 = vpop.f32.mrf.mxu0
      %v2246 = vpop.f32.mrf.mxu0
      %v2247 = vadd.f32 0.0, %v2246
      %v2248 = vpop.f32.mrf.mxu0
      %2249 = vmatprep.mubr.bf16.mxu0 0
      %2250 = vmatmul.mubr.bf16.gmra.mxu0 %v2162
      %v2251 = vpop.f32.mrf.mxu0
      %v2252 = vadd.f32 0.0, %v2251
      %v2253 = vpop.f32.mrf.mxu0
      %v2254 = vpop.f32.mrf.mxu0
      %v2255 = vadd.f32 0.0, %v2254
      %v2256 = vpop.f32.mrf.mxu0
      %2257 = vmatprep.mubr.bf16.mxu0 0
      %2258 = vmatmul.mubr.bf16.gmra.mxu0 %v2165
      %v2259 = vpop.f32.mrf.mxu0
      %v2260 = vadd.f32 0.0, %v2259
      %v2261 = vpop.f32.mrf.mxu0
      %v2262 = vpop.f32.mrf.mxu0
      %v2263 = vadd.f32 0.0, %v2262
      %v2264 = vpop.f32.mrf.mxu0
      %2265 = vmatprep.mubr.bf16.mxu0 0
      %2266 = vmatmul.mubr.bf16.gmra.mxu0 %v2168
      %v2267 = vpop.f32.mrf.mxu0
      %v2268 = vadd.f32 0.0, %v2267
      %v2269 = vpop.f32.mrf.mxu0
      %v2270 = vpop.f32.mrf.mxu0
      %v2271 = vadd.f32 0.0, %v2270
      %v2272 = vpop.f32.mrf.mxu0
      %2273 = vmatprep.mubr.bf16.mxu0 0
      %2274 = vmatmul.mubr.bf16.gmra.mxu0 %v2171
      %v2275 = vpop.f32.mrf.mxu0
      %v2276 = vadd.f32 0.0, %v2275
      %v2277 = vpop.f32.mrf.mxu0
      %v2278 = vpop.f32.mrf.mxu0
      %v2279 = vadd.f32 0.0, %v2278
      %v2280 = vpop.f32.mrf.mxu0
      %2281 = vmatprep.mubr.bf16.mxu0 0
      %2282 = vmatmul.mubr.bf16.gmra.mxu0 %v2174
      %v2283 = vpop.f32.mrf.mxu0
      %v2284 = vadd.f32 0.0, %v2283
      %v2285 = vpop.f32.mrf.mxu0
      %v2286 = vpop.f32.mrf.mxu0
      %v2287 = vadd.f32 0.0, %v2286
      %v2288 = vpop.f32.mrf.mxu0
      %2289 = vmatprep.mubr.bf16.mxu0 0
      %2290 = vmatmul.mubr.bf16.gmra.mxu0 %v2177
      %v2291 = vpop.f32.mrf.mxu0
      %v2292 = vadd.f32 0.0, %v2291
      %v2293 = vpop.f32.mrf.mxu0
      %v2294 = vpop.f32.mrf.mxu0
      %v2295 = vadd.f32 0.0, %v2294
      %v2296 = vpop.f32.mrf.mxu0
      %2297 = vmatprep.mubr.bf16.mxu0 0
      %2298 = vmatmul.mubr.bf16.gmra.mxu0 %v2180
      %v2299 = vpop.f32.mrf.mxu0
      %v2300 = vadd.f32 0.0, %v2299
      %v2301 = vpop.f32.mrf.mxu0
      %v2302 = vpop.f32.mrf.mxu0
      %v2303 = vadd.f32 0.0, %v2302
      %v2304 = vpop.f32.mrf.mxu0
      %2305 = vmatprep.mubr.bf16.mxu0 0
      %2306 = vmatmul.mubr.bf16.gmra.mxu0 %v2183
      %v2307 = vpop.f32.mrf.mxu0
      %v2308 = vadd.f32 0.0, %v2307
      %v2309 = vpop.f32.mrf.mxu0
      %v2310 = vpop.f32.mrf.mxu0
      %v2311 = vadd.f32 0.0, %v2310
      %v2312 = vpop.f32.mrf.mxu0
      %2313 = vmatprep.mubr.bf16.mxu0 0
      %2314 = vmatmul.mubr.bf16.gmra.mxu0 %v2186
      %v2315 = vpop.f32.mrf.mxu0
      %v2316 = vadd.f32 0.0, %v2315
      %v2317 = vpop.f32.mrf.mxu0
      %v2318 = vpop.f32.mrf.mxu0
      %v2319 = vadd.f32 0.0, %v2318
      %v2320 = vpop.f32.mrf.mxu0
      %2321 = vmatprep.mubr.bf16.mxu0 0
      %2322 = vmatmul.mubr.bf16.gmra.mxu0 %v2189
      %v2323 = vpop.f32.mrf.mxu0
      %v2324 = vadd.f32 0.0, %v2323
      %v2325 = vpop.f32.mrf.mxu0
      %v2326 = vpop.f32.mrf.mxu0
      %v2327 = vadd.f32 0.0, %v2326
      %v2328 = vpop.f32.mrf.mxu0
      %2329 = vmatprep.mubr.bf16.mxu0 0
      %2330 = vmatmul.mubr.bf16.gmra.mxu0 %v2192
      %v2331 = vpop.f32.mrf.mxu0
      %v2332 = vadd.f32 0.0, %v2331
      %v2333 = vpop.f32.mrf.mxu0
      %v2334 = vpop.f32.mrf.mxu0
      %v2335 = vadd.f32 0.0, %v2334
      %v2336 = vpop.f32.mrf.mxu0
      %2337 = vmatprep.mubr.bf16.mxu0 0
      %2338 = vmatmul.mubr.bf16.gmra.mxu0 %v2195
      %v2339 = vpop.f32.mrf.mxu0
      %v2340 = vadd.f32 0.0, %v2339
      %v2341 = vpop.f32.mrf.mxu0
      %v2342 = vpop.f32.mrf.mxu0
      %v2343 = vadd.f32 0.0, %v2342
      %v2344 = vpop.f32.mrf.mxu0
      %2345 = vmatprep.mubr.bf16.mxu0 0
      %2346 = vmatmul.mubr.bf16.gmra.mxu0 %v2198
      %v2347 = vpop.f32.mrf.mxu0
      %v2348 = vadd.f32 0.0, %v2347
      %v2349 = vpop.f32.mrf.mxu0
      %v2350 = vpop.f32.mrf.mxu0
      %v2351 = vadd.f32 0.0, %v2350
      %v2352 = vpop.f32.mrf.mxu0
      %2353 = vmatprep.mubr.bf16.mxu0 0
      %2354 = vmatmul.mubr.bf16.gmra.mxu0 %v2201
      %v2355 = vpop.f32.mrf.mxu0
      %v2356 = vadd.f32 0.0, %v2355
      %v2357 = vpop.f32.mrf.mxu0
      %v2358 = vpop.f32.mrf.mxu0
      %v2359 = vadd.f32 0.0, %v2358
      %v2360 = vpop.f32.mrf.mxu0
      %2361 = vmatprep.mubr.bf16.mxu0 0
      %2362 = vmatmul.mubr.bf16.gmra.mxu0 %v2204
      %v2363 = vpop.f32.mrf.mxu0
      %v2364 = vadd.f32 0.0, %v2363
      %v2365 = vpop.f32.mrf.mxu0
      %v2366 = vpop.f32.mrf.mxu0
      %v2367 = vadd.f32 0.0, %v2366
      %v2368 = vpop.f32.mrf.mxu0
      %2369 = vdwg.mxu0
      %v2370 = vadd.f32 %v2109, %v2244
      %v2371 = vadd.f32 %v2110, %v2247
      %v2372 = vadd.f32 %v2111, %v2252
      %v2373 = vadd.f32 %v2112, %v2255
      %v2374 = vadd.f32 %v2113, %v2260
      %v2375 = vadd.f32 %v2114, %v2263
      %v2376 = vadd.f32 %v2115, %v2268
      %v2377 = vadd.f32 %v2116, %v2271
      %v2378 = vadd.f32 %v2117, %v2276
      %v2379 = vadd.f32 %v2118, %v2279
      %v2380 = vadd.f32 %v2119, %v2284
      %v2381 = vadd.f32 %v2120, %v2287
      %v2382 = vadd.f32 %v2121, %v2292
      %v2383 = vadd.f32 %v2122, %v2295
      %v2384 = vadd.f32 %v2123, %v2300
      %v2385 = vadd.f32 %v2124, %v2303
      %v2386 = vadd.f32 %v2125, %v2308
      %v2387 = vadd.f32 %v2126, %v2311
      %v2388 = vadd.f32 %v2127, %v2316
      %v2389 = vadd.f32 %v2128, %v2319
      %v2390 = vadd.f32 %v2129, %v2324
      %v2391 = vadd.f32 %v2130, %v2327
      %v2392 = vadd.f32 %v2131, %v2332
      %v2393 = vadd.f32 %v2132, %v2335
      %v2394 = vadd.f32 %v2133, %v2340
      %v2395 = vadd.f32 %v2134, %v2343
      %v2396 = vadd.f32 %v2135, %v2348
      %v2397 = vadd.f32 %v2136, %v2351
      %v2398 = vadd.f32 %v2137, %v2356
      %v2399 = vadd.f32 %v2138, %v2359
      %v2400 = vadd.f32 %v2139, %v2364
      %v2401 = vadd.f32 %v2140, %v2367
      %v2402 = vpack.c.bf16 %v563, %v562
      %v2403 = vpack.c.bf16 %v565, %v564
      %v2404 = vpack.c.bf16 %v567, %v566
      %v2405 = vpack.c.bf16 %v569, %v568
      %v2406 = vpack.c.bf16 %v571, %v570
      %v2407 = vpack.c.bf16 %v573, %v572
      %v2408 = vpack.c.bf16 %v575, %v574
      %v2409 = vpack.c.bf16 %v577, %v576
      %v2410 = vpack.c.bf16 %v579, %v578
      %v2411 = vpack.c.bf16 %v581, %v580
      %v2412 = vpack.c.bf16 %v583, %v582
      %v2413 = vpack.c.bf16 %v585, %v584
      %v2414 = vpack.c.bf16 %v587, %v586
      %v2415 = vpack.c.bf16 %v589, %v588
      %v2416 = vpack.c.bf16 %v591, %v590
      %v2417 = vpack.c.bf16 %v593, %v592
      %v2418 = vld [vmem:[%s1 + $0xc] sm:$0xc]
      %v2420 = vunpack.c.l.b16 %v2418
      %v2421 = vpack.c.b16 %v2420, %v2420
      %v2422 = vrot.slane %v2421, 2
      %v2424 = vsel %vm226, %v2402, 0
      %v2427 = vsel %vm226, %v2403, 0
      %v2430 = vsel %vm226, %v2404, 0
      %v2433 = vsel %vm226, %v2405, 0
      %v2436 = vsel %vm226, %v2406, 0
      %v2439 = vsel %vm226, %v2407, 0
      %v2442 = vsel %vm226, %v2408, 0
      %v2445 = vsel %vm226, %v2409, 0
      %v2448 = vsel %vm226, %v2410, 0
      %v2451 = vsel %vm226, %v2411, 0
      %v2454 = vsel %vm226, %v2412, 0
      %v2457 = vsel %vm226, %v2413, 0
      %v2460 = vsel %vm226, %v2414, 0
      %v2463 = vsel %vm226, %v2415, 0
      %v2466 = vsel %vm226, %v2416, 0
      %v2469 = vsel %vm226, %v2417, 0
      %v2472 = vsel %vm712, %v2422, 0
      %2474 = vmatprep.subr.bf16.mxu0 0
      %2475 = vmatpush1.bf16.msra.mxu0 0
      %2476 = vmatprep.subr.bf16.mxu0 0
      %2477 = vmatpush1.bf16.msra.mxu0 0
      %2478 = vmatprep.subr.bf16.mxu0 0
      %2479 = vmatpush1.bf16.msra.mxu0 0
      %2480 = vmatprep.subr.bf16.mxu0 0
      %2481 = vmatpush1.bf16.msra.mxu0 0
      %2482 = vmatprep.subr.bf16.mxu0 0
      %2483 = vmatpush1.bf16.msra.mxu0 0
      %2484 = vmatprep.subr.bf16.mxu0 0
      %2485 = vmatpush1.bf16.msra.mxu0 0
      %2486 = vmatprep.subr.bf16.mxu0 0
      %2487 = vmatpush1.bf16.msra.mxu0 0
      %2488 = vmatprep.subr.bf16.mxu0 0
      %2489 = vmatpush1.bf16.msra.mxu0 %v2472
      %2490 = vmatprep.subr.bf16.mxu0 0
      %2491 = vmatpush2.bf16.msra.mxu0 0
      %2492 = vmatprep.subr.bf16.mxu0 0
      %2493 = vmatpush2.bf16.msra.mxu0 0
      %2494 = vmatprep.subr.bf16.mxu0 0
      %2495 = vmatpush2.bf16.msra.mxu0 0
      %2496 = vmatprep.subr.bf16.mxu0 0
      %2497 = vmatpush2.bf16.msra.mxu0 0
      %2498 = vmatprep.subr.bf16.mxu0 0
      %2499 = vmatpush2.bf16.msra.mxu0 0
      %2500 = vmatprep.subr.bf16.mxu0 0
      %2501 = vmatpush2.bf16.msra.mxu0 0
      %2502 = vmatprep.subr.bf16.mxu0 0
      %2503 = vmatpush2.bf16.msra.mxu0 0
      %2504 = vmatprep.subr.bf16.mxu0 0
      %2505 = vmatpush2.bf16.msra.mxu0 0
      %2506 = vmatprep.mubr.bf16.mxu0 0
      %2507 = vmatmul.mubr.bf16.gmra.mxu0 %v2424
      %v2508 = vpop.f32.mrf.mxu0
      %v2509 = vadd.f32 0.0, %v2508
      %v2510 = vpop.f32.mrf.mxu0
      %v2511 = vpop.f32.mrf.mxu0
      %v2512 = vadd.f32 0.0, %v2511
      %v2513 = vpop.f32.mrf.mxu0
      %2514 = vmatprep.mubr.bf16.mxu0 0
      %2515 = vmatmul.mubr.bf16.gmra.mxu0 %v2427
      %v2516 = vpop.f32.mrf.mxu0
      %v2517 = vadd.f32 0.0, %v2516
      %v2518 = vpop.f32.mrf.mxu0
      %v2519 = vpop.f32.mrf.mxu0
      %v2520 = vadd.f32 0.0, %v2519
      %v2521 = vpop.f32.mrf.mxu0
      %2522 = vmatprep.mubr.bf16.mxu0 0
      %2523 = vmatmul.mubr.bf16.gmra.mxu0 %v2430
      %v2524 = vpop.f32.mrf.mxu0
      %v2525 = vadd.f32 0.0, %v2524
      %v2526 = vpop.f32.mrf.mxu0
      %v2527 = vpop.f32.mrf.mxu0
      %v2528 = vadd.f32 0.0, %v2527
      %v2529 = vpop.f32.mrf.mxu0
      %2530 = vmatprep.mubr.bf16.mxu0 0
      %2531 = vmatmul.mubr.bf16.gmra.mxu0 %v2433
      %v2532 = vpop.f32.mrf.mxu0
      %v2533 = vadd.f32 0.0, %v2532
      %v2534 = vpop.f32.mrf.mxu0
      %v2535 = vpop.f32.mrf.mxu0
      %v2536 = vadd.f32 0.0, %v2535
      %v2537 = vpop.f32.mrf.mxu0
      %2538 = vmatprep.mubr.bf16.mxu0 0
      %2539 = vmatmul.mubr.bf16.gmra.mxu0 %v2436
      %v2540 = vpop.f32.mrf.mxu0
      %v2541 = vadd.f32 0.0, %v2540
      %v2542 = vpop.f32.mrf.mxu0
      %v2543 = vpop.f32.mrf.mxu0
      %v2544 = vadd.f32 0.0, %v2543
      %v2545 = vpop.f32.mrf.mxu0
      %2546 = vmatprep.mubr.bf16.mxu0 0
      %2547 = vmatmul.mubr.bf16.gmra.mxu0 %v2439
      %v2548 = vpop.f32.mrf.mxu0
      %v2549 = vadd.f32 0.0, %v2548
      %v2550 = vpop.f32.mrf.mxu0
      %v2551 = vpop.f32.mrf.mxu0
      %v2552 = vadd.f32 0.0, %v2551
      %v2553 = vpop.f32.mrf.mxu0
      %2554 = vmatprep.mubr.bf16.mxu0 0
      %2555 = vmatmul.mubr.bf16.gmra.mxu0 %v2442
      %v2556 = vpop.f32.mrf.mxu0
      %v2557 = vadd.f32 0.0, %v2556
      %v2558 = vpop.f32.mrf.mxu0
      %v2559 = vpop.f32.mrf.mxu0
      %v2560 = vadd.f32 0.0, %v2559
      %v2561 = vpop.f32.mrf.mxu0
      %2562 = vmatprep.mubr.bf16.mxu0 0
      %2563 = vmatmul.mubr.bf16.gmra.mxu0 %v2445
      %v2564 = vpop.f32.mrf.mxu0
      %v2565 = vadd.f32 0.0, %v2564
      %v2566 = vpop.f32.mrf.mxu0
      %v2567 = vpop.f32.mrf.mxu0
      %v2568 = vadd.f32 0.0, %v2567
      %v2569 = vpop.f32.mrf.mxu0
      %2570 = vmatprep.mubr.bf16.mxu0 0
      %2571 = vmatmul.mubr.bf16.gmra.mxu0 %v2448
      %v2572 = vpop.f32.mrf.mxu0
      %v2573 = vadd.f32 0.0, %v2572
      %v2574 = vpop.f32.mrf.mxu0
      %v2575 = vpop.f32.mrf.mxu0
      %v2576 = vadd.f32 0.0, %v2575
      %v2577 = vpop.f32.mrf.mxu0
      %2578 = vmatprep.mubr.bf16.mxu0 0
      %2579 = vmatmul.mubr.bf16.gmra.mxu0 %v2451
      %v2580 = vpop.f32.mrf.mxu0
      %v2581 = vadd.f32 0.0, %v2580
      %v2582 = vpop.f32.mrf.mxu0
      %v2583 = vpop.f32.mrf.mxu0
      %v2584 = vadd.f32 0.0, %v2583
      %v2585 = vpop.f32.mrf.mxu0
      %2586 = vmatprep.mubr.bf16.mxu0 0
      %2587 = vmatmul.mubr.bf16.gmra.mxu0 %v2454
      %v2588 = vpop.f32.mrf.mxu0
      %v2589 = vadd.f32 0.0, %v2588
      %v2590 = vpop.f32.mrf.mxu0
      %v2591 = vpop.f32.mrf.mxu0
      %v2592 = vadd.f32 0.0, %v2591
      %v2593 = vpop.f32.mrf.mxu0
      %2594 = vmatprep.mubr.bf16.mxu0 0
      %2595 = vmatmul.mubr.bf16.gmra.mxu0 %v2457
      %v2596 = vpop.f32.mrf.mxu0
      %v2597 = vadd.f32 0.0, %v2596
      %v2598 = vpop.f32.mrf.mxu0
      %v2599 = vpop.f32.mrf.mxu0
      %v2600 = vadd.f32 0.0, %v2599
      %v2601 = vpop.f32.mrf.mxu0
      %2602 = vmatprep.mubr.bf16.mxu0 0
      %2603 = vmatmul.mubr.bf16.gmra.mxu0 %v2460
      %v2604 = vpop.f32.mrf.mxu0
      %v2605 = vadd.f32 0.0, %v2604
      %v2606 = vpop.f32.mrf.mxu0
      %v2607 = vpop.f32.mrf.mxu0
      %v2608 = vadd.f32 0.0, %v2607
      %v2609 = vpop.f32.mrf.mxu0
      %2610 = vmatprep.mubr.bf16.mxu0 0
      %2611 = vmatmul.mubr.bf16.gmra.mxu0 %v2463
      %v2612 = vpop.f32.mrf.mxu0
      %v2613 = vadd.f32 0.0, %v2612
      %v2614 = vpop.f32.mrf.mxu0
      %v2615 = vpop.f32.mrf.mxu0
      %v2616 = vadd.f32 0.0, %v2615
      %v2617 = vpop.f32.mrf.mxu0
      %2618 = vmatprep.mubr.bf16.mxu0 0
      %2619 = vmatmul.mubr.bf16.gmra.mxu0 %v2466
      %v2620 = vpop.f32.mrf.mxu0
      %v2621 = vadd.f32 0.0, %v2620
      %v2622 = vpop.f32.mrf.mxu0
      %v2623 = vpop.f32.mrf.mxu0
      %v2624 = vadd.f32 0.0, %v2623
      %v2625 = vpop.f32.mrf.mxu0
      %2626 = vmatprep.mubr.bf16.mxu0 0
      %2627 = vmatmul.mubr.bf16.gmra.mxu0 %v2469
      %v2628 = vpop.f32.mrf.mxu0
      %v2629 = vadd.f32 0.0, %v2628
      %v2630 = vpop.f32.mrf.mxu0
      %v2631 = vpop.f32.mrf.mxu0
      %v2632 = vadd.f32 0.0, %v2631
      %v2633 = vpop.f32.mrf.mxu0
      %2634 = vdwg.mxu0
      %v2635 = vadd.f32 %v2370, %v2509
      %v2636 = vadd.f32 %v2371, %v2512
      %v2637 = vadd.f32 %v2372, %v2517
      %v2638 = vadd.f32 %v2373, %v2520
      %v2639 = vadd.f32 %v2374, %v2525
      %v2640 = vadd.f32 %v2375, %v2528
      %v2641 = vadd.f32 %v2376, %v2533
      %v2642 = vadd.f32 %v2377, %v2536
      %v2643 = vadd.f32 %v2378, %v2541
      %v2644 = vadd.f32 %v2379, %v2544
      %v2645 = vadd.f32 %v2380, %v2549
      %v2646 = vadd.f32 %v2381, %v2552
      %v2647 = vadd.f32 %v2382, %v2557
      %v2648 = vadd.f32 %v2383, %v2560
      %v2649 = vadd.f32 %v2384, %v2565
      %v2650 = vadd.f32 %v2385, %v2568
      %v2651 = vadd.f32 %v2386, %v2573
      %v2652 = vadd.f32 %v2387, %v2576
      %v2653 = vadd.f32 %v2388, %v2581
      %v2654 = vadd.f32 %v2389, %v2584
      %v2655 = vadd.f32 %v2390, %v2589
      %v2656 = vadd.f32 %v2391, %v2592
      %v2657 = vadd.f32 %v2392, %v2597
      %v2658 = vadd.f32 %v2393, %v2600
      %v2659 = vadd.f32 %v2394, %v2605
      %v2660 = vadd.f32 %v2395, %v2608
      %v2661 = vadd.f32 %v2396, %v2613
      %v2662 = vadd.f32 %v2397, %v2616
      %v2663 = vadd.f32 %v2398, %v2621
      %v2664 = vadd.f32 %v2399, %v2624
      %v2665 = vadd.f32 %v2400, %v2629
      %v2666 = vadd.f32 %v2401, %v2632
      %v2667 = vpack.c.bf16 %v595, %v594
      %v2668 = vpack.c.bf16 %v597, %v596
      %v2669 = vpack.c.bf16 %v599, %v598
      %v2670 = vpack.c.bf16 %v601, %v600
      %v2671 = vpack.c.bf16 %v603, %v602
      %v2672 = vpack.c.bf16 %v605, %v604
      %v2673 = vpack.c.bf16 %v607, %v606
      %v2674 = vpack.c.bf16 %v609, %v608
      %v2675 = vpack.c.bf16 %v611, %v610
      %v2676 = vpack.c.bf16 %v613, %v612
      %v2677 = vpack.c.bf16 %v615, %v614
      %v2678 = vpack.c.bf16 %v617, %v616
      %v2679 = vpack.c.bf16 %v619, %v618
      %v2680 = vpack.c.bf16 %v621, %v620
      %v2681 = vpack.c.bf16 %v623, %v622
      %v2682 = vpack.c.bf16 %v625, %v624
      %v2683 = vld [vmem:[%s1 + $0x10] sm:$0x3]
      %v2685 = vsel %vm226, %v2667, 0
      %v2688 = vsel %vm226, %v2668, 0
      %v2691 = vsel %vm226, %v2669, 0
      %v2694 = vsel %vm226, %v2670, 0
      %v2697 = vsel %vm226, %v2671, 0
      %v2700 = vsel %vm226, %v2672, 0
      %v2703 = vsel %vm226, %v2673, 0
      %v2706 = vsel %vm226, %v2674, 0
      %v2709 = vsel %vm226, %v2675, 0
      %v2712 = vsel %vm226, %v2676, 0
      %v2715 = vsel %vm226, %v2677, 0
      %v2718 = vsel %vm226, %v2678, 0
      %v2721 = vsel %vm226, %v2679, 0
      %v2724 = vsel %vm226, %v2680, 0
      %v2727 = vsel %vm226, %v2681, 0
      %v2730 = vsel %vm226, %v2682, 0
      %v2733 = vsel %vm712, %v2683, 0
      %2735 = vmatprep.subr.bf16.mxu0 0
      %2736 = vmatpush1.bf16.msra.mxu0 0
      %2737 = vmatprep.subr.bf16.mxu0 0
      %2738 = vmatpush1.bf16.msra.mxu0 0
      %2739 = vmatprep.subr.bf16.mxu0 0
      %2740 = vmatpush1.bf16.msra.mxu0 0
      %2741 = vmatprep.subr.bf16.mxu0 0
      %2742 = vmatpush1.bf16.msra.mxu0 0
      %2743 = vmatprep.subr.bf16.mxu0 0
      %2744 = vmatpush1.bf16.msra.mxu0 0
      %2745 = vmatprep.subr.bf16.mxu0 0
      %2746 = vmatpush1.bf16.msra.mxu0 0
      %2747 = vmatprep.subr.bf16.mxu0 0
      %2748 = vmatpush1.bf16.msra.mxu0 0
      %2749 = vmatprep.subr.bf16.mxu0 0
      %2750 = vmatpush1.bf16.msra.mxu0 %v2733
      %2751 = vmatprep.subr.bf16.mxu0 0
      %2752 = vmatpush2.bf16.msra.mxu0 0
      %2753 = vmatprep.subr.bf16.mxu0 0
      %2754 = vmatpush2.bf16.msra.mxu0 0
      %2755 = vmatprep.subr.bf16.mxu0 0
      %2756 = vmatpush2.bf16.msra.mxu0 0
      %2757 = vmatprep.subr.bf16.mxu0 0
      %2758 = vmatpush2.bf16.msra.mxu0 0
      %2759 = vmatprep.subr.bf16.mxu0 0
      %2760 = vmatpush2.bf16.msra.mxu0 0
      %2761 = vmatprep.subr.bf16.mxu0 0
      %2762 = vmatpush2.bf16.msra.mxu0 0
      %2763 = vmatprep.subr.bf16.mxu0 0
      %2764 = vmatpush2.bf16.msra.mxu0 0
      %2765 = vmatprep.subr.bf16.mxu0 0
      %2766 = vmatpush2.bf16.msra.mxu0 0
      %2767 = vmatprep.mubr.bf16.mxu0 0
      %2768 = vmatmul.mubr.bf16.gmra.mxu0 %v2685
      %v2769 = vpop.f32.mrf.mxu0
      %v2770 = vadd.f32 0.0, %v2769
      %v2771 = vpop.f32.mrf.mxu0
      %v2772 = vpop.f32.mrf.mxu0
      %v2773 = vadd.f32 0.0, %v2772
      %v2774 = vpop.f32.mrf.mxu0
      %2775 = vmatprep.mubr.bf16.mxu0 0
      %2776 = vmatmul.mubr.bf16.gmra.mxu0 %v2688
      %v2777 = vpop.f32.mrf.mxu0
      %v2778 = vadd.f32 0.0, %v2777
      %v2779 = vpop.f32.mrf.mxu0
      %v2780 = vpop.f32.mrf.mxu0
      %v2781 = vadd.f32 0.0, %v2780
      %v2782 = vpop.f32.mrf.mxu0
      %2783 = vmatprep.mubr.bf16.mxu0 0
      %2784 = vmatmul.mubr.bf16.gmra.mxu0 %v2691
      %v2785 = vpop.f32.mrf.mxu0
      %v2786 = vadd.f32 0.0, %v2785
      %v2787 = vpop.f32.mrf.mxu0
      %v2788 = vpop.f32.mrf.mxu0
      %v2789 = vadd.f32 0.0, %v2788
      %v2790 = vpop.f32.mrf.mxu0
      %2791 = vmatprep.mubr.bf16.mxu0 0
      %2792 = vmatmul.mubr.bf16.gmra.mxu0 %v2694
      %v2793 = vpop.f32.mrf.mxu0
      %v2794 = vadd.f32 0.0, %v2793
      %v2795 = vpop.f32.mrf.mxu0
      %v2796 = vpop.f32.mrf.mxu0
      %v2797 = vadd.f32 0.0, %v2796
      %v2798 = vpop.f32.mrf.mxu0
      %2799 = vmatprep.mubr.bf16.mxu0 0
      %2800 = vmatmul.mubr.bf16.gmra.mxu0 %v2697
      %v2801 = vpop.f32.mrf.mxu0
      %v2802 = vadd.f32 0.0, %v2801
      %v2803 = vpop.f32.mrf.mxu0
      %v2804 = vpop.f32.mrf.mxu0
      %v2805 = vadd.f32 0.0, %v2804
      %v2806 = vpop.f32.mrf.mxu0
      %2807 = vmatprep.mubr.bf16.mxu0 0
      %2808 = vmatmul.mubr.bf16.gmra.mxu0 %v2700
      %v2809 = vpop.f32.mrf.mxu0
      %v2810 = vadd.f32 0.0, %v2809
      %v2811 = vpop.f32.mrf.mxu0
      %v2812 = vpop.f32.mrf.mxu0
      %v2813 = vadd.f32 0.0, %v2812
      %v2814 = vpop.f32.mrf.mxu0
      %2815 = vmatprep.mubr.bf16.mxu0 0
      %2816 = vmatmul.mubr.bf16.gmra.mxu0 %v2703
      %v2817 = vpop.f32.mrf.mxu0
      %v2818 = vadd.f32 0.0, %v2817
      %v2819 = vpop.f32.mrf.mxu0
      %v2820 = vpop.f32.mrf.mxu0
      %v2821 = vadd.f32 0.0, %v2820
      %v2822 = vpop.f32.mrf.mxu0
      %2823 = vmatprep.mubr.bf16.mxu0 0
      %2824 = vmatmul.mubr.bf16.gmra.mxu0 %v2706
      %v2825 = vpop.f32.mrf.mxu0
      %v2826 = vadd.f32 0.0, %v2825
      %v2827 = vpop.f32.mrf.mxu0
      %v2828 = vpop.f32.mrf.mxu0
      %v2829 = vadd.f32 0.0, %v2828
      %v2830 = vpop.f32.mrf.mxu0
      %2831 = vmatprep.mubr.bf16.mxu0 0
      %2832 = vmatmul.mubr.bf16.gmra.mxu0 %v2709
      %v2833 = vpop.f32.mrf.mxu0
      %v2834 = vadd.f32 0.0, %v2833
      %v2835 = vpop.f32.mrf.mxu0
      %v2836 = vpop.f32.mrf.mxu0
      %v2837 = vadd.f32 0.0, %v2836
      %v2838 = vpop.f32.mrf.mxu0
      %2839 = vmatprep.mubr.bf16.mxu0 0
      %2840 = vmatmul.mubr.bf16.gmra.mxu0 %v2712
      %v2841 = vpop.f32.mrf.mxu0
      %v2842 = vadd.f32 0.0, %v2841
      %v2843 = vpop.f32.mrf.mxu0
      %v2844 = vpop.f32.mrf.mxu0
      %v2845 = vadd.f32 0.0, %v2844
      %v2846 = vpop.f32.mrf.mxu0
      %2847 = vmatprep.mubr.bf16.mxu0 0
      %2848 = vmatmul.mubr.bf16.gmra.mxu0 %v2715
      %v2849 = vpop.f32.mrf.mxu0
      %v2850 = vadd.f32 0.0, %v2849
      %v2851 = vpop.f32.mrf.mxu0
      %v2852 = vpop.f32.mrf.mxu0
      %v2853 = vadd.f32 0.0, %v2852
      %v2854 = vpop.f32.mrf.mxu0
      %2855 = vmatprep.mubr.bf16.mxu0 0
      %2856 = vmatmul.mubr.bf16.gmra.mxu0 %v2718
      %v2857 = vpop.f32.mrf.mxu0
      %v2858 = vadd.f32 0.0, %v2857
      %v2859 = vpop.f32.mrf.mxu0
      %v2860 = vpop.f32.mrf.mxu0
      %v2861 = vadd.f32 0.0, %v2860
      %v2862 = vpop.f32.mrf.mxu0
      %2863 = vmatprep.mubr.bf16.mxu0 0
      %2864 = vmatmul.mubr.bf16.gmra.mxu0 %v2721
      %v2865 = vpop.f32.mrf.mxu0
      %v2866 = vadd.f32 0.0, %v2865
      %v2867 = vpop.f32.mrf.mxu0
      %v2868 = vpop.f32.mrf.mxu0
      %v2869 = vadd.f32 0.0, %v2868
      %v2870 = vpop.f32.mrf.mxu0
      %2871 = vmatprep.mubr.bf16.mxu0 0
      %2872 = vmatmul.mubr.bf16.gmra.mxu0 %v2724
      %v2873 = vpop.f32.mrf.mxu0
      %v2874 = vadd.f32 0.0, %v2873
      %v2875 = vpop.f32.mrf.mxu0
      %v2876 = vpop.f32.mrf.mxu0
      %v2877 = vadd.f32 0.0, %v2876
      %v2878 = vpop.f32.mrf.mxu0
      %2879 = vmatprep.mubr.bf16.mxu0 0
      %2880 = vmatmul.mubr.bf16.gmra.mxu0 %v2727
      %v2881 = vpop.f32.mrf.mxu0
      %v2882 = vadd.f32 0.0, %v2881
      %v2883 = vpop.f32.mrf.mxu0
      %v2884 = vpop.f32.mrf.mxu0
      %v2885 = vadd.f32 0.0, %v2884
      %v2886 = vpop.f32.mrf.mxu0
      %2887 = vmatprep.mubr.bf16.mxu0 0
      %2888 = vmatmul.mubr.bf16.gmra.mxu0 %v2730
      %v2889 = vpop.f32.mrf.mxu0
      %v2890 = vadd.f32 0.0, %v2889
      %v2891 = vpop.f32.mrf.mxu0
      %v2892 = vpop.f32.mrf.mxu0
      %v2893 = vadd.f32 0.0, %v2892
      %v2894 = vpop.f32.mrf.mxu0
      %2895 = vdwg.mxu0
      %v2896 = vadd.f32 %v2635, %v2770
      %v2897 = vadd.f32 %v2636, %v2773
      %v2898 = vadd.f32 %v2637, %v2778
      %v2899 = vadd.f32 %v2638, %v2781
      %v2900 = vadd.f32 %v2639, %v2786
      %v2901 = vadd.f32 %v2640, %v2789
      %v2902 = vadd.f32 %v2641, %v2794
      %v2903 = vadd.f32 %v2642, %v2797
      %v2904 = vadd.f32 %v2643, %v2802
      %v2905 = vadd.f32 %v2644, %v2805
      %v2906 = vadd.f32 %v2645, %v2810
      %v2907 = vadd.f32 %v2646, %v2813
      %v2908 = vadd.f32 %v2647, %v2818
      %v2909 = vadd.f32 %v2648, %v2821
      %v2910 = vadd.f32 %v2649, %v2826
      %v2911 = vadd.f32 %v2650, %v2829
      %v2912 = vadd.f32 %v2651, %v2834
      %v2913 = vadd.f32 %v2652, %v2837
      %v2914 = vadd.f32 %v2653, %v2842
      %v2915 = vadd.f32 %v2654, %v2845
      %v2916 = vadd.f32 %v2655, %v2850
      %v2917 = vadd.f32 %v2656, %v2853
      %v2918 = vadd.f32 %v2657, %v2858
      %v2919 = vadd.f32 %v2658, %v2861
      %v2920 = vadd.f32 %v2659, %v2866
      %v2921 = vadd.f32 %v2660, %v2869
      %v2922 = vadd.f32 %v2661, %v2874
      %v2923 = vadd.f32 %v2662, %v2877
      %v2924 = vadd.f32 %v2663, %v2882
      %v2925 = vadd.f32 %v2664, %v2885
      %v2926 = vadd.f32 %v2665, %v2890
      %v2927 = vadd.f32 %v2666, %v2893
      %v2928 = vld [vmem:[%s2] sm:$0x1]
      %v2930 = vlaneseq
      %v2931 = vshrl.u32 %v2930, 7
      %v2932 = vsub.s32 0, %v2931
      %v2933 = vrot.slane %v2928, %v2932
      %v2935 = vadd.f32 %v2896, %v2933
      %v2936 = vadd.f32 %v2897, %v2933
      %v2937 = vadd.f32 %v2898, %v2933
      %v2938 = vadd.f32 %v2899, %v2933
      %v2939 = vadd.f32 %v2900, %v2933
      %v2940 = vadd.f32 %v2901, %v2933
      %v2941 = vadd.f32 %v2902, %v2933
      %v2942 = vadd.f32 %v2903, %v2933
      %v2943 = vadd.f32 %v2904, %v2933
      %v2944 = vadd.f32 %v2905, %v2933
      %v2945 = vadd.f32 %v2906, %v2933
      %v2946 = vadd.f32 %v2907, %v2933
      %v2947 = vadd.f32 %v2908, %v2933
      %v2948 = vadd.f32 %v2909, %v2933
      %v2949 = vadd.f32 %v2910, %v2933
      %v2950 = vadd.f32 %v2911, %v2933
      %v2951 = vadd.f32 %v2912, %v2933
      %v2952 = vadd.f32 %v2913, %v2933
      %v2953 = vadd.f32 %v2914, %v2933
      %v2954 = vadd.f32 %v2915, %v2933
      %v2955 = vadd.f32 %v2916, %v2933
      %v2956 = vadd.f32 %v2917, %v2933
      %v2957 = vadd.f32 %v2918, %v2933
      %v2958 = vadd.f32 %v2919, %v2933
      %v2959 = vadd.f32 %v2920, %v2933
      %v2960 = vadd.f32 %v2921, %v2933
      %v2961 = vadd.f32 %v2922, %v2933
      %v2962 = vadd.f32 %v2923, %v2933
      %v2963 = vadd.f32 %v2924, %v2933
      %v2964 = vadd.f32 %v2925, %v2933
      %v2965 = vadd.f32 %v2926, %v2933
      %v2966 = vadd.f32 %v2927, %v2933
      %v2967 = vtanh.pop %v2935
      %v2968 = vtanh.pop %v2936
      %v2969 = vtanh.pop %v2937
      %v2970 = vtanh.pop %v2938
      %v2971 = vtanh.pop %v2939
      %v2972 = vtanh.pop %v2940
      %v2973 = vtanh.pop %v2941
      %v2974 = vtanh.pop %v2942
      %v2975 = vtanh.pop %v2943
      %v2976 = vtanh.pop %v2944
      %v2977 = vtanh.pop %v2945
      %v2978 = vtanh.pop %v2946
      %v2979 = vtanh.pop %v2947
      %v2980 = vtanh.pop %v2948
      %v2981 = vtanh.pop %v2949
      %v2982 = vtanh.pop %v2950
      %v2983 = vtanh.pop %v2951
      %v2984 = vtanh.pop %v2952
      %v2985 = vtanh.pop %v2953
      %v2986 = vtanh.pop %v2954
      %v2987 = vtanh.pop %v2955
      %v2988 = vtanh.pop %v2956
      %v2989 = vtanh.pop %v2957
      %v2990 = vtanh.pop %v2958
      %v2991 = vtanh.pop %v2959
      %v2992 = vtanh.pop %v2960
      %v2993 = vtanh.pop %v2961
      %v2994 = vtanh.pop %v2962
      %v2995 = vtanh.pop %v2963
      %v2996 = vtanh.pop %v2964
      %v2997 = vtanh.pop %v2965
      %v2998 = vtanh.pop %v2966
      %2999 = vst.msk [vmem:[#allocation3] sm:$0xff] %vm226, 0.0
      %3000 = vst.msk [vmem:[#allocation3 + $0x8] sm:$0xff] %vm226, 0.0
      %3001 = vst.msk [vmem:[#allocation3 + $0x10] sm:$0x3] %vm229, 0.0
      %s3002 = scalar_lea.vmem [#allocation3], 408
      %3003 = vst.msk [vmem:[%s3002] sm:$0xff] %vm226, 0.0
      %3004 = vst.msk [vmem:[%s3002 + $0x8] sm:$0xff] %vm226, 0.0
      %3005 = vst.msk [vmem:[%s3002 + $0x10] sm:$0x3] %vm229, 0.0
      %3006 = vst.msk [vmem:[#allocation3] sm:$0x1] %vm235, 0.0
      %3007 = vst.msk [vmem:[#allocation3 + $0x18] sm:$0x1] %vm235, 0.0
      %3008 = vst.msk [vmem:[#allocation3 + $0x30] sm:$0x1] %vm235, 0.0
      %3009 = vst.msk [vmem:[#allocation3 + $0x48] sm:$0x1] %vm235, 0.0
      %3010 = vst.msk [vmem:[#allocation3 + $0x60] sm:$0x1] %vm235, 0.0
      %3011 = vst.msk [vmem:[#allocation3 + $0x78] sm:$0x1] %vm235, 0.0
      %3012 = vst.msk [vmem:[#allocation3 + $0x90] sm:$0x1] %vm235, 0.0
      %3013 = vst.msk [vmem:[#allocation3 + $0xa8] sm:$0x1] %vm235, 0.0
      %3014 = vst.msk [vmem:[#allocation3 + $0xc0] sm:$0x1] %vm235, 0.0
      %3015 = vst.msk [vmem:[#allocation3 + $0xd8] sm:$0x1] %vm235, 0.0
      %3016 = vst.msk [vmem:[#allocation3 + $0xf0] sm:$0x1] %vm235, 0.0
      %3017 = vst.msk [vmem:[#allocation3 + $0x108] sm:$0x1] %vm235, 0.0
      %3018 = vst.msk [vmem:[#allocation3 + $0x120] sm:$0x1] %vm235, 0.0
      %3019 = vst.msk [vmem:[#allocation3 + $0x138] sm:$0x1] %vm235, 0.0
      %3020 = vst.msk [vmem:[#allocation3 + $0x150] sm:$0x1] %vm235, 0.0
      %3021 = vst.msk [vmem:[#allocation3 + $0x168] sm:$0x1] %vm235, 0.0
      %3022 = vst.msk [vmem:[#allocation3 + $0x180] sm:$0x1] %vm235, 0.0
      %3023 = vst.msk [vmem:[#allocation3 + $0x198] sm:$0x1] %vm235, 0.0
      %3024 = vst.msk [vmem:[#allocation3 + $0x11] sm:$0x1] %vm235, 0.0
      %3025 = vst.msk [vmem:[#allocation3 + $0x29] sm:$0x1] %vm235, 0.0
      %3026 = vst.msk [vmem:[#allocation3 + $0x41] sm:$0x1] %vm235, 0.0
      %3027 = vst.msk [vmem:[#allocation3 + $0x59] sm:$0x1] %vm235, 0.0
      %3028 = vst.msk [vmem:[#allocation3 + $0x71] sm:$0x1] %vm235, 0.0
      %3029 = vst.msk [vmem:[#allocation3 + $0x89] sm:$0x1] %vm235, 0.0
      %3030 = vst.msk [vmem:[#allocation3 + $0xa1] sm:$0x1] %vm235, 0.0
      %3031 = vst.msk [vmem:[#allocation3 + $0xb9] sm:$0x1] %vm235, 0.0
      %3032 = vst.msk [vmem:[#allocation3 + $0xd1] sm:$0x1] %vm235, 0.0
      %3033 = vst.msk [vmem:[#allocation3 + $0xe9] sm:$0x1] %vm235, 0.0
      %3034 = vst.msk [vmem:[#allocation3 + $0x101] sm:$0x1] %vm235, 0.0
      %3035 = vst.msk [vmem:[#allocation3 + $0x119] sm:$0x1] %vm235, 0.0
      %3036 = vst.msk [vmem:[#allocation3 + $0x131] sm:$0x1] %vm235, 0.0
      %3037 = vst.msk [vmem:[#allocation3 + $0x149] sm:$0x1] %vm235, 0.0
      %3038 = vst.msk [vmem:[#allocation3 + $0x161] sm:$0x1] %vm235, 0.0
      %3039 = vst.msk [vmem:[#allocation3 + $0x179] sm:$0x1] %vm235, 0.0
      %3040 = vst.msk [vmem:[#allocation3 + $0x191] sm:$0x1] %vm235, 0.0
      %3041 = vst.msk [vmem:[#allocation3 + $0x1a9] sm:$0x1] %vm235, 0.0
      %s3042 = scalar_lea.vmem [#allocation3], 24
      %3043 = vst.msk [vmem:[%s3042 + $0x1] sm:$0xff] %vm226, %v2967
      %3044 = vst.msk [vmem:[%s3042 + $0x9] sm:$0xff] %vm226, %v2968
      %3045 = vst.msk [vmem:[%s3042 + $0x19] sm:$0xff] %vm226, %v2969
      %3046 = vst.msk [vmem:[%s3042 + $0x21] sm:$0xff] %vm226, %v2970
      %3047 = vst.msk [vmem:[%s3042 + $0x31] sm:$0xff] %vm226, %v2971
      %3048 = vst.msk [vmem:[%s3042 + $0x39] sm:$0xff] %vm226, %v2972
      %3049 = vst.msk [vmem:[%s3042 + $0x49] sm:$0xff] %vm226, %v2973
      %3050 = vst.msk [vmem:[%s3042 + $0x51] sm:$0xff] %vm226, %v2974
      %3051 = vst.msk [vmem:[%s3042 + $0x61] sm:$0xff] %vm226, %v2975
      %3052 = vst.msk [vmem:[%s3042 + $0x69] sm:$0xff] %vm226, %v2976
      %3053 = vst.msk [vmem:[%s3042 + $0x79] sm:$0xff] %vm226, %v2977
      %3054 = vst.msk [vmem:[%s3042 + $0x81] sm:$0xff] %vm226, %v2978
      %3055 = vst.msk [vmem:[%s3042 + $0x91] sm:$0xff] %vm226, %v2979
      %3056 = vst.msk [vmem:[%s3042 + $0x99] sm:$0xff] %vm226, %v2980
      %3057 = vst.msk [vmem:[%s3042 + $0xa9] sm:$0xff] %vm226, %v2981
      %3058 = vst.msk [vmem:[%s3042 + $0xb1] sm:$0xff] %vm226, %v2982
      %3059 = vst.msk [vmem:[%s3042 + $0xc1] sm:$0xff] %vm226, %v2983
      %3060 = vst.msk [vmem:[%s3042 + $0xc9] sm:$0xff] %vm226, %v2984
      %3061 = vst.msk [vmem:[%s3042 + $0xd9] sm:$0xff] %vm226, %v2985
      %3062 = vst.msk [vmem:[%s3042 + $0xe1] sm:$0xff] %vm226, %v2986
      %3063 = vst.msk [vmem:[%s3042 + $0xf1] sm:$0xff] %vm226, %v2987
      %3064 = vst.msk [vmem:[%s3042 + $0xf9] sm:$0xff] %vm226, %v2988
      %3065 = vst.msk [vmem:[%s3042 + $0x109] sm:$0xff] %vm226, %v2989
      %3066 = vst.msk [vmem:[%s3042 + $0x111] sm:$0xff] %vm226, %v2990
      %3067 = vst.msk [vmem:[%s3042 + $0x121] sm:$0xff] %vm226, %v2991
      %3068 = vst.msk [vmem:[%s3042 + $0x129] sm:$0xff] %vm226, %v2992
      %3069 = vst.msk [vmem:[%s3042 + $0x139] sm:$0xff] %vm226, %v2993
      %3070 = vst.msk [vmem:[%s3042 + $0x141] sm:$0xff] %vm226, %v2994
      %3071 = vst.msk [vmem:[%s3042 + $0x151] sm:$0xff] %vm226, %v2995
      %3072 = vst.msk [vmem:[%s3042 + $0x159] sm:$0xff] %vm226, %v2996
      %3073 = vst.msk [vmem:[%s3042 + $0x169] sm:$0xff] %vm226, %v2997
      %3074 = vst.msk [vmem:[%s3042 + $0x171] sm:$0xff] %vm226, %v2998
      %v3075 = vld [vmem:[#allocation3] sm:$0xff]
      %v3076 = vld [vmem:[#allocation3 + $0x8] sm:$0xff]
      %v3077 = vld [vmem:[#allocation3 + $0x18] sm:$0xff]
      %v3078 = vld [vmem:[#allocation3 + $0x20] sm:$0xff]
      %v3079 = vld [vmem:[#allocation3 + $0x30] sm:$0xff]
      %v3080 = vld [vmem:[#allocation3 + $0x38] sm:$0xff]
      %v3081 = vld [vmem:[#allocation3 + $0x48] sm:$0xff]
      %v3082 = vld [vmem:[#allocation3 + $0x50] sm:$0xff]
      %v3083 = vld [vmem:[#allocation3 + $0x60] sm:$0xff]
      %v3084 = vld [vmem:[#allocation3 + $0x68] sm:$0xff]
      %v3085 = vld [vmem:[#allocation3 + $0x78] sm:$0xff]
      %v3086 = vld [vmem:[#allocation3 + $0x80] sm:$0xff]
      %v3087 = vld [vmem:[#allocation3 + $0x90] sm:$0xff]
      %v3088 = vld [vmem:[#allocation3 + $0x98] sm:$0xff]
      %v3089 = vld [vmem:[#allocation3 + $0xa8] sm:$0xff]
      %v3090 = vld [vmem:[#allocation3 + $0xb0] sm:$0xff]
      %v3091 = vld [vmem:[#allocation3 + $0xc0] sm:$0xff]
      %v3092 = vld [vmem:[#allocation3 + $0xc8] sm:$0xff]
      %v3093 = vld [vmem:[#allocation3 + $0xd8] sm:$0xff]
      %v3094 = vld [vmem:[#allocation3 + $0xe0] sm:$0xff]
      %v3095 = vld [vmem:[#allocation3 + $0xf0] sm:$0xff]
      %v3096 = vld [vmem:[#allocation3 + $0xf8] sm:$0xff]
      %v3097 = vld [vmem:[#allocation3 + $0x108] sm:$0xff]
      %v3098 = vld [vmem:[#allocation3 + $0x110] sm:$0xff]
      %v3099 = vld [vmem:[#allocation3 + $0x120] sm:$0xff]
      %v3100 = vld [vmem:[#allocation3 + $0x128] sm:$0xff]
      %v3101 = vld [vmem:[#allocation3 + $0x138] sm:$0xff]
      %v3102 = vld [vmem:[#allocation3 + $0x140] sm:$0xff]
      %v3103 = vld [vmem:[#allocation3 + $0x150] sm:$0xff]
      %v3104 = vld [vmem:[#allocation3 + $0x158] sm:$0xff]
      %v3105 = vld [vmem:[#allocation3 + $0x168] sm:$0xff]
      %v3106 = vld [vmem:[#allocation3 + $0x170] sm:$0xff]
      %v3107 = vld [vmem:[#allocation3 + $0x1] sm:$0xff]
      %v3108 = vld [vmem:[#allocation3 + $0x9] sm:$0xff]
      %v3109 = vld [vmem:[#allocation3 + $0x19] sm:$0xff]
      %v3110 = vld [vmem:[#allocation3 + $0x21] sm:$0xff]
      %v3111 = vld [vmem:[#allocation3 + $0x31] sm:$0xff]
      %v3112 = vld [vmem:[#allocation3 + $0x39] sm:$0xff]
      %v3113 = vld [vmem:[#allocation3 + $0x49] sm:$0xff]
      %v3114 = vld [vmem:[#allocation3 + $0x51] sm:$0xff]
      %v3115 = vld [vmem:[#allocation3 + $0x61] sm:$0xff]
      %v3116 = vld [vmem:[#allocation3 + $0x69] sm:$0xff]
      %v3117 = vld [vmem:[#allocation3 + $0x79] sm:$0xff]
      %v3118 = vld [vmem:[#allocation3 + $0x81] sm:$0xff]
      %v3119 = vld [vmem:[#allocation3 + $0x91] sm:$0xff]
      %v3120 = vld [vmem:[#allocation3 + $0x99] sm:$0xff]
      %v3121 = vld [vmem:[#allocation3 + $0xa9] sm:$0xff]
      %v3122 = vld [vmem:[#allocation3 + $0xb1] sm:$0xff]
      %v3123 = vld [vmem:[#allocation3 + $0xc1] sm:$0xff]
      %v3124 = vld [vmem:[#allocation3 + $0xc9] sm:$0xff]
      %v3125 = vld [vmem:[#allocation3 + $0xd9] sm:$0xff]
      %v3126 = vld [vmem:[#allocation3 + $0xe1] sm:$0xff]
      %v3127 = vld [vmem:[#allocation3 + $0xf1] sm:$0xff]
      %v3128 = vld [vmem:[#allocation3 + $0xf9] sm:$0xff]
      %v3129 = vld [vmem:[#allocation3 + $0x109] sm:$0xff]
      %v3130 = vld [vmem:[#allocation3 + $0x111] sm:$0xff]
      %v3131 = vld [vmem:[#allocation3 + $0x121] sm:$0xff]
      %v3132 = vld [vmem:[#allocation3 + $0x129] sm:$0xff]
      %v3133 = vld [vmem:[#allocation3 + $0x139] sm:$0xff]
      %v3134 = vld [vmem:[#allocation3 + $0x141] sm:$0xff]
      %v3135 = vld [vmem:[#allocation3 + $0x151] sm:$0xff]
      %v3136 = vld [vmem:[#allocation3 + $0x159] sm:$0xff]
      %v3137 = vld [vmem:[#allocation3 + $0x169] sm:$0xff]
      %v3138 = vld [vmem:[#allocation3 + $0x171] sm:$0xff]
      %v3139 = vld [vmem:[#allocation3 + $0x2] sm:$0xff]
      %v3140 = vld [vmem:[#allocation3 + $0xa] sm:$0xff]
      %v3141 = vld [vmem:[#allocation3 + $0x1a] sm:$0xff]
      %v3142 = vld [vmem:[#allocation3 + $0x22] sm:$0xff]
      %v3143 = vld [vmem:[#allocation3 + $0x32] sm:$0xff]
      %v3144 = vld [vmem:[#allocation3 + $0x3a] sm:$0xff]
      %v3145 = vld [vmem:[#allocation3 + $0x4a] sm:$0xff]
      %v3146 = vld [vmem:[#allocation3 + $0x52] sm:$0xff]
      %v3147 = vld [vmem:[#allocation3 + $0x62] sm:$0xff]
      %v3148 = vld [vmem:[#allocation3 + $0x6a] sm:$0xff]
      %v3149 = vld [vmem:[#allocation3 + $0x7a] sm:$0xff]
      %v3150 = vld [vmem:[#allocation3 + $0x82] sm:$0xff]
      %v3151 = vld [vmem:[#allocation3 + $0x92] sm:$0xff]
      %v3152 = vld [vmem:[#allocation3 + $0x9a] sm:$0xff]
      %v3153 = vld [vmem:[#allocation3 + $0xaa] sm:$0xff]
      %v3154 = vld [vmem:[#allocation3 + $0xb2] sm:$0xff]
      %v3155 = vld [vmem:[#allocation3 + $0xc2] sm:$0xff]
      %v3156 = vld [vmem:[#allocation3 + $0xca] sm:$0xff]
      %v3157 = vld [vmem:[#allocation3 + $0xda] sm:$0xff]
      %v3158 = vld [vmem:[#allocation3 + $0xe2] sm:$0xff]
      %v3159 = vld [vmem:[#allocation3 + $0xf2] sm:$0xff]
      %v3160 = vld [vmem:[#allocation3 + $0xfa] sm:$0xff]
      %v3161 = vld [vmem:[#allocation3 + $0x10a] sm:$0xff]
      %v3162 = vld [vmem:[#allocation3 + $0x112] sm:$0xff]
      %v3163 = vld [vmem:[#allocation3 + $0x122] sm:$0xff]
      %v3164 = vld [vmem:[#allocation3 + $0x12a] sm:$0xff]
      %v3165 = vld [vmem:[#allocation3 + $0x13a] sm:$0xff]
      %v3166 = vld [vmem:[#allocation3 + $0x142] sm:$0xff]
      %v3167 = vld [vmem:[#allocation3 + $0x152] sm:$0xff]
      %v3168 = vld [vmem:[#allocation3 + $0x15a] sm:$0xff]
      %v3169 = vld [vmem:[#allocation3 + $0x16a] sm:$0xff]
      %v3170 = vld [vmem:[#allocation3 + $0x172] sm:$0xff]
      %v3171 = vld [vmem:[%s3042] sm:$0xff]
      %v3172 = vld [vmem:[%s3042 + $0x8] sm:$0xff]
      %v3173 = vld [vmem:[%s3042 + $0x18] sm:$0xff]
      %v3174 = vld [vmem:[%s3042 + $0x20] sm:$0xff]
      %v3175 = vld [vmem:[%s3042 + $0x30] sm:$0xff]
      %v3176 = vld [vmem:[%s3042 + $0x38] sm:$0xff]
      %v3177 = vld [vmem:[%s3042 + $0x48] sm:$0xff]
      %v3178 = vld [vmem:[%s3042 + $0x50] sm:$0xff]
      %v3179 = vld [vmem:[%s3042 + $0x60] sm:$0xff]
      %v3180 = vld [vmem:[%s3042 + $0x68] sm:$0xff]
      %v3181 = vld [vmem:[%s3042 + $0x78] sm:$0xff]
      %v3182 = vld [vmem:[%s3042 + $0x80] sm:$0xff]
      %v3183 = vld [vmem:[%s3042 + $0x90] sm:$0xff]
      %v3184 = vld [vmem:[%s3042 + $0x98] sm:$0xff]
      %v3185 = vld [vmem:[%s3042 + $0xa8] sm:$0xff]
      %v3186 = vld [vmem:[%s3042 + $0xb0] sm:$0xff]
      %v3187 = vld [vmem:[%s3042 + $0xc0] sm:$0xff]
      %v3188 = vld [vmem:[%s3042 + $0xc8] sm:$0xff]
      %v3189 = vld [vmem:[%s3042 + $0xd8] sm:$0xff]
      %v3190 = vld [vmem:[%s3042 + $0xe0] sm:$0xff]
      %v3191 = vld [vmem:[%s3042 + $0xf0] sm:$0xff]
      %v3192 = vld [vmem:[%s3042 + $0xf8] sm:$0xff]
      %v3193 = vld [vmem:[%s3042 + $0x108] sm:$0xff]
      %v3194 = vld [vmem:[%s3042 + $0x110] sm:$0xff]
      %v3195 = vld [vmem:[%s3042 + $0x120] sm:$0xff]
      %v3196 = vld [vmem:[%s3042 + $0x128] sm:$0xff]
      %v3197 = vld [vmem:[%s3042 + $0x138] sm:$0xff]
      %v3198 = vld [vmem:[%s3042 + $0x140] sm:$0xff]
      %v3199 = vld [vmem:[%s3042 + $0x150] sm:$0xff]
      %v3200 = vld [vmem:[%s3042 + $0x158] sm:$0xff]
      %v3201 = vld [vmem:[%s3042 + $0x168] sm:$0xff]
      %v3202 = vld [vmem:[%s3042 + $0x170] sm:$0xff]
      %v3203 = vld [vmem:[%s3042 + $0x1] sm:$0xff]
      %v3204 = vld [vmem:[%s3042 + $0x9] sm:$0xff]
      %v3205 = vld [vmem:[%s3042 + $0x19] sm:$0xff]
      %v3206 = vld [vmem:[%s3042 + $0x21] sm:$0xff]
      %v3207 = vld [vmem:[%s3042 + $0x31] sm:$0xff]
      %v3208 = vld [vmem:[%s3042 + $0x39] sm:$0xff]
      %v3209 = vld [vmem:[%s3042 + $0x49] sm:$0xff]
      %v3210 = vld [vmem:[%s3042 + $0x51] sm:$0xff]
      %v3211 = vld [vmem:[%s3042 + $0x61] sm:$0xff]
      %v3212 = vld [vmem:[%s3042 + $0x69] sm:$0xff]
      %v3213 = vld [vmem:[%s3042 + $0x79] sm:$0xff]
      %v3214 = vld [vmem:[%s3042 + $0x81] sm:$0xff]
      %v3215 = vld [vmem:[%s3042 + $0x91] sm:$0xff]
      %v3216 = vld [vmem:[%s3042 + $0x99] sm:$0xff]
      %v3217 = vld [vmem:[%s3042 + $0xa9] sm:$0xff]
      %v3218 = vld [vmem:[%s3042 + $0xb1] sm:$0xff]
      %v3219 = vld [vmem:[%s3042 + $0xc1] sm:$0xff]
      %v3220 = vld [vmem:[%s3042 + $0xc9] sm:$0xff]
      %v3221 = vld [vmem:[%s3042 + $0xd9] sm:$0xff]
      %v3222 = vld [vmem:[%s3042 + $0xe1] sm:$0xff]
      %v3223 = vld [vmem:[%s3042 + $0xf1] sm:$0xff]
      %v3224 = vld [vmem:[%s3042 + $0xf9] sm:$0xff]
      %v3225 = vld [vmem:[%s3042 + $0x109] sm:$0xff]
      %v3226 = vld [vmem:[%s3042 + $0x111] sm:$0xff]
      %v3227 = vld [vmem:[%s3042 + $0x121] sm:$0xff]
      %v3228 = vld [vmem:[%s3042 + $0x129] sm:$0xff]
      %v3229 = vld [vmem:[%s3042 + $0x139] sm:$0xff]
      %v3230 = vld [vmem:[%s3042 + $0x141] sm:$0xff]
      %v3231 = vld [vmem:[%s3042 + $0x151] sm:$0xff]
      %v3232 = vld [vmem:[%s3042 + $0x159] sm:$0xff]
      %v3233 = vld [vmem:[%s3042 + $0x169] sm:$0xff]
      %v3234 = vld [vmem:[%s3042 + $0x171] sm:$0xff]
      %v3235 = vld [vmem:[%s3042 + $0x2] sm:$0xff]
      %v3236 = vld [vmem:[%s3042 + $0xa] sm:$0xff]
      %v3237 = vld [vmem:[%s3042 + $0x1a] sm:$0xff]
      %v3238 = vld [vmem:[%s3042 + $0x22] sm:$0xff]
      %v3239 = vld [vmem:[%s3042 + $0x32] sm:$0xff]
      %v3240 = vld [vmem:[%s3042 + $0x3a] sm:$0xff]
      %v3241 = vld [vmem:[%s3042 + $0x4a] sm:$0xff]
      %v3242 = vld [vmem:[%s3042 + $0x52] sm:$0xff]
      %v3243 = vld [vmem:[%s3042 + $0x62] sm:$0xff]
      %v3244 = vld [vmem:[%s3042 + $0x6a] sm:$0xff]
      %v3245 = vld [vmem:[%s3042 + $0x7a] sm:$0xff]
      %v3246 = vld [vmem:[%s3042 + $0x82] sm:$0xff]
      %v3247 = vld [vmem:[%s3042 + $0x92] sm:$0xff]
      %v3248 = vld [vmem:[%s3042 + $0x9a] sm:$0xff]
      %v3249 = vld [vmem:[%s3042 + $0xaa] sm:$0xff]
      %v3250 = vld [vmem:[%s3042 + $0xb2] sm:$0xff]
      %v3251 = vld [vmem:[%s3042 + $0xc2] sm:$0xff]
      %v3252 = vld [vmem:[%s3042 + $0xca] sm:$0xff]
      %v3253 = vld [vmem:[%s3042 + $0xda] sm:$0xff]
      %v3254 = vld [vmem:[%s3042 + $0xe2] sm:$0xff]
      %v3255 = vld [vmem:[%s3042 + $0xf2] sm:$0xff]
      %v3256 = vld [vmem:[%s3042 + $0xfa] sm:$0xff]
      %v3257 = vld [vmem:[%s3042 + $0x10a] sm:$0xff]
      %v3258 = vld [vmem:[%s3042 + $0x112] sm:$0xff]
      %v3259 = vld [vmem:[%s3042 + $0x122] sm:$0xff]
      %v3260 = vld [vmem:[%s3042 + $0x12a] sm:$0xff]
      %v3261 = vld [vmem:[%s3042 + $0x13a] sm:$0xff]
      %v3262 = vld [vmem:[%s3042 + $0x142] sm:$0xff]
      %v3263 = vld [vmem:[%s3042 + $0x152] sm:$0xff]
      %v3264 = vld [vmem:[%s3042 + $0x15a] sm:$0xff]
      %v3265 = vld [vmem:[%s3042 + $0x16a] sm:$0xff]
      %v3266 = vld [vmem:[%s3042 + $0x172] sm:$0xff]
      %s3267 = scalar_lea.vmem [#allocation3], 48
      %v3268 = vld [vmem:[%s3267] sm:$0xff]
      %v3269 = vld [vmem:[%s3267 + $0x8] sm:$0xff]
      %v3270 = vld [vmem:[%s3267 + $0x18] sm:$0xff]
      %v3271 = vld [vmem:[%s3267 + $0x20] sm:$0xff]
      %v3272 = vld [vmem:[%s3267 + $0x30] sm:$0xff]
      %v3273 = vld [vmem:[%s3267 + $0x38] sm:$0xff]
      %v3274 = vld [vmem:[%s3267 + $0x48] sm:$0xff]
      %v3275 = vld [vmem:[%s3267 + $0x50] sm:$0xff]
      %v3276 = vld [vmem:[%s3267 + $0x60] sm:$0xff]
      %v3277 = vld [vmem:[%s3267 + $0x68] sm:$0xff]
      %v3278 = vld [vmem:[%s3267 + $0x78] sm:$0xff]
      %v3279 = vld [vmem:[%s3267 + $0x80] sm:$0xff]
      %v3280 = vld [vmem:[%s3267 + $0x90] sm:$0xff]
      %v3281 = vld [vmem:[%s3267 + $0x98] sm:$0xff]
      %v3282 = vld [vmem:[%s3267 + $0xa8] sm:$0xff]
      %v3283 = vld [vmem:[%s3267 + $0xb0] sm:$0xff]
      %v3284 = vld [vmem:[%s3267 + $0xc0] sm:$0xff]
      %v3285 = vld [vmem:[%s3267 + $0xc8] sm:$0xff]
      %v3286 = vld [vmem:[%s3267 + $0xd8] sm:$0xff]
      %v3287 = vld [vmem:[%s3267 + $0xe0] sm:$0xff]
      %v3288 = vld [vmem:[%s3267 + $0xf0] sm:$0xff]
      %v3289 = vld [vmem:[%s3267 + $0xf8] sm:$0xff]
      %v3290 = vld [vmem:[%s3267 + $0x108] sm:$0xff]
      %v3291 = vld [vmem:[%s3267 + $0x110] sm:$0xff]
      %v3292 = vld [vmem:[%s3267 + $0x120] sm:$0xff]
      %v3293 = vld [vmem:[%s3267 + $0x128] sm:$0xff]
      %v3294 = vld [vmem:[%s3267 + $0x138] sm:$0xff]
      %v3295 = vld [vmem:[%s3267 + $0x140] sm:$0xff]
      %v3296 = vld [vmem:[%s3267 + $0x150] sm:$0xff]
      %v3297 = vld [vmem:[%s3267 + $0x158] sm:$0xff]
      %v3298 = vld [vmem:[%s3267 + $0x168] sm:$0xff]
      %v3299 = vld [vmem:[%s3267 + $0x170] sm:$0xff]
      %v3300 = vld [vmem:[%s3267 + $0x1] sm:$0xff]
      %v3301 = vld [vmem:[%s3267 + $0x9] sm:$0xff]
      %v3302 = vld [vmem:[%s3267 + $0x19] sm:$0xff]
      %v3303 = vld [vmem:[%s3267 + $0x21] sm:$0xff]
      %v3304 = vld [vmem:[%s3267 + $0x31] sm:$0xff]
      %v3305 = vld [vmem:[%s3267 + $0x39] sm:$0xff]
      %v3306 = vld [vmem:[%s3267 + $0x49] sm:$0xff]
      %v3307 = vld [vmem:[%s3267 + $0x51] sm:$0xff]
      %v3308 = vld [vmem:[%s3267 + $0x61] sm:$0xff]
      %v3309 = vld [vmem:[%s3267 + $0x69] sm:$0xff]
      %v3310 = vld [vmem:[%s3267 + $0x79] sm:$0xff]
      %v3311 = vld [vmem:[%s3267 + $0x81] sm:$0xff]
      %v3312 = vld [vmem:[%s3267 + $0x91] sm:$0xff]
      %v3313 = vld [vmem:[%s3267 + $0x99] sm:$0xff]
      %v3314 = vld [vmem:[%s3267 + $0xa9] sm:$0xff]
      %v3315 = vld [vmem:[%s3267 + $0xb1] sm:$0xff]
      %v3316 = vld [vmem:[%s3267 + $0xc1] sm:$0xff]
      %v3317 = vld [vmem:[%s3267 + $0xc9] sm:$0xff]
      %v3318 = vld [vmem:[%s3267 + $0xd9] sm:$0xff]
      %v3319 = vld [vmem:[%s3267 + $0xe1] sm:$0xff]
      %v3320 = vld [vmem:[%s3267 + $0xf1] sm:$0xff]
      %v3321 = vld [vmem:[%s3267 + $0xf9] sm:$0xff]
      %v3322 = vld [vmem:[%s3267 + $0x109] sm:$0xff]
      %v3323 = vld [vmem:[%s3267 + $0x111] sm:$0xff]
      %v3324 = vld [vmem:[%s3267 + $0x121] sm:$0xff]
      %v3325 = vld [vmem:[%s3267 + $0x129] sm:$0xff]
      %v3326 = vld [vmem:[%s3267 + $0x139] sm:$0xff]
      %v3327 = vld [vmem:[%s3267 + $0x141] sm:$0xff]
      %v3328 = vld [vmem:[%s3267 + $0x151] sm:$0xff]
      %v3329 = vld [vmem:[%s3267 + $0x159] sm:$0xff]
      %v3330 = vld [vmem:[%s3267 + $0x169] sm:$0xff]
      %v3331 = vld [vmem:[%s3267 + $0x171] sm:$0xff]
      %v3332 = vld [vmem:[%s3267 + $0x2] sm:$0xff]
      %v3333 = vld [vmem:[%s3267 + $0xa] sm:$0xff]
      %v3334 = vld [vmem:[%s3267 + $0x1a] sm:$0xff]
      %v3335 = vld [vmem:[%s3267 + $0x22] sm:$0xff]
      %v3336 = vld [vmem:[%s3267 + $0x32] sm:$0xff]
      %v3337 = vld [vmem:[%s3267 + $0x3a] sm:$0xff]
      %v3338 = vld [vmem:[%s3267 + $0x4a] sm:$0xff]
      %v3339 = vld [vmem:[%s3267 + $0x52] sm:$0xff]
      %v3340 = vld [vmem:[%s3267 + $0x62] sm:$0xff]
      %v3341 = vld [vmem:[%s3267 + $0x6a] sm:$0xff]
      %v3342 = vld [vmem:[%s3267 + $0x7a] sm:$0xff]
      %v3343 = vld [vmem:[%s3267 + $0x82] sm:$0xff]
      %v3344 = vld [vmem:[%s3267 + $0x92] sm:$0xff]
      %v3345 = vld [vmem:[%s3267 + $0x9a] sm:$0xff]
      %v3346 = vld [vmem:[%s3267 + $0xaa] sm:$0xff]
      %v3347 = vld [vmem:[%s3267 + $0xb2] sm:$0xff]
      %v3348 = vld [vmem:[%s3267 + $0xc2] sm:$0xff]
      %v3349 = vld [vmem:[%s3267 + $0xca] sm:$0xff]
      %v3350 = vld [vmem:[%s3267 + $0xda] sm:$0xff]
      %v3351 = vld [vmem:[%s3267 + $0xe2] sm:$0xff]
      %v3352 = vld [vmem:[%s3267 + $0xf2] sm:$0xff]
      %v3353 = vld [vmem:[%s3267 + $0xfa] sm:$0xff]
      %v3354 = vld [vmem:[%s3267 + $0x10a] sm:$0xff]
      %v3355 = vld [vmem:[%s3267 + $0x112] sm:$0xff]
      %v3356 = vld [vmem:[%s3267 + $0x122] sm:$0xff]
      %v3357 = vld [vmem:[%s3267 + $0x12a] sm:$0xff]
      %v3358 = vld [vmem:[%s3267 + $0x13a] sm:$0xff]
      %v3359 = vld [vmem:[%s3267 + $0x142] sm:$0xff]
      %v3360 = vld [vmem:[%s3267 + $0x152] sm:$0xff]
      %v3361 = vld [vmem:[%s3267 + $0x15a] sm:$0xff]
      %v3362 = vld [vmem:[%s3267 + $0x16a] sm:$0xff]
      %v3363 = vld [vmem:[%s3267 + $0x172] sm:$0xff]
      %v3364 = vpack.c.bf16 %v3076, %v3075
      %v3365 = vpack.c.bf16 %v3078, %v3077
      %v3366 = vpack.c.bf16 %v3080, %v3079
      %v3367 = vpack.c.bf16 %v3082, %v3081
      %v3368 = vpack.c.bf16 %v3084, %v3083
      %v3369 = vpack.c.bf16 %v3086, %v3085
      %v3370 = vpack.c.bf16 %v3088, %v3087
      %v3371 = vpack.c.bf16 %v3090, %v3089
      %v3372 = vpack.c.bf16 %v3092, %v3091
      %v3373 = vpack.c.bf16 %v3094, %v3093
      %v3374 = vpack.c.bf16 %v3096, %v3095
      %v3375 = vpack.c.bf16 %v3098, %v3097
      %v3376 = vpack.c.bf16 %v3100, %v3099
      %v3377 = vpack.c.bf16 %v3102, %v3101
      %v3378 = vpack.c.bf16 %v3104, %v3103
      %v3379 = vpack.c.bf16 %v3106, %v3105
      %v3380 = vld [vmem:[%s3] sm:$0x3]
      %v3381 = vpack.c.bf16 %v3108, %v3107
      %v3382 = vpack.c.bf16 %v3110, %v3109
      %v3383 = vpack.c.bf16 %v3112, %v3111
      %v3384 = vpack.c.bf16 %v3114, %v3113
      %v3385 = vpack.c.bf16 %v3116, %v3115
      %v3386 = vpack.c.bf16 %v3118, %v3117
      %v3387 = vpack.c.bf16 %v3120, %v3119
      %v3388 = vpack.c.bf16 %v3122, %v3121
      %v3389 = vpack.c.bf16 %v3124, %v3123
      %v3390 = vpack.c.bf16 %v3126, %v3125
      %v3391 = vpack.c.bf16 %v3128, %v3127
      %v3392 = vpack.c.bf16 %v3130, %v3129
      %v3393 = vpack.c.bf16 %v3132, %v3131
      %v3394 = vpack.c.bf16 %v3134, %v3133
      %v3395 = vpack.c.bf16 %v3136, %v3135
      %v3396 = vpack.c.bf16 %v3138, %v3137
      %v3397 = vld [vmem:[%s3] sm:$0xc]
      %v3399 = vunpack.c.l.b16 %v3397
      %v3400 = vpack.c.b16 %v3399, %v3399
      %v3401 = vrot.slane %v3400, 2
      %v3403 = vsel %vm226, %v3381, 0
      %v3406 = vsel %vm226, %v3382, 0
      %v3409 = vsel %vm226, %v3383, 0
      %v3412 = vsel %vm226, %v3384, 0
      %v3415 = vsel %vm226, %v3385, 0
      %v3418 = vsel %vm226, %v3386, 0
      %v3421 = vsel %vm226, %v3387, 0
      %v3424 = vsel %vm226, %v3388, 0
      %v3427 = vsel %vm226, %v3389, 0
      %v3430 = vsel %vm226, %v3390, 0
      %v3433 = vsel %vm226, %v3391, 0
      %v3436 = vsel %vm226, %v3392, 0
      %v3439 = vsel %vm226, %v3393, 0
      %v3442 = vsel %vm226, %v3394, 0
      %v3445 = vsel %vm226, %v3395, 0
      %v3448 = vsel %vm226, %v3396, 0
      %v3451 = vsel %vm712, %v3401, 0
      %3453 = vmatprep.subr.bf16.mxu0 0
      %3454 = vmatpush1.bf16.msra.mxu0 0
      %3455 = vmatprep.subr.bf16.mxu0 0
      %3456 = vmatpush1.bf16.msra.mxu0 0
      %3457 = vmatprep.subr.bf16.mxu0 0
      %3458 = vmatpush1.bf16.msra.mxu0 0
      %3459 = vmatprep.subr.bf16.mxu0 0
      %3460 = vmatpush1.bf16.msra.mxu0 0
      %3461 = vmatprep.subr.bf16.mxu0 0
      %3462 = vmatpush1.bf16.msra.mxu0 0
      %3463 = vmatprep.subr.bf16.mxu0 0
      %3464 = vmatpush1.bf16.msra.mxu0 0
      %3465 = vmatprep.subr.bf16.mxu0 0
      %3466 = vmatpush1.bf16.msra.mxu0 0
      %3467 = vmatprep.subr.bf16.mxu0 0
      %3468 = vmatpush1.bf16.msra.mxu0 %v3451
      %3469 = vmatprep.subr.bf16.mxu0 0
      %3470 = vmatpush2.bf16.msra.mxu0 0
      %3471 = vmatprep.subr.bf16.mxu0 0
      %3472 = vmatpush2.bf16.msra.mxu0 0
      %3473 = vmatprep.subr.bf16.mxu0 0
      %3474 = vmatpush2.bf16.msra.mxu0 0
      %3475 = vmatprep.subr.bf16.mxu0 0
      %3476 = vmatpush2.bf16.msra.mxu0 0
      %3477 = vmatprep.subr.bf16.mxu0 0
      %3478 = vmatpush2.bf16.msra.mxu0 0
      %3479 = vmatprep.subr.bf16.mxu0 0
      %3480 = vmatpush2.bf16.msra.mxu0 0
      %3481 = vmatprep.subr.bf16.mxu0 0
      %3482 = vmatpush2.bf16.msra.mxu0 0
      %3483 = vmatprep.subr.bf16.mxu0 0
      %3484 = vmatpush2.bf16.msra.mxu0 0
      %3485 = vmatprep.mubr.bf16.mxu0 0
      %3486 = vmatmul.mubr.bf16.gmra.mxu0 %v3403
      %v3487 = vpop.f32.mrf.mxu0
      %v3488 = vadd.f32 0.0, %v3487
      %v3489 = vpop.f32.mrf.mxu0
      %v3490 = vpop.f32.mrf.mxu0
      %v3491 = vadd.f32 0.0, %v3490
      %v3492 = vpop.f32.mrf.mxu0
      %3493 = vmatprep.mubr.bf16.mxu0 0
      %3494 = vmatmul.mubr.bf16.gmra.mxu0 %v3406
      %v3495 = vpop.f32.mrf.mxu0
      %v3496 = vadd.f32 0.0, %v3495
      %v3497 = vpop.f32.mrf.mxu0
      %v3498 = vpop.f32.mrf.mxu0
      %v3499 = vadd.f32 0.0, %v3498
      %v3500 = vpop.f32.mrf.mxu0
      %3501 = vmatprep.mubr.bf16.mxu0 0
      %3502 = vmatmul.mubr.bf16.gmra.mxu0 %v3409
      %v3503 = vpop.f32.mrf.mxu0
      %v3504 = vadd.f32 0.0, %v3503
      %v3505 = vpop.f32.mrf.mxu0
      %v3506 = vpop.f32.mrf.mxu0
      %v3507 = vadd.f32 0.0, %v3506
      %v3508 = vpop.f32.mrf.mxu0
      %3509 = vmatprep.mubr.bf16.mxu0 0
      %3510 = vmatmul.mubr.bf16.gmra.mxu0 %v3412
      %v3511 = vpop.f32.mrf.mxu0
      %v3512 = vadd.f32 0.0, %v3511
      %v3513 = vpop.f32.mrf.mxu0
      %v3514 = vpop.f32.mrf.mxu0
      %v3515 = vadd.f32 0.0, %v3514
      %v3516 = vpop.f32.mrf.mxu0
      %3517 = vmatprep.mubr.bf16.mxu0 0
      %3518 = vmatmul.mubr.bf16.gmra.mxu0 %v3415
      %v3519 = vpop.f32.mrf.mxu0
      %v3520 = vadd.f32 0.0, %v3519
      %v3521 = vpop.f32.mrf.mxu0
      %v3522 = vpop.f32.mrf.mxu0
      %v3523 = vadd.f32 0.0, %v3522
      %v3524 = vpop.f32.mrf.mxu0
      %3525 = vmatprep.mubr.bf16.mxu0 0
      %3526 = vmatmul.mubr.bf16.gmra.mxu0 %v3418
      %v3527 = vpop.f32.mrf.mxu0
      %v3528 = vadd.f32 0.0, %v3527
      %v3529 = vpop.f32.mrf.mxu0
      %v3530 = vpop.f32.mrf.mxu0
      %v3531 = vadd.f32 0.0, %v3530
      %v3532 = vpop.f32.mrf.mxu0
      %3533 = vmatprep.mubr.bf16.mxu0 0
      %3534 = vmatmul.mubr.bf16.gmra.mxu0 %v3421
      %v3535 = vpop.f32.mrf.mxu0
      %v3536 = vadd.f32 0.0, %v3535
      %v3537 = vpop.f32.mrf.mxu0
      %v3538 = vpop.f32.mrf.mxu0
      %v3539 = vadd.f32 0.0, %v3538
      %v3540 = vpop.f32.mrf.mxu0
      %3541 = vmatprep.mubr.bf16.mxu0 0
      %3542 = vmatmul.mubr.bf16.gmra.mxu0 %v3424
      %v3543 = vpop.f32.mrf.mxu0
      %v3544 = vadd.f32 0.0, %v3543
      %v3545 = vpop.f32.mrf.mxu0
      %v3546 = vpop.f32.mrf.mxu0
      %v3547 = vadd.f32 0.0, %v3546
      %v3548 = vpop.f32.mrf.mxu0
      %3549 = vmatprep.mubr.bf16.mxu0 0
      %3550 = vmatmul.mubr.bf16.gmra.mxu0 %v3427
      %v3551 = vpop.f32.mrf.mxu0
      %v3552 = vadd.f32 0.0, %v3551
      %v3553 = vpop.f32.mrf.mxu0
      %v3554 = vpop.f32.mrf.mxu0
      %v3555 = vadd.f32 0.0, %v3554
      %v3556 = vpop.f32.mrf.mxu0
      %3557 = vmatprep.mubr.bf16.mxu0 0
      %3558 = vmatmul.mubr.bf16.gmra.mxu0 %v3430
      %v3559 = vpop.f32.mrf.mxu0
      %v3560 = vadd.f32 0.0, %v3559
      %v3561 = vpop.f32.mrf.mxu0
      %v3562 = vpop.f32.mrf.mxu0
      %v3563 = vadd.f32 0.0, %v3562
      %v3564 = vpop.f32.mrf.mxu0
      %3565 = vmatprep.mubr.bf16.mxu0 0
      %3566 = vmatmul.mubr.bf16.gmra.mxu0 %v3433
      %v3567 = vpop.f32.mrf.mxu0
      %v3568 = vadd.f32 0.0, %v3567
      %v3569 = vpop.f32.mrf.mxu0
      %v3570 = vpop.f32.mrf.mxu0
      %v3571 = vadd.f32 0.0, %v3570
      %v3572 = vpop.f32.mrf.mxu0
      %3573 = vmatprep.mubr.bf16.mxu0 0
      %3574 = vmatmul.mubr.bf16.gmra.mxu0 %v3436
      %v3575 = vpop.f32.mrf.mxu0
      %v3576 = vadd.f32 0.0, %v3575
      %v3577 = vpop.f32.mrf.mxu0
      %v3578 = vpop.f32.mrf.mxu0
      %v3579 = vadd.f32 0.0, %v3578
      %v3580 = vpop.f32.mrf.mxu0
      %3581 = vmatprep.mubr.bf16.mxu0 0
      %3582 = vmatmul.mubr.bf16.gmra.mxu0 %v3439
      %v3583 = vpop.f32.mrf.mxu0
      %v3584 = vadd.f32 0.0, %v3583
      %v3585 = vpop.f32.mrf.mxu0
      %v3586 = vpop.f32.mrf.mxu0
      %v3587 = vadd.f32 0.0, %v3586
      %v3588 = vpop.f32.mrf.mxu0
      %3589 = vmatprep.mubr.bf16.mxu0 0
      %3590 = vmatmul.mubr.bf16.gmra.mxu0 %v3442
      %v3591 = vpop.f32.mrf.mxu0
      %v3592 = vadd.f32 0.0, %v3591
      %v3593 = vpop.f32.mrf.mxu0
      %v3594 = vpop.f32.mrf.mxu0
      %v3595 = vadd.f32 0.0, %v3594
      %v3596 = vpop.f32.mrf.mxu0
      %3597 = vmatprep.mubr.bf16.mxu0 0
      %3598 = vmatmul.mubr.bf16.gmra.mxu0 %v3445
      %v3599 = vpop.f32.mrf.mxu0
      %v3600 = vadd.f32 0.0, %v3599
      %v3601 = vpop.f32.mrf.mxu0
      %v3602 = vpop.f32.mrf.mxu0
      %v3603 = vadd.f32 0.0, %v3602
      %v3604 = vpop.f32.mrf.mxu0
      %3605 = vmatprep.mubr.bf16.mxu0 0
      %3606 = vmatmul.mubr.bf16.gmra.mxu0 %v3448
      %v3607 = vpop.f32.mrf.mxu0
      %v3608 = vadd.f32 0.0, %v3607
      %v3609 = vpop.f32.mrf.mxu0
      %v3610 = vpop.f32.mrf.mxu0
      %v3611 = vadd.f32 0.0, %v3610
      %v3612 = vpop.f32.mrf.mxu0
      %3613 = vdwg.mxu0
      %v3615 = vsel %vm226, %v3364, 0
      %v3618 = vsel %vm226, %v3365, 0
      %v3621 = vsel %vm226, %v3366, 0
      %v3624 = vsel %vm226, %v3367, 0
      %v3627 = vsel %vm226, %v3368, 0
      %v3630 = vsel %vm226, %v3369, 0
      %v3633 = vsel %vm226, %v3370, 0
      %v3636 = vsel %vm226, %v3371, 0
      %v3639 = vsel %vm226, %v3372, 0
      %v3642 = vsel %vm226, %v3373, 0
      %v3645 = vsel %vm226, %v3374, 0
      %v3648 = vsel %vm226, %v3375, 0
      %v3651 = vsel %vm226, %v3376, 0
      %v3654 = vsel %vm226, %v3377, 0
      %v3657 = vsel %vm226, %v3378, 0
      %v3660 = vsel %vm226, %v3379, 0
      %v3663 = vsel %vm712, %v3380, 0
      %3665 = vmatprep.subr.bf16.mxu0 0
      %3666 = vmatpush1.bf16.msra.mxu0 0
      %3667 = vmatprep.subr.bf16.mxu0 0
      %3668 = vmatpush1.bf16.msra.mxu0 0
      %3669 = vmatprep.subr.bf16.mxu0 0
      %3670 = vmatpush1.bf16.msra.mxu0 0
      %3671 = vmatprep.subr.bf16.mxu0 0
      %3672 = vmatpush1.bf16.msra.mxu0 0
      %3673 = vmatprep.subr.bf16.mxu0 0
      %3674 = vmatpush1.bf16.msra.mxu0 0
      %3675 = vmatprep.subr.bf16.mxu0 0
      %3676 = vmatpush1.bf16.msra.mxu0 0
      %3677 = vmatprep.subr.bf16.mxu0 0
      %3678 = vmatpush1.bf16.msra.mxu0 0
      %3679 = vmatprep.subr.bf16.mxu0 0
      %3680 = vmatpush1.bf16.msra.mxu0 %v3663
      %3681 = vmatprep.subr.bf16.mxu0 0
      %3682 = vmatpush2.bf16.msra.mxu0 0
      %3683 = vmatprep.subr.bf16.mxu0 0
      %3684 = vmatpush2.bf16.msra.mxu0 0
      %3685 = vmatprep.subr.bf16.mxu0 0
      %3686 = vmatpush2.bf16.msra.mxu0 0
      %3687 = vmatprep.subr.bf16.mxu0 0
      %3688 = vmatpush2.bf16.msra.mxu0 0
      %3689 = vmatprep.subr.bf16.mxu0 0
      %3690 = vmatpush2.bf16.msra.mxu0 0
      %3691 = vmatprep.subr.bf16.mxu0 0
      %3692 = vmatpush2.bf16.msra.mxu0 0
      %3693 = vmatprep.subr.bf16.mxu0 0
      %3694 = vmatpush2.bf16.msra.mxu0 0
      %3695 = vmatprep.subr.bf16.mxu0 0
      %3696 = vmatpush2.bf16.msra.mxu0 0
      %3697 = vmatprep.mubr.bf16.mxu0 0
      %3698 = vmatmul.mubr.bf16.gmra.mxu0 %v3615
      %v3699 = vpop.f32.mrf.mxu0
      %v3700 = vadd.f32 %v3488, %v3699
      %v3701 = vpop.f32.mrf.mxu0
      %v3702 = vpop.f32.mrf.mxu0
      %v3703 = vadd.f32 %v3491, %v3702
      %v3704 = vpop.f32.mrf.mxu0
      %3705 = vmatprep.mubr.bf16.mxu0 0
      %3706 = vmatmul.mubr.bf16.gmra.mxu0 %v3618
      %v3707 = vpop.f32.mrf.mxu0
      %v3708 = vadd.f32 %v3496, %v3707
      %v3709 = vpop.f32.mrf.mxu0
      %v3710 = vpop.f32.mrf.mxu0
      %v3711 = vadd.f32 %v3499, %v3710
      %v3712 = vpop.f32.mrf.mxu0
      %3713 = vmatprep.mubr.bf16.mxu0 0
      %3714 = vmatmul.mubr.bf16.gmra.mxu0 %v3621
      %v3715 = vpop.f32.mrf.mxu0
      %v3716 = vadd.f32 %v3504, %v3715
      %v3717 = vpop.f32.mrf.mxu0
      %v3718 = vpop.f32.mrf.mxu0
      %v3719 = vadd.f32 %v3507, %v3718
      %v3720 = vpop.f32.mrf.mxu0
      %3721 = vmatprep.mubr.bf16.mxu0 0
      %3722 = vmatmul.mubr.bf16.gmra.mxu0 %v3624
      %v3723 = vpop.f32.mrf.mxu0
      %v3724 = vadd.f32 %v3512, %v3723
      %v3725 = vpop.f32.mrf.mxu0
      %v3726 = vpop.f32.mrf.mxu0
      %v3727 = vadd.f32 %v3515, %v3726
      %v3728 = vpop.f32.mrf.mxu0
      %3729 = vmatprep.mubr.bf16.mxu0 0
      %3730 = vmatmul.mubr.bf16.gmra.mxu0 %v3627
      %v3731 = vpop.f32.mrf.mxu0
      %v3732 = vadd.f32 %v3520, %v3731
      %v3733 = vpop.f32.mrf.mxu0
      %v3734 = vpop.f32.mrf.mxu0
      %v3735 = vadd.f32 %v3523, %v3734
      %v3736 = vpop.f32.mrf.mxu0
      %3737 = vmatprep.mubr.bf16.mxu0 0
      %3738 = vmatmul.mubr.bf16.gmra.mxu0 %v3630
      %v3739 = vpop.f32.mrf.mxu0
      %v3740 = vadd.f32 %v3528, %v3739
      %v3741 = vpop.f32.mrf.mxu0
      %v3742 = vpop.f32.mrf.mxu0
      %v3743 = vadd.f32 %v3531, %v3742
      %v3744 = vpop.f32.mrf.mxu0
      %3745 = vmatprep.mubr.bf16.mxu0 0
      %3746 = vmatmul.mubr.bf16.gmra.mxu0 %v3633
      %v3747 = vpop.f32.mrf.mxu0
      %v3748 = vadd.f32 %v3536, %v3747
      %v3749 = vpop.f32.mrf.mxu0
      %v3750 = vpop.f32.mrf.mxu0
      %v3751 = vadd.f32 %v3539, %v3750
      %v3752 = vpop.f32.mrf.mxu0
      %3753 = vmatprep.mubr.bf16.mxu0 0
      %3754 = vmatmul.mubr.bf16.gmra.mxu0 %v3636
      %v3755 = vpop.f32.mrf.mxu0
      %v3756 = vadd.f32 %v3544, %v3755
      %v3757 = vpop.f32.mrf.mxu0
      %v3758 = vpop.f32.mrf.mxu0
      %v3759 = vadd.f32 %v3547, %v3758
      %v3760 = vpop.f32.mrf.mxu0
      %3761 = vmatprep.mubr.bf16.mxu0 0
      %3762 = vmatmul.mubr.bf16.gmra.mxu0 %v3639
      %v3763 = vpop.f32.mrf.mxu0
      %v3764 = vadd.f32 %v3552, %v3763
      %v3765 = vpop.f32.mrf.mxu0
      %v3766 = vpop.f32.mrf.mxu0
      %v3767 = vadd.f32 %v3555, %v3766
      %v3768 = vpop.f32.mrf.mxu0
      %3769 = vmatprep.mubr.bf16.mxu0 0
      %3770 = vmatmul.mubr.bf16.gmra.mxu0 %v3642
      %v3771 = vpop.f32.mrf.mxu0
      %v3772 = vadd.f32 %v3560, %v3771
      %v3773 = vpop.f32.mrf.mxu0
      %v3774 = vpop.f32.mrf.mxu0
      %v3775 = vadd.f32 %v3563, %v3774
      %v3776 = vpop.f32.mrf.mxu0
      %3777 = vmatprep.mubr.bf16.mxu0 0
      %3778 = vmatmul.mubr.bf16.gmra.mxu0 %v3645
      %v3779 = vpop.f32.mrf.mxu0
      %v3780 = vadd.f32 %v3568, %v3779
      %v3781 = vpop.f32.mrf.mxu0
      %v3782 = vpop.f32.mrf.mxu0
      %v3783 = vadd.f32 %v3571, %v3782
      %v3784 = vpop.f32.mrf.mxu0
      %3785 = vmatprep.mubr.bf16.mxu0 0
      %3786 = vmatmul.mubr.bf16.gmra.mxu0 %v3648
      %v3787 = vpop.f32.mrf.mxu0
      %v3788 = vadd.f32 %v3576, %v3787
      %v3789 = vpop.f32.mrf.mxu0
      %v3790 = vpop.f32.mrf.mxu0
      %v3791 = vadd.f32 %v3579, %v3790
      %v3792 = vpop.f32.mrf.mxu0
      %3793 = vmatprep.mubr.bf16.mxu0 0
      %3794 = vmatmul.mubr.bf16.gmra.mxu0 %v3651
      %v3795 = vpop.f32.mrf.mxu0
      %v3796 = vadd.f32 %v3584, %v3795
      %v3797 = vpop.f32.mrf.mxu0
      %v3798 = vpop.f32.mrf.mxu0
      %v3799 = vadd.f32 %v3587, %v3798
      %v3800 = vpop.f32.mrf.mxu0
      %3801 = vmatprep.mubr.bf16.mxu0 0
      %3802 = vmatmul.mubr.bf16.gmra.mxu0 %v3654
      %v3803 = vpop.f32.mrf.mxu0
      %v3804 = vadd.f32 %v3592, %v3803
      %v3805 = vpop.f32.mrf.mxu0
      %v3806 = vpop.f32.mrf.mxu0
      %v3807 = vadd.f32 %v3595, %v3806
      %v3808 = vpop.f32.mrf.mxu0
      %3809 = vmatprep.mubr.bf16.mxu0 0
      %3810 = vmatmul.mubr.bf16.gmra.mxu0 %v3657
      %v3811 = vpop.f32.mrf.mxu0
      %v3812 = vadd.f32 %v3600, %v3811
      %v3813 = vpop.f32.mrf.mxu0
      %v3814 = vpop.f32.mrf.mxu0
      %v3815 = vadd.f32 %v3603, %v3814
      %v3816 = vpop.f32.mrf.mxu0
      %3817 = vmatprep.mubr.bf16.mxu0 0
      %3818 = vmatmul.mubr.bf16.gmra.mxu0 %v3660
      %v3819 = vpop.f32.mrf.mxu0
      %v3820 = vadd.f32 %v3608, %v3819
      %v3821 = vpop.f32.mrf.mxu0
      %v3822 = vpop.f32.mrf.mxu0
      %v3823 = vadd.f32 %v3611, %v3822
      %v3824 = vpop.f32.mrf.mxu0
      %3825 = vdwg.mxu0
      %v3826 = vpack.c.bf16 %v3140, %v3139
      %v3827 = vpack.c.bf16 %v3142, %v3141
      %v3828 = vpack.c.bf16 %v3144, %v3143
      %v3829 = vpack.c.bf16 %v3146, %v3145
      %v3830 = vpack.c.bf16 %v3148, %v3147
      %v3831 = vpack.c.bf16 %v3150, %v3149
      %v3832 = vpack.c.bf16 %v3152, %v3151
      %v3833 = vpack.c.bf16 %v3154, %v3153
      %v3834 = vpack.c.bf16 %v3156, %v3155
      %v3835 = vpack.c.bf16 %v3158, %v3157
      %v3836 = vpack.c.bf16 %v3160, %v3159
      %v3837 = vpack.c.bf16 %v3162, %v3161
      %v3838 = vpack.c.bf16 %v3164, %v3163
      %v3839 = vpack.c.bf16 %v3166, %v3165
      %v3840 = vpack.c.bf16 %v3168, %v3167
      %v3841 = vpack.c.bf16 %v3170, %v3169
      %v3842 = vld [vmem:[%s3 + $0x4] sm:$0x3]
      %v3844 = vsel %vm226, %v3826, 0
      %v3847 = vsel %vm226, %v3827, 0
      %v3850 = vsel %vm226, %v3828, 0
      %v3853 = vsel %vm226, %v3829, 0
      %v3856 = vsel %vm226, %v3830, 0
      %v3859 = vsel %vm226, %v3831, 0
      %v3862 = vsel %vm226, %v3832, 0
      %v3865 = vsel %vm226, %v3833, 0
      %v3868 = vsel %vm226, %v3834, 0
      %v3871 = vsel %vm226, %v3835, 0
      %v3874 = vsel %vm226, %v3836, 0
      %v3877 = vsel %vm226, %v3837, 0
      %v3880 = vsel %vm226, %v3838, 0
      %v3883 = vsel %vm226, %v3839, 0
      %v3886 = vsel %vm226, %v3840, 0
      %v3889 = vsel %vm226, %v3841, 0
      %v3892 = vsel %vm712, %v3842, 0
      %3894 = vmatprep.subr.bf16.mxu0 0
      %3895 = vmatpush1.bf16.msra.mxu0 0
      %3896 = vmatprep.subr.bf16.mxu0 0
      %3897 = vmatpush1.bf16.msra.mxu0 0
      %3898 = vmatprep.subr.bf16.mxu0 0
      %3899 = vmatpush1.bf16.msra.mxu0 0
      %3900 = vmatprep.subr.bf16.mxu0 0
      %3901 = vmatpush1.bf16.msra.mxu0 0
      %3902 = vmatprep.subr.bf16.mxu0 0
      %3903 = vmatpush1.bf16.msra.mxu0 0
      %3904 = vmatprep.subr.bf16.mxu0 0
      %3905 = vmatpush1.bf16.msra.mxu0 0
      %3906 = vmatprep.subr.bf16.mxu0 0
      %3907 = vmatpush1.bf16.msra.mxu0 0
      %3908 = vmatprep.subr.bf16.mxu0 0
      %3909 = vmatpush1.bf16.msra.mxu0 %v3892
      %3910 = vmatprep.subr.bf16.mxu0 0
      %3911 = vmatpush2.bf16.msra.mxu0 0
      %3912 = vmatprep.subr.bf16.mxu0 0
      %3913 = vmatpush2.bf16.msra.mxu0 0
      %3914 = vmatprep.subr.bf16.mxu0 0
      %3915 = vmatpush2.bf16.msra.mxu0 0
      %3916 = vmatprep.subr.bf16.mxu0 0
      %3917 = vmatpush2.bf16.msra.mxu0 0
      %3918 = vmatprep.subr.bf16.mxu0 0
      %3919 = vmatpush2.bf16.msra.mxu0 0
      %3920 = vmatprep.subr.bf16.mxu0 0
      %3921 = vmatpush2.bf16.msra.mxu0 0
      %3922 = vmatprep.subr.bf16.mxu0 0
      %3923 = vmatpush2.bf16.msra.mxu0 0
      %3924 = vmatprep.subr.bf16.mxu0 0
      %3925 = vmatpush2.bf16.msra.mxu0 0
      %3926 = vmatprep.mubr.bf16.mxu0 0
      %3927 = vmatmul.mubr.bf16.gmra.mxu0 %v3844
      %v3928 = vpop.f32.mrf.mxu0
      %v3929 = vadd.f32 0.0, %v3928
      %v3930 = vpop.f32.mrf.mxu0
      %v3931 = vpop.f32.mrf.mxu0
      %v3932 = vadd.f32 0.0, %v3931
      %v3933 = vpop.f32.mrf.mxu0
      %3934 = vmatprep.mubr.bf16.mxu0 0
      %3935 = vmatmul.mubr.bf16.gmra.mxu0 %v3847
      %v3936 = vpop.f32.mrf.mxu0
      %v3937 = vadd.f32 0.0, %v3936
      %v3938 = vpop.f32.mrf.mxu0
      %v3939 = vpop.f32.mrf.mxu0
      %v3940 = vadd.f32 0.0, %v3939
      %v3941 = vpop.f32.mrf.mxu0
      %3942 = vmatprep.mubr.bf16.mxu0 0
      %3943 = vmatmul.mubr.bf16.gmra.mxu0 %v3850
      %v3944 = vpop.f32.mrf.mxu0
      %v3945 = vadd.f32 0.0, %v3944
      %v3946 = vpop.f32.mrf.mxu0
      %v3947 = vpop.f32.mrf.mxu0
      %v3948 = vadd.f32 0.0, %v3947
      %v3949 = vpop.f32.mrf.mxu0
      %3950 = vmatprep.mubr.bf16.mxu0 0
      %3951 = vmatmul.mubr.bf16.gmra.mxu0 %v3853
      %v3952 = vpop.f32.mrf.mxu0
      %v3953 = vadd.f32 0.0, %v3952
      %v3954 = vpop.f32.mrf.mxu0
      %v3955 = vpop.f32.mrf.mxu0
      %v3956 = vadd.f32 0.0, %v3955
      %v3957 = vpop.f32.mrf.mxu0
      %3958 = vmatprep.mubr.bf16.mxu0 0
      %3959 = vmatmul.mubr.bf16.gmra.mxu0 %v3856
      %v3960 = vpop.f32.mrf.mxu0
      %v3961 = vadd.f32 0.0, %v3960
      %v3962 = vpop.f32.mrf.mxu0
      %v3963 = vpop.f32.mrf.mxu0
      %v3964 = vadd.f32 0.0, %v3963
      %v3965 = vpop.f32.mrf.mxu0
      %3966 = vmatprep.mubr.bf16.mxu0 0
      %3967 = vmatmul.mubr.bf16.gmra.mxu0 %v3859
      %v3968 = vpop.f32.mrf.mxu0
      %v3969 = vadd.f32 0.0, %v3968
      %v3970 = vpop.f32.mrf.mxu0
      %v3971 = vpop.f32.mrf.mxu0
      %v3972 = vadd.f32 0.0, %v3971
      %v3973 = vpop.f32.mrf.mxu0
      %3974 = vmatprep.mubr.bf16.mxu0 0
      %3975 = vmatmul.mubr.bf16.gmra.mxu0 %v3862
      %v3976 = vpop.f32.mrf.mxu0
      %v3977 = vadd.f32 0.0, %v3976
      %v3978 = vpop.f32.mrf.mxu0
      %v3979 = vpop.f32.mrf.mxu0
      %v3980 = vadd.f32 0.0, %v3979
      %v3981 = vpop.f32.mrf.mxu0
      %3982 = vmatprep.mubr.bf16.mxu0 0
      %3983 = vmatmul.mubr.bf16.gmra.mxu0 %v3865
      %v3984 = vpop.f32.mrf.mxu0
      %v3985 = vadd.f32 0.0, %v3984
      %v3986 = vpop.f32.mrf.mxu0
      %v3987 = vpop.f32.mrf.mxu0
      %v3988 = vadd.f32 0.0, %v3987
      %v3989 = vpop.f32.mrf.mxu0
      %3990 = vmatprep.mubr.bf16.mxu0 0
      %3991 = vmatmul.mubr.bf16.gmra.mxu0 %v3868
      %v3992 = vpop.f32.mrf.mxu0
      %v3993 = vadd.f32 0.0, %v3992
      %v3994 = vpop.f32.mrf.mxu0
      %v3995 = vpop.f32.mrf.mxu0
      %v3996 = vadd.f32 0.0, %v3995
      %v3997 = vpop.f32.mrf.mxu0
      %3998 = vmatprep.mubr.bf16.mxu0 0
      %3999 = vmatmul.mubr.bf16.gmra.mxu0 %v3871
      %v4000 = vpop.f32.mrf.mxu0
      %v4001 = vadd.f32 0.0, %v4000
      %v4002 = vpop.f32.mrf.mxu0
      %v4003 = vpop.f32.mrf.mxu0
      %v4004 = vadd.f32 0.0, %v4003
      %v4005 = vpop.f32.mrf.mxu0
      %4006 = vmatprep.mubr.bf16.mxu0 0
      %4007 = vmatmul.mubr.bf16.gmra.mxu0 %v3874
      %v4008 = vpop.f32.mrf.mxu0
      %v4009 = vadd.f32 0.0, %v4008
      %v4010 = vpop.f32.mrf.mxu0
      %v4011 = vpop.f32.mrf.mxu0
      %v4012 = vadd.f32 0.0, %v4011
      %v4013 = vpop.f32.mrf.mxu0
      %4014 = vmatprep.mubr.bf16.mxu0 0
      %4015 = vmatmul.mubr.bf16.gmra.mxu0 %v3877
      %v4016 = vpop.f32.mrf.mxu0
      %v4017 = vadd.f32 0.0, %v4016
      %v4018 = vpop.f32.mrf.mxu0
      %v4019 = vpop.f32.mrf.mxu0
      %v4020 = vadd.f32 0.0, %v4019
      %v4021 = vpop.f32.mrf.mxu0
      %4022 = vmatprep.mubr.bf16.mxu0 0
      %4023 = vmatmul.mubr.bf16.gmra.mxu0 %v3880
      %v4024 = vpop.f32.mrf.mxu0
      %v4025 = vadd.f32 0.0, %v4024
      %v4026 = vpop.f32.mrf.mxu0
      %v4027 = vpop.f32.mrf.mxu0
      %v4028 = vadd.f32 0.0, %v4027
      %v4029 = vpop.f32.mrf.mxu0
      %4030 = vmatprep.mubr.bf16.mxu0 0
      %4031 = vmatmul.mubr.bf16.gmra.mxu0 %v3883
      %v4032 = vpop.f32.mrf.mxu0
      %v4033 = vadd.f32 0.0, %v4032
      %v4034 = vpop.f32.mrf.mxu0
      %v4035 = vpop.f32.mrf.mxu0
      %v4036 = vadd.f32 0.0, %v4035
      %v4037 = vpop.f32.mrf.mxu0
      %4038 = vmatprep.mubr.bf16.mxu0 0
      %4039 = vmatmul.mubr.bf16.gmra.mxu0 %v3886
      %v4040 = vpop.f32.mrf.mxu0
      %v4041 = vadd.f32 0.0, %v4040
      %v4042 = vpop.f32.mrf.mxu0
      %v4043 = vpop.f32.mrf.mxu0
      %v4044 = vadd.f32 0.0, %v4043
      %v4045 = vpop.f32.mrf.mxu0
      %4046 = vmatprep.mubr.bf16.mxu0 0
      %4047 = vmatmul.mubr.bf16.gmra.mxu0 %v3889
      %v4048 = vpop.f32.mrf.mxu0
      %v4049 = vadd.f32 0.0, %v4048
      %v4050 = vpop.f32.mrf.mxu0
      %v4051 = vpop.f32.mrf.mxu0
      %v4052 = vadd.f32 0.0, %v4051
      %v4053 = vpop.f32.mrf.mxu0
      %4054 = vdwg.mxu0
      %v4055 = vadd.f32 %v3700, %v3929
      %v4056 = vadd.f32 %v3703, %v3932
      %v4057 = vadd.f32 %v3708, %v3937
      %v4058 = vadd.f32 %v3711, %v3940
      %v4059 = vadd.f32 %v3716, %v3945
      %v4060 = vadd.f32 %v3719, %v3948
      %v4061 = vadd.f32 %v3724, %v3953
      %v4062 = vadd.f32 %v3727, %v3956
      %v4063 = vadd.f32 %v3732, %v3961
      %v4064 = vadd.f32 %v3735, %v3964
      %v4065 = vadd.f32 %v3740, %v3969
      %v4066 = vadd.f32 %v3743, %v3972
      %v4067 = vadd.f32 %v3748, %v3977
      %v4068 = vadd.f32 %v3751, %v3980
      %v4069 = vadd.f32 %v3756, %v3985
      %v4070 = vadd.f32 %v3759, %v3988
      %v4071 = vadd.f32 %v3764, %v3993
      %v4072 = vadd.f32 %v3767, %v3996
      %v4073 = vadd.f32 %v3772, %v4001
      %v4074 = vadd.f32 %v3775, %v4004
      %v4075 = vadd.f32 %v3780, %v4009
      %v4076 = vadd.f32 %v3783, %v4012
      %v4077 = vadd.f32 %v3788, %v4017
      %v4078 = vadd.f32 %v3791, %v4020
      %v4079 = vadd.f32 %v3796, %v4025
      %v4080 = vadd.f32 %v3799, %v4028
      %v4081 = vadd.f32 %v3804, %v4033
      %v4082 = vadd.f32 %v3807, %v4036
      %v4083 = vadd.f32 %v3812, %v4041
      %v4084 = vadd.f32 %v3815, %v4044
      %v4085 = vadd.f32 %v3820, %v4049
      %v4086 = vadd.f32 %v3823, %v4052
      %v4087 = vpack.c.bf16 %v3172, %v3171
      %v4088 = vpack.c.bf16 %v3174, %v3173
      %v4089 = vpack.c.bf16 %v3176, %v3175
      %v4090 = vpack.c.bf16 %v3178, %v3177
      %v4091 = vpack.c.bf16 %v3180, %v3179
      %v4092 = vpack.c.bf16 %v3182, %v3181
      %v4093 = vpack.c.bf16 %v3184, %v3183
      %v4094 = vpack.c.bf16 %v3186, %v3185
      %v4095 = vpack.c.bf16 %v3188, %v3187
      %v4096 = vpack.c.bf16 %v3190, %v3189
      %v4097 = vpack.c.bf16 %v3192, %v3191
      %v4098 = vpack.c.bf16 %v3194, %v3193
      %v4099 = vpack.c.bf16 %v3196, %v3195
      %v4100 = vpack.c.bf16 %v3198, %v3197
      %v4101 = vpack.c.bf16 %v3200, %v3199
      %v4102 = vpack.c.bf16 %v3202, %v3201
      %v4103 = vld [vmem:[%s3 + $0x4] sm:$0xc]
      %v4105 = vunpack.c.l.b16 %v4103
      %v4106 = vpack.c.b16 %v4105, %v4105
      %v4107 = vrot.slane %v4106, 2
      %v4109 = vsel %vm226, %v4087, 0
      %v4112 = vsel %vm226, %v4088, 0
      %v4115 = vsel %vm226, %v4089, 0
      %v4118 = vsel %vm226, %v4090, 0
      %v4121 = vsel %vm226, %v4091, 0
      %v4124 = vsel %vm226, %v4092, 0
      %v4127 = vsel %vm226, %v4093, 0
      %v4130 = vsel %vm226, %v4094, 0
      %v4133 = vsel %vm226, %v4095, 0
      %v4136 = vsel %vm226, %v4096, 0
      %v4139 = vsel %vm226, %v4097, 0
      %v4142 = vsel %vm226, %v4098, 0
      %v4145 = vsel %vm226, %v4099, 0
      %v4148 = vsel %vm226, %v4100, 0
      %v4151 = vsel %vm226, %v4101, 0
      %v4154 = vsel %vm226, %v4102, 0
      %v4157 = vsel %vm712, %v4107, 0
      %4159 = vmatprep.subr.bf16.mxu0 0
      %4160 = vmatpush1.bf16.msra.mxu0 0
      %4161 = vmatprep.subr.bf16.mxu0 0
      %4162 = vmatpush1.bf16.msra.mxu0 0
      %4163 = vmatprep.subr.bf16.mxu0 0
      %4164 = vmatpush1.bf16.msra.mxu0 0
      %4165 = vmatprep.subr.bf16.mxu0 0
      %4166 = vmatpush1.bf16.msra.mxu0 0
      %4167 = vmatprep.subr.bf16.mxu0 0
      %4168 = vmatpush1.bf16.msra.mxu0 0
      %4169 = vmatprep.subr.bf16.mxu0 0
      %4170 = vmatpush1.bf16.msra.mxu0 0
      %4171 = vmatprep.subr.bf16.mxu0 0
      %4172 = vmatpush1.bf16.msra.mxu0 0
      %4173 = vmatprep.subr.bf16.mxu0 0
      %4174 = vmatpush1.bf16.msra.mxu0 %v4157
      %4175 = vmatprep.subr.bf16.mxu0 0
      %4176 = vmatpush2.bf16.msra.mxu0 0
      %4177 = vmatprep.subr.bf16.mxu0 0
      %4178 = vmatpush2.bf16.msra.mxu0 0
      %4179 = vmatprep.subr.bf16.mxu0 0
      %4180 = vmatpush2.bf16.msra.mxu0 0
      %4181 = vmatprep.subr.bf16.mxu0 0
      %4182 = vmatpush2.bf16.msra.mxu0 0
      %4183 = vmatprep.subr.bf16.mxu0 0
      %4184 = vmatpush2.bf16.msra.mxu0 0
      %4185 = vmatprep.subr.bf16.mxu0 0
      %4186 = vmatpush2.bf16.msra.mxu0 0
      %4187 = vmatprep.subr.bf16.mxu0 0
      %4188 = vmatpush2.bf16.msra.mxu0 0
      %4189 = vmatprep.subr.bf16.mxu0 0
      %4190 = vmatpush2.bf16.msra.mxu0 0
      %4191 = vmatprep.mubr.bf16.mxu0 0
      %4192 = vmatmul.mubr.bf16.gmra.mxu0 %v4109
      %v4193 = vpop.f32.mrf.mxu0
      %v4194 = vadd.f32 0.0, %v4193
      %v4195 = vpop.f32.mrf.mxu0
      %v4196 = vpop.f32.mrf.mxu0
      %v4197 = vadd.f32 0.0, %v4196
      %v4198 = vpop.f32.mrf.mxu0
      %4199 = vmatprep.mubr.bf16.mxu0 0
      %4200 = vmatmul.mubr.bf16.gmra.mxu0 %v4112
      %v4201 = vpop.f32.mrf.mxu0
      %v4202 = vadd.f32 0.0, %v4201
      %v4203 = vpop.f32.mrf.mxu0
      %v4204 = vpop.f32.mrf.mxu0
      %v4205 = vadd.f32 0.0, %v4204
      %v4206 = vpop.f32.mrf.mxu0
      %4207 = vmatprep.mubr.bf16.mxu0 0
      %4208 = vmatmul.mubr.bf16.gmra.mxu0 %v4115
      %v4209 = vpop.f32.mrf.mxu0
      %v4210 = vadd.f32 0.0, %v4209
      %v4211 = vpop.f32.mrf.mxu0
      %v4212 = vpop.f32.mrf.mxu0
      %v4213 = vadd.f32 0.0, %v4212
      %v4214 = vpop.f32.mrf.mxu0
      %4215 = vmatprep.mubr.bf16.mxu0 0
      %4216 = vmatmul.mubr.bf16.gmra.mxu0 %v4118
      %v4217 = vpop.f32.mrf.mxu0
      %v4218 = vadd.f32 0.0, %v4217
      %v4219 = vpop.f32.mrf.mxu0
      %v4220 = vpop.f32.mrf.mxu0
      %v4221 = vadd.f32 0.0, %v4220
      %v4222 = vpop.f32.mrf.mxu0
      %4223 = vmatprep.mubr.bf16.mxu0 0
      %4224 = vmatmul.mubr.bf16.gmra.mxu0 %v4121
      %v4225 = vpop.f32.mrf.mxu0
      %v4226 = vadd.f32 0.0, %v4225
      %v4227 = vpop.f32.mrf.mxu0
      %v4228 = vpop.f32.mrf.mxu0
      %v4229 = vadd.f32 0.0, %v4228
      %v4230 = vpop.f32.mrf.mxu0
      %4231 = vmatprep.mubr.bf16.mxu0 0
      %4232 = vmatmul.mubr.bf16.gmra.mxu0 %v4124
      %v4233 = vpop.f32.mrf.mxu0
      %v4234 = vadd.f32 0.0, %v4233
      %v4235 = vpop.f32.mrf.mxu0
      %v4236 = vpop.f32.mrf.mxu0
      %v4237 = vadd.f32 0.0, %v4236
      %v4238 = vpop.f32.mrf.mxu0
      %4239 = vmatprep.mubr.bf16.mxu0 0
      %4240 = vmatmul.mubr.bf16.gmra.mxu0 %v4127
      %v4241 = vpop.f32.mrf.mxu0
      %v4242 = vadd.f32 0.0, %v4241
      %v4243 = vpop.f32.mrf.mxu0
      %v4244 = vpop.f32.mrf.mxu0
      %v4245 = vadd.f32 0.0, %v4244
      %v4246 = vpop.f32.mrf.mxu0
      %4247 = vmatprep.mubr.bf16.mxu0 0
      %4248 = vmatmul.mubr.bf16.gmra.mxu0 %v4130
      %v4249 = vpop.f32.mrf.mxu0
      %v4250 = vadd.f32 0.0, %v4249
      %v4251 = vpop.f32.mrf.mxu0
      %v4252 = vpop.f32.mrf.mxu0
      %v4253 = vadd.f32 0.0, %v4252
      %v4254 = vpop.f32.mrf.mxu0
      %4255 = vmatprep.mubr.bf16.mxu0 0
      %4256 = vmatmul.mubr.bf16.gmra.mxu0 %v4133
      %v4257 = vpop.f32.mrf.mxu0
      %v4258 = vadd.f32 0.0, %v4257
      %v4259 = vpop.f32.mrf.mxu0
      %v4260 = vpop.f32.mrf.mxu0
      %v4261 = vadd.f32 0.0, %v4260
      %v4262 = vpop.f32.mrf.mxu0
      %4263 = vmatprep.mubr.bf16.mxu0 0
      %4264 = vmatmul.mubr.bf16.gmra.mxu0 %v4136
      %v4265 = vpop.f32.mrf.mxu0
      %v4266 = vadd.f32 0.0, %v4265
      %v4267 = vpop.f32.mrf.mxu0
      %v4268 = vpop.f32.mrf.mxu0
      %v4269 = vadd.f32 0.0, %v4268
      %v4270 = vpop.f32.mrf.mxu0
      %4271 = vmatprep.mubr.bf16.mxu0 0
      %4272 = vmatmul.mubr.bf16.gmra.mxu0 %v4139
      %v4273 = vpop.f32.mrf.mxu0
      %v4274 = vadd.f32 0.0, %v4273
      %v4275 = vpop.f32.mrf.mxu0
      %v4276 = vpop.f32.mrf.mxu0
      %v4277 = vadd.f32 0.0, %v4276
      %v4278 = vpop.f32.mrf.mxu0
      %4279 = vmatprep.mubr.bf16.mxu0 0
      %4280 = vmatmul.mubr.bf16.gmra.mxu0 %v4142
      %v4281 = vpop.f32.mrf.mxu0
      %v4282 = vadd.f32 0.0, %v4281
      %v4283 = vpop.f32.mrf.mxu0
      %v4284 = vpop.f32.mrf.mxu0
      %v4285 = vadd.f32 0.0, %v4284
      %v4286 = vpop.f32.mrf.mxu0
      %4287 = vmatprep.mubr.bf16.mxu0 0
      %4288 = vmatmul.mubr.bf16.gmra.mxu0 %v4145
      %v4289 = vpop.f32.mrf.mxu0
      %v4290 = vadd.f32 0.0, %v4289
      %v4291 = vpop.f32.mrf.mxu0
      %v4292 = vpop.f32.mrf.mxu0
      %v4293 = vadd.f32 0.0, %v4292
      %v4294 = vpop.f32.mrf.mxu0
      %4295 = vmatprep.mubr.bf16.mxu0 0
      %4296 = vmatmul.mubr.bf16.gmra.mxu0 %v4148
      %v4297 = vpop.f32.mrf.mxu0
      %v4298 = vadd.f32 0.0, %v4297
      %v4299 = vpop.f32.mrf.mxu0
      %v4300 = vpop.f32.mrf.mxu0
      %v4301 = vadd.f32 0.0, %v4300
      %v4302 = vpop.f32.mrf.mxu0
      %4303 = vmatprep.mubr.bf16.mxu0 0
      %4304 = vmatmul.mubr.bf16.gmra.mxu0 %v4151
      %v4305 = vpop.f32.mrf.mxu0
      %v4306 = vadd.f32 0.0, %v4305
      %v4307 = vpop.f32.mrf.mxu0
      %v4308 = vpop.f32.mrf.mxu0
      %v4309 = vadd.f32 0.0, %v4308
      %v4310 = vpop.f32.mrf.mxu0
      %4311 = vmatprep.mubr.bf16.mxu0 0
      %4312 = vmatmul.mubr.bf16.gmra.mxu0 %v4154
      %v4313 = vpop.f32.mrf.mxu0
      %v4314 = vadd.f32 0.0, %v4313
      %v4315 = vpop.f32.mrf.mxu0
      %v4316 = vpop.f32.mrf.mxu0
      %v4317 = vadd.f32 0.0, %v4316
      %v4318 = vpop.f32.mrf.mxu0
      %4319 = vdwg.mxu0
      %v4320 = vadd.f32 %v4055, %v4194
      %v4321 = vadd.f32 %v4056, %v4197
      %v4322 = vadd.f32 %v4057, %v4202
      %v4323 = vadd.f32 %v4058, %v4205
      %v4324 = vadd.f32 %v4059, %v4210
      %v4325 = vadd.f32 %v4060, %v4213
      %v4326 = vadd.f32 %v4061, %v4218
      %v4327 = vadd.f32 %v4062, %v4221
      %v4328 = vadd.f32 %v4063, %v4226
      %v4329 = vadd.f32 %v4064, %v4229
      %v4330 = vadd.f32 %v4065, %v4234
      %v4331 = vadd.f32 %v4066, %v4237
      %v4332 = vadd.f32 %v4067, %v4242
      %v4333 = vadd.f32 %v4068, %v4245
      %v4334 = vadd.f32 %v4069, %v4250
      %v4335 = vadd.f32 %v4070, %v4253
      %v4336 = vadd.f32 %v4071, %v4258
      %v4337 = vadd.f32 %v4072, %v4261
      %v4338 = vadd.f32 %v4073, %v4266
      %v4339 = vadd.f32 %v4074, %v4269
      %v4340 = vadd.f32 %v4075, %v4274
      %v4341 = vadd.f32 %v4076, %v4277
      %v4342 = vadd.f32 %v4077, %v4282
      %v4343 = vadd.f32 %v4078, %v4285
      %v4344 = vadd.f32 %v4079, %v4290
      %v4345 = vadd.f32 %v4080, %v4293
      %v4346 = vadd.f32 %v4081, %v4298
      %v4347 = vadd.f32 %v4082, %v4301
      %v4348 = vadd.f32 %v4083, %v4306
      %v4349 = vadd.f32 %v4084, %v4309
      %v4350 = vadd.f32 %v4085, %v4314
      %v4351 = vadd.f32 %v4086, %v4317
      %v4352 = vpack.c.bf16 %v3204, %v3203
      %v4353 = vpack.c.bf16 %v3206, %v3205
      %v4354 = vpack.c.bf16 %v3208, %v3207
      %v4355 = vpack.c.bf16 %v3210, %v3209
      %v4356 = vpack.c.bf16 %v3212, %v3211
      %v4357 = vpack.c.bf16 %v3214, %v3213
      %v4358 = vpack.c.bf16 %v3216, %v3215
      %v4359 = vpack.c.bf16 %v3218, %v3217
      %v4360 = vpack.c.bf16 %v3220, %v3219
      %v4361 = vpack.c.bf16 %v3222, %v3221
      %v4362 = vpack.c.bf16 %v3224, %v3223
      %v4363 = vpack.c.bf16 %v3226, %v3225
      %v4364 = vpack.c.bf16 %v3228, %v3227
      %v4365 = vpack.c.bf16 %v3230, %v3229
      %v4366 = vpack.c.bf16 %v3232, %v3231
      %v4367 = vpack.c.bf16 %v3234, %v3233
      %v4368 = vld [vmem:[%s3 + $0x8] sm:$0x3]
      %v4370 = vsel %vm226, %v4352, 0
      %v4373 = vsel %vm226, %v4353, 0
      %v4376 = vsel %vm226, %v4354, 0
      %v4379 = vsel %vm226, %v4355, 0
      %v4382 = vsel %vm226, %v4356, 0
      %v4385 = vsel %vm226, %v4357, 0
      %v4388 = vsel %vm226, %v4358, 0
      %v4391 = vsel %vm226, %v4359, 0
      %v4394 = vsel %vm226, %v4360, 0
      %v4397 = vsel %vm226, %v4361, 0
      %v4400 = vsel %vm226, %v4362, 0
      %v4403 = vsel %vm226, %v4363, 0
      %v4406 = vsel %vm226, %v4364, 0
      %v4409 = vsel %vm226, %v4365, 0
      %v4412 = vsel %vm226, %v4366, 0
      %v4415 = vsel %vm226, %v4367, 0
      %v4418 = vsel %vm712, %v4368, 0
      %4420 = vmatprep.subr.bf16.mxu0 0
      %4421 = vmatpush1.bf16.msra.mxu0 0
      %4422 = vmatprep.subr.bf16.mxu0 0
      %4423 = vmatpush1.bf16.msra.mxu0 0
      %4424 = vmatprep.subr.bf16.mxu0 0
      %4425 = vmatpush1.bf16.msra.mxu0 0
      %4426 = vmatprep.subr.bf16.mxu0 0
      %4427 = vmatpush1.bf16.msra.mxu0 0
      %4428 = vmatprep.subr.bf16.mxu0 0
      %4429 = vmatpush1.bf16.msra.mxu0 0
      %4430 = vmatprep.subr.bf16.mxu0 0
      %4431 = vmatpush1.bf16.msra.mxu0 0
      %4432 = vmatprep.subr.bf16.mxu0 0
      %4433 = vmatpush1.bf16.msra.mxu0 0
      %4434 = vmatprep.subr.bf16.mxu0 0
      %4435 = vmatpush1.bf16.msra.mxu0 %v4418
      %4436 = vmatprep.subr.bf16.mxu0 0
      %4437 = vmatpush2.bf16.msra.mxu0 0
      %4438 = vmatprep.subr.bf16.mxu0 0
      %4439 = vmatpush2.bf16.msra.mxu0 0
      %4440 = vmatprep.subr.bf16.mxu0 0
      %4441 = vmatpush2.bf16.msra.mxu0 0
      %4442 = vmatprep.subr.bf16.mxu0 0
      %4443 = vmatpush2.bf16.msra.mxu0 0
      %4444 = vmatprep.subr.bf16.mxu0 0
      %4445 = vmatpush2.bf16.msra.mxu0 0
      %4446 = vmatprep.subr.bf16.mxu0 0
      %4447 = vmatpush2.bf16.msra.mxu0 0
      %4448 = vmatprep.subr.bf16.mxu0 0
      %4449 = vmatpush2.bf16.msra.mxu0 0
      %4450 = vmatprep.subr.bf16.mxu0 0
      %4451 = vmatpush2.bf16.msra.mxu0 0
      %4452 = vmatprep.mubr.bf16.mxu0 0
      %4453 = vmatmul.mubr.bf16.gmra.mxu0 %v4370
      %v4454 = vpop.f32.mrf.mxu0
      %v4455 = vadd.f32 0.0, %v4454
      %v4456 = vpop.f32.mrf.mxu0
      %v4457 = vpop.f32.mrf.mxu0
      %v4458 = vadd.f32 0.0, %v4457
      %v4459 = vpop.f32.mrf.mxu0
      %4460 = vmatprep.mubr.bf16.mxu0 0
      %4461 = vmatmul.mubr.bf16.gmra.mxu0 %v4373
      %v4462 = vpop.f32.mrf.mxu0
      %v4463 = vadd.f32 0.0, %v4462
      %v4464 = vpop.f32.mrf.mxu0
      %v4465 = vpop.f32.mrf.mxu0
      %v4466 = vadd.f32 0.0, %v4465
      %v4467 = vpop.f32.mrf.mxu0
      %4468 = vmatprep.mubr.bf16.mxu0 0
      %4469 = vmatmul.mubr.bf16.gmra.mxu0 %v4376
      %v4470 = vpop.f32.mrf.mxu0
      %v4471 = vadd.f32 0.0, %v4470
      %v4472 = vpop.f32.mrf.mxu0
      %v4473 = vpop.f32.mrf.mxu0
      %v4474 = vadd.f32 0.0, %v4473
      %v4475 = vpop.f32.mrf.mxu0
      %4476 = vmatprep.mubr.bf16.mxu0 0
      %4477 = vmatmul.mubr.bf16.gmra.mxu0 %v4379
      %v4478 = vpop.f32.mrf.mxu0
      %v4479 = vadd.f32 0.0, %v4478
      %v4480 = vpop.f32.mrf.mxu0
      %v4481 = vpop.f32.mrf.mxu0
      %v4482 = vadd.f32 0.0, %v4481
      %v4483 = vpop.f32.mrf.mxu0
      %4484 = vmatprep.mubr.bf16.mxu0 0
      %4485 = vmatmul.mubr.bf16.gmra.mxu0 %v4382
      %v4486 = vpop.f32.mrf.mxu0
      %v4487 = vadd.f32 0.0, %v4486
      %v4488 = vpop.f32.mrf.mxu0
      %v4489 = vpop.f32.mrf.mxu0
      %v4490 = vadd.f32 0.0, %v4489
      %v4491 = vpop.f32.mrf.mxu0
      %4492 = vmatprep.mubr.bf16.mxu0 0
      %4493 = vmatmul.mubr.bf16.gmra.mxu0 %v4385
      %v4494 = vpop.f32.mrf.mxu0
      %v4495 = vadd.f32 0.0, %v4494
      %v4496 = vpop.f32.mrf.mxu0
      %v4497 = vpop.f32.mrf.mxu0
      %v4498 = vadd.f32 0.0, %v4497
      %v4499 = vpop.f32.mrf.mxu0
      %4500 = vmatprep.mubr.bf16.mxu0 0
      %4501 = vmatmul.mubr.bf16.gmra.mxu0 %v4388
      %v4502 = vpop.f32.mrf.mxu0
      %v4503 = vadd.f32 0.0, %v4502
      %v4504 = vpop.f32.mrf.mxu0
      %v4505 = vpop.f32.mrf.mxu0
      %v4506 = vadd.f32 0.0, %v4505
      %v4507 = vpop.f32.mrf.mxu0
      %4508 = vmatprep.mubr.bf16.mxu0 0
      %4509 = vmatmul.mubr.bf16.gmra.mxu0 %v4391
      %v4510 = vpop.f32.mrf.mxu0
      %v4511 = vadd.f32 0.0, %v4510
      %v4512 = vpop.f32.mrf.mxu0
      %v4513 = vpop.f32.mrf.mxu0
      %v4514 = vadd.f32 0.0, %v4513
      %v4515 = vpop.f32.mrf.mxu0
      %4516 = vmatprep.mubr.bf16.mxu0 0
      %4517 = vmatmul.mubr.bf16.gmra.mxu0 %v4394
      %v4518 = vpop.f32.mrf.mxu0
      %v4519 = vadd.f32 0.0, %v4518
      %v4520 = vpop.f32.mrf.mxu0
      %v4521 = vpop.f32.mrf.mxu0
      %v4522 = vadd.f32 0.0, %v4521
      %v4523 = vpop.f32.mrf.mxu0
      %4524 = vmatprep.mubr.bf16.mxu0 0
      %4525 = vmatmul.mubr.bf16.gmra.mxu0 %v4397
      %v4526 = vpop.f32.mrf.mxu0
      %v4527 = vadd.f32 0.0, %v4526
      %v4528 = vpop.f32.mrf.mxu0
      %v4529 = vpop.f32.mrf.mxu0
      %v4530 = vadd.f32 0.0, %v4529
      %v4531 = vpop.f32.mrf.mxu0
      %4532 = vmatprep.mubr.bf16.mxu0 0
      %4533 = vmatmul.mubr.bf16.gmra.mxu0 %v4400
      %v4534 = vpop.f32.mrf.mxu0
      %v4535 = vadd.f32 0.0, %v4534
      %v4536 = vpop.f32.mrf.mxu0
      %v4537 = vpop.f32.mrf.mxu0
      %v4538 = vadd.f32 0.0, %v4537
      %v4539 = vpop.f32.mrf.mxu0
      %4540 = vmatprep.mubr.bf16.mxu0 0
      %4541 = vmatmul.mubr.bf16.gmra.mxu0 %v4403
      %v4542 = vpop.f32.mrf.mxu0
      %v4543 = vadd.f32 0.0, %v4542
      %v4544 = vpop.f32.mrf.mxu0
      %v4545 = vpop.f32.mrf.mxu0
      %v4546 = vadd.f32 0.0, %v4545
      %v4547 = vpop.f32.mrf.mxu0
      %4548 = vmatprep.mubr.bf16.mxu0 0
      %4549 = vmatmul.mubr.bf16.gmra.mxu0 %v4406
      %v4550 = vpop.f32.mrf.mxu0
      %v4551 = vadd.f32 0.0, %v4550
      %v4552 = vpop.f32.mrf.mxu0
      %v4553 = vpop.f32.mrf.mxu0
      %v4554 = vadd.f32 0.0, %v4553
      %v4555 = vpop.f32.mrf.mxu0
      %4556 = vmatprep.mubr.bf16.mxu0 0
      %4557 = vmatmul.mubr.bf16.gmra.mxu0 %v4409
      %v4558 = vpop.f32.mrf.mxu0
      %v4559 = vadd.f32 0.0, %v4558
      %v4560 = vpop.f32.mrf.mxu0
      %v4561 = vpop.f32.mrf.mxu0
      %v4562 = vadd.f32 0.0, %v4561
      %v4563 = vpop.f32.mrf.mxu0
      %4564 = vmatprep.mubr.bf16.mxu0 0
      %4565 = vmatmul.mubr.bf16.gmra.mxu0 %v4412
      %v4566 = vpop.f32.mrf.mxu0
      %v4567 = vadd.f32 0.0, %v4566
      %v4568 = vpop.f32.mrf.mxu0
      %v4569 = vpop.f32.mrf.mxu0
      %v4570 = vadd.f32 0.0, %v4569
      %v4571 = vpop.f32.mrf.mxu0
      %4572 = vmatprep.mubr.bf16.mxu0 0
      %4573 = vmatmul.mubr.bf16.gmra.mxu0 %v4415
      %v4574 = vpop.f32.mrf.mxu0
      %v4575 = vadd.f32 0.0, %v4574
      %v4576 = vpop.f32.mrf.mxu0
      %v4577 = vpop.f32.mrf.mxu0
      %v4578 = vadd.f32 0.0, %v4577
      %v4579 = vpop.f32.mrf.mxu0
      %4580 = vdwg.mxu0
      %v4581 = vadd.f32 %v4320, %v4455
      %v4582 = vadd.f32 %v4321, %v4458
      %v4583 = vadd.f32 %v4322, %v4463
      %v4584 = vadd.f32 %v4323, %v4466
      %v4585 = vadd.f32 %v4324, %v4471
      %v4586 = vadd.f32 %v4325, %v4474
      %v4587 = vadd.f32 %v4326, %v4479
      %v4588 = vadd.f32 %v4327, %v4482
      %v4589 = vadd.f32 %v4328, %v4487
      %v4590 = vadd.f32 %v4329, %v4490
      %v4591 = vadd.f32 %v4330, %v4495
      %v4592 = vadd.f32 %v4331, %v4498
      %v4593 = vadd.f32 %v4332, %v4503
      %v4594 = vadd.f32 %v4333, %v4506
      %v4595 = vadd.f32 %v4334, %v4511
      %v4596 = vadd.f32 %v4335, %v4514
      %v4597 = vadd.f32 %v4336, %v4519
      %v4598 = vadd.f32 %v4337, %v4522
      %v4599 = vadd.f32 %v4338, %v4527
      %v4600 = vadd.f32 %v4339, %v4530
      %v4601 = vadd.f32 %v4340, %v4535
      %v4602 = vadd.f32 %v4341, %v4538
      %v4603 = vadd.f32 %v4342, %v4543
      %v4604 = vadd.f32 %v4343, %v4546
      %v4605 = vadd.f32 %v4344, %v4551
      %v4606 = vadd.f32 %v4345, %v4554
      %v4607 = vadd.f32 %v4346, %v4559
      %v4608 = vadd.f32 %v4347, %v4562
      %v4609 = vadd.f32 %v4348, %v4567
      %v4610 = vadd.f32 %v4349, %v4570
      %v4611 = vadd.f32 %v4350, %v4575
      %v4612 = vadd.f32 %v4351, %v4578
      %v4613 = vpack.c.bf16 %v3236, %v3235
      %v4614 = vpack.c.bf16 %v3238, %v3237
      %v4615 = vpack.c.bf16 %v3240, %v3239
      %v4616 = vpack.c.bf16 %v3242, %v3241
      %v4617 = vpack.c.bf16 %v3244, %v3243
      %v4618 = vpack.c.bf16 %v3246, %v3245
      %v4619 = vpack.c.bf16 %v3248, %v3247
      %v4620 = vpack.c.bf16 %v3250, %v3249
      %v4621 = vpack.c.bf16 %v3252, %v3251
      %v4622 = vpack.c.bf16 %v3254, %v3253
      %v4623 = vpack.c.bf16 %v3256, %v3255
      %v4624 = vpack.c.bf16 %v3258, %v3257
      %v4625 = vpack.c.bf16 %v3260, %v3259
      %v4626 = vpack.c.bf16 %v3262, %v3261
      %v4627 = vpack.c.bf16 %v3264, %v3263
      %v4628 = vpack.c.bf16 %v3266, %v3265
      %v4629 = vld [vmem:[%s3 + $0x8] sm:$0xc]
      %v4631 = vunpack.c.l.b16 %v4629
      %v4632 = vpack.c.b16 %v4631, %v4631
      %v4633 = vrot.slane %v4632, 2
      %v4635 = vsel %vm226, %v4613, 0
      %v4638 = vsel %vm226, %v4614, 0
      %v4641 = vsel %vm226, %v4615, 0
      %v4644 = vsel %vm226, %v4616, 0
      %v4647 = vsel %vm226, %v4617, 0
      %v4650 = vsel %vm226, %v4618, 0
      %v4653 = vsel %vm226, %v4619, 0
      %v4656 = vsel %vm226, %v4620, 0
      %v4659 = vsel %vm226, %v4621, 0
      %v4662 = vsel %vm226, %v4622, 0
      %v4665 = vsel %vm226, %v4623, 0
      %v4668 = vsel %vm226, %v4624, 0
      %v4671 = vsel %vm226, %v4625, 0
      %v4674 = vsel %vm226, %v4626, 0
      %v4677 = vsel %vm226, %v4627, 0
      %v4680 = vsel %vm226, %v4628, 0
      %v4683 = vsel %vm712, %v4633, 0
      %4685 = vmatprep.subr.bf16.mxu0 0
      %4686 = vmatpush1.bf16.msra.mxu0 0
      %4687 = vmatprep.subr.bf16.mxu0 0
      %4688 = vmatpush1.bf16.msra.mxu0 0
      %4689 = vmatprep.subr.bf16.mxu0 0
      %4690 = vmatpush1.bf16.msra.mxu0 0
      %4691 = vmatprep.subr.bf16.mxu0 0
      %4692 = vmatpush1.bf16.msra.mxu0 0
      %4693 = vmatprep.subr.bf16.mxu0 0
      %4694 = vmatpush1.bf16.msra.mxu0 0
      %4695 = vmatprep.subr.bf16.mxu0 0
      %4696 = vmatpush1.bf16.msra.mxu0 0
      %4697 = vmatprep.subr.bf16.mxu0 0
      %4698 = vmatpush1.bf16.msra.mxu0 0
      %4699 = vmatprep.subr.bf16.mxu0 0
      %4700 = vmatpush1.bf16.msra.mxu0 %v4683
      %4701 = vmatprep.subr.bf16.mxu0 0
      %4702 = vmatpush2.bf16.msra.mxu0 0
      %4703 = vmatprep.subr.bf16.mxu0 0
      %4704 = vmatpush2.bf16.msra.mxu0 0
      %4705 = vmatprep.subr.bf16.mxu0 0
      %4706 = vmatpush2.bf16.msra.mxu0 0
      %4707 = vmatprep.subr.bf16.mxu0 0
      %4708 = vmatpush2.bf16.msra.mxu0 0
      %4709 = vmatprep.subr.bf16.mxu0 0
      %4710 = vmatpush2.bf16.msra.mxu0 0
      %4711 = vmatprep.subr.bf16.mxu0 0
      %4712 = vmatpush2.bf16.msra.mxu0 0
      %4713 = vmatprep.subr.bf16.mxu0 0
      %4714 = vmatpush2.bf16.msra.mxu0 0
      %4715 = vmatprep.subr.bf16.mxu0 0
      %4716 = vmatpush2.bf16.msra.mxu0 0
      %4717 = vmatprep.mubr.bf16.mxu0 0
      %4718 = vmatmul.mubr.bf16.gmra.mxu0 %v4635
      %v4719 = vpop.f32.mrf.mxu0
      %v4720 = vadd.f32 0.0, %v4719
      %v4721 = vpop.f32.mrf.mxu0
      %v4722 = vpop.f32.mrf.mxu0
      %v4723 = vadd.f32 0.0, %v4722
      %v4724 = vpop.f32.mrf.mxu0
      %4725 = vmatprep.mubr.bf16.mxu0 0
      %4726 = vmatmul.mubr.bf16.gmra.mxu0 %v4638
      %v4727 = vpop.f32.mrf.mxu0
      %v4728 = vadd.f32 0.0, %v4727
      %v4729 = vpop.f32.mrf.mxu0
      %v4730 = vpop.f32.mrf.mxu0
      %v4731 = vadd.f32 0.0, %v4730
      %v4732 = vpop.f32.mrf.mxu0
      %4733 = vmatprep.mubr.bf16.mxu0 0
      %4734 = vmatmul.mubr.bf16.gmra.mxu0 %v4641
      %v4735 = vpop.f32.mrf.mxu0
      %v4736 = vadd.f32 0.0, %v4735
      %v4737 = vpop.f32.mrf.mxu0
      %v4738 = vpop.f32.mrf.mxu0
      %v4739 = vadd.f32 0.0, %v4738
      %v4740 = vpop.f32.mrf.mxu0
      %4741 = vmatprep.mubr.bf16.mxu0 0
      %4742 = vmatmul.mubr.bf16.gmra.mxu0 %v4644
      %v4743 = vpop.f32.mrf.mxu0
      %v4744 = vadd.f32 0.0, %v4743
      %v4745 = vpop.f32.mrf.mxu0
      %v4746 = vpop.f32.mrf.mxu0
      %v4747 = vadd.f32 0.0, %v4746
      %v4748 = vpop.f32.mrf.mxu0
      %4749 = vmatprep.mubr.bf16.mxu0 0
      %4750 = vmatmul.mubr.bf16.gmra.mxu0 %v4647
      %v4751 = vpop.f32.mrf.mxu0
      %v4752 = vadd.f32 0.0, %v4751
      %v4753 = vpop.f32.mrf.mxu0
      %v4754 = vpop.f32.mrf.mxu0
      %v4755 = vadd.f32 0.0, %v4754
      %v4756 = vpop.f32.mrf.mxu0
      %4757 = vmatprep.mubr.bf16.mxu0 0
      %4758 = vmatmul.mubr.bf16.gmra.mxu0 %v4650
      %v4759 = vpop.f32.mrf.mxu0
      %v4760 = vadd.f32 0.0, %v4759
      %v4761 = vpop.f32.mrf.mxu0
      %v4762 = vpop.f32.mrf.mxu0
      %v4763 = vadd.f32 0.0, %v4762
      %v4764 = vpop.f32.mrf.mxu0
      %4765 = vmatprep.mubr.bf16.mxu0 0
      %4766 = vmatmul.mubr.bf16.gmra.mxu0 %v4653
      %v4767 = vpop.f32.mrf.mxu0
      %v4768 = vadd.f32 0.0, %v4767
      %v4769 = vpop.f32.mrf.mxu0
      %v4770 = vpop.f32.mrf.mxu0
      %v4771 = vadd.f32 0.0, %v4770
      %v4772 = vpop.f32.mrf.mxu0
      %4773 = vmatprep.mubr.bf16.mxu0 0
      %4774 = vmatmul.mubr.bf16.gmra.mxu0 %v4656
      %v4775 = vpop.f32.mrf.mxu0
      %v4776 = vadd.f32 0.0, %v4775
      %v4777 = vpop.f32.mrf.mxu0
      %v4778 = vpop.f32.mrf.mxu0
      %v4779 = vadd.f32 0.0, %v4778
      %v4780 = vpop.f32.mrf.mxu0
      %4781 = vmatprep.mubr.bf16.mxu0 0
      %4782 = vmatmul.mubr.bf16.gmra.mxu0 %v4659
      %v4783 = vpop.f32.mrf.mxu0
      %v4784 = vadd.f32 0.0, %v4783
      %v4785 = vpop.f32.mrf.mxu0
      %v4786 = vpop.f32.mrf.mxu0
      %v4787 = vadd.f32 0.0, %v4786
      %v4788 = vpop.f32.mrf.mxu0
      %4789 = vmatprep.mubr.bf16.mxu0 0
      %4790 = vmatmul.mubr.bf16.gmra.mxu0 %v4662
      %v4791 = vpop.f32.mrf.mxu0
      %v4792 = vadd.f32 0.0, %v4791
      %v4793 = vpop.f32.mrf.mxu0
      %v4794 = vpop.f32.mrf.mxu0
      %v4795 = vadd.f32 0.0, %v4794
      %v4796 = vpop.f32.mrf.mxu0
      %4797 = vmatprep.mubr.bf16.mxu0 0
      %4798 = vmatmul.mubr.bf16.gmra.mxu0 %v4665
      %v4799 = vpop.f32.mrf.mxu0
      %v4800 = vadd.f32 0.0, %v4799
      %v4801 = vpop.f32.mrf.mxu0
      %v4802 = vpop.f32.mrf.mxu0
      %v4803 = vadd.f32 0.0, %v4802
      %v4804 = vpop.f32.mrf.mxu0
      %4805 = vmatprep.mubr.bf16.mxu0 0
      %4806 = vmatmul.mubr.bf16.gmra.mxu0 %v4668
      %v4807 = vpop.f32.mrf.mxu0
      %v4808 = vadd.f32 0.0, %v4807
      %v4809 = vpop.f32.mrf.mxu0
      %v4810 = vpop.f32.mrf.mxu0
      %v4811 = vadd.f32 0.0, %v4810
      %v4812 = vpop.f32.mrf.mxu0
      %4813 = vmatprep.mubr.bf16.mxu0 0
      %4814 = vmatmul.mubr.bf16.gmra.mxu0 %v4671
      %v4815 = vpop.f32.mrf.mxu0
      %v4816 = vadd.f32 0.0, %v4815
      %v4817 = vpop.f32.mrf.mxu0
      %v4818 = vpop.f32.mrf.mxu0
      %v4819 = vadd.f32 0.0, %v4818
      %v4820 = vpop.f32.mrf.mxu0
      %4821 = vmatprep.mubr.bf16.mxu0 0
      %4822 = vmatmul.mubr.bf16.gmra.mxu0 %v4674
      %v4823 = vpop.f32.mrf.mxu0
      %v4824 = vadd.f32 0.0, %v4823
      %v4825 = vpop.f32.mrf.mxu0
      %v4826 = vpop.f32.mrf.mxu0
      %v4827 = vadd.f32 0.0, %v4826
      %v4828 = vpop.f32.mrf.mxu0
      %4829 = vmatprep.mubr.bf16.mxu0 0
      %4830 = vmatmul.mubr.bf16.gmra.mxu0 %v4677
      %v4831 = vpop.f32.mrf.mxu0
      %v4832 = vadd.f32 0.0, %v4831
      %v4833 = vpop.f32.mrf.mxu0
      %v4834 = vpop.f32.mrf.mxu0
      %v4835 = vadd.f32 0.0, %v4834
      %v4836 = vpop.f32.mrf.mxu0
      %4837 = vmatprep.mubr.bf16.mxu0 0
      %4838 = vmatmul.mubr.bf16.gmra.mxu0 %v4680
      %v4839 = vpop.f32.mrf.mxu0
      %v4840 = vadd.f32 0.0, %v4839
      %v4841 = vpop.f32.mrf.mxu0
      %v4842 = vpop.f32.mrf.mxu0
      %v4843 = vadd.f32 0.0, %v4842
      %v4844 = vpop.f32.mrf.mxu0
      %4845 = vdwg.mxu0
      %v4846 = vadd.f32 %v4581, %v4720
      %v4847 = vadd.f32 %v4582, %v4723
      %v4848 = vadd.f32 %v4583, %v4728
      %v4849 = vadd.f32 %v4584, %v4731
      %v4850 = vadd.f32 %v4585, %v4736
      %v4851 = vadd.f32 %v4586, %v4739
      %v4852 = vadd.f32 %v4587, %v4744
      %v4853 = vadd.f32 %v4588, %v4747
      %v4854 = vadd.f32 %v4589, %v4752
      %v4855 = vadd.f32 %v4590, %v4755
      %v4856 = vadd.f32 %v4591, %v4760
      %v4857 = vadd.f32 %v4592, %v4763
      %v4858 = vadd.f32 %v4593, %v4768
      %v4859 = vadd.f32 %v4594, %v4771
      %v4860 = vadd.f32 %v4595, %v4776
      %v4861 = vadd.f32 %v4596, %v4779
      %v4862 = vadd.f32 %v4597, %v4784
      %v4863 = vadd.f32 %v4598, %v4787
      %v4864 = vadd.f32 %v4599, %v4792
      %v4865 = vadd.f32 %v4600, %v4795
      %v4866 = vadd.f32 %v4601, %v4800
      %v4867 = vadd.f32 %v4602, %v4803
      %v4868 = vadd.f32 %v4603, %v4808
      %v4869 = vadd.f32 %v4604, %v4811
      %v4870 = vadd.f32 %v4605, %v4816
      %v4871 = vadd.f32 %v4606, %v4819
      %v4872 = vadd.f32 %v4607, %v4824
      %v4873 = vadd.f32 %v4608, %v4827
      %v4874 = vadd.f32 %v4609, %v4832
      %v4875 = vadd.f32 %v4610, %v4835
      %v4876 = vadd.f32 %v4611, %v4840
      %v4877 = vadd.f32 %v4612, %v4843
      %v4878 = vpack.c.bf16 %v3269, %v3268
      %v4879 = vpack.c.bf16 %v3271, %v3270
      %v4880 = vpack.c.bf16 %v3273, %v3272
      %v4881 = vpack.c.bf16 %v3275, %v3274
      %v4882 = vpack.c.bf16 %v3277, %v3276
      %v4883 = vpack.c.bf16 %v3279, %v3278
      %v4884 = vpack.c.bf16 %v3281, %v3280
      %v4885 = vpack.c.bf16 %v3283, %v3282
      %v4886 = vpack.c.bf16 %v3285, %v3284
      %v4887 = vpack.c.bf16 %v3287, %v3286
      %v4888 = vpack.c.bf16 %v3289, %v3288
      %v4889 = vpack.c.bf16 %v3291, %v3290
      %v4890 = vpack.c.bf16 %v3293, %v3292
      %v4891 = vpack.c.bf16 %v3295, %v3294
      %v4892 = vpack.c.bf16 %v3297, %v3296
      %v4893 = vpack.c.bf16 %v3299, %v3298
      %v4894 = vld [vmem:[%s3 + $0xc] sm:$0x3]
      %v4896 = vsel %vm226, %v4878, 0
      %v4899 = vsel %vm226, %v4879, 0
      %v4902 = vsel %vm226, %v4880, 0
      %v4905 = vsel %vm226, %v4881, 0
      %v4908 = vsel %vm226, %v4882, 0
      %v4911 = vsel %vm226, %v4883, 0
      %v4914 = vsel %vm226, %v4884, 0
      %v4917 = vsel %vm226, %v4885, 0
      %v4920 = vsel %vm226, %v4886, 0
      %v4923 = vsel %vm226, %v4887, 0
      %v4926 = vsel %vm226, %v4888, 0
      %v4929 = vsel %vm226, %v4889, 0
      %v4932 = vsel %vm226, %v4890, 0
      %v4935 = vsel %vm226, %v4891, 0
      %v4938 = vsel %vm226, %v4892, 0
      %v4941 = vsel %vm226, %v4893, 0
      %v4944 = vsel %vm712, %v4894, 0
      %4946 = vmatprep.subr.bf16.mxu0 0
      %4947 = vmatpush1.bf16.msra.mxu0 0
      %4948 = vmatprep.subr.bf16.mxu0 0
      %4949 = vmatpush1.bf16.msra.mxu0 0
      %4950 = vmatprep.subr.bf16.mxu0 0
      %4951 = vmatpush1.bf16.msra.mxu0 0
      %4952 = vmatprep.subr.bf16.mxu0 0
      %4953 = vmatpush1.bf16.msra.mxu0 0
      %4954 = vmatprep.subr.bf16.mxu0 0
      %4955 = vmatpush1.bf16.msra.mxu0 0
      %4956 = vmatprep.subr.bf16.mxu0 0
      %4957 = vmatpush1.bf16.msra.mxu0 0
      %4958 = vmatprep.subr.bf16.mxu0 0
      %4959 = vmatpush1.bf16.msra.mxu0 0
      %4960 = vmatprep.subr.bf16.mxu0 0
      %4961 = vmatpush1.bf16.msra.mxu0 %v4944
      %4962 = vmatprep.subr.bf16.mxu0 0
      %4963 = vmatpush2.bf16.msra.mxu0 0
      %4964 = vmatprep.subr.bf16.mxu0 0
      %4965 = vmatpush2.bf16.msra.mxu0 0
      %4966 = vmatprep.subr.bf16.mxu0 0
      %4967 = vmatpush2.bf16.msra.mxu0 0
      %4968 = vmatprep.subr.bf16.mxu0 0
      %4969 = vmatpush2.bf16.msra.mxu0 0
      %4970 = vmatprep.subr.bf16.mxu0 0
      %4971 = vmatpush2.bf16.msra.mxu0 0
      %4972 = vmatprep.subr.bf16.mxu0 0
      %4973 = vmatpush2.bf16.msra.mxu0 0
      %4974 = vmatprep.subr.bf16.mxu0 0
      %4975 = vmatpush2.bf16.msra.mxu0 0
      %4976 = vmatprep.subr.bf16.mxu0 0
      %4977 = vmatpush2.bf16.msra.mxu0 0
      %4978 = vmatprep.mubr.bf16.mxu0 0
      %4979 = vmatmul.mubr.bf16.gmra.mxu0 %v4896
      %v4980 = vpop.f32.mrf.mxu0
      %v4981 = vadd.f32 0.0, %v4980
      %v4982 = vpop.f32.mrf.mxu0
      %v4983 = vpop.f32.mrf.mxu0
      %v4984 = vadd.f32 0.0, %v4983
      %v4985 = vpop.f32.mrf.mxu0
      %4986 = vmatprep.mubr.bf16.mxu0 0
      %4987 = vmatmul.mubr.bf16.gmra.mxu0 %v4899
      %v4988 = vpop.f32.mrf.mxu0
      %v4989 = vadd.f32 0.0, %v4988
      %v4990 = vpop.f32.mrf.mxu0
      %v4991 = vpop.f32.mrf.mxu0
      %v4992 = vadd.f32 0.0, %v4991
      %v4993 = vpop.f32.mrf.mxu0
      %4994 = vmatprep.mubr.bf16.mxu0 0
      %4995 = vmatmul.mubr.bf16.gmra.mxu0 %v4902
      %v4996 = vpop.f32.mrf.mxu0
      %v4997 = vadd.f32 0.0, %v4996
      %v4998 = vpop.f32.mrf.mxu0
      %v4999 = vpop.f32.mrf.mxu0
      %v5000 = vadd.f32 0.0, %v4999
      %v5001 = vpop.f32.mrf.mxu0
      %5002 = vmatprep.mubr.bf16.mxu0 0
      %5003 = vmatmul.mubr.bf16.gmra.mxu0 %v4905
      %v5004 = vpop.f32.mrf.mxu0
      %v5005 = vadd.f32 0.0, %v5004
      %v5006 = vpop.f32.mrf.mxu0
      %v5007 = vpop.f32.mrf.mxu0
      %v5008 = vadd.f32 0.0, %v5007
      %v5009 = vpop.f32.mrf.mxu0
      %5010 = vmatprep.mubr.bf16.mxu0 0
      %5011 = vmatmul.mubr.bf16.gmra.mxu0 %v4908
      %v5012 = vpop.f32.mrf.mxu0
      %v5013 = vadd.f32 0.0, %v5012
      %v5014 = vpop.f32.mrf.mxu0
      %v5015 = vpop.f32.mrf.mxu0
      %v5016 = vadd.f32 0.0, %v5015
      %v5017 = vpop.f32.mrf.mxu0
      %5018 = vmatprep.mubr.bf16.mxu0 0
      %5019 = vmatmul.mubr.bf16.gmra.mxu0 %v4911
      %v5020 = vpop.f32.mrf.mxu0
      %v5021 = vadd.f32 0.0, %v5020
      %v5022 = vpop.f32.mrf.mxu0
      %v5023 = vpop.f32.mrf.mxu0
      %v5024 = vadd.f32 0.0, %v5023
      %v5025 = vpop.f32.mrf.mxu0
      %5026 = vmatprep.mubr.bf16.mxu0 0
      %5027 = vmatmul.mubr.bf16.gmra.mxu0 %v4914
      %v5028 = vpop.f32.mrf.mxu0
      %v5029 = vadd.f32 0.0, %v5028
      %v5030 = vpop.f32.mrf.mxu0
      %v5031 = vpop.f32.mrf.mxu0
      %v5032 = vadd.f32 0.0, %v5031
      %v5033 = vpop.f32.mrf.mxu0
      %5034 = vmatprep.mubr.bf16.mxu0 0
      %5035 = vmatmul.mubr.bf16.gmra.mxu0 %v4917
      %v5036 = vpop.f32.mrf.mxu0
      %v5037 = vadd.f32 0.0, %v5036
      %v5038 = vpop.f32.mrf.mxu0
      %v5039 = vpop.f32.mrf.mxu0
      %v5040 = vadd.f32 0.0, %v5039
      %v5041 = vpop.f32.mrf.mxu0
      %5042 = vmatprep.mubr.bf16.mxu0 0
      %5043 = vmatmul.mubr.bf16.gmra.mxu0 %v4920
      %v5044 = vpop.f32.mrf.mxu0
      %v5045 = vadd.f32 0.0, %v5044
      %v5046 = vpop.f32.mrf.mxu0
      %v5047 = vpop.f32.mrf.mxu0
      %v5048 = vadd.f32 0.0, %v5047
      %v5049 = vpop.f32.mrf.mxu0
      %5050 = vmatprep.mubr.bf16.mxu0 0
      %5051 = vmatmul.mubr.bf16.gmra.mxu0 %v4923
      %v5052 = vpop.f32.mrf.mxu0
      %v5053 = vadd.f32 0.0, %v5052
      %v5054 = vpop.f32.mrf.mxu0
      %v5055 = vpop.f32.mrf.mxu0
      %v5056 = vadd.f32 0.0, %v5055
      %v5057 = vpop.f32.mrf.mxu0
      %5058 = vmatprep.mubr.bf16.mxu0 0
      %5059 = vmatmul.mubr.bf16.gmra.mxu0 %v4926
      %v5060 = vpop.f32.mrf.mxu0
      %v5061 = vadd.f32 0.0, %v5060
      %v5062 = vpop.f32.mrf.mxu0
      %v5063 = vpop.f32.mrf.mxu0
      %v5064 = vadd.f32 0.0, %v5063
      %v5065 = vpop.f32.mrf.mxu0
      %5066 = vmatprep.mubr.bf16.mxu0 0
      %5067 = vmatmul.mubr.bf16.gmra.mxu0 %v4929
      %v5068 = vpop.f32.mrf.mxu0
      %v5069 = vadd.f32 0.0, %v5068
      %v5070 = vpop.f32.mrf.mxu0
      %v5071 = vpop.f32.mrf.mxu0
      %v5072 = vadd.f32 0.0, %v5071
      %v5073 = vpop.f32.mrf.mxu0
      %5074 = vmatprep.mubr.bf16.mxu0 0
      %5075 = vmatmul.mubr.bf16.gmra.mxu0 %v4932
      %v5076 = vpop.f32.mrf.mxu0
      %v5077 = vadd.f32 0.0, %v5076
      %v5078 = vpop.f32.mrf.mxu0
      %v5079 = vpop.f32.mrf.mxu0
      %v5080 = vadd.f32 0.0, %v5079
      %v5081 = vpop.f32.mrf.mxu0
      %5082 = vmatprep.mubr.bf16.mxu0 0
      %5083 = vmatmul.mubr.bf16.gmra.mxu0 %v4935
      %v5084 = vpop.f32.mrf.mxu0
      %v5085 = vadd.f32 0.0, %v5084
      %v5086 = vpop.f32.mrf.mxu0
      %v5087 = vpop.f32.mrf.mxu0
      %v5088 = vadd.f32 0.0, %v5087
      %v5089 = vpop.f32.mrf.mxu0
      %5090 = vmatprep.mubr.bf16.mxu0 0
      %5091 = vmatmul.mubr.bf16.gmra.mxu0 %v4938
      %v5092 = vpop.f32.mrf.mxu0
      %v5093 = vadd.f32 0.0, %v5092
      %v5094 = vpop.f32.mrf.mxu0
      %v5095 = vpop.f32.mrf.mxu0
      %v5096 = vadd.f32 0.0, %v5095
      %v5097 = vpop.f32.mrf.mxu0
      %5098 = vmatprep.mubr.bf16.mxu0 0
      %5099 = vmatmul.mubr.bf16.gmra.mxu0 %v4941
      %v5100 = vpop.f32.mrf.mxu0
      %v5101 = vadd.f32 0.0, %v5100
      %v5102 = vpop.f32.mrf.mxu0
      %v5103 = vpop.f32.mrf.mxu0
      %v5104 = vadd.f32 0.0, %v5103
      %v5105 = vpop.f32.mrf.mxu0
      %5106 = vdwg.mxu0
      %v5107 = vadd.f32 %v4846, %v4981
      %v5108 = vadd.f32 %v4847, %v4984
      %v5109 = vadd.f32 %v4848, %v4989
      %v5110 = vadd.f32 %v4849, %v4992
      %v5111 = vadd.f32 %v4850, %v4997
      %v5112 = vadd.f32 %v4851, %v5000
      %v5113 = vadd.f32 %v4852, %v5005
      %v5114 = vadd.f32 %v4853, %v5008
      %v5115 = vadd.f32 %v4854, %v5013
      %v5116 = vadd.f32 %v4855, %v5016
      %v5117 = vadd.f32 %v4856, %v5021
      %v5118 = vadd.f32 %v4857, %v5024
      %v5119 = vadd.f32 %v4858, %v5029
      %v5120 = vadd.f32 %v4859, %v5032
      %v5121 = vadd.f32 %v4860, %v5037
      %v5122 = vadd.f32 %v4861, %v5040
      %v5123 = vadd.f32 %v4862, %v5045
      %v5124 = vadd.f32 %v4863, %v5048
      %v5125 = vadd.f32 %v4864, %v5053
      %v5126 = vadd.f32 %v4865, %v5056
      %v5127 = vadd.f32 %v4866, %v5061
      %v5128 = vadd.f32 %v4867, %v5064
      %v5129 = vadd.f32 %v4868, %v5069
      %v5130 = vadd.f32 %v4869, %v5072
      %v5131 = vadd.f32 %v4870, %v5077
      %v5132 = vadd.f32 %v4871, %v5080
      %v5133 = vadd.f32 %v4872, %v5085
      %v5134 = vadd.f32 %v4873, %v5088
      %v5135 = vadd.f32 %v4874, %v5093
      %v5136 = vadd.f32 %v4875, %v5096
      %v5137 = vadd.f32 %v4876, %v5101
      %v5138 = vadd.f32 %v4877, %v5104
      %v5139 = vpack.c.bf16 %v3301, %v3300
      %v5140 = vpack.c.bf16 %v3303, %v3302
      %v5141 = vpack.c.bf16 %v3305, %v3304
      %v5142 = vpack.c.bf16 %v3307, %v3306
      %v5143 = vpack.c.bf16 %v3309, %v3308
      %v5144 = vpack.c.bf16 %v3311, %v3310
      %v5145 = vpack.c.bf16 %v3313, %v3312
      %v5146 = vpack.c.bf16 %v3315, %v3314
      %v5147 = vpack.c.bf16 %v3317, %v3316
      %v5148 = vpack.c.bf16 %v3319, %v3318
      %v5149 = vpack.c.bf16 %v3321, %v3320
      %v5150 = vpack.c.bf16 %v3323, %v3322
      %v5151 = vpack.c.bf16 %v3325, %v3324
      %v5152 = vpack.c.bf16 %v3327, %v3326
      %v5153 = vpack.c.bf16 %v3329, %v3328
      %v5154 = vpack.c.bf16 %v3331, %v3330
      %v5155 = vld [vmem:[%s3 + $0xc] sm:$0xc]
      %v5157 = vunpack.c.l.b16 %v5155
      %v5158 = vpack.c.b16 %v5157, %v5157
      %v5159 = vrot.slane %v5158, 2
      %v5161 = vsel %vm226, %v5139, 0
      %v5164 = vsel %vm226, %v5140, 0
      %v5167 = vsel %vm226, %v5141, 0
      %v5170 = vsel %vm226, %v5142, 0
      %v5173 = vsel %vm226, %v5143, 0
      %v5176 = vsel %vm226, %v5144, 0
      %v5179 = vsel %vm226, %v5145, 0
      %v5182 = vsel %vm226, %v5146, 0
      %v5185 = vsel %vm226, %v5147, 0
      %v5188 = vsel %vm226, %v5148, 0
      %v5191 = vsel %vm226, %v5149, 0
      %v5194 = vsel %vm226, %v5150, 0
      %v5197 = vsel %vm226, %v5151, 0
      %v5200 = vsel %vm226, %v5152, 0
      %v5203 = vsel %vm226, %v5153, 0
      %v5206 = vsel %vm226, %v5154, 0
      %v5209 = vsel %vm712, %v5159, 0
      %5211 = vmatprep.subr.bf16.mxu0 0
      %5212 = vmatpush1.bf16.msra.mxu0 0
      %5213 = vmatprep.subr.bf16.mxu0 0
      %5214 = vmatpush1.bf16.msra.mxu0 0
      %5215 = vmatprep.subr.bf16.mxu0 0
      %5216 = vmatpush1.bf16.msra.mxu0 0
      %5217 = vmatprep.subr.bf16.mxu0 0
      %5218 = vmatpush1.bf16.msra.mxu0 0
      %5219 = vmatprep.subr.bf16.mxu0 0
      %5220 = vmatpush1.bf16.msra.mxu0 0
      %5221 = vmatprep.subr.bf16.mxu0 0
      %5222 = vmatpush1.bf16.msra.mxu0 0
      %5223 = vmatprep.subr.bf16.mxu0 0
      %5224 = vmatpush1.bf16.msra.mxu0 0
      %5225 = vmatprep.subr.bf16.mxu0 0
      %5226 = vmatpush1.bf16.msra.mxu0 %v5209
      %5227 = vmatprep.subr.bf16.mxu0 0
      %5228 = vmatpush2.bf16.msra.mxu0 0
      %5229 = vmatprep.subr.bf16.mxu0 0
      %5230 = vmatpush2.bf16.msra.mxu0 0
      %5231 = vmatprep.subr.bf16.mxu0 0
      %5232 = vmatpush2.bf16.msra.mxu0 0
      %5233 = vmatprep.subr.bf16.mxu0 0
      %5234 = vmatpush2.bf16.msra.mxu0 0
      %5235 = vmatprep.subr.bf16.mxu0 0
      %5236 = vmatpush2.bf16.msra.mxu0 0
      %5237 = vmatprep.subr.bf16.mxu0 0
      %5238 = vmatpush2.bf16.msra.mxu0 0
      %5239 = vmatprep.subr.bf16.mxu0 0
      %5240 = vmatpush2.bf16.msra.mxu0 0
      %5241 = vmatprep.subr.bf16.mxu0 0
      %5242 = vmatpush2.bf16.msra.mxu0 0
      %5243 = vmatprep.mubr.bf16.mxu0 0
      %5244 = vmatmul.mubr.bf16.gmra.mxu0 %v5161
      %v5245 = vpop.f32.mrf.mxu0
      %v5246 = vadd.f32 0.0, %v5245
      %v5247 = vpop.f32.mrf.mxu0
      %v5248 = vpop.f32.mrf.mxu0
      %v5249 = vadd.f32 0.0, %v5248
      %v5250 = vpop.f32.mrf.mxu0
      %5251 = vmatprep.mubr.bf16.mxu0 0
      %5252 = vmatmul.mubr.bf16.gmra.mxu0 %v5164
      %v5253 = vpop.f32.mrf.mxu0
      %v5254 = vadd.f32 0.0, %v5253
      %v5255 = vpop.f32.mrf.mxu0
      %v5256 = vpop.f32.mrf.mxu0
      %v5257 = vadd.f32 0.0, %v5256
      %v5258 = vpop.f32.mrf.mxu0
      %5259 = vmatprep.mubr.bf16.mxu0 0
      %5260 = vmatmul.mubr.bf16.gmra.mxu0 %v5167
      %v5261 = vpop.f32.mrf.mxu0
      %v5262 = vadd.f32 0.0, %v5261
      %v5263 = vpop.f32.mrf.mxu0
      %v5264 = vpop.f32.mrf.mxu0
      %v5265 = vadd.f32 0.0, %v5264
      %v5266 = vpop.f32.mrf.mxu0
      %5267 = vmatprep.mubr.bf16.mxu0 0
      %5268 = vmatmul.mubr.bf16.gmra.mxu0 %v5170
      %v5269 = vpop.f32.mrf.mxu0
      %v5270 = vadd.f32 0.0, %v5269
      %v5271 = vpop.f32.mrf.mxu0
      %v5272 = vpop.f32.mrf.mxu0
      %v5273 = vadd.f32 0.0, %v5272
      %v5274 = vpop.f32.mrf.mxu0
      %5275 = vmatprep.mubr.bf16.mxu0 0
      %5276 = vmatmul.mubr.bf16.gmra.mxu0 %v5173
      %v5277 = vpop.f32.mrf.mxu0
      %v5278 = vadd.f32 0.0, %v5277
      %v5279 = vpop.f32.mrf.mxu0
      %v5280 = vpop.f32.mrf.mxu0
      %v5281 = vadd.f32 0.0, %v5280
      %v5282 = vpop.f32.mrf.mxu0
      %5283 = vmatprep.mubr.bf16.mxu0 0
      %5284 = vmatmul.mubr.bf16.gmra.mxu0 %v5176
      %v5285 = vpop.f32.mrf.mxu0
      %v5286 = vadd.f32 0.0, %v5285
      %v5287 = vpop.f32.mrf.mxu0
      %v5288 = vpop.f32.mrf.mxu0
      %v5289 = vadd.f32 0.0, %v5288
      %v5290 = vpop.f32.mrf.mxu0
      %5291 = vmatprep.mubr.bf16.mxu0 0
      %5292 = vmatmul.mubr.bf16.gmra.mxu0 %v5179
      %v5293 = vpop.f32.mrf.mxu0
      %v5294 = vadd.f32 0.0, %v5293
      %v5295 = vpop.f32.mrf.mxu0
      %v5296 = vpop.f32.mrf.mxu0
      %v5297 = vadd.f32 0.0, %v5296
      %v5298 = vpop.f32.mrf.mxu0
      %5299 = vmatprep.mubr.bf16.mxu0 0
      %5300 = vmatmul.mubr.bf16.gmra.mxu0 %v5182
      %v5301 = vpop.f32.mrf.mxu0
      %v5302 = vadd.f32 0.0, %v5301
      %v5303 = vpop.f32.mrf.mxu0
      %v5304 = vpop.f32.mrf.mxu0
      %v5305 = vadd.f32 0.0, %v5304
      %v5306 = vpop.f32.mrf.mxu0
      %5307 = vmatprep.mubr.bf16.mxu0 0
      %5308 = vmatmul.mubr.bf16.gmra.mxu0 %v5185
      %v5309 = vpop.f32.mrf.mxu0
      %v5310 = vadd.f32 0.0, %v5309
      %v5311 = vpop.f32.mrf.mxu0
      %v5312 = vpop.f32.mrf.mxu0
      %v5313 = vadd.f32 0.0, %v5312
      %v5314 = vpop.f32.mrf.mxu0
      %5315 = vmatprep.mubr.bf16.mxu0 0
      %5316 = vmatmul.mubr.bf16.gmra.mxu0 %v5188
      %v5317 = vpop.f32.mrf.mxu0
      %v5318 = vadd.f32 0.0, %v5317
      %v5319 = vpop.f32.mrf.mxu0
      %v5320 = vpop.f32.mrf.mxu0
      %v5321 = vadd.f32 0.0, %v5320
      %v5322 = vpop.f32.mrf.mxu0
      %5323 = vmatprep.mubr.bf16.mxu0 0
      %5324 = vmatmul.mubr.bf16.gmra.mxu0 %v5191
      %v5325 = vpop.f32.mrf.mxu0
      %v5326 = vadd.f32 0.0, %v5325
      %v5327 = vpop.f32.mrf.mxu0
      %v5328 = vpop.f32.mrf.mxu0
      %v5329 = vadd.f32 0.0, %v5328
      %v5330 = vpop.f32.mrf.mxu0
      %5331 = vmatprep.mubr.bf16.mxu0 0
      %5332 = vmatmul.mubr.bf16.gmra.mxu0 %v5194
      %v5333 = vpop.f32.mrf.mxu0
      %v5334 = vadd.f32 0.0, %v5333
      %v5335 = vpop.f32.mrf.mxu0
      %v5336 = vpop.f32.mrf.mxu0
      %v5337 = vadd.f32 0.0, %v5336
      %v5338 = vpop.f32.mrf.mxu0
      %5339 = vmatprep.mubr.bf16.mxu0 0
      %5340 = vmatmul.mubr.bf16.gmra.mxu0 %v5197
      %v5341 = vpop.f32.mrf.mxu0
      %v5342 = vadd.f32 0.0, %v5341
      %v5343 = vpop.f32.mrf.mxu0
      %v5344 = vpop.f32.mrf.mxu0
      %v5345 = vadd.f32 0.0, %v5344
      %v5346 = vpop.f32.mrf.mxu0
      %5347 = vmatprep.mubr.bf16.mxu0 0
      %5348 = vmatmul.mubr.bf16.gmra.mxu0 %v5200
      %v5349 = vpop.f32.mrf.mxu0
      %v5350 = vadd.f32 0.0, %v5349
      %v5351 = vpop.f32.mrf.mxu0
      %v5352 = vpop.f32.mrf.mxu0
      %v5353 = vadd.f32 0.0, %v5352
      %v5354 = vpop.f32.mrf.mxu0
      %5355 = vmatprep.mubr.bf16.mxu0 0
      %5356 = vmatmul.mubr.bf16.gmra.mxu0 %v5203
      %v5357 = vpop.f32.mrf.mxu0
      %v5358 = vadd.f32 0.0, %v5357
      %v5359 = vpop.f32.mrf.mxu0
      %v5360 = vpop.f32.mrf.mxu0
      %v5361 = vadd.f32 0.0, %v5360
      %v5362 = vpop.f32.mrf.mxu0
      %5363 = vmatprep.mubr.bf16.mxu0 0
      %5364 = vmatmul.mubr.bf16.gmra.mxu0 %v5206
      %v5365 = vpop.f32.mrf.mxu0
      %v5366 = vadd.f32 0.0, %v5365
      %v5367 = vpop.f32.mrf.mxu0
      %v5368 = vpop.f32.mrf.mxu0
      %v5369 = vadd.f32 0.0, %v5368
      %v5370 = vpop.f32.mrf.mxu0
      %5371 = vdwg.mxu0
      %v5372 = vadd.f32 %v5107, %v5246
      %v5373 = vadd.f32 %v5108, %v5249
      %v5374 = vadd.f32 %v5109, %v5254
      %v5375 = vadd.f32 %v5110, %v5257
      %v5376 = vadd.f32 %v5111, %v5262
      %v5377 = vadd.f32 %v5112, %v5265
      %v5378 = vadd.f32 %v5113, %v5270
      %v5379 = vadd.f32 %v5114, %v5273
      %v5380 = vadd.f32 %v5115, %v5278
      %v5381 = vadd.f32 %v5116, %v5281
      %v5382 = vadd.f32 %v5117, %v5286
      %v5383 = vadd.f32 %v5118, %v5289
      %v5384 = vadd.f32 %v5119, %v5294
      %v5385 = vadd.f32 %v5120, %v5297
      %v5386 = vadd.f32 %v5121, %v5302
      %v5387 = vadd.f32 %v5122, %v5305
      %v5388 = vadd.f32 %v5123, %v5310
      %v5389 = vadd.f32 %v5124, %v5313
      %v5390 = vadd.f32 %v5125, %v5318
      %v5391 = vadd.f32 %v5126, %v5321
      %v5392 = vadd.f32 %v5127, %v5326
      %v5393 = vadd.f32 %v5128, %v5329
      %v5394 = vadd.f32 %v5129, %v5334
      %v5395 = vadd.f32 %v5130, %v5337
      %v5396 = vadd.f32 %v5131, %v5342
      %v5397 = vadd.f32 %v5132, %v5345
      %v5398 = vadd.f32 %v5133, %v5350
      %v5399 = vadd.f32 %v5134, %v5353
      %v5400 = vadd.f32 %v5135, %v5358
      %v5401 = vadd.f32 %v5136, %v5361
      %v5402 = vadd.f32 %v5137, %v5366
      %v5403 = vadd.f32 %v5138, %v5369
      %v5404 = vpack.c.bf16 %v3333, %v3332
      %v5405 = vpack.c.bf16 %v3335, %v3334
      %v5406 = vpack.c.bf16 %v3337, %v3336
      %v5407 = vpack.c.bf16 %v3339, %v3338
      %v5408 = vpack.c.bf16 %v3341, %v3340
      %v5409 = vpack.c.bf16 %v3343, %v3342
      %v5410 = vpack.c.bf16 %v3345, %v3344
      %v5411 = vpack.c.bf16 %v3347, %v3346
      %v5412 = vpack.c.bf16 %v3349, %v3348
      %v5413 = vpack.c.bf16 %v3351, %v3350
      %v5414 = vpack.c.bf16 %v3353, %v3352
      %v5415 = vpack.c.bf16 %v3355, %v3354
      %v5416 = vpack.c.bf16 %v3357, %v3356
      %v5417 = vpack.c.bf16 %v3359, %v3358
      %v5418 = vpack.c.bf16 %v3361, %v3360
      %v5419 = vpack.c.bf16 %v3363, %v3362
      %v5420 = vld [vmem:[%s3 + $0x10] sm:$0x3]
      %v5422 = vsel %vm226, %v5404, 0
      %v5425 = vsel %vm226, %v5405, 0
      %v5428 = vsel %vm226, %v5406, 0
      %v5431 = vsel %vm226, %v5407, 0
      %v5434 = vsel %vm226, %v5408, 0
      %v5437 = vsel %vm226, %v5409, 0
      %v5440 = vsel %vm226, %v5410, 0
      %v5443 = vsel %vm226, %v5411, 0
      %v5446 = vsel %vm226, %v5412, 0
      %v5449 = vsel %vm226, %v5413, 0
      %v5452 = vsel %vm226, %v5414, 0
      %v5455 = vsel %vm226, %v5415, 0
      %v5458 = vsel %vm226, %v5416, 0
      %v5461 = vsel %vm226, %v5417, 0
      %v5464 = vsel %vm226, %v5418, 0
      %v5467 = vsel %vm226, %v5419, 0
      %v5470 = vsel %vm712, %v5420, 0
      %5472 = vmatprep.subr.bf16.mxu0 0
      %5473 = vmatpush1.bf16.msra.mxu0 0
      %5474 = vmatprep.subr.bf16.mxu0 0
      %5475 = vmatpush1.bf16.msra.mxu0 0
      %5476 = vmatprep.subr.bf16.mxu0 0
      %5477 = vmatpush1.bf16.msra.mxu0 0
      %5478 = vmatprep.subr.bf16.mxu0 0
      %5479 = vmatpush1.bf16.msra.mxu0 0
      %5480 = vmatprep.subr.bf16.mxu0 0
      %5481 = vmatpush1.bf16.msra.mxu0 0
      %5482 = vmatprep.subr.bf16.mxu0 0
      %5483 = vmatpush1.bf16.msra.mxu0 0
      %5484 = vmatprep.subr.bf16.mxu0 0
      %5485 = vmatpush1.bf16.msra.mxu0 0
      %5486 = vmatprep.subr.bf16.mxu0 0
      %5487 = vmatpush1.bf16.msra.mxu0 %v5470
      %5488 = vmatprep.subr.bf16.mxu0 0
      %5489 = vmatpush2.bf16.msra.mxu0 0
      %5490 = vmatprep.subr.bf16.mxu0 0
      %5491 = vmatpush2.bf16.msra.mxu0 0
      %5492 = vmatprep.subr.bf16.mxu0 0
      %5493 = vmatpush2.bf16.msra.mxu0 0
      %5494 = vmatprep.subr.bf16.mxu0 0
      %5495 = vmatpush2.bf16.msra.mxu0 0
      %5496 = vmatprep.subr.bf16.mxu0 0
      %5497 = vmatpush2.bf16.msra.mxu0 0
      %5498 = vmatprep.subr.bf16.mxu0 0
      %5499 = vmatpush2.bf16.msra.mxu0 0
      %5500 = vmatprep.subr.bf16.mxu0 0
      %5501 = vmatpush2.bf16.msra.mxu0 0
      %5502 = vmatprep.subr.bf16.mxu0 0
      %5503 = vmatpush2.bf16.msra.mxu0 0
      %5504 = vmatprep.mubr.bf16.mxu0 0
      %5505 = vmatmul.mubr.bf16.gmra.mxu0 %v5422
      %v5506 = vpop.f32.mrf.mxu0
      %v5507 = vadd.f32 0.0, %v5506
      %v5508 = vpop.f32.mrf.mxu0
      %v5509 = vpop.f32.mrf.mxu0
      %v5510 = vadd.f32 0.0, %v5509
      %v5511 = vpop.f32.mrf.mxu0
      %5512 = vmatprep.mubr.bf16.mxu0 0
      %5513 = vmatmul.mubr.bf16.gmra.mxu0 %v5425
      %v5514 = vpop.f32.mrf.mxu0
      %v5515 = vadd.f32 0.0, %v5514
      %v5516 = vpop.f32.mrf.mxu0
      %v5517 = vpop.f32.mrf.mxu0
      %v5518 = vadd.f32 0.0, %v5517
      %v5519 = vpop.f32.mrf.mxu0
      %5520 = vmatprep.mubr.bf16.mxu0 0
      %5521 = vmatmul.mubr.bf16.gmra.mxu0 %v5428
      %v5522 = vpop.f32.mrf.mxu0
      %v5523 = vadd.f32 0.0, %v5522
      %v5524 = vpop.f32.mrf.mxu0
      %v5525 = vpop.f32.mrf.mxu0
      %v5526 = vadd.f32 0.0, %v5525
      %v5527 = vpop.f32.mrf.mxu0
      %5528 = vmatprep.mubr.bf16.mxu0 0
      %5529 = vmatmul.mubr.bf16.gmra.mxu0 %v5431
      %v5530 = vpop.f32.mrf.mxu0
      %v5531 = vadd.f32 0.0, %v5530
      %v5532 = vpop.f32.mrf.mxu0
      %v5533 = vpop.f32.mrf.mxu0
      %v5534 = vadd.f32 0.0, %v5533
      %v5535 = vpop.f32.mrf.mxu0
      %5536 = vmatprep.mubr.bf16.mxu0 0
      %5537 = vmatmul.mubr.bf16.gmra.mxu0 %v5434
      %v5538 = vpop.f32.mrf.mxu0
      %v5539 = vadd.f32 0.0, %v5538
      %v5540 = vpop.f32.mrf.mxu0
      %v5541 = vpop.f32.mrf.mxu0
      %v5542 = vadd.f32 0.0, %v5541
      %v5543 = vpop.f32.mrf.mxu0
      %5544 = vmatprep.mubr.bf16.mxu0 0
      %5545 = vmatmul.mubr.bf16.gmra.mxu0 %v5437
      %v5546 = vpop.f32.mrf.mxu0
      %v5547 = vadd.f32 0.0, %v5546
      %v5548 = vpop.f32.mrf.mxu0
      %v5549 = vpop.f32.mrf.mxu0
      %v5550 = vadd.f32 0.0, %v5549
      %v5551 = vpop.f32.mrf.mxu0
      %5552 = vmatprep.mubr.bf16.mxu0 0
      %5553 = vmatmul.mubr.bf16.gmra.mxu0 %v5440
      %v5554 = vpop.f32.mrf.mxu0
      %v5555 = vadd.f32 0.0, %v5554
      %v5556 = vpop.f32.mrf.mxu0
      %v5557 = vpop.f32.mrf.mxu0
      %v5558 = vadd.f32 0.0, %v5557
      %v5559 = vpop.f32.mrf.mxu0
      %5560 = vmatprep.mubr.bf16.mxu0 0
      %5561 = vmatmul.mubr.bf16.gmra.mxu0 %v5443
      %v5562 = vpop.f32.mrf.mxu0
      %v5563 = vadd.f32 0.0, %v5562
      %v5564 = vpop.f32.mrf.mxu0
      %v5565 = vpop.f32.mrf.mxu0
      %v5566 = vadd.f32 0.0, %v5565
      %v5567 = vpop.f32.mrf.mxu0
      %5568 = vmatprep.mubr.bf16.mxu0 0
      %5569 = vmatmul.mubr.bf16.gmra.mxu0 %v5446
      %v5570 = vpop.f32.mrf.mxu0
      %v5571 = vadd.f32 0.0, %v5570
      %v5572 = vpop.f32.mrf.mxu0
      %v5573 = vpop.f32.mrf.mxu0
      %v5574 = vadd.f32 0.0, %v5573
      %v5575 = vpop.f32.mrf.mxu0
      %5576 = vmatprep.mubr.bf16.mxu0 0
      %5577 = vmatmul.mubr.bf16.gmra.mxu0 %v5449
      %v5578 = vpop.f32.mrf.mxu0
      %v5579 = vadd.f32 0.0, %v5578
      %v5580 = vpop.f32.mrf.mxu0
      %v5581 = vpop.f32.mrf.mxu0
      %v5582 = vadd.f32 0.0, %v5581
      %v5583 = vpop.f32.mrf.mxu0
      %5584 = vmatprep.mubr.bf16.mxu0 0
      %5585 = vmatmul.mubr.bf16.gmra.mxu0 %v5452
      %v5586 = vpop.f32.mrf.mxu0
      %v5587 = vadd.f32 0.0, %v5586
      %v5588 = vpop.f32.mrf.mxu0
      %v5589 = vpop.f32.mrf.mxu0
      %v5590 = vadd.f32 0.0, %v5589
      %v5591 = vpop.f32.mrf.mxu0
      %5592 = vmatprep.mubr.bf16.mxu0 0
      %5593 = vmatmul.mubr.bf16.gmra.mxu0 %v5455
      %v5594 = vpop.f32.mrf.mxu0
      %v5595 = vadd.f32 0.0, %v5594
      %v5596 = vpop.f32.mrf.mxu0
      %v5597 = vpop.f32.mrf.mxu0
      %v5598 = vadd.f32 0.0, %v5597
      %v5599 = vpop.f32.mrf.mxu0
      %5600 = vmatprep.mubr.bf16.mxu0 0
      %5601 = vmatmul.mubr.bf16.gmra.mxu0 %v5458
      %v5602 = vpop.f32.mrf.mxu0
      %v5603 = vadd.f32 0.0, %v5602
      %v5604 = vpop.f32.mrf.mxu0
      %v5605 = vpop.f32.mrf.mxu0
      %v5606 = vadd.f32 0.0, %v5605
      %v5607 = vpop.f32.mrf.mxu0
      %5608 = vmatprep.mubr.bf16.mxu0 0
      %5609 = vmatmul.mubr.bf16.gmra.mxu0 %v5461
      %v5610 = vpop.f32.mrf.mxu0
      %v5611 = vadd.f32 0.0, %v5610
      %v5612 = vpop.f32.mrf.mxu0
      %v5613 = vpop.f32.mrf.mxu0
      %v5614 = vadd.f32 0.0, %v5613
      %v5615 = vpop.f32.mrf.mxu0
      %5616 = vmatprep.mubr.bf16.mxu0 0
      %5617 = vmatmul.mubr.bf16.gmra.mxu0 %v5464
      %v5618 = vpop.f32.mrf.mxu0
      %v5619 = vadd.f32 0.0, %v5618
      %v5620 = vpop.f32.mrf.mxu0
      %v5621 = vpop.f32.mrf.mxu0
      %v5622 = vadd.f32 0.0, %v5621
      %v5623 = vpop.f32.mrf.mxu0
      %5624 = vmatprep.mubr.bf16.mxu0 0
      %5625 = vmatmul.mubr.bf16.gmra.mxu0 %v5467
      %v5626 = vpop.f32.mrf.mxu0
      %v5627 = vadd.f32 0.0, %v5626
      %v5628 = vpop.f32.mrf.mxu0
      %v5629 = vpop.f32.mrf.mxu0
      %v5630 = vadd.f32 0.0, %v5629
      %v5631 = vpop.f32.mrf.mxu0
      %5632 = vdwg.mxu0
      %v5633 = vadd.f32 %v5372, %v5507
      %v5634 = vadd.f32 %v5373, %v5510
      %v5635 = vadd.f32 %v5374, %v5515
      %v5636 = vadd.f32 %v5375, %v5518
      %v5637 = vadd.f32 %v5376, %v5523
      %v5638 = vadd.f32 %v5377, %v5526
      %v5639 = vadd.f32 %v5378, %v5531
      %v5640 = vadd.f32 %v5379, %v5534
      %v5641 = vadd.f32 %v5380, %v5539
      %v5642 = vadd.f32 %v5381, %v5542
      %v5643 = vadd.f32 %v5382, %v5547
      %v5644 = vadd.f32 %v5383, %v5550
      %v5645 = vadd.f32 %v5384, %v5555
      %v5646 = vadd.f32 %v5385, %v5558
      %v5647 = vadd.f32 %v5386, %v5563
      %v5648 = vadd.f32 %v5387, %v5566
      %v5649 = vadd.f32 %v5388, %v5571
      %v5650 = vadd.f32 %v5389, %v5574
      %v5651 = vadd.f32 %v5390, %v5579
      %v5652 = vadd.f32 %v5391, %v5582
      %v5653 = vadd.f32 %v5392, %v5587
      %v5654 = vadd.f32 %v5393, %v5590
      %v5655 = vadd.f32 %v5394, %v5595
      %v5656 = vadd.f32 %v5395, %v5598
      %v5657 = vadd.f32 %v5396, %v5603
      %v5658 = vadd.f32 %v5397, %v5606
      %v5659 = vadd.f32 %v5398, %v5611
      %v5660 = vadd.f32 %v5399, %v5614
      %v5661 = vadd.f32 %v5400, %v5619
      %v5662 = vadd.f32 %v5401, %v5622
      %v5663 = vadd.f32 %v5402, %v5627
      %v5664 = vadd.f32 %v5403, %v5630
      %v5665 = vld [vmem:[%s4] sm:$0x1]
      %v5667 = vlaneseq
      %v5668 = vshrl.u32 %v5667, 7
      %v5669 = vsub.s32 0, %v5668
      %v5670 = vrot.slane %v5665, %v5669
      %v5672 = vadd.f32 %v5633, %v5670
      %v5673 = vadd.f32 %v5634, %v5670
      %v5674 = vadd.f32 %v5635, %v5670
      %v5675 = vadd.f32 %v5636, %v5670
      %v5676 = vadd.f32 %v5637, %v5670
      %v5677 = vadd.f32 %v5638, %v5670
      %v5678 = vadd.f32 %v5639, %v5670
      %v5679 = vadd.f32 %v5640, %v5670
      %v5680 = vadd.f32 %v5641, %v5670
      %v5681 = vadd.f32 %v5642, %v5670
      %v5682 = vadd.f32 %v5643, %v5670
      %v5683 = vadd.f32 %v5644, %v5670
      %v5684 = vadd.f32 %v5645, %v5670
      %v5685 = vadd.f32 %v5646, %v5670
      %v5686 = vadd.f32 %v5647, %v5670
      %v5687 = vadd.f32 %v5648, %v5670
      %v5688 = vadd.f32 %v5649, %v5670
      %v5689 = vadd.f32 %v5650, %v5670
      %v5690 = vadd.f32 %v5651, %v5670
      %v5691 = vadd.f32 %v5652, %v5670
      %v5692 = vadd.f32 %v5653, %v5670
      %v5693 = vadd.f32 %v5654, %v5670
      %v5694 = vadd.f32 %v5655, %v5670
      %v5695 = vadd.f32 %v5656, %v5670
      %v5696 = vadd.f32 %v5657, %v5670
      %v5697 = vadd.f32 %v5658, %v5670
      %v5698 = vadd.f32 %v5659, %v5670
      %v5699 = vadd.f32 %v5660, %v5670
      %v5700 = vadd.f32 %v5661, %v5670
      %v5701 = vadd.f32 %v5662, %v5670
      %v5702 = vadd.f32 %v5663, %v5670
      %v5703 = vadd.f32 %v5664, %v5670
      %v5704 = vadd.f32 %v272, %v5672
      %v5705 = vadd.f32 %v273, %v5673
      %v5706 = vadd.f32 %v274, %v5674
      %v5707 = vadd.f32 %v275, %v5675
      %v5708 = vadd.f32 %v276, %v5676
      %v5709 = vadd.f32 %v277, %v5677
      %v5710 = vadd.f32 %v278, %v5678
      %v5711 = vadd.f32 %v279, %v5679
      %v5712 = vadd.f32 %v280, %v5680
      %v5713 = vadd.f32 %v281, %v5681
      %v5714 = vadd.f32 %v282, %v5682
      %v5715 = vadd.f32 %v283, %v5683
      %v5716 = vadd.f32 %v284, %v5684
      %v5717 = vadd.f32 %v285, %v5685
      %v5718 = vadd.f32 %v286, %v5686
      %v5719 = vadd.f32 %v287, %v5687
      %v5720 = vadd.f32 %v288, %v5688
      %v5721 = vadd.f32 %v289, %v5689
      %v5722 = vadd.f32 %v290, %v5690
      %v5723 = vadd.f32 %v291, %v5691
      %v5724 = vadd.f32 %v292, %v5692
      %v5725 = vadd.f32 %v293, %v5693
      %v5726 = vadd.f32 %v294, %v5694
      %v5727 = vadd.f32 %v295, %v5695
      %v5728 = vadd.f32 %v296, %v5696
      %v5729 = vadd.f32 %v297, %v5697
      %v5730 = vadd.f32 %v298, %v5698
      %v5731 = vadd.f32 %v299, %v5699
      %v5732 = vadd.f32 %v300, %v5700
      %v5733 = vadd.f32 %v301, %v5701
      %v5734 = vadd.f32 %v302, %v5702
      %v5735 = vadd.f32 %v303, %v5703
      %v5736 = vtanh.pop %v5704
      %v5737 = vtanh.pop %v5705
      %v5738 = vtanh.pop %v5706
      %v5739 = vtanh.pop %v5707
      %v5740 = vtanh.pop %v5708
      %v5741 = vtanh.pop %v5709
      %v5742 = vtanh.pop %v5710
      %v5743 = vtanh.pop %v5711
      %v5744 = vtanh.pop %v5712
      %v5745 = vtanh.pop %v5713
      %v5746 = vtanh.pop %v5714
      %v5747 = vtanh.pop %v5715
      %v5748 = vtanh.pop %v5716
      %v5749 = vtanh.pop %v5717
      %v5750 = vtanh.pop %v5718
      %v5751 = vtanh.pop %v5719
      %v5752 = vtanh.pop %v5720
      %v5753 = vtanh.pop %v5721
      %v5754 = vtanh.pop %v5722
      %v5755 = vtanh.pop %v5723
      %v5756 = vtanh.pop %v5724
      %v5757 = vtanh.pop %v5725
      %v5758 = vtanh.pop %v5726
      %v5759 = vtanh.pop %v5727
      %v5760 = vtanh.pop %v5728
      %v5761 = vtanh.pop %v5729
      %v5762 = vtanh.pop %v5730
      %v5763 = vtanh.pop %v5731
      %v5764 = vtanh.pop %v5732
      %v5765 = vtanh.pop %v5733
      %v5766 = vtanh.pop %v5734
      %v5767 = vtanh.pop %v5735
      %5768 = vst.msk [vmem:[%s224] sm:$0xff] %vm226, %v5736
      %5769 = vst.msk [vmem:[%s224 + $0x8] sm:$0xff] %vm226, %v5737
      %5770 = vst.msk [vmem:[%s224 + $0x10] sm:$0xff] %vm226, %v5738
      %5771 = vst.msk [vmem:[%s224 + $0x18] sm:$0xff] %vm226, %v5739
      %5772 = vst.msk [vmem:[%s224 + $0x20] sm:$0xff] %vm226, %v5740
      %5773 = vst.msk [vmem:[%s224 + $0x28] sm:$0xff] %vm226, %v5741
      %5774 = vst.msk [vmem:[%s224 + $0x30] sm:$0xff] %vm226, %v5742
      %5775 = vst.msk [vmem:[%s224 + $0x38] sm:$0xff] %vm226, %v5743
      %5776 = vst.msk [vmem:[%s224 + $0x40] sm:$0xff] %vm226, %v5744
      %5777 = vst.msk [vmem:[%s224 + $0x48] sm:$0xff] %vm226, %v5745
      %5778 = vst.msk [vmem:[%s224 + $0x50] sm:$0xff] %vm226, %v5746
      %5779 = vst.msk [vmem:[%s224 + $0x58] sm:$0xff] %vm226, %v5747
      %5780 = vst.msk [vmem:[%s224 + $0x60] sm:$0xff] %vm226, %v5748
      %5781 = vst.msk [vmem:[%s224 + $0x68] sm:$0xff] %vm226, %v5749
      %5782 = vst.msk [vmem:[%s224 + $0x70] sm:$0xff] %vm226, %v5750
      %5783 = vst.msk [vmem:[%s224 + $0x78] sm:$0xff] %vm226, %v5751
      %5784 = vst.msk [vmem:[%s224 + $0x80] sm:$0xff] %vm226, %v5752
      %5785 = vst.msk [vmem:[%s224 + $0x88] sm:$0xff] %vm226, %v5753
      %5786 = vst.msk [vmem:[%s224 + $0x90] sm:$0xff] %vm226, %v5754
      %5787 = vst.msk [vmem:[%s224 + $0x98] sm:$0xff] %vm226, %v5755
      %5788 = vst.msk [vmem:[%s224 + $0xa0] sm:$0xff] %vm226, %v5756
      %5789 = vst.msk [vmem:[%s224 + $0xa8] sm:$0xff] %vm226, %v5757
      %5790 = vst.msk [vmem:[%s224 + $0xb0] sm:$0xff] %vm226, %v5758
      %5791 = vst.msk [vmem:[%s224 + $0xb8] sm:$0xff] %vm226, %v5759
      %5792 = vst.msk [vmem:[%s224 + $0xc0] sm:$0xff] %vm226, %v5760
      %5793 = vst.msk [vmem:[%s224 + $0xc8] sm:$0xff] %vm226, %v5761
      %5794 = vst.msk [vmem:[%s224 + $0xd0] sm:$0xff] %vm226, %v5762
      %5795 = vst.msk [vmem:[%s224 + $0xd8] sm:$0xff] %vm226, %v5763
      %5796 = vst.msk [vmem:[%s224 + $0xe0] sm:$0xff] %vm226, %v5764
      %5797 = vst.msk [vmem:[%s224 + $0xe8] sm:$0xff] %vm226, %v5765
      %5798 = vst.msk [vmem:[%s224 + $0xf0] sm:$0xff] %vm226, %v5766
      %5799 = vst.msk [vmem:[%s224 + $0xf8] sm:$0xff] %vm226, %v5767
      %p5800 = scmp.lt.s32.totalorder %s16, 1
      %s5801 = scalar_select %p5800, %s16, 1
      %s5802 = smul.addr %s5801, 32
      %s5803 = smul.addr %s5802, 8
      %s5804 = scalar_lea.vmem %s5, %s5803
      // Predicated region
      $region41: #{tpu_custom_call.1} parent=39 // pred_check
        %p5805 = pneg %p144
      $region42: #{tpu_custom_call.1} parent=39 // pred_check_branch
        %5807 = sbr.rel (%p5805) target = $region44
      $region43: #{tpu_custom_call.1} parent=39 // pred_region
        _
      $region44: #{tpu_custom_call.1} parent=39 // pred_fallthru
        _
    $region40: #{tpu_custom_call.1} parent=5 // pred_fallthru
      _
    %p5808 = scmp.le.s32.totalorder 2, %s11
    // Predicated region
    $region45: #{tpu_custom_call.1} parent=5 // pred_check
      %p5809 = pneg %p5808
    $region46: #{tpu_custom_call.1} parent=5 // pred_check_branch
      %5811 = sbr.rel (%p5809) target = $region48
    $region47: #{tpu_custom_call.1} parent=5 // pred_region
      %s5812 = ssub.s32 %s11, 2
      // Predicated region
      $region49: #{tpu_custom_call.1} parent=47 // pred_check
        %p5813 = pneg %p150
      $region50: #{tpu_custom_call.1} parent=47 // pred_check_branch
        %5815 = sbr.rel (%p5813) target = $region52
      $region51: #{tpu_custom_call.1} parent=47 // pred_region
        %p5816 = scmp.lt.s32.totalorder %s17, 1
        %s5817 = scalar_select %p5816, %s17, 1
        %s5818 = smul.addr %s5817, 32
        %s5819 = smul.addr %s5818, 8
        %s5820 = scalar_lea.vmem %s5, %s5819
      $region52: #{tpu_custom_call.1} parent=47 // pred_fallthru
        _
    $region48: #{tpu_custom_call.1} parent=5 // pred_fallthru
      _
  $region6: #{tpu_custom_call.1} parent=0 // loop_footer
    %s15 = sadd.s32 1, %s11
  $region7: #{tpu_custom_call.1} parent=0 // loop_footer_branch
    %10 = sbr.rel target = $region3
  $region8: #{tpu_custom_call.1} parent=0 // loop_exit
    _

</llo_original>
